<compile_context>
chip_gen: v7x
topology: tpu7x:2x2x1
jax: 0.10.0
libtpu: 0.0.40
codegen_flags: <defaults>
</compile_context>

<pallas_src>
import functools

import numpy as np

import jax
import jax.numpy as jnp
from jax import lax
from jax.experimental import pallas as pl
from jax.experimental.pallas import tpu as pltpu


# bfloat16 here = ~2x MXU throughput + half the weight/activation VMEM
# (accumulation stays float32).  float32 keeps the reference check tight.
MXU_DTYPE = jnp.float32


def _round_up(n, m):
    return ((n + m - 1) // m) * m


# ----------------------------------------------------------------------------
# Fused kernel: conv1 -> ReLU -> conv2 -> ReLU -> conv3 -> ReLU -> fc1 -> ReLU -> fc2
# ----------------------------------------------------------------------------
def _dqn_fused_kernel(x_ref, t1_ref, b1_ref, t2_ref, b2_ref, t3_ref, b3_ref,
                      fw1_ref, fb1_ref, fw2_ref, fb2_ref, o_ref,
                      a1_ref, a2_ref, *, geom):
    """One batch tile, everything VMEM-resident.

    Layouts (per batch row; every row pitch P* is a multiple of 128 lanes):
      x_ref : (TB, H  * P0)      NHWC input rows, flattened, pad lanes = 0
      a1/a2 : (TB, Hi * Pi)      conv1/conv2 outputs (VMEM scratch)
      tN    : (kN * Pin, Pout)   kernel-row-concatenated width-Toeplitz weights
      bN    : (1, Pout)          bias tiled across output width (0 in pad lanes)
      fw1   : (H3 * P3, 512)     rows permuted to the padded NHWC flatten order
      fw2   : (512, n_pad)       action dim zero-padded to a multiple of 128
      o_ref : (TB, n_pad)
    """
    (k1, s1, h1, p0, p1), (k2, s2, h2, _, p2), (k3, s3, h3, _, p3) = geom
    f32 = jnp.float32

    def mm(a, w):
        return jnp.dot(a, w, preferred_element_type=f32)

    act_dtype = a1_ref.dtype

    # ---- conv1 + ReLU: one dot per output row (kh folded into K) -----------
    t1 = t1_ref[...]
    b1 = b1_ref[...]
    for oh in range(h1):
        slab = x_ref[:, oh * s1 * p0: oh * s1 * p0 + k1 * p0]       # (TB, k1*P0)
        a1_ref[:, oh * p1:(oh + 1) * p1] = jnp.maximum(
            mm(slab, t1) + b1, 0.0).astype(act_dtype)

    # ---- conv2 + ReLU -------------------------------------------------------
    t2 = t2_ref[...]
    b2 = b2_ref[...]
    for oh in range(h2):
        slab = a1_ref[:, oh * s2 * p1: oh * s2 * p1 + k2 * p1]      # (TB, k2*P1)
        a2_ref[:, oh * p2:(oh + 1) * p2] = jnp.maximum(
            mm(slab, t2) + b2, 0.0).astype(act_dtype)

    # ---- conv3 + ReLU, accumulated directly into fc1 (no concat/flatten) ----
    t3 = t3_ref[...]
    b3 = b3_ref[...]
    acc = None
    for oh in range(h3):
        slab = a2_ref[:, oh * s3 * p2: oh * s3 * p2 + k3 * p2]      # (TB, k3*P2)
        row3 = jnp.maximum(mm(slab, t3) + b3, 0.0).astype(act_dtype)  # (TB, P3)
        part = mm(row3, fw1_ref[oh * p3:(oh + 1) * p3, :])          # (TB, 512)
        acc = part if acc is None else acc + part

    hfc = jnp.maximum(acc + fb1_ref[...], 0.0).astype(act_dtype)    # (TB, 512)
    q = mm(hfc, fw2_ref[...]) + fb2_ref[...]
    o_ref[...] = q.astype(o_ref.dtype)


# ----------------------------------------------------------------------------
# Forward wrapper: one input layout op, one pallas_call, one final slice.
# ----------------------------------------------------------------------------
def dqn_forward(kparams, x_nchw, *, geom, n_actions, n_pad):
    B, C, H, W = x_nchw.shape
    (k1, s1, h1, p0, p1), (k2, s2, h2, _, p2), (k3, s3, h3, _, p3) = geom

    # NCHW -> (B, H, W*C) NHWC rows, zero-pad each row to P0 lanes, flatten.
    # TODO(synk): accept NHWC input natively to make this a free reshape.
    x_rows = jnp.transpose(x_nchw, (0, 2, 3, 1)).reshape(B, H, W * C)
    if p0 > W * C:
        x_rows = jnp.pad(x_rows, ((0, 0), (0, 0), (0, p0 - W * C)))
    x_flat = x_rows.reshape(B, H * p0).astype(kparams["t1"].dtype)

    # Batch tile: whole batch at demo size; capped for large replay batches so
    # the "parallel" grid axis pipelines DMA and (on v7x) uses both TCs.
    tb = B if B <= 128 else 128
    grid = (pl.cdiv(B, tb),)

    def batch_spec(cols):
        return pl.BlockSpec((tb, cols), lambda i: (i, 0))

    def full_spec(arr):
        nd = arr.ndim
        return pl.BlockSpec(arr.shape, lambda i, _n=nd: (0,) * _n)

    weights = (kparams["t1"], kparams["b1"], kparams["t2"], kparams["b2"],
               kparams["t3"], kparams["b3"], kparams["fw1"], kparams["fb1"],
               kparams["fw2"], kparams["fb2"])

    q_pad = pl.pallas_call(
        functools.partial(_dqn_fused_kernel, geom=geom),
        out_shape=jax.ShapeDtypeStruct((B, n_pad), jnp.float32),
        grid_spec=pltpu.PrefetchScalarGridSpec(
            num_scalar_prefetch=0,
            grid=grid,
            in_specs=[batch_spec(H * p0)] + [full_spec(w) for w in weights],
            out_specs=batch_spec(n_pad),
            scratch_shapes=[pltpu.VMEM((tb, h1 * p1), kparams["t1"].dtype),
                            pltpu.VMEM((tb, h2 * p2), kparams["t1"].dtype)]),
        compiler_params=pltpu.CompilerParams(
            dimension_semantics=("parallel",)),
    )(x_flat, *weights)

    # Only the final output is sliced back to the unpadded action count.
    return q_pad[:, :n_actions]


# ----------------------------------------------------------------------------
# Parameters: PyTorch-layout init + one-time conversion to kernel format.
# ----------------------------------------------------------------------------
def init_dqn_params(input_shape, n_actions, key):
    """PyTorch-layout parameters with PyTorch-style uniform init bounds."""
    C_in, H, W = input_shape

    def uniform(k, shape, fan_in):
        bound = 1.0 / np.sqrt(fan_in)
        return jax.random.uniform(k, shape, jnp.float32, -bound, bound)

    ks = jax.random.split(key, 10)
    params = {}
    params["w1"] = uniform(ks[0], (32, C_in, 8, 8), C_in * 8 * 8)   # Conv2d(C,32,8,s=4)
    params["b1"] = uniform(ks[1], (32,), C_in * 8 * 8)
    params["w2"] = uniform(ks[2], (64, 32, 4, 4), 32 * 4 * 4)       # Conv2d(32,64,4,s=2)
    params["b2"] = uniform(ks[3], (64,), 32 * 4 * 4)
    params["w3"] = uniform(ks[4], (64, 64, 3, 3), 64 * 3 * 3)       # Conv2d(64,64,3,s=1)
    params["b3"] = uniform(ks[5], (64,), 64 * 3 * 3)

    h1, w1 = (H - 8) // 4 + 1, (W - 8) // 4 + 1
    h2, w2 = (h1 - 4) // 2 + 1, (w1 - 4) // 2 + 1
    h3, w3 = (h2 - 3) // 1 + 1, (w2 - 3) // 1 + 1
    conv_out_size = 64 * h3 * w3

    params["fw1"] = uniform(ks[6], (conv_out_size, 512), conv_out_size)
    params["fb1"] = uniform(ks[7], (512,), conv_out_size)
    params["fw2"] = uniform(ks[8], (512, n_actions), 512)
    params["fb2"] = uniform(ks[9], (n_actions,), 512)
    return params, conv_out_size


def prepare_kernel_params(params, input_shape, n_actions):
    """One-time (outside jit) conversion of PyTorch weights to kernel format:
    conv weights -> kernel-row-concatenated, lane-padded width-Toeplitz
    matrices; biases tiled across output width; fc1 rows permuted to the
    padded NHWC flatten order; fc2 padded to a multiple of 128 lanes."""
    C, H, W = input_shape

    def out_dim(n, k, s):
        return (n - k) // s + 1

    H1, W1 = out_dim(H, 8, 4), out_dim(W, 8, 4)
    H2, W2 = out_dim(H1, 4, 2), out_dim(W1, 4, 2)
    H3, W3 = out_dim(H2, 3, 1), out_dim(W2, 3, 1)

    P0 = _round_up(W * C, 128)
    P1 = _round_up(W1 * 32, 128)
    P2 = _round_up(W2 * 64, 128)
    P3 = _round_up(W3 * 64, 128)

    def toeplitz(w_oihw, s, w_in, w_out, p_in, p_out):
        # T[kh*p_in + wi*Ci + ci, ow*Co + co] = w[co, ci, kh, wi - ow*s]; 0 else.
        Co, Ci, K, _ = w_oihw.shape
        w = np.asarray(w_oihw, np.float32)
        t = np.zeros((K * p_in, p_out), np.float32)
        for kh in range(K):
            for ow in range(w_out):
                for kw in range(K):
                    wi = ow * s + kw
                    t[kh * p_in + wi * Ci: kh * p_in + (wi + 1) * Ci,
                      ow * Co: (ow + 1) * Co] = w[:, :, kh, kw].T
        return t

    def bias_row(b, co, w_out, p_out):
        out = np.zeros((1, p_out), np.float32)
        out[0, :w_out * co] = np.tile(np.asarray(b, np.float32), w_out)
        return out

    t1 = toeplitz(params["w1"], 4, W, W1, P0, P1)
    t2 = toeplitz(params["w2"], 2, W1, W2, P1, P2)
    t3 = toeplitz(params["w3"], 1, W2, W3, P2, P3)
    b1 = bias_row(params["b1"], 32, W1, P1)
    b2 = bias_row(params["b2"], 64, W2, P2)
    b3 = bias_row(params["b3"], 64, W3, P3)

    # fc1 rows: PyTorch NCHW flatten index (c*H3*W3 + oh*W3 + ow) mapped to the
    # kernel's padded NHWC flatten index (oh*P3 + ow*64 + c); zeros in pad rows.
    fw1_raw = np.asarray(params["fw1"], np.float32)
    fw1 = np.zeros((H3 * P3, fw1_raw.shape[1]), np.float32)
    for oh in range(H3):
        for ow in range(W3):
            for c in range(64):
                fw1[oh * P3 + ow * 64 + c, :] = fw1_raw[c * H3 * W3 + oh * W3 + ow, :]
    fb1 = np.asarray(params["fb1"], np.float32)[None, :]

    # fc2: pad the action dim to a lane-dense multiple of 128 (zero columns).
    n_pad = _round_up(max(n_actions, 1), 128)
    fw2_raw = np.asarray(params["fw2"], np.float32)
    fw2 = np.zeros((fw2_raw.shape[0], n_pad), np.float32)
    fw2[:, :n_actions] = fw2_raw
    fb2 = np.zeros((1, n_pad), np.float32)
    fb2[0, :n_actions] = np.asarray(params["fb2"], np.float32)

    kparams = dict(
        t1=jnp.asarray(t1, MXU_DTYPE), b1=jnp.asarray(b1),
        t2=jnp.asarray(t2, MXU_DTYPE), b2=jnp.asarray(b2),
        t3=jnp.asarray(t3, MXU_DTYPE), b3=jnp.asarray(b3),
        fw1=jnp.asarray(fw1, MXU_DTYPE), fb1=jnp.asarray(fb1),
        fw2=jnp.asarray(fw2, MXU_DTYPE), fb2=jnp.asarray(fb2),
    )
    # (kernel, stride, H_out, P_in, P_out) per conv layer.
    geom = ((8, 4, H1, P0, P1), (4, 2, H2, P1, P2), (3, 1, H3, P2, P3))
    return kparams, geom, n_pad


# ----------------------------------------------------------------------------
# Plain-XLA reference of the same module (numerical check only).
# ----------------------------------------------------------------------------
def dqn_reference(params, x_nchw):
    hp = lax.Precision.HIGHEST

    def conv(x, w, b, s):
        y = lax.conv_general_dilated(
            x, w, (s, s), "VALID",
            dimension_numbers=("NCHW", "OIHW", "NCHW"), precision=hp)
        return jnp.maximum(y + b[None, :, None, None], 0.0)

    h = conv(x_nchw, params["w1"], params["b1"], 4)
    h = conv(h, params["w2"], params["b2"], 2)
    h = conv(h, params["w3"], params["b3"], 1)
    flat = h.reshape(x_nchw.shape[0], -1)
    h = jnp.maximum(jnp.dot(flat, params["fw1"], precision=hp) + params["fb1"], 0.0)
    return jnp.dot(h, params["fw2"], precision=hp) + params["fb2"]


if __name__ == "__main__":
    # 36 -> (36-8)/4+1=8 -> (8-4)/2+1=3 -> (3-3)/1+1=1  => conv_out_size = 64
    B, C, H, W = 2, 4, 36, 36
    n_actions = 6
    input_shape = (C, H, W)

    root = jax.random.PRNGKey(0)
    pkey, xkey = jax.random.split(root)
    params, conv_out_size = init_dqn_params(input_shape, n_actions, pkey)
    kparams, geom, n_pad = prepare_kernel_params(params, input_shape, n_actions)

    x = jax.random.normal(xkey, (B, C, H, W), dtype=jnp.float32)

    fwd = jax.jit(functools.partial(
        dqn_forward, geom=geom, n_actions=n_actions, n_pad=n_pad))
    q = jax.block_until_ready(fwd(kparams, x))

    assert q.shape == (B, n_actions), q.shape
    assert q.dtype == jnp.float32

    # Numerical check against a plain-XLA implementation of the same module.
    # (2e-2 tolerance leaves headroom for MXU_DTYPE=bfloat16; f32 is far tighter.)
    q_ref = jax.block_until_ready(jax.jit(dqn_reference)(params, x))
    err = float(jnp.max(jnp.abs(q - q_ref)))
    assert err < 2e-2, f"max abs err vs reference: {err}"

    print("KERNEL_OK")
</pallas_src>

<mosaic_0001>
module attributes {stable_mosaic.version = 11 : i64} {
  func.func @_dqn_fused_kernel(%arg0: i32, %arg1: memref<2x9216xf32, #tpu.memory_space<vmem>>, %arg2: memref<2048x256xf32, #tpu.memory_space<vmem>>, %arg3: memref<1x256xf32, #tpu.memory_space<vmem>>, %arg4: memref<1024x256xf32, #tpu.memory_space<vmem>>, %arg5: memref<1x256xf32, #tpu.memory_space<vmem>>, %arg6: memref<768x128xf32, #tpu.memory_space<vmem>>, %arg7: memref<1x128xf32, #tpu.memory_space<vmem>>, %arg8: memref<128x512xf32, #tpu.memory_space<vmem>>, %arg9: memref<1x512xf32, #tpu.memory_space<vmem>>, %arg10: memref<512x128xf32, #tpu.memory_space<vmem>>, %arg11: memref<1x128xf32, #tpu.memory_space<vmem>>, %arg12: memref<2x128xf32, #tpu.memory_space<vmem>>, %arg13: memref<2x2048xf32, #tpu.memory_space<vmem>>, %arg14: memref<2x768xf32, #tpu.memory_space<vmem>>) attributes {dimension_semantics = [#tpu.dimension_semantics<parallel>], iteration_bounds = array<i64: 1>, scalar_prefetch = 0 : i64, scratch_operands = 2 : i64, tpu.core_type = #tpu.core_type<tc>, window_params = [{transform_indices = @transform_0, window_bounds = array<i64: 2, 9216>}, {pipeline_mode = #tpu.pipeline_mode<synchronous>, transform_indices = @transform_1, window_bounds = array<i64: 2048, 256>}, {pipeline_mode = #tpu.pipeline_mode<synchronous>, transform_indices = @transform_2, window_bounds = array<i64: 1, 256>}, {pipeline_mode = #tpu.pipeline_mode<synchronous>, transform_indices = @transform_3, window_bounds = array<i64: 1024, 256>}, {pipeline_mode = #tpu.pipeline_mode<synchronous>, transform_indices = @transform_4, window_bounds = array<i64: 1, 256>}, {pipeline_mode = #tpu.pipeline_mode<synchronous>, transform_indices = @transform_5, window_bounds = array<i64: 768, 128>}, {pipeline_mode = #tpu.pipeline_mode<synchronous>, transform_indices = @transform_6, window_bounds = array<i64: 1, 128>}, {pipeline_mode = #tpu.pipeline_mode<synchronous>, transform_indices = @transform_7, window_bounds = array<i64: 128, 512>}, {pipeline_mode = #tpu.pipeline_mode<synchronous>, transform_indices = @transform_8, window_bounds = array<i64: 1, 512>}, {pipeline_mode = #tpu.pipeline_mode<synchronous>, transform_indices = @transform_9, window_bounds = array<i64: 512, 128>}, {pipeline_mode = #tpu.pipeline_mode<synchronous>, transform_indices = @transform_10, window_bounds = array<i64: 1, 128>}, {transform_indices = @transform_11, window_bounds = array<i64: 2, 128>}]} {
    %c0 = arith.constant 0 : index
    %c0_0 = arith.constant 0 : index
    %0 = vector.load %arg2[%c0, %c0_0] : memref<2048x256xf32, #tpu.memory_space<vmem>>, vector<2048x256xf32>
    %c0_1 = arith.constant 0 : index
    %c0_2 = arith.constant 0 : index
    %1 = vector.load %arg3[%c0_1, %c0_2] : memref<1x256xf32, #tpu.memory_space<vmem>>, vector<1x256xf32>
    %c0_3 = arith.constant 0 : index
    %c0_4 = arith.constant 0 : index
    %2 = vector.load %arg1[%c0_3, %c0_4] : memref<2x9216xf32, #tpu.memory_space<vmem>>, vector<2x2048xf32>
    %cst = arith.constant dense<0.000000e+00> : vector<2x256xf32>
    %3 = tpu.matmul %2, %0, %cst {dimension_numbers = #tpu.dot_dimension_numbers<[1], [0], [0], [1], [0, 0, 1, 1], [], []>} : vector<2x2048xf32>, vector<2048x256xf32>, vector<2x256xf32> -> vector<2x256xf32>
    %4 = vector.broadcast %1 : vector<1x256xf32> to vector<2x256xf32>
    %5 = arith.addf %3, %4 : vector<2x256xf32>
    %cst_5 = arith.constant 0.000000e+00 : f32
    %6 = vector.broadcast %cst_5 : f32 to vector<2x256xf32>
    %7 = arith.maximumf %5, %6 : vector<2x256xf32>
    %c0_6 = arith.constant 0 : index
    %c0_7 = arith.constant 0 : index
    %8 = vector.load %arg13[%c0_6, %c0_7] : memref<2x2048xf32, #tpu.memory_space<vmem>>, vector<2x256xf32>
    tpu.vector_store %arg13[%c0_6, %c0_7], %7 {strides = array<i32>} : memref<2x2048xf32, #tpu.memory_space<vmem>>, vector<2x256xf32>,
    %c0_8 = arith.constant 0 : index
    %c1024 = arith.constant 1024 : index
    %9 = vector.load %arg1[%c0_8, %c1024] : memref<2x9216xf32, #tpu.memory_space<vmem>>, vector<2x2048xf32>
    %cst_9 = arith.constant dense<0.000000e+00> : vector<2x256xf32>
    %10 = tpu.matmul %9, %0, %cst_9 {dimension_numbers = #tpu.dot_dimension_numbers<[1], [0], [0], [1], [0, 0, 1, 1], [], []>} : vector<2x2048xf32>, vector<2048x256xf32>, vector<2x256xf32> -> vector<2x256xf32>
    %11 = vector.broadcast %1 : vector<1x256xf32> to vector<2x256xf32>
    %12 = arith.addf %10, %11 : vector<2x256xf32>
    %cst_10 = arith.constant 0.000000e+00 : f32
    %13 = vector.broadcast %cst_10 : f32 to vector<2x256xf32>
    %14 = arith.maximumf %12, %13 : vector<2x256xf32>
    %c0_11 = arith.constant 0 : index
    %c256 = arith.constant 256 : index
    %15 = vector.load %arg13[%c0_11, %c256] : memref<2x2048xf32, #tpu.memory_space<vmem>>, vector<2x256xf32>
    tpu.vector_store %arg13[%c0_11, %c256], %14 {strides = array<i32>} : memref<2x2048xf32, #tpu.memory_space<vmem>>, vector<2x256xf32>,
    %c0_12 = arith.constant 0 : index
    %c2048 = arith.constant 2048 : index
    %16 = vector.load %arg1[%c0_12, %c2048] : memref<2x9216xf32, #tpu.memory_space<vmem>>, vector<2x2048xf32>
    %cst_13 = arith.constant dense<0.000000e+00> : vector<2x256xf32>
    %17 = tpu.matmul %16, %0, %cst_13 {dimension_numbers = #tpu.dot_dimension_numbers<[1], [0], [0], [1], [0, 0, 1, 1], [], []>} : vector<2x2048xf32>, vector<2048x256xf32>, vector<2x256xf32> -> vector<2x256xf32>
    %18 = vector.broadcast %1 : vector<1x256xf32> to vector<2x256xf32>
    %19 = arith.addf %17, %18 : vector<2x256xf32>
    %cst_14 = arith.constant 0.000000e+00 : f32
    %20 = vector.broadcast %cst_14 : f32 to vector<2x256xf32>
    %21 = arith.maximumf %19, %20 : vector<2x256xf32>
    %c0_15 = arith.constant 0 : index
    %c512 = arith.constant 512 : index
    %22 = vector.load %arg13[%c0_15, %c512] : memref<2x2048xf32, #tpu.memory_space<vmem>>, vector<2x256xf32>
    tpu.vector_store %arg13[%c0_15, %c512], %21 {strides = array<i32>} : memref<2x2048xf32, #tpu.memory_space<vmem>>, vector<2x256xf32>,
    %c0_16 = arith.constant 0 : index
    %c3072 = arith.constant 3072 : index
    %23 = vector.load %arg1[%c0_16, %c3072] : memref<2x9216xf32, #tpu.memory_space<vmem>>, vector<2x2048xf32>
    %cst_17 = arith.constant dense<0.000000e+00> : vector<2x256xf32>
    %24 = tpu.matmul %23, %0, %cst_17 {dimension_numbers = #tpu.dot_dimension_numbers<[1], [0], [0], [1], [0, 0, 1, 1], [], []>} : vector<2x2048xf32>, vector<2048x256xf32>, vector<2x256xf32> -> vector<2x256xf32>
    %25 = vector.broadcast %1 : vector<1x256xf32> to vector<2x256xf32>
    %26 = arith.addf %24, %25 : vector<2x256xf32>
    %cst_18 = arith.constant 0.000000e+00 : f32
    %27 = vector.broadcast %cst_18 : f32 to vector<2x256xf32>
    %28 = arith.maximumf %26, %27 : vector<2x256xf32>
    %c0_19 = arith.constant 0 : index
    %c768 = arith.constant 768 : index
    %29 = vector.load %arg13[%c0_19, %c768] : memref<2x2048xf32, #tpu.memory_space<vmem>>, vector<2x256xf32>
    tpu.vector_store %arg13[%c0_19, %c768], %28 {strides = array<i32>} : memref<2x2048xf32, #tpu.memory_space<vmem>>, vector<2x256xf32>,
    %c0_20 = arith.constant 0 : index
    %c4096 = arith.constant 4096 : index
    %30 = vector.load %arg1[%c0_20, %c4096] : memref<2x9216xf32, #tpu.memory_space<vmem>>, vector<2x2048xf32>
    %cst_21 = arith.constant dense<0.000000e+00> : vector<2x256xf32>
    %31 = tpu.matmul %30, %0, %cst_21 {dimension_numbers = #tpu.dot_dimension_numbers<[1], [0], [0], [1], [0, 0, 1, 1], [], []>} : vector<2x2048xf32>, vector<2048x256xf32>, vector<2x256xf32> -> vector<2x256xf32>
    %32 = vector.broadcast %1 : vector<1x256xf32> to vector<2x256xf32>
    %33 = arith.addf %31, %32 : vector<2x256xf32>
    %cst_22 = arith.constant 0.000000e+00 : f32
    %34 = vector.broadcast %cst_22 : f32 to vector<2x256xf32>
    %35 = arith.maximumf %33, %34 : vector<2x256xf32>
    %c0_23 = arith.constant 0 : index
    %c1024_24 = arith.constant 1024 : index
    %36 = vector.load %arg13[%c0_23, %c1024_24] : memref<2x2048xf32, #tpu.memory_space<vmem>>, vector<2x256xf32>
    tpu.vector_store %arg13[%c0_23, %c1024_24], %35 {strides = array<i32>} : memref<2x2048xf32, #tpu.memory_space<vmem>>, vector<2x256xf32>,
    %c0_25 = arith.constant 0 : index
    %c5120 = arith.constant 5120 : index
    %37 = vector.load %arg1[%c0_25, %c5120] : memref<2x9216xf32, #tpu.memory_space<vmem>>, vector<2x2048xf32>
    %cst_26 = arith.constant dense<0.000000e+00> : vector<2x256xf32>
    %38 = tpu.matmul %37, %0, %cst_26 {dimension_numbers = #tpu.dot_dimension_numbers<[1], [0], [0], [1], [0, 0, 1, 1], [], []>} : vector<2x2048xf32>, vector<2048x256xf32>, vector<2x256xf32> -> vector<2x256xf32>
    %39 = vector.broadcast %1 : vector<1x256xf32> to vector<2x256xf32>
    %40 = arith.addf %38, %39 : vector<2x256xf32>
    %cst_27 = arith.constant 0.000000e+00 : f32
    %41 = vector.broadcast %cst_27 : f32 to vector<2x256xf32>
    %42 = arith.maximumf %40, %41 : vector<2x256xf32>
    %c0_28 = arith.constant 0 : index
    %c1280 = arith.constant 1280 : index
    %43 = vector.load %arg13[%c0_28, %c1280] : memref<2x2048xf32, #tpu.memory_space<vmem>>, vector<2x256xf32>
    tpu.vector_store %arg13[%c0_28, %c1280], %42 {strides = array<i32>} : memref<2x2048xf32, #tpu.memory_space<vmem>>, vector<2x256xf32>,
    %c0_29 = arith.constant 0 : index
    %c6144 = arith.constant 6144 : index
    %44 = vector.load %arg1[%c0_29, %c6144] : memref<2x9216xf32, #tpu.memory_space<vmem>>, vector<2x2048xf32>
    %cst_30 = arith.constant dense<0.000000e+00> : vector<2x256xf32>
    %45 = tpu.matmul %44, %0, %cst_30 {dimension_numbers = #tpu.dot_dimension_numbers<[1], [0], [0], [1], [0, 0, 1, 1], [], []>} : vector<2x2048xf32>, vector<2048x256xf32>, vector<2x256xf32> -> vector<2x256xf32>
    %46 = vector.broadcast %1 : vector<1x256xf32> to vector<2x256xf32>
    %47 = arith.addf %45, %46 : vector<2x256xf32>
    %cst_31 = arith.constant 0.000000e+00 : f32
    %48 = vector.broadcast %cst_31 : f32 to vector<2x256xf32>
    %49 = arith.maximumf %47, %48 : vector<2x256xf32>
    %c0_32 = arith.constant 0 : index
    %c1536 = arith.constant 1536 : index
    %50 = vector.load %arg13[%c0_32, %c1536] : memref<2x2048xf32, #tpu.memory_space<vmem>>, vector<2x256xf32>
    tpu.vector_store %arg13[%c0_32, %c1536], %49 {strides = array<i32>} : memref<2x2048xf32, #tpu.memory_space<vmem>>, vector<2x256xf32>,
    %c0_33 = arith.constant 0 : index
    %c7168 = arith.constant 7168 : index
    %51 = vector.load %arg1[%c0_33, %c7168] : memref<2x9216xf32, #tpu.memory_space<vmem>>, vector<2x2048xf32>
    %cst_34 = arith.constant dense<0.000000e+00> : vector<2x256xf32>
    %52 = tpu.matmul %51, %0, %cst_34 {dimension_numbers = #tpu.dot_dimension_numbers<[1], [0], [0], [1], [0, 0, 1, 1], [], []>} : vector<2x2048xf32>, vector<2048x256xf32>, vector<2x256xf32> -> vector<2x256xf32>
    %53 = vector.broadcast %1 : vector<1x256xf32> to vector<2x256xf32>
    %54 = arith.addf %52, %53 : vector<2x256xf32>
    %cst_35 = arith.constant 0.000000e+00 : f32
    %55 = vector.broadcast %cst_35 : f32 to vector<2x256xf32>
    %56 = arith.maximumf %54, %55 : vector<2x256xf32>
    %c0_36 = arith.constant 0 : index
    %c1792 = arith.constant 1792 : index
    %57 = vector.load %arg13[%c0_36, %c1792] : memref<2x2048xf32, #tpu.memory_space<vmem>>, vector<2x256xf32>
    tpu.vector_store %arg13[%c0_36, %c1792], %56 {strides = array<i32>} : memref<2x2048xf32, #tpu.memory_space<vmem>>, vector<2x256xf32>,
    %c0_37 = arith.constant 0 : index
    %c0_38 = arith.constant 0 : index
    %58 = vector.load %arg4[%c0_37, %c0_38] : memref<1024x256xf32, #tpu.memory_space<vmem>>, vector<1024x256xf32>
    %c0_39 = arith.constant 0 : index
    %c0_40 = arith.constant 0 : index
    %59 = vector.load %arg5[%c0_39, %c0_40] : memref<1x256xf32, #tpu.memory_space<vmem>>, vector<1x256xf32>
    %c0_41 = arith.constant 0 : index
    %c0_42 = arith.constant 0 : index
    %60 = vector.load %arg13[%c0_41, %c0_42] : memref<2x2048xf32, #tpu.memory_space<vmem>>, vector<2x1024xf32>
    %cst_43 = arith.constant dense<0.000000e+00> : vector<2x256xf32>
    %61 = tpu.matmul %60, %58, %cst_43 {dimension_numbers = #tpu.dot_dimension_numbers<[1], [0], [0], [1], [0, 0, 1, 1], [], []>} : vector<2x1024xf32>, vector<1024x256xf32>, vector<2x256xf32> -> vector<2x256xf32>
    %62 = vector.broadcast %59 : vector<1x256xf32> to vector<2x256xf32>
    %63 = arith.addf %61, %62 : vector<2x256xf32>
    %cst_44 = arith.constant 0.000000e+00 : f32
    %64 = vector.broadcast %cst_44 : f32 to vector<2x256xf32>
    %65 = arith.maximumf %63, %64 : vector<2x256xf32>
    %c0_45 = arith.constant 0 : index
    %c0_46 = arith.constant 0 : index
    %66 = vector.load %arg14[%c0_45, %c0_46] : memref<2x768xf32, #tpu.memory_space<vmem>>, vector<2x256xf32>
    tpu.vector_store %arg14[%c0_45, %c0_46], %65 {strides = array<i32>} : memref<2x768xf32, #tpu.memory_space<vmem>>, vector<2x256xf32>,
    %c0_47 = arith.constant 0 : index
    %c512_48 = arith.constant 512 : index
    %67 = vector.load %arg13[%c0_47, %c512_48] : memref<2x2048xf32, #tpu.memory_space<vmem>>, vector<2x1024xf32>
    %cst_49 = arith.constant dense<0.000000e+00> : vector<2x256xf32>
    %68 = tpu.matmul %67, %58, %cst_49 {dimension_numbers = #tpu.dot_dimension_numbers<[1], [0], [0], [1], [0, 0, 1, 1], [], []>} : vector<2x1024xf32>, vector<1024x256xf32>, vector<2x256xf32> -> vector<2x256xf32>
    %69 = vector.broadcast %59 : vector<1x256xf32> to vector<2x256xf32>
    %70 = arith.addf %68, %69 : vector<2x256xf32>
    %cst_50 = arith.constant 0.000000e+00 : f32
    %71 = vector.broadcast %cst_50 : f32 to vector<2x256xf32>
    %72 = arith.maximumf %70, %71 : vector<2x256xf32>
    %c0_51 = arith.constant 0 : index
    %c256_52 = arith.constant 256 : index
    %73 = vector.load %arg14[%c0_51, %c256_52] : memref<2x768xf32, #tpu.memory_space<vmem>>, vector<2x256xf32>
    tpu.vector_store %arg14[%c0_51, %c256_52], %72 {strides = array<i32>} : memref<2x768xf32, #tpu.memory_space<vmem>>, vector<2x256xf32>,
    %c0_53 = arith.constant 0 : index
    %c1024_54 = arith.constant 1024 : index
    %74 = vector.load %arg13[%c0_53, %c1024_54] : memref<2x2048xf32, #tpu.memory_space<vmem>>, vector<2x1024xf32>
    %cst_55 = arith.constant dense<0.000000e+00> : vector<2x256xf32>
    %75 = tpu.matmul %74, %58, %cst_55 {dimension_numbers = #tpu.dot_dimension_numbers<[1], [0], [0], [1], [0, 0, 1, 1], [], []>} : vector<2x1024xf32>, vector<1024x256xf32>, vector<2x256xf32> -> vector<2x256xf32>
    %76 = vector.broadcast %59 : vector<1x256xf32> to vector<2x256xf32>
    %77 = arith.addf %75, %76 : vector<2x256xf32>
    %cst_56 = arith.constant 0.000000e+00 : f32
    %78 = vector.broadcast %cst_56 : f32 to vector<2x256xf32>
    %79 = arith.maximumf %77, %78 : vector<2x256xf32>
    %c0_57 = arith.constant 0 : index
    %c512_58 = arith.constant 512 : index
    %80 = vector.load %arg14[%c0_57, %c512_58] : memref<2x768xf32, #tpu.memory_space<vmem>>, vector<2x256xf32>
    tpu.vector_store %arg14[%c0_57, %c512_58], %79 {strides = array<i32>} : memref<2x768xf32, #tpu.memory_space<vmem>>, vector<2x256xf32>,
    %c0_59 = arith.constant 0 : index
    %c0_60 = arith.constant 0 : index
    %81 = vector.load %arg6[%c0_59, %c0_60] : memref<768x128xf32, #tpu.memory_space<vmem>>, vector<768x128xf32>
    %c0_61 = arith.constant 0 : index
    %c0_62 = arith.constant 0 : index
    %82 = vector.load %arg7[%c0_61, %c0_62] : memref<1x128xf32, #tpu.memory_space<vmem>>, vector<1x128xf32>
    %c0_63 = arith.constant 0 : index
    %c0_64 = arith.constant 0 : index
    %83 = vector.load %arg14[%c0_63, %c0_64] : memref<2x768xf32, #tpu.memory_space<vmem>>, vector<2x768xf32>
    %cst_65 = arith.constant dense<0.000000e+00> : vector<2x128xf32>
    %84 = tpu.matmul %83, %81, %cst_65 {dimension_numbers = #tpu.dot_dimension_numbers<[1], [0], [0], [1], [0, 0, 1, 1], [], []>} : vector<2x768xf32>, vector<768x128xf32>, vector<2x128xf32> -> vector<2x128xf32>
    %85 = vector.broadcast %82 : vector<1x128xf32> to vector<2x128xf32>
    %86 = arith.addf %84, %85 : vector<2x128xf32>
    %cst_66 = arith.constant 0.000000e+00 : f32
    %87 = vector.broadcast %cst_66 : f32 to vector<2x128xf32>
    %88 = arith.maximumf %86, %87 : vector<2x128xf32>
    %c0_67 = arith.constant 0 : index
    %c0_68 = arith.constant 0 : index
    %89 = vector.load %arg8[%c0_67, %c0_68] : memref<128x512xf32, #tpu.memory_space<vmem>>, vector<128x512xf32>
    %cst_69 = arith.constant dense<0.000000e+00> : vector<2x512xf32>
    %90 = tpu.matmul %88, %89, %cst_69 {dimension_numbers = #tpu.dot_dimension_numbers<[1], [0], [0], [1], [0, 0, 1, 1], [], []>} : vector<2x128xf32>, vector<128x512xf32>, vector<2x512xf32> -> vector<2x512xf32>
    %c0_70 = arith.constant 0 : index
    %c0_71 = arith.constant 0 : index
    %91 = vector.load %arg9[%c0_70, %c0_71] : memref<1x512xf32, #tpu.memory_space<vmem>>, vector<1x512xf32>
    %92 = vector.broadcast %91 : vector<1x512xf32> to vector<2x512xf32>
    %93 = arith.addf %90, %92 : vector<2x512xf32>
    %cst_72 = arith.constant 0.000000e+00 : f32
    %94 = vector.broadcast %cst_72 : f32 to vector<2x512xf32>
    %95 = arith.maximumf %93, %94 : vector<2x512xf32>
    %c0_73 = arith.constant 0 : index
    %c0_74 = arith.constant 0 : index
    %96 = vector.load %arg10[%c0_73, %c0_74] : memref<512x128xf32, #tpu.memory_space<vmem>>, vector<512x128xf32>
    %cst_75 = arith.constant dense<0.000000e+00> : vector<2x128xf32>
    %97 = tpu.matmul %95, %96, %cst_75 {dimension_numbers = #tpu.dot_dimension_numbers<[1], [0], [0], [1], [0, 0, 1, 1], [], []>} : vector<2x512xf32>, vector<512x128xf32>, vector<2x128xf32> -> vector<2x128xf32>
    %c0_76 = arith.constant 0 : index
    %c0_77 = arith.constant 0 : index
    %98 = vector.load %arg11[%c0_76, %c0_77] : memref<1x128xf32, #tpu.memory_space<vmem>>, vector<1x128xf32>
    %99 = vector.broadcast %98 : vector<1x128xf32> to vector<2x128xf32>
    %100 = arith.addf %97, %99 : vector<2x128xf32>
    %c0_78 = arith.constant 0 : index
    %c0_79 = arith.constant 0 : index
    %101 = vector.load %arg12[%c0_78, %c0_79] : memref<2x128xf32, #tpu.memory_space<vmem>>, vector<2x128xf32>
    tpu.vector_store %arg12[%c0_78, %c0_79], %100 {strides = array<i32>} : memref<2x128xf32, #tpu.memory_space<vmem>>, vector<2x128xf32>,
    return
  }
  func.func @transform_0(%arg0: i32) -> (i32, i32) {
    %c0_i32 = arith.constant 0 : i32
    %c0_i32_0 = arith.constant 0 : i32
    return %arg0, %c0_i32 : i32, i32
  }
  func.func @transform_1(%arg0: i32) -> (i32, i32) {
    %c0_i32 = arith.constant 0 : i32
    %c0_i32_0 = arith.constant 0 : i32
    %c0_i32_1 = arith.constant 0 : i32
    return %c0_i32, %c0_i32_0 : i32, i32
  }
  func.func @transform_2(%arg0: i32) -> (i32, i32) {
    %c0_i32 = arith.constant 0 : i32
    %c0_i32_0 = arith.constant 0 : i32
    %c0_i32_1 = arith.constant 0 : i32
    return %c0_i32, %c0_i32_0 : i32, i32
  }
  func.func @transform_3(%arg0: i32) -> (i32, i32) {
    %c0_i32 = arith.constant 0 : i32
    %c0_i32_0 = arith.constant 0 : i32
    %c0_i32_1 = arith.constant 0 : i32
    return %c0_i32, %c0_i32_0 : i32, i32
  }
  func.func @transform_4(%arg0: i32) -> (i32, i32) {
    %c0_i32 = arith.constant 0 : i32
    %c0_i32_0 = arith.constant 0 : i32
    %c0_i32_1 = arith.constant 0 : i32
    return %c0_i32, %c0_i32_0 : i32, i32
  }
  func.func @transform_5(%arg0: i32) -> (i32, i32) {
    %c0_i32 = arith.constant 0 : i32
    %c0_i32_0 = arith.constant 0 : i32
    %c0_i32_1 = arith.constant 0 : i32
    return %c0_i32, %c0_i32_0 : i32, i32
  }
  func.func @transform_6(%arg0: i32) -> (i32, i32) {
    %c0_i32 = arith.constant 0 : i32
    %c0_i32_0 = arith.constant 0 : i32
    %c0_i32_1 = arith.constant 0 : i32
    return %c0_i32, %c0_i32_0 : i32, i32
  }
  func.func @transform_7(%arg0: i32) -> (i32, i32) {
    %c0_i32 = arith.constant 0 : i32
    %c0_i32_0 = arith.constant 0 : i32
    %c0_i32_1 = arith.constant 0 : i32
    return %c0_i32, %c0_i32_0 : i32, i32
  }
  func.func @transform_8(%arg0: i32) -> (i32, i32) {
    %c0_i32 = arith.constant 0 : i32
    %c0_i32_0 = arith.constant 0 : i32
    %c0_i32_1 = arith.constant 0 : i32
    return %c0_i32, %c0_i32_0 : i32, i32
  }
  func.func @transform_9(%arg0: i32) -> (i32, i32) {
    %c0_i32 = arith.constant 0 : i32
    %c0_i32_0 = arith.constant 0 : i32
    %c0_i32_1 = arith.constant 0 : i32
    return %c0_i32, %c0_i32_0 : i32, i32
  }
  func.func @transform_10(%arg0: i32) -> (i32, i32) {
    %c0_i32 = arith.constant 0 : i32
    %c0_i32_0 = arith.constant 0 : i32
    %c0_i32_1 = arith.constant 0 : i32
    return %c0_i32, %c0_i32_0 : i32, i32
  }
  func.func @transform_11(%arg0: i32) -> (i32, i32) {
    %c0_i32 = arith.constant 0 : i32
    %c0_i32_0 = arith.constant 0 : i32
    return %arg0, %c0_i32 : i32, i32
  }
}

</mosaic_0001>

<llo_original>
// kernel: dqn_forward.1
$region0: #{dqn_forward.1}
  #allocation0 [shape = 'u32[]', space=smem, size = 0x4, offset = 0x4, fixed_abs, tag = 'smem constant byte address 0x4 - core index']
  #allocation1 [shape = 'u32[144,128]{1,0:T(1,128)}', space=vmem, size = 0x12000, scoped, tag = 'internal scratch']
  #allocation2 [shape = 'f32[2,2048]{1,0:T(2,128)}', space=vmem, size = 0x4000, scoped, tag = 'scratch operand']
  #allocation3 [shape = 'f32[2,768]{1,0:T(2,128)}', space=vmem, size = 0x1800, scoped, tag = 'scratch operand']
  %s0 = inlined_call_operand.vmem [shape: f32[2,9216], index: 0, kind: input, shape index: {}]
  %s1 = inlined_call_operand.hbm [shape: f32[2048,256], index: 1, kind: input, shape index: {}]
  %s2 = inlined_call_operand.hbm [shape: f32[1,256], index: 2, kind: input, shape index: {}]
  %s3 = inlined_call_operand.hbm [shape: f32[1024,256], index: 3, kind: input, shape index: {}]
  %s4 = inlined_call_operand.hbm [shape: f32[1,256], index: 4, kind: input, shape index: {}]
  %s5 = inlined_call_operand.hbm [shape: f32[768,128], index: 5, kind: input, shape index: {}]
  %s6 = inlined_call_operand.hbm [shape: f32[1,128], index: 6, kind: input, shape index: {}]
  %s7 = inlined_call_operand.hbm [shape: f32[128,512], index: 7, kind: input, shape index: {}]
  %s8 = inlined_call_operand.hbm [shape: f32[1,512], index: 8, kind: input, shape index: {}]
  %s9 = inlined_call_operand.hbm [shape: f32[512,128], index: 9, kind: input, shape index: {}]
  %s10 = inlined_call_operand.hbm [shape: f32[1,128], index: 10, kind: input, shape index: {}]
  %s11 = inlined_call_operand.hbm [shape: f32[2,128], index: 11, kind: output, shape index: {}]
  %s12 = sld [smem:[#allocation0]]
  $region94: #{dqn_forward.1} parent=0
    _
  %s14 = ssub.s32 1, %s12
  %s15 = scalar_select 0, %s14, %s12
  $region1: #{dqn_forward.1} parent=0
    #allocation4 [shape = 'u8[2097152]{0}', space=vmem, size = 0x200000, scoped, tag = 'input window, operand 1, single buffered']
    #allocation5 [shape = 's32[1]{0}', space=sflag, size = 0x4, scoped, tag = 'scoped memory for dqn_forward.1']
    #allocation6 [shape = 's32[1]{0}', space=sflag, size = 0x4, scoped, tag = 'scoped memory for dqn_forward.1']
    #allocation7 [shape = 'u8[1024]{0}', space=vmem, size = 0x400, scoped, tag = 'input window, operand 2, single buffered']
    #allocation8 [shape = 's32[1]{0}', space=sflag, size = 0x4, scoped, tag = 'scoped memory for dqn_forward.1']
    #allocation9 [shape = 'u8[1048576]{0}', space=vmem, size = 0x100000, scoped, tag = 'input window, operand 3, single buffered']
    #allocation10 [shape = 'u8[1024]{0}', space=vmem, size = 0x400, scoped, tag = 'input window, operand 4, single buffered']
    #allocation11 [shape = 's32[1]{0}', space=sflag, size = 0x4, scoped, tag = 'scoped memory for dqn_forward.1']
    #allocation12 [shape = 'u8[393216]{0}', space=vmem, size = 0x60000, scoped, tag = 'input window, operand 5, single buffered']
    #allocation13 [shape = 'u8[512]{0}', space=vmem, size = 0x400, scoped, tag = 'input window, operand 6, single buffered']
    #allocation14 [shape = 's32[1]{0}', space=sflag, size = 0x4, scoped, tag = 'scoped memory for dqn_forward.1']
    #allocation15 [shape = 'u8[262144]{0}', space=vmem, size = 0x40000, scoped, tag = 'input window, operand 7, single buffered']
    #allocation16 [shape = 'u8[2048]{0}', space=vmem, size = 0x800, scoped, tag = 'input window, operand 8, single buffered']
    #allocation17 [shape = 's32[1]{0}', space=sflag, size = 0x4, scoped, tag = 'scoped memory for dqn_forward.1']
    #allocation18 [shape = 'u8[262144]{0}', space=vmem, size = 0x40000, scoped, tag = 'input window, operand 9, single buffered']
    #allocation19 [shape = 'u8[512]{0}', space=vmem, size = 0x400, scoped, tag = 'input window, operand 10, single buffered']
    #allocation20 [shape = 's32[1]{0}', space=sflag, size = 0x4, scoped, tag = 'scoped memory for dqn_forward.1']
    #allocation21 [shape = 'u8[1024]{0}', space=vmem, size = 0x400, scoped, tag = 'output window, operand 0, single buffered']
    %16 = vsyncpa [#allocation5], 0
    %17 = vsyncpa [#allocation8], 0
    %18 = vsyncpa [#allocation11], 0
    %19 = vsyncpa [#allocation14], 0
    %20 = vsyncpa [#allocation17], 0
    %21 = vsyncpa [#allocation20], 0
    %22 = vsyncpa [#allocation6], 0
    // Predicated region
    $region2: #{dqn_forward.1} parent=1 // pred_check
      _
    $region3: #{dqn_forward.1} parent=1 // pred_check_branch
      %24 = sbr.rel (0) target = $region5
    $region4: #{dqn_forward.1} parent=1 // pred_region
      _
    $region5: #{dqn_forward.1} parent=1 // pred_fallthru
      _
    // Predicated region
    $region6: #{dqn_forward.1} parent=1 // pred_check
      _
    $region7: #{dqn_forward.1} parent=1 // pred_check_branch
      %26 = sbr.rel (0) target = $region9
    $region8: #{dqn_forward.1} parent=1 // pred_region
      %s28 = ssub.s32 65536, 65536
      %29 = vsyncadd [#allocation5], %s28
      %s30 = sshll.u32 [#allocation4], 4
      %s31 = int_to_ptr.vmem [resolvable:$true] %s30
      %36 = dma.hbm_to_vmem [thread:$0]  %s1, 65536, %s31, [#allocation5], 256, 256, 16
    $region9: #{dqn_forward.1} parent=1 // pred_fallthru
      _
    // Predicated region
    $region10: #{dqn_forward.1} parent=1 // pred_check
      _
    $region11: #{dqn_forward.1} parent=1 // pred_check_branch
      %38 = sbr.rel (0) target = $region13
    $region12: #{dqn_forward.1} parent=1 // pred_region
      %s40 = ssub.s32 32, 32
      %41 = vsyncadd [#allocation8], %s40
      %s43 = sshll.u32 [#allocation7], 4
      %s44 = int_to_ptr.vmem [resolvable:$true] %s43
      %46 = dma.hbm_to_vmem [thread:$0]  %s2, 32, %s44, [#allocation8]
    $region13: #{dqn_forward.1} parent=1 // pred_fallthru
      _
    // Predicated region
    $region14: #{dqn_forward.1} parent=1 // pred_check
      _
    $region15: #{dqn_forward.1} parent=1 // pred_check_branch
      %48 = sbr.rel (0) target = $region17
    $region16: #{dqn_forward.1} parent=1 // pred_region
      %s50 = ssub.s32 32768, 32768
      %51 = vsyncadd [#allocation8], %s50
      %s52 = sshll.u32 [#allocation9], 4
      %s53 = int_to_ptr.vmem [resolvable:$true] %s52
      %58 = dma.hbm_to_vmem [thread:$0]  %s3, 32768, %s53, [#allocation8], 256, 256, 16
    $region17: #{dqn_forward.1} parent=1 // pred_fallthru
      _
    // Predicated region
    $region18: #{dqn_forward.1} parent=1 // pred_check
      _
    $region19: #{dqn_forward.1} parent=1 // pred_check_branch
      %60 = sbr.rel (0) target = $region21
    $region20: #{dqn_forward.1} parent=1 // pred_region
      %s62 = ssub.s32 32, 32
      %63 = vsyncadd [#allocation11], %s62
      %s65 = sshll.u32 [#allocation10], 4
      %s66 = int_to_ptr.vmem [resolvable:$true] %s65
      %68 = dma.hbm_to_vmem [thread:$0]  %s4, 32, %s66, [#allocation11]
    $region21: #{dqn_forward.1} parent=1 // pred_fallthru
      _
    // Predicated region
    $region22: #{dqn_forward.1} parent=1 // pred_check
      _
    $region23: #{dqn_forward.1} parent=1 // pred_check_branch
      %70 = sbr.rel (0) target = $region25
    $region24: #{dqn_forward.1} parent=1 // pred_region
      %s72 = ssub.s32 12288, 12288
      %73 = vsyncadd [#allocation11], %s72
      %s74 = sshll.u32 [#allocation12], 4
      %s75 = int_to_ptr.vmem [resolvable:$true] %s74
      %80 = dma.hbm_to_vmem [thread:$0]  %s5, 12288, %s75, [#allocation11], 128, 128, 8
    $region25: #{dqn_forward.1} parent=1 // pred_fallthru
      _
    // Predicated region
    $region26: #{dqn_forward.1} parent=1 // pred_check
      _
    $region27: #{dqn_forward.1} parent=1 // pred_check_branch
      %82 = sbr.rel (0) target = $region29
    $region28: #{dqn_forward.1} parent=1 // pred_region
      %s84 = ssub.s32 16, 16
      %85 = vsyncadd [#allocation14], %s84
      %s87 = sshll.u32 [#allocation13], 4
      %s88 = int_to_ptr.vmem [resolvable:$true] %s87
      %90 = dma.hbm_to_vmem [thread:$0]  %s6, 16, %s88, [#allocation14]
    $region29: #{dqn_forward.1} parent=1 // pred_fallthru
      _
    // Predicated region
    $region30: #{dqn_forward.1} parent=1 // pred_check
      _
    $region31: #{dqn_forward.1} parent=1 // pred_check_branch
      %92 = sbr.rel (0) target = $region33
    $region32: #{dqn_forward.1} parent=1 // pred_region
      %s94 = ssub.s32 8192, 8192
      %95 = vsyncadd [#allocation14], %s94
      %s96 = sshll.u32 [#allocation15], 4
      %s97 = int_to_ptr.vmem [resolvable:$true] %s96
      %102 = dma.hbm_to_vmem [thread:$0]  %s7, 8192, %s97, [#allocation14], 512, 512, 32
    $region33: #{dqn_forward.1} parent=1 // pred_fallthru
      _
    // Predicated region
    $region34: #{dqn_forward.1} parent=1 // pred_check
      _
    $region35: #{dqn_forward.1} parent=1 // pred_check_branch
      %104 = sbr.rel (0) target = $region37
    $region36: #{dqn_forward.1} parent=1 // pred_region
      %s106 = ssub.s32 64, 64
      %107 = vsyncadd [#allocation17], %s106
      %s109 = sshll.u32 [#allocation16], 4
      %s110 = int_to_ptr.vmem [resolvable:$true] %s109
      %112 = dma.hbm_to_vmem [thread:$0]  %s8, 64, %s110, [#allocation17]
    $region37: #{dqn_forward.1} parent=1 // pred_fallthru
      _
    // Predicated region
    $region38: #{dqn_forward.1} parent=1 // pred_check
      _
    $region39: #{dqn_forward.1} parent=1 // pred_check_branch
      %114 = sbr.rel (0) target = $region41
    $region40: #{dqn_forward.1} parent=1 // pred_region
      %s116 = ssub.s32 8192, 8192
      %117 = vsyncadd [#allocation17], %s116
      %s118 = sshll.u32 [#allocation18], 4
      %s119 = int_to_ptr.vmem [resolvable:$true] %s118
      %124 = dma.hbm_to_vmem [thread:$0]  %s9, 8192, %s119, [#allocation17], 128, 128, 8
    $region41: #{dqn_forward.1} parent=1 // pred_fallthru
      _
    // Predicated region
    $region42: #{dqn_forward.1} parent=1 // pred_check
      _
    $region43: #{dqn_forward.1} parent=1 // pred_check_branch
      %126 = sbr.rel (0) target = $region45
    $region44: #{dqn_forward.1} parent=1 // pred_region
      %s128 = ssub.s32 16, 16
      %129 = vsyncadd [#allocation20], %s128
      %s131 = sshll.u32 [#allocation19], 4
      %s132 = int_to_ptr.vmem [resolvable:$true] %s131
      %134 = dma.hbm_to_vmem [thread:$0]  %s10, 16, %s132, [#allocation20]
    $region45: #{dqn_forward.1} parent=1 // pred_fallthru
      _
    // Predicated region
    $region46: #{dqn_forward.1} parent=1 // pred_check
      _
    $region47: #{dqn_forward.1} parent=1 // pred_check_branch
      %136 = sbr.rel (0) target = $region49
    $region48: #{dqn_forward.1} parent=1 // pred_region
      %137 = dma.done [#allocation5], 65536
    $region49: #{dqn_forward.1} parent=1 // pred_fallthru
      _
    // Predicated region
    $region50: #{dqn_forward.1} parent=1 // pred_check
      _
    $region51: #{dqn_forward.1} parent=1 // pred_check_branch
      %139 = sbr.rel (0) target = $region53
    $region52: #{dqn_forward.1} parent=1 // pred_region
      %140 = dma.done [#allocation8], 32
    $region53: #{dqn_forward.1} parent=1 // pred_fallthru
      _
    // Predicated region
    $region54: #{dqn_forward.1} parent=1 // pred_check
      _
    $region55: #{dqn_forward.1} parent=1 // pred_check_branch
      %142 = sbr.rel (0) target = $region57
    $region56: #{dqn_forward.1} parent=1 // pred_region
      %143 = dma.done [#allocation8], 32768
    $region57: #{dqn_forward.1} parent=1 // pred_fallthru
      _
    // Predicated region
    $region58: #{dqn_forward.1} parent=1 // pred_check
      _
    $region59: #{dqn_forward.1} parent=1 // pred_check_branch
      %145 = sbr.rel (0) target = $region61
    $region60: #{dqn_forward.1} parent=1 // pred_region
      %146 = dma.done [#allocation11], 32
    $region61: #{dqn_forward.1} parent=1 // pred_fallthru
      _
    // Predicated region
    $region62: #{dqn_forward.1} parent=1 // pred_check
      _
    $region63: #{dqn_forward.1} parent=1 // pred_check_branch
      %148 = sbr.rel (0) target = $region65
    $region64: #{dqn_forward.1} parent=1 // pred_region
      %149 = dma.done [#allocation11], 12288
    $region65: #{dqn_forward.1} parent=1 // pred_fallthru
      _
    // Predicated region
    $region66: #{dqn_forward.1} parent=1 // pred_check
      _
    $region67: #{dqn_forward.1} parent=1 // pred_check_branch
      %151 = sbr.rel (0) target = $region69
    $region68: #{dqn_forward.1} parent=1 // pred_region
      %152 = dma.done [#allocation14], 16
    $region69: #{dqn_forward.1} parent=1 // pred_fallthru
      _
    // Predicated region
    $region70: #{dqn_forward.1} parent=1 // pred_check
      _
    $region71: #{dqn_forward.1} parent=1 // pred_check_branch
      %154 = sbr.rel (0) target = $region73
    $region72: #{dqn_forward.1} parent=1 // pred_region
      %155 = dma.done [#allocation14], 8192
    $region73: #{dqn_forward.1} parent=1 // pred_fallthru
      _
    // Predicated region
    $region74: #{dqn_forward.1} parent=1 // pred_check
      _
    $region75: #{dqn_forward.1} parent=1 // pred_check_branch
      %157 = sbr.rel (0) target = $region77
    $region76: #{dqn_forward.1} parent=1 // pred_region
      %158 = dma.done [#allocation17], 64
    $region77: #{dqn_forward.1} parent=1 // pred_fallthru
      _
    // Predicated region
    $region78: #{dqn_forward.1} parent=1 // pred_check
      _
    $region79: #{dqn_forward.1} parent=1 // pred_check_branch
      %160 = sbr.rel (0) target = $region81
    $region80: #{dqn_forward.1} parent=1 // pred_region
      %161 = dma.done [#allocation17], 8192
    $region81: #{dqn_forward.1} parent=1 // pred_fallthru
      _
    // Predicated region
    $region82: #{dqn_forward.1} parent=1 // pred_check
      _
    $region83: #{dqn_forward.1} parent=1 // pred_check_branch
      %163 = sbr.rel (0) target = $region85
    $region84: #{dqn_forward.1} parent=1 // pred_region
      %164 = dma.done [#allocation20], 16
    $region85: #{dqn_forward.1} parent=1 // pred_fallthru
      _
    %v165 = vld [vmem:[#allocation4] sm:$0xff]
    %v166 = vld [vmem:[#allocation4 + $0x8] sm:$0xff]
    %v167 = vld [vmem:[#allocation4 + $0x10] sm:$0xff]
    %v168 = vld [vmem:[#allocation4 + $0x18] sm:$0xff]
    %v169 = vld [vmem:[#allocation4 + $0x20] sm:$0xff]
    %v170 = vld [vmem:[#allocation4 + $0x28] sm:$0xff]
    %v171 = vld [vmem:[#allocation4 + $0x30] sm:$0xff]
    %v172 = vld [vmem:[#allocation4 + $0x38] sm:$0xff]
    %v173 = vld [vmem:[#allocation4 + $0x40] sm:$0xff]
    %v174 = vld [vmem:[#allocation4 + $0x48] sm:$0xff]
    %v175 = vld [vmem:[#allocation4 + $0x50] sm:$0xff]
    %v176 = vld [vmem:[#allocation4 + $0x58] sm:$0xff]
    %v177 = vld [vmem:[#allocation4 + $0x60] sm:$0xff]
    %v178 = vld [vmem:[#allocation4 + $0x68] sm:$0xff]
    %v179 = vld [vmem:[#allocation4 + $0x70] sm:$0xff]
    %v180 = vld [vmem:[#allocation4 + $0x78] sm:$0xff]
    %v181 = vld [vmem:[#allocation4 + $0x80] sm:$0xff]
    %v182 = vld [vmem:[#allocation4 + $0x88] sm:$0xff]
    %v183 = vld [vmem:[#allocation4 + $0x90] sm:$0xff]
    %v184 = vld [vmem:[#allocation4 + $0x98] sm:$0xff]
    %v185 = vld [vmem:[#allocation4 + $0xa0] sm:$0xff]
    %v186 = vld [vmem:[#allocation4 + $0xa8] sm:$0xff]
    %v187 = vld [vmem:[#allocation4 + $0xb0] sm:$0xff]
    %v188 = vld [vmem:[#allocation4 + $0xb8] sm:$0xff]
    %v189 = vld [vmem:[#allocation4 + $0xc0] sm:$0xff]
    %v190 = vld [vmem:[#allocation4 + $0xc8] sm:$0xff]
    %v191 = vld [vmem:[#allocation4 + $0xd0] sm:$0xff]
    %v192 = vld [vmem:[#allocation4 + $0xd8] sm:$0xff]
    %v193 = vld [vmem:[#allocation4 + $0xe0] sm:$0xff]
    %v194 = vld [vmem:[#allocation4 + $0xe8] sm:$0xff]
    %v195 = vld [vmem:[#allocation4 + $0xf0] sm:$0xff]
    %v196 = vld [vmem:[#allocation4 + $0xf8] sm:$0xff]
    %v197 = vld [vmem:[#allocation4 + $0x100] sm:$0xff]
    %v198 = vld [vmem:[#allocation4 + $0x108] sm:$0xff]
    %v199 = vld [vmem:[#allocation4 + $0x110] sm:$0xff]
    %v200 = vld [vmem:[#allocation4 + $0x118] sm:$0xff]
    %v201 = vld [vmem:[#allocation4 + $0x120] sm:$0xff]
    %v202 = vld [vmem:[#allocation4 + $0x128] sm:$0xff]
    %v203 = vld [vmem:[#allocation4 + $0x130] sm:$0xff]
    %v204 = vld [vmem:[#allocation4 + $0x138] sm:$0xff]
    %v205 = vld [vmem:[#allocation4 + $0x140] sm:$0xff]
    %v206 = vld [vmem:[#allocation4 + $0x148] sm:$0xff]
    %v207 = vld [vmem:[#allocation4 + $0x150] sm:$0xff]
    %v208 = vld [vmem:[#allocation4 + $0x158] sm:$0xff]
    %v209 = vld [vmem:[#allocation4 + $0x160] sm:$0xff]
    %v210 = vld [vmem:[#allocation4 + $0x168] sm:$0xff]
    %v211 = vld [vmem:[#allocation4 + $0x170] sm:$0xff]
    %v212 = vld [vmem:[#allocation4 + $0x178] sm:$0xff]
    %v213 = vld [vmem:[#allocation4 + $0x180] sm:$0xff]
    %v214 = vld [vmem:[#allocation4 + $0x188] sm:$0xff]
    %v215 = vld [vmem:[#allocation4 + $0x190] sm:$0xff]
    %v216 = vld [vmem:[#allocation4 + $0x198] sm:$0xff]
    %v217 = vld [vmem:[#allocation4 + $0x1a0] sm:$0xff]
    %v218 = vld [vmem:[#allocation4 + $0x1a8] sm:$0xff]
    %v219 = vld [vmem:[#allocation4 + $0x1b0] sm:$0xff]
    %v220 = vld [vmem:[#allocation4 + $0x1b8] sm:$0xff]
    %v221 = vld [vmem:[#allocation4 + $0x1c0] sm:$0xff]
    %v222 = vld [vmem:[#allocation4 + $0x1c8] sm:$0xff]
    %v223 = vld [vmem:[#allocation4 + $0x1d0] sm:$0xff]
    %v224 = vld [vmem:[#allocation4 + $0x1d8] sm:$0xff]
    %v225 = vld [vmem:[#allocation4 + $0x1e0] sm:$0xff]
    %v226 = vld [vmem:[#allocation4 + $0x1e8] sm:$0xff]
    %v227 = vld [vmem:[#allocation4 + $0x1f0] sm:$0xff]
    %v228 = vld [vmem:[#allocation4 + $0x1f8] sm:$0xff]
    %v229 = vld [vmem:[#allocation4 + $0x200] sm:$0xff]
    %v230 = vld [vmem:[#allocation4 + $0x208] sm:$0xff]
    %v231 = vld [vmem:[#allocation4 + $0x210] sm:$0xff]
    %v232 = vld [vmem:[#allocation4 + $0x218] sm:$0xff]
    %v233 = vld [vmem:[#allocation4 + $0x220] sm:$0xff]
    %v234 = vld [vmem:[#allocation4 + $0x228] sm:$0xff]
    %v235 = vld [vmem:[#allocation4 + $0x230] sm:$0xff]
    %v236 = vld [vmem:[#allocation4 + $0x238] sm:$0xff]
    %v237 = vld [vmem:[#allocation4 + $0x240] sm:$0xff]
    %v238 = vld [vmem:[#allocation4 + $0x248] sm:$0xff]
    %v239 = vld [vmem:[#allocation4 + $0x250] sm:$0xff]
    %v240 = vld [vmem:[#allocation4 + $0x258] sm:$0xff]
    %v241 = vld [vmem:[#allocation4 + $0x260] sm:$0xff]
    %v242 = vld [vmem:[#allocation4 + $0x268] sm:$0xff]
    %v243 = vld [vmem:[#allocation4 + $0x270] sm:$0xff]
    %v244 = vld [vmem:[#allocation4 + $0x278] sm:$0xff]
    %v245 = vld [vmem:[#allocation4 + $0x280] sm:$0xff]
    %v246 = vld [vmem:[#allocation4 + $0x288] sm:$0xff]
    %v247 = vld [vmem:[#allocation4 + $0x290] sm:$0xff]
    %v248 = vld [vmem:[#allocation4 + $0x298] sm:$0xff]
    %v249 = vld [vmem:[#allocation4 + $0x2a0] sm:$0xff]
    %v250 = vld [vmem:[#allocation4 + $0x2a8] sm:$0xff]
    %v251 = vld [vmem:[#allocation4 + $0x2b0] sm:$0xff]
    %v252 = vld [vmem:[#allocation4 + $0x2b8] sm:$0xff]
    %v253 = vld [vmem:[#allocation4 + $0x2c0] sm:$0xff]
    %v254 = vld [vmem:[#allocation4 + $0x2c8] sm:$0xff]
    %v255 = vld [vmem:[#allocation4 + $0x2d0] sm:$0xff]
    %v256 = vld [vmem:[#allocation4 + $0x2d8] sm:$0xff]
    %v257 = vld [vmem:[#allocation4 + $0x2e0] sm:$0xff]
    %v258 = vld [vmem:[#allocation4 + $0x2e8] sm:$0xff]
    %v259 = vld [vmem:[#allocation4 + $0x2f0] sm:$0xff]
    %v260 = vld [vmem:[#allocation4 + $0x2f8] sm:$0xff]
    %v261 = vld [vmem:[#allocation4 + $0x300] sm:$0xff]
    %v262 = vld [vmem:[#allocation4 + $0x308] sm:$0xff]
    %v263 = vld [vmem:[#allocation4 + $0x310] sm:$0xff]
    %v264 = vld [vmem:[#allocation4 + $0x318] sm:$0xff]
    %v265 = vld [vmem:[#allocation4 + $0x320] sm:$0xff]
    %v266 = vld [vmem:[#allocation4 + $0x328] sm:$0xff]
    %v267 = vld [vmem:[#allocation4 + $0x330] sm:$0xff]
    %v268 = vld [vmem:[#allocation4 + $0x338] sm:$0xff]
    %v269 = vld [vmem:[#allocation4 + $0x340] sm:$0xff]
    %v270 = vld [vmem:[#allocation4 + $0x348] sm:$0xff]
    %v271 = vld [vmem:[#allocation4 + $0x350] sm:$0xff]
    %v272 = vld [vmem:[#allocation4 + $0x358] sm:$0xff]
    %v273 = vld [vmem:[#allocation4 + $0x360] sm:$0xff]
    %v274 = vld [vmem:[#allocation4 + $0x368] sm:$0xff]
    %v275 = vld [vmem:[#allocation4 + $0x370] sm:$0xff]
    %v276 = vld [vmem:[#allocation4 + $0x378] sm:$0xff]
    %v277 = vld [vmem:[#allocation4 + $0x380] sm:$0xff]
    %v278 = vld [vmem:[#allocation4 + $0x388] sm:$0xff]
    %v279 = vld [vmem:[#allocation4 + $0x390] sm:$0xff]
    %v280 = vld [vmem:[#allocation4 + $0x398] sm:$0xff]
    %v281 = vld [vmem:[#allocation4 + $0x3a0] sm:$0xff]
    %v282 = vld [vmem:[#allocation4 + $0x3a8] sm:$0xff]
    %v283 = vld [vmem:[#allocation4 + $0x3b0] sm:$0xff]
    %v284 = vld [vmem:[#allocation4 + $0x3b8] sm:$0xff]
    %v285 = vld [vmem:[#allocation4 + $0x3c0] sm:$0xff]
    %v286 = vld [vmem:[#allocation4 + $0x3c8] sm:$0xff]
    %v287 = vld [vmem:[#allocation4 + $0x3d0] sm:$0xff]
    %v288 = vld [vmem:[#allocation4 + $0x3d8] sm:$0xff]
    %v289 = vld [vmem:[#allocation4 + $0x3e0] sm:$0xff]
    %v290 = vld [vmem:[#allocation4 + $0x3e8] sm:$0xff]
    %v291 = vld [vmem:[#allocation4 + $0x3f0] sm:$0xff]
    %v292 = vld [vmem:[#allocation4 + $0x3f8] sm:$0xff]
    %v293 = vld [vmem:[#allocation4 + $0x400] sm:$0xff]
    %v294 = vld [vmem:[#allocation4 + $0x408] sm:$0xff]
    %v295 = vld [vmem:[#allocation4 + $0x410] sm:$0xff]
    %v296 = vld [vmem:[#allocation4 + $0x418] sm:$0xff]
    %v297 = vld [vmem:[#allocation4 + $0x420] sm:$0xff]
    %v298 = vld [vmem:[#allocation4 + $0x428] sm:$0xff]
    %v299 = vld [vmem:[#allocation4 + $0x430] sm:$0xff]
    %v300 = vld [vmem:[#allocation4 + $0x438] sm:$0xff]
    %v301 = vld [vmem:[#allocation4 + $0x440] sm:$0xff]
    %v302 = vld [vmem:[#allocation4 + $0x448] sm:$0xff]
    %v303 = vld [vmem:[#allocation4 + $0x450] sm:$0xff]
    %v304 = vld [vmem:[#allocation4 + $0x458] sm:$0xff]
    %v305 = vld [vmem:[#allocation4 + $0x460] sm:$0xff]
    %v306 = vld [vmem:[#allocation4 + $0x468] sm:$0xff]
    %v307 = vld [vmem:[#allocation4 + $0x470] sm:$0xff]
    %v308 = vld [vmem:[#allocation4 + $0x478] sm:$0xff]
    %v309 = vld [vmem:[#allocation4 + $0x480] sm:$0xff]
    %v310 = vld [vmem:[#allocation4 + $0x488] sm:$0xff]
    %v311 = vld [vmem:[#allocation4 + $0x490] sm:$0xff]
    %v312 = vld [vmem:[#allocation4 + $0x498] sm:$0xff]
    %v313 = vld [vmem:[#allocation4 + $0x4a0] sm:$0xff]
    %v314 = vld [vmem:[#allocation4 + $0x4a8] sm:$0xff]
    %v315 = vld [vmem:[#allocation4 + $0x4b0] sm:$0xff]
    %v316 = vld [vmem:[#allocation4 + $0x4b8] sm:$0xff]
    %v317 = vld [vmem:[#allocation4 + $0x4c0] sm:$0xff]
    %v318 = vld [vmem:[#allocation4 + $0x4c8] sm:$0xff]
    %v319 = vld [vmem:[#allocation4 + $0x4d0] sm:$0xff]
    %v320 = vld [vmem:[#allocation4 + $0x4d8] sm:$0xff]
    %v321 = vld [vmem:[#allocation4 + $0x4e0] sm:$0xff]
    %v322 = vld [vmem:[#allocation4 + $0x4e8] sm:$0xff]
    %v323 = vld [vmem:[#allocation4 + $0x4f0] sm:$0xff]
    %v324 = vld [vmem:[#allocation4 + $0x4f8] sm:$0xff]
    %v325 = vld [vmem:[#allocation4 + $0x500] sm:$0xff]
    %v326 = vld [vmem:[#allocation4 + $0x508] sm:$0xff]
    %v327 = vld [vmem:[#allocation4 + $0x510] sm:$0xff]
    %v328 = vld [vmem:[#allocation4 + $0x518] sm:$0xff]
    %v329 = vld [vmem:[#allocation4 + $0x520] sm:$0xff]
    %v330 = vld [vmem:[#allocation4 + $0x528] sm:$0xff]
    %v331 = vld [vmem:[#allocation4 + $0x530] sm:$0xff]
    %v332 = vld [vmem:[#allocation4 + $0x538] sm:$0xff]
    %v333 = vld [vmem:[#allocation4 + $0x540] sm:$0xff]
    %v334 = vld [vmem:[#allocation4 + $0x548] sm:$0xff]
    %v335 = vld [vmem:[#allocation4 + $0x550] sm:$0xff]
    %v336 = vld [vmem:[#allocation4 + $0x558] sm:$0xff]
    %v337 = vld [vmem:[#allocation4 + $0x560] sm:$0xff]
    %v338 = vld [vmem:[#allocation4 + $0x568] sm:$0xff]
    %v339 = vld [vmem:[#allocation4 + $0x570] sm:$0xff]
    %v340 = vld [vmem:[#allocation4 + $0x578] sm:$0xff]
    %v341 = vld [vmem:[#allocation4 + $0x580] sm:$0xff]
    %v342 = vld [vmem:[#allocation4 + $0x588] sm:$0xff]
    %v343 = vld [vmem:[#allocation4 + $0x590] sm:$0xff]
    %v344 = vld [vmem:[#allocation4 + $0x598] sm:$0xff]
    %v345 = vld [vmem:[#allocation4 + $0x5a0] sm:$0xff]
    %v346 = vld [vmem:[#allocation4 + $0x5a8] sm:$0xff]
    %v347 = vld [vmem:[#allocation4 + $0x5b0] sm:$0xff]
    %v348 = vld [vmem:[#allocation4 + $0x5b8] sm:$0xff]
    %v349 = vld [vmem:[#allocation4 + $0x5c0] sm:$0xff]
    %v350 = vld [vmem:[#allocation4 + $0x5c8] sm:$0xff]
    %v351 = vld [vmem:[#allocation4 + $0x5d0] sm:$0xff]
    %v352 = vld [vmem:[#allocation4 + $0x5d8] sm:$0xff]
    %v353 = vld [vmem:[#allocation4 + $0x5e0] sm:$0xff]
    %v354 = vld [vmem:[#allocation4 + $0x5e8] sm:$0xff]
    %v355 = vld [vmem:[#allocation4 + $0x5f0] sm:$0xff]
    %v356 = vld [vmem:[#allocation4 + $0x5f8] sm:$0xff]
    %v357 = vld [vmem:[#allocation4 + $0x600] sm:$0xff]
    %v358 = vld [vmem:[#allocation4 + $0x608] sm:$0xff]
    %v359 = vld [vmem:[#allocation4 + $0x610] sm:$0xff]
    %v360 = vld [vmem:[#allocation4 + $0x618] sm:$0xff]
    %v361 = vld [vmem:[#allocation4 + $0x620] sm:$0xff]
    %v362 = vld [vmem:[#allocation4 + $0x628] sm:$0xff]
    %v363 = vld [vmem:[#allocation4 + $0x630] sm:$0xff]
    %v364 = vld [vmem:[#allocation4 + $0x638] sm:$0xff]
    %v365 = vld [vmem:[#allocation4 + $0x640] sm:$0xff]
    %v366 = vld [vmem:[#allocation4 + $0x648] sm:$0xff]
    %v367 = vld [vmem:[#allocation4 + $0x650] sm:$0xff]
    %v368 = vld [vmem:[#allocation4 + $0x658] sm:$0xff]
    %v369 = vld [vmem:[#allocation4 + $0x660] sm:$0xff]
    %v370 = vld [vmem:[#allocation4 + $0x668] sm:$0xff]
    %v371 = vld [vmem:[#allocation4 + $0x670] sm:$0xff]
    %v372 = vld [vmem:[#allocation4 + $0x678] sm:$0xff]
    %v373 = vld [vmem:[#allocation4 + $0x680] sm:$0xff]
    %v374 = vld [vmem:[#allocation4 + $0x688] sm:$0xff]
    %v375 = vld [vmem:[#allocation4 + $0x690] sm:$0xff]
    %v376 = vld [vmem:[#allocation4 + $0x698] sm:$0xff]
    %v377 = vld [vmem:[#allocation4 + $0x6a0] sm:$0xff]
    %v378 = vld [vmem:[#allocation4 + $0x6a8] sm:$0xff]
    %v379 = vld [vmem:[#allocation4 + $0x6b0] sm:$0xff]
    %v380 = vld [vmem:[#allocation4 + $0x6b8] sm:$0xff]
    %v381 = vld [vmem:[#allocation4 + $0x6c0] sm:$0xff]
    %v382 = vld [vmem:[#allocation4 + $0x6c8] sm:$0xff]
    %v383 = vld [vmem:[#allocation4 + $0x6d0] sm:$0xff]
    %v384 = vld [vmem:[#allocation4 + $0x6d8] sm:$0xff]
    %v385 = vld [vmem:[#allocation4 + $0x6e0] sm:$0xff]
    %v386 = vld [vmem:[#allocation4 + $0x6e8] sm:$0xff]
    %v387 = vld [vmem:[#allocation4 + $0x6f0] sm:$0xff]
    %v388 = vld [vmem:[#allocation4 + $0x6f8] sm:$0xff]
    %v389 = vld [vmem:[#allocation4 + $0x700] sm:$0xff]
    %v390 = vld [vmem:[#allocation4 + $0x708] sm:$0xff]
    %v391 = vld [vmem:[#allocation4 + $0x710] sm:$0xff]
    %v392 = vld [vmem:[#allocation4 + $0x718] sm:$0xff]
    %v393 = vld [vmem:[#allocation4 + $0x720] sm:$0xff]
    %v394 = vld [vmem:[#allocation4 + $0x728] sm:$0xff]
    %v395 = vld [vmem:[#allocation4 + $0x730] sm:$0xff]
    %v396 = vld [vmem:[#allocation4 + $0x738] sm:$0xff]
    %v397 = vld [vmem:[#allocation4 + $0x740] sm:$0xff]
    %v398 = vld [vmem:[#allocation4 + $0x748] sm:$0xff]
    %v399 = vld [vmem:[#allocation4 + $0x750] sm:$0xff]
    %v400 = vld [vmem:[#allocation4 + $0x758] sm:$0xff]
    %v401 = vld [vmem:[#allocation4 + $0x760] sm:$0xff]
    %v402 = vld [vmem:[#allocation4 + $0x768] sm:$0xff]
    %v403 = vld [vmem:[#allocation4 + $0x770] sm:$0xff]
    %v404 = vld [vmem:[#allocation4 + $0x778] sm:$0xff]
    %v405 = vld [vmem:[#allocation4 + $0x780] sm:$0xff]
    %v406 = vld [vmem:[#allocation4 + $0x788] sm:$0xff]
    %v407 = vld [vmem:[#allocation4 + $0x790] sm:$0xff]
    %v408 = vld [vmem:[#allocation4 + $0x798] sm:$0xff]
    %v409 = vld [vmem:[#allocation4 + $0x7a0] sm:$0xff]
    %v410 = vld [vmem:[#allocation4 + $0x7a8] sm:$0xff]
    %v411 = vld [vmem:[#allocation4 + $0x7b0] sm:$0xff]
    %v412 = vld [vmem:[#allocation4 + $0x7b8] sm:$0xff]
    %v413 = vld [vmem:[#allocation4 + $0x7c0] sm:$0xff]
    %v414 = vld [vmem:[#allocation4 + $0x7c8] sm:$0xff]
    %v415 = vld [vmem:[#allocation4 + $0x7d0] sm:$0xff]
    %v416 = vld [vmem:[#allocation4 + $0x7d8] sm:$0xff]
    %v417 = vld [vmem:[#allocation4 + $0x7e0] sm:$0xff]
    %v418 = vld [vmem:[#allocation4 + $0x7e8] sm:$0xff]
    %v419 = vld [vmem:[#allocation4 + $0x7f0] sm:$0xff]
    %v420 = vld [vmem:[#allocation4 + $0x7f8] sm:$0xff]
    %v421 = vld [vmem:[#allocation4 + $0x800] sm:$0xff]
    %v422 = vld [vmem:[#allocation4 + $0x808] sm:$0xff]
    %v423 = vld [vmem:[#allocation4 + $0x810] sm:$0xff]
    %v424 = vld [vmem:[#allocation4 + $0x818] sm:$0xff]
    %v425 = vld [vmem:[#allocation4 + $0x820] sm:$0xff]
    %v426 = vld [vmem:[#allocation4 + $0x828] sm:$0xff]
    %v427 = vld [vmem:[#allocation4 + $0x830] sm:$0xff]
    %v428 = vld [vmem:[#allocation4 + $0x838] sm:$0xff]
    %v429 = vld [vmem:[#allocation4 + $0x840] sm:$0xff]
    %v430 = vld [vmem:[#allocation4 + $0x848] sm:$0xff]
    %v431 = vld [vmem:[#allocation4 + $0x850] sm:$0xff]
    %v432 = vld [vmem:[#allocation4 + $0x858] sm:$0xff]
    %v433 = vld [vmem:[#allocation4 + $0x860] sm:$0xff]
    %v434 = vld [vmem:[#allocation4 + $0x868] sm:$0xff]
    %v435 = vld [vmem:[#allocation4 + $0x870] sm:$0xff]
    %v436 = vld [vmem:[#allocation4 + $0x878] sm:$0xff]
    %v437 = vld [vmem:[#allocation4 + $0x880] sm:$0xff]
    %v438 = vld [vmem:[#allocation4 + $0x888] sm:$0xff]
    %v439 = vld [vmem:[#allocation4 + $0x890] sm:$0xff]
    %v440 = vld [vmem:[#allocation4 + $0x898] sm:$0xff]
    %v441 = vld [vmem:[#allocation4 + $0x8a0] sm:$0xff]
    %v442 = vld [vmem:[#allocation4 + $0x8a8] sm:$0xff]
    %v443 = vld [vmem:[#allocation4 + $0x8b0] sm:$0xff]
    %v444 = vld [vmem:[#allocation4 + $0x8b8] sm:$0xff]
    %v445 = vld [vmem:[#allocation4 + $0x8c0] sm:$0xff]
    %v446 = vld [vmem:[#allocation4 + $0x8c8] sm:$0xff]
    %v447 = vld [vmem:[#allocation4 + $0x8d0] sm:$0xff]
    %v448 = vld [vmem:[#allocation4 + $0x8d8] sm:$0xff]
    %v449 = vld [vmem:[#allocation4 + $0x8e0] sm:$0xff]
    %v450 = vld [vmem:[#allocation4 + $0x8e8] sm:$0xff]
    %v451 = vld [vmem:[#allocation4 + $0x8f0] sm:$0xff]
    %v452 = vld [vmem:[#allocation4 + $0x8f8] sm:$0xff]
    %v453 = vld [vmem:[#allocation4 + $0x900] sm:$0xff]
    %v454 = vld [vmem:[#allocation4 + $0x908] sm:$0xff]
    %v455 = vld [vmem:[#allocation4 + $0x910] sm:$0xff]
    %v456 = vld [vmem:[#allocation4 + $0x918] sm:$0xff]
    %v457 = vld [vmem:[#allocation4 + $0x920] sm:$0xff]
    %v458 = vld [vmem:[#allocation4 + $0x928] sm:$0xff]
    %v459 = vld [vmem:[#allocation4 + $0x930] sm:$0xff]
    %v460 = vld [vmem:[#allocation4 + $0x938] sm:$0xff]
    %v461 = vld [vmem:[#allocation4 + $0x940] sm:$0xff]
    %v462 = vld [vmem:[#allocation4 + $0x948] sm:$0xff]
    %v463 = vld [vmem:[#allocation4 + $0x950] sm:$0xff]
    %v464 = vld [vmem:[#allocation4 + $0x958] sm:$0xff]
    %v465 = vld [vmem:[#allocation4 + $0x960] sm:$0xff]
    %v466 = vld [vmem:[#allocation4 + $0x968] sm:$0xff]
    %v467 = vld [vmem:[#allocation4 + $0x970] sm:$0xff]
    %v468 = vld [vmem:[#allocation4 + $0x978] sm:$0xff]
    %v469 = vld [vmem:[#allocation4 + $0x980] sm:$0xff]
    %v470 = vld [vmem:[#allocation4 + $0x988] sm:$0xff]
    %v471 = vld [vmem:[#allocation4 + $0x990] sm:$0xff]
    %v472 = vld [vmem:[#allocation4 + $0x998] sm:$0xff]
    %v473 = vld [vmem:[#allocation4 + $0x9a0] sm:$0xff]
    %v474 = vld [vmem:[#allocation4 + $0x9a8] sm:$0xff]
    %v475 = vld [vmem:[#allocation4 + $0x9b0] sm:$0xff]
    %v476 = vld [vmem:[#allocation4 + $0x9b8] sm:$0xff]
    %v477 = vld [vmem:[#allocation4 + $0x9c0] sm:$0xff]
    %v478 = vld [vmem:[#allocation4 + $0x9c8] sm:$0xff]
    %v479 = vld [vmem:[#allocation4 + $0x9d0] sm:$0xff]
    %v480 = vld [vmem:[#allocation4 + $0x9d8] sm:$0xff]
    %v481 = vld [vmem:[#allocation4 + $0x9e0] sm:$0xff]
    %v482 = vld [vmem:[#allocation4 + $0x9e8] sm:$0xff]
    %v483 = vld [vmem:[#allocation4 + $0x9f0] sm:$0xff]
    %v484 = vld [vmem:[#allocation4 + $0x9f8] sm:$0xff]
    %v485 = vld [vmem:[#allocation4 + $0xa00] sm:$0xff]
    %v486 = vld [vmem:[#allocation4 + $0xa08] sm:$0xff]
    %v487 = vld [vmem:[#allocation4 + $0xa10] sm:$0xff]
    %v488 = vld [vmem:[#allocation4 + $0xa18] sm:$0xff]
    %v489 = vld [vmem:[#allocation4 + $0xa20] sm:$0xff]
    %v490 = vld [vmem:[#allocation4 + $0xa28] sm:$0xff]
    %v491 = vld [vmem:[#allocation4 + $0xa30] sm:$0xff]
    %v492 = vld [vmem:[#allocation4 + $0xa38] sm:$0xff]
    %v493 = vld [vmem:[#allocation4 + $0xa40] sm:$0xff]
    %v494 = vld [vmem:[#allocation4 + $0xa48] sm:$0xff]
    %v495 = vld [vmem:[#allocation4 + $0xa50] sm:$0xff]
    %v496 = vld [vmem:[#allocation4 + $0xa58] sm:$0xff]
    %v497 = vld [vmem:[#allocation4 + $0xa60] sm:$0xff]
    %v498 = vld [vmem:[#allocation4 + $0xa68] sm:$0xff]
    %v499 = vld [vmem:[#allocation4 + $0xa70] sm:$0xff]
    %v500 = vld [vmem:[#allocation4 + $0xa78] sm:$0xff]
    %v501 = vld [vmem:[#allocation4 + $0xa80] sm:$0xff]
    %v502 = vld [vmem:[#allocation4 + $0xa88] sm:$0xff]
    %v503 = vld [vmem:[#allocation4 + $0xa90] sm:$0xff]
    %v504 = vld [vmem:[#allocation4 + $0xa98] sm:$0xff]
    %v505 = vld [vmem:[#allocation4 + $0xaa0] sm:$0xff]
    %v506 = vld [vmem:[#allocation4 + $0xaa8] sm:$0xff]
    %v507 = vld [vmem:[#allocation4 + $0xab0] sm:$0xff]
    %v508 = vld [vmem:[#allocation4 + $0xab8] sm:$0xff]
    %v509 = vld [vmem:[#allocation4 + $0xac0] sm:$0xff]
    %v510 = vld [vmem:[#allocation4 + $0xac8] sm:$0xff]
    %v511 = vld [vmem:[#allocation4 + $0xad0] sm:$0xff]
    %v512 = vld [vmem:[#allocation4 + $0xad8] sm:$0xff]
    %v513 = vld [vmem:[#allocation4 + $0xae0] sm:$0xff]
    %v514 = vld [vmem:[#allocation4 + $0xae8] sm:$0xff]
    %v515 = vld [vmem:[#allocation4 + $0xaf0] sm:$0xff]
    %v516 = vld [vmem:[#allocation4 + $0xaf8] sm:$0xff]
    %v517 = vld [vmem:[#allocation4 + $0xb00] sm:$0xff]
    %v518 = vld [vmem:[#allocation4 + $0xb08] sm:$0xff]
    %v519 = vld [vmem:[#allocation4 + $0xb10] sm:$0xff]
    %v520 = vld [vmem:[#allocation4 + $0xb18] sm:$0xff]
    %v521 = vld [vmem:[#allocation4 + $0xb20] sm:$0xff]
    %v522 = vld [vmem:[#allocation4 + $0xb28] sm:$0xff]
    %v523 = vld [vmem:[#allocation4 + $0xb30] sm:$0xff]
    %v524 = vld [vmem:[#allocation4 + $0xb38] sm:$0xff]
    %v525 = vld [vmem:[#allocation4 + $0xb40] sm:$0xff]
    %v526 = vld [vmem:[#allocation4 + $0xb48] sm:$0xff]
    %v527 = vld [vmem:[#allocation4 + $0xb50] sm:$0xff]
    %v528 = vld [vmem:[#allocation4 + $0xb58] sm:$0xff]
    %v529 = vld [vmem:[#allocation4 + $0xb60] sm:$0xff]
    %v530 = vld [vmem:[#allocation4 + $0xb68] sm:$0xff]
    %v531 = vld [vmem:[#allocation4 + $0xb70] sm:$0xff]
    %v532 = vld [vmem:[#allocation4 + $0xb78] sm:$0xff]
    %v533 = vld [vmem:[#allocation4 + $0xb80] sm:$0xff]
    %v534 = vld [vmem:[#allocation4 + $0xb88] sm:$0xff]
    %v535 = vld [vmem:[#allocation4 + $0xb90] sm:$0xff]
    %v536 = vld [vmem:[#allocation4 + $0xb98] sm:$0xff]
    %v537 = vld [vmem:[#allocation4 + $0xba0] sm:$0xff]
    %v538 = vld [vmem:[#allocation4 + $0xba8] sm:$0xff]
    %v539 = vld [vmem:[#allocation4 + $0xbb0] sm:$0xff]
    %v540 = vld [vmem:[#allocation4 + $0xbb8] sm:$0xff]
    %v541 = vld [vmem:[#allocation4 + $0xbc0] sm:$0xff]
    %v542 = vld [vmem:[#allocation4 + $0xbc8] sm:$0xff]
    %v543 = vld [vmem:[#allocation4 + $0xbd0] sm:$0xff]
    %v544 = vld [vmem:[#allocation4 + $0xbd8] sm:$0xff]
    %v545 = vld [vmem:[#allocation4 + $0xbe0] sm:$0xff]
    %v546 = vld [vmem:[#allocation4 + $0xbe8] sm:$0xff]
    %v547 = vld [vmem:[#allocation4 + $0xbf0] sm:$0xff]
    %v548 = vld [vmem:[#allocation4 + $0xbf8] sm:$0xff]
    %v549 = vld [vmem:[#allocation4 + $0xc00] sm:$0xff]
    %v550 = vld [vmem:[#allocation4 + $0xc08] sm:$0xff]
    %v551 = vld [vmem:[#allocation4 + $0xc10] sm:$0xff]
    %v552 = vld [vmem:[#allocation4 + $0xc18] sm:$0xff]
    %v553 = vld [vmem:[#allocation4 + $0xc20] sm:$0xff]
    %v554 = vld [vmem:[#allocation4 + $0xc28] sm:$0xff]
    %v555 = vld [vmem:[#allocation4 + $0xc30] sm:$0xff]
    %v556 = vld [vmem:[#allocation4 + $0xc38] sm:$0xff]
    %v557 = vld [vmem:[#allocation4 + $0xc40] sm:$0xff]
    %v558 = vld [vmem:[#allocation4 + $0xc48] sm:$0xff]
    %v559 = vld [vmem:[#allocation4 + $0xc50] sm:$0xff]
    %v560 = vld [vmem:[#allocation4 + $0xc58] sm:$0xff]
    %v561 = vld [vmem:[#allocation4 + $0xc60] sm:$0xff]
    %v562 = vld [vmem:[#allocation4 + $0xc68] sm:$0xff]
    %v563 = vld [vmem:[#allocation4 + $0xc70] sm:$0xff]
    %v564 = vld [vmem:[#allocation4 + $0xc78] sm:$0xff]
    %v565 = vld [vmem:[#allocation4 + $0xc80] sm:$0xff]
    %v566 = vld [vmem:[#allocation4 + $0xc88] sm:$0xff]
    %v567 = vld [vmem:[#allocation4 + $0xc90] sm:$0xff]
    %v568 = vld [vmem:[#allocation4 + $0xc98] sm:$0xff]
    %v569 = vld [vmem:[#allocation4 + $0xca0] sm:$0xff]
    %v570 = vld [vmem:[#allocation4 + $0xca8] sm:$0xff]
    %v571 = vld [vmem:[#allocation4 + $0xcb0] sm:$0xff]
    %v572 = vld [vmem:[#allocation4 + $0xcb8] sm:$0xff]
    %v573 = vld [vmem:[#allocation4 + $0xcc0] sm:$0xff]
    %v574 = vld [vmem:[#allocation4 + $0xcc8] sm:$0xff]
    %v575 = vld [vmem:[#allocation4 + $0xcd0] sm:$0xff]
    %v576 = vld [vmem:[#allocation4 + $0xcd8] sm:$0xff]
    %v577 = vld [vmem:[#allocation4 + $0xce0] sm:$0xff]
    %v578 = vld [vmem:[#allocation4 + $0xce8] sm:$0xff]
    %v579 = vld [vmem:[#allocation4 + $0xcf0] sm:$0xff]
    %v580 = vld [vmem:[#allocation4 + $0xcf8] sm:$0xff]
    %v581 = vld [vmem:[#allocation4 + $0xd00] sm:$0xff]
    %v582 = vld [vmem:[#allocation4 + $0xd08] sm:$0xff]
    %v583 = vld [vmem:[#allocation4 + $0xd10] sm:$0xff]
    %v584 = vld [vmem:[#allocation4 + $0xd18] sm:$0xff]
    %v585 = vld [vmem:[#allocation4 + $0xd20] sm:$0xff]
    %v586 = vld [vmem:[#allocation4 + $0xd28] sm:$0xff]
    %v587 = vld [vmem:[#allocation4 + $0xd30] sm:$0xff]
    %v588 = vld [vmem:[#allocation4 + $0xd38] sm:$0xff]
    %v589 = vld [vmem:[#allocation4 + $0xd40] sm:$0xff]
    %v590 = vld [vmem:[#allocation4 + $0xd48] sm:$0xff]
    %v591 = vld [vmem:[#allocation4 + $0xd50] sm:$0xff]
    %v592 = vld [vmem:[#allocation4 + $0xd58] sm:$0xff]
    %v593 = vld [vmem:[#allocation4 + $0xd60] sm:$0xff]
    %v594 = vld [vmem:[#allocation4 + $0xd68] sm:$0xff]
    %v595 = vld [vmem:[#allocation4 + $0xd70] sm:$0xff]
    %v596 = vld [vmem:[#allocation4 + $0xd78] sm:$0xff]
    %v597 = vld [vmem:[#allocation4 + $0xd80] sm:$0xff]
    %v598 = vld [vmem:[#allocation4 + $0xd88] sm:$0xff]
    %v599 = vld [vmem:[#allocation4 + $0xd90] sm:$0xff]
    %v600 = vld [vmem:[#allocation4 + $0xd98] sm:$0xff]
    %v601 = vld [vmem:[#allocation4 + $0xda0] sm:$0xff]
    %v602 = vld [vmem:[#allocation4 + $0xda8] sm:$0xff]
    %v603 = vld [vmem:[#allocation4 + $0xdb0] sm:$0xff]
    %v604 = vld [vmem:[#allocation4 + $0xdb8] sm:$0xff]
    %v605 = vld [vmem:[#allocation4 + $0xdc0] sm:$0xff]
    %v606 = vld [vmem:[#allocation4 + $0xdc8] sm:$0xff]
    %v607 = vld [vmem:[#allocation4 + $0xdd0] sm:$0xff]
    %v608 = vld [vmem:[#allocation4 + $0xdd8] sm:$0xff]
    %v609 = vld [vmem:[#allocation4 + $0xde0] sm:$0xff]
    %v610 = vld [vmem:[#allocation4 + $0xde8] sm:$0xff]
    %v611 = vld [vmem:[#allocation4 + $0xdf0] sm:$0xff]
    %v612 = vld [vmem:[#allocation4 + $0xdf8] sm:$0xff]
    %v613 = vld [vmem:[#allocation4 + $0xe00] sm:$0xff]
    %v614 = vld [vmem:[#allocation4 + $0xe08] sm:$0xff]
    %v615 = vld [vmem:[#allocation4 + $0xe10] sm:$0xff]
    %v616 = vld [vmem:[#allocation4 + $0xe18] sm:$0xff]
    %v617 = vld [vmem:[#allocation4 + $0xe20] sm:$0xff]
    %v618 = vld [vmem:[#allocation4 + $0xe28] sm:$0xff]
    %v619 = vld [vmem:[#allocation4 + $0xe30] sm:$0xff]
    %v620 = vld [vmem:[#allocation4 + $0xe38] sm:$0xff]
    %v621 = vld [vmem:[#allocation4 + $0xe40] sm:$0xff]
    %v622 = vld [vmem:[#allocation4 + $0xe48] sm:$0xff]
    %v623 = vld [vmem:[#allocation4 + $0xe50] sm:$0xff]
    %v624 = vld [vmem:[#allocation4 + $0xe58] sm:$0xff]
    %v625 = vld [vmem:[#allocation4 + $0xe60] sm:$0xff]
    %v626 = vld [vmem:[#allocation4 + $0xe68] sm:$0xff]
    %v627 = vld [vmem:[#allocation4 + $0xe70] sm:$0xff]
    %v628 = vld [vmem:[#allocation4 + $0xe78] sm:$0xff]
    %v629 = vld [vmem:[#allocation4 + $0xe80] sm:$0xff]
    %v630 = vld [vmem:[#allocation4 + $0xe88] sm:$0xff]
    %v631 = vld [vmem:[#allocation4 + $0xe90] sm:$0xff]
    %v632 = vld [vmem:[#allocation4 + $0xe98] sm:$0xff]
    %v633 = vld [vmem:[#allocation4 + $0xea0] sm:$0xff]
    %v634 = vld [vmem:[#allocation4 + $0xea8] sm:$0xff]
    %v635 = vld [vmem:[#allocation4 + $0xeb0] sm:$0xff]
    %v636 = vld [vmem:[#allocation4 + $0xeb8] sm:$0xff]
    %v637 = vld [vmem:[#allocation4 + $0xec0] sm:$0xff]
    %v638 = vld [vmem:[#allocation4 + $0xec8] sm:$0xff]
    %v639 = vld [vmem:[#allocation4 + $0xed0] sm:$0xff]
    %v640 = vld [vmem:[#allocation4 + $0xed8] sm:$0xff]
    %v641 = vld [vmem:[#allocation4 + $0xee0] sm:$0xff]
    %v642 = vld [vmem:[#allocation4 + $0xee8] sm:$0xff]
    %v643 = vld [vmem:[#allocation4 + $0xef0] sm:$0xff]
    %v644 = vld [vmem:[#allocation4 + $0xef8] sm:$0xff]
    %v645 = vld [vmem:[#allocation4 + $0xf00] sm:$0xff]
    %v646 = vld [vmem:[#allocation4 + $0xf08] sm:$0xff]
    %v647 = vld [vmem:[#allocation4 + $0xf10] sm:$0xff]
    %v648 = vld [vmem:[#allocation4 + $0xf18] sm:$0xff]
    %v649 = vld [vmem:[#allocation4 + $0xf20] sm:$0xff]
    %v650 = vld [vmem:[#allocation4 + $0xf28] sm:$0xff]
    %v651 = vld [vmem:[#allocation4 + $0xf30] sm:$0xff]
    %v652 = vld [vmem:[#allocation4 + $0xf38] sm:$0xff]
    %v653 = vld [vmem:[#allocation4 + $0xf40] sm:$0xff]
    %v654 = vld [vmem:[#allocation4 + $0xf48] sm:$0xff]
    %v655 = vld [vmem:[#allocation4 + $0xf50] sm:$0xff]
    %v656 = vld [vmem:[#allocation4 + $0xf58] sm:$0xff]
    %v657 = vld [vmem:[#allocation4 + $0xf60] sm:$0xff]
    %v658 = vld [vmem:[#allocation4 + $0xf68] sm:$0xff]
    %v659 = vld [vmem:[#allocation4 + $0xf70] sm:$0xff]
    %v660 = vld [vmem:[#allocation4 + $0xf78] sm:$0xff]
    %v661 = vld [vmem:[#allocation4 + $0xf80] sm:$0xff]
    %v662 = vld [vmem:[#allocation4 + $0xf88] sm:$0xff]
    %v663 = vld [vmem:[#allocation4 + $0xf90] sm:$0xff]
    %v664 = vld [vmem:[#allocation4 + $0xf98] sm:$0xff]
    %v665 = vld [vmem:[#allocation4 + $0xfa0] sm:$0xff]
    %v666 = vld [vmem:[#allocation4 + $0xfa8] sm:$0xff]
    %v667 = vld [vmem:[#allocation4 + $0xfb0] sm:$0xff]
    %v668 = vld [vmem:[#allocation4 + $0xfb8] sm:$0xff]
    %v669 = vld [vmem:[#allocation4 + $0xfc0] sm:$0xff]
    %v670 = vld [vmem:[#allocation4 + $0xfc8] sm:$0xff]
    %v671 = vld [vmem:[#allocation4 + $0xfd0] sm:$0xff]
    %v672 = vld [vmem:[#allocation4 + $0xfd8] sm:$0xff]
    %v673 = vld [vmem:[#allocation4 + $0xfe0] sm:$0xff]
    %v674 = vld [vmem:[#allocation4 + $0xfe8] sm:$0xff]
    %v675 = vld [vmem:[#allocation4 + $0xff0] sm:$0xff]
    %v676 = vld [vmem:[#allocation4 + $0xff8] sm:$0xff]
    %v677 = vld [vmem:[#allocation7] sm:$0x3]
    %v678 = vld [vmem:[%s0] sm:$0xff]
    %v679 = vld [vmem:[%s0 + $0x8] sm:$0xff]
    %v680 = vld [vmem:[%s0 + $0x10] sm:$0xff]
    %v681 = vld [vmem:[%s0 + $0x18] sm:$0xff]
    %v683 = vlaneseq
    %v684 = vshrl.u32 %v683, 7
    %v685 = vsub.s32 0, %v684
    %v686 = vrot.slane %v677, %v685
    %v687 = vlaneseq
    %v688 = vshrl.u32 %v687, 7
    %v689 = vsub.s32 1, %v688
    %v690 = vrot.slane %v677, %v689
    %v697 = vcombine.high %v678, %v678
    %v699 = vunpack.c.l.s4 1983009808
    %v700 = vunpack.c.0.s8 %v699
    %v701 = vlaneseq
    %v702 = vshrl.u32 %v701, 7
    %v703 = vsub.s32 %v700, %v702
    %v704 = vrot.slane %v678, %v703
    %v706 = vunpack.c.l.s4 1983009808
    %v707 = vunpack.c.0.s8 %v706
    %v708 = vlaneseq
    %v709 = vshrl.u32 %v708, 7
    %v710 = vsub.s32 %v707, %v709
    %v711 = vrot.slane %v697, %v710
    %v712 = vcombine.high %v704, %v704
    %v713 = vcombine.high %v711, %v711
    %v714 = vcombine.high %v679, %v679
    %v716 = vunpack.c.l.s4 1983009808
    %v717 = vunpack.c.0.s8 %v716
    %v718 = vlaneseq
    %v719 = vshrl.u32 %v718, 7
    %v720 = vsub.s32 %v717, %v719
    %v721 = vrot.slane %v679, %v720
    %v723 = vunpack.c.l.s4 1983009808
    %v724 = vunpack.c.0.s8 %v723
    %v725 = vlaneseq
    %v726 = vshrl.u32 %v725, 7
    %v727 = vsub.s32 %v724, %v726
    %v728 = vrot.slane %v714, %v727
    %v729 = vcombine.high %v721, %v721
    %v730 = vcombine.high %v728, %v728
    %v731 = vcombine.high %v680, %v680
    %v733 = vunpack.c.l.s4 1983009808
    %v734 = vunpack.c.0.s8 %v733
    %v735 = vlaneseq
    %v736 = vshrl.u32 %v735, 7
    %v737 = vsub.s32 %v734, %v736
    %v738 = vrot.slane %v680, %v737
    %v740 = vunpack.c.l.s4 1983009808
    %v741 = vunpack.c.0.s8 %v740
    %v742 = vlaneseq
    %v743 = vshrl.u32 %v742, 7
    %v744 = vsub.s32 %v741, %v743
    %v745 = vrot.slane %v731, %v744
    %v746 = vcombine.high %v738, %v738
    %v747 = vcombine.high %v745, %v745
    %v748 = vcombine.high %v681, %v681
    %v750 = vunpack.c.l.s4 1983009808
    %v751 = vunpack.c.0.s8 %v750
    %v752 = vlaneseq
    %v753 = vshrl.u32 %v752, 7
    %v754 = vsub.s32 %v751, %v753
    %v755 = vrot.slane %v681, %v754
    %v757 = vunpack.c.l.s4 1983009808
    %v758 = vunpack.c.0.s8 %v757
    %v759 = vlaneseq
    %v760 = vshrl.u32 %v759, 7
    %v761 = vsub.s32 %v758, %v760
    %v762 = vrot.slane %v748, %v761
    %v763 = vcombine.high %v755, %v755
    %v764 = vcombine.high %v762, %v762
    %781 = vmatprep.subr.mxu0 %v166
    %782 = vmatpush1.msra.mxu0 %v165
    %783 = vmatprep.subr.mxu0 %v168
    %784 = vmatpush1.msra.mxu0 %v167
    %785 = vmatprep.subr.mxu0 %v170
    %786 = vmatpush1.msra.mxu0 %v169
    %787 = vmatprep.subr.mxu0 %v172
    %788 = vmatpush1.msra.mxu0 %v171
    %789 = vmatprep.subr.mxu0 %v174
    %790 = vmatpush1.msra.mxu0 %v173
    %791 = vmatprep.subr.mxu0 %v176
    %792 = vmatpush1.msra.mxu0 %v175
    %793 = vmatprep.subr.mxu0 %v178
    %794 = vmatpush1.msra.mxu0 %v177
    %795 = vmatprep.subr.mxu0 %v180
    %796 = vmatpush1.msra.mxu0 %v179
    %797 = vmatprep.subr.mxu0 %v182
    %798 = vmatpush1.msra.mxu0 %v181
    %799 = vmatprep.subr.mxu0 %v184
    %800 = vmatpush1.msra.mxu0 %v183
    %801 = vmatprep.subr.mxu0 %v186
    %802 = vmatpush1.msra.mxu0 %v185
    %803 = vmatprep.subr.mxu0 %v188
    %804 = vmatpush1.msra.mxu0 %v187
    %805 = vmatprep.subr.mxu0 %v190
    %806 = vmatpush1.msra.mxu0 %v189
    %807 = vmatprep.subr.mxu0 %v192
    %808 = vmatpush1.msra.mxu0 %v191
    %809 = vmatprep.subr.mxu0 %v194
    %810 = vmatpush1.msra.mxu0 %v193
    %811 = vmatprep.subr.mxu0 %v196
    %812 = vmatpush1.msra.mxu0 %v195
    %813 = vmatprep.subr.mxu0 %v198
    %814 = vmatpush1.msra.mxu0 %v197
    %815 = vmatprep.subr.mxu0 %v200
    %816 = vmatpush1.msra.mxu0 %v199
    %817 = vmatprep.subr.mxu0 %v202
    %818 = vmatpush1.msra.mxu0 %v201
    %819 = vmatprep.subr.mxu0 %v204
    %820 = vmatpush1.msra.mxu0 %v203
    %821 = vmatprep.subr.mxu0 %v206
    %822 = vmatpush1.msra.mxu0 %v205
    %823 = vmatprep.subr.mxu0 %v208
    %824 = vmatpush1.msra.mxu0 %v207
    %825 = vmatprep.subr.mxu0 %v210
    %826 = vmatpush1.msra.mxu0 %v209
    %827 = vmatprep.subr.mxu0 %v212
    %828 = vmatpush1.msra.mxu0 %v211
    %829 = vmatprep.subr.mxu0 %v214
    %830 = vmatpush1.msra.mxu0 %v213
    %831 = vmatprep.subr.mxu0 %v216
    %832 = vmatpush1.msra.mxu0 %v215
    %833 = vmatprep.subr.mxu0 %v218
    %834 = vmatpush1.msra.mxu0 %v217
    %835 = vmatprep.subr.mxu0 %v220
    %836 = vmatpush1.msra.mxu0 %v219
    %837 = vmatprep.subr.mxu0 %v222
    %838 = vmatpush1.msra.mxu0 %v221
    %839 = vmatprep.subr.mxu0 %v224
    %840 = vmatpush1.msra.mxu0 %v223
    %841 = vmatprep.subr.mxu0 %v226
    %842 = vmatpush1.msra.mxu0 %v225
    %843 = vmatprep.subr.mxu0 %v228
    %844 = vmatpush1.msra.mxu0 %v227
    %845 = vmatprep.mubr.f32.mxu0 %v712
    %846 = vmatmul.mubr.f32.gmra.mrb[0].mxu0 %v704
    %v847 = vpop.f32.mrb[0].mxu0
    %v848 = vadd.f32 %v686, %v847
    %v849 = vpop.f32.mrb[0].mxu0
    %v850 = vadd.f32 %v690, %v849
    %851 = vdwg.mxu0
    %852 = vmatprep.subr.mxu0 %v230
    %853 = vmatpush1.msra.mxu0 %v229
    %854 = vmatprep.subr.mxu0 %v232
    %855 = vmatpush1.msra.mxu0 %v231
    %856 = vmatprep.subr.mxu0 %v234
    %857 = vmatpush1.msra.mxu0 %v233
    %858 = vmatprep.subr.mxu0 %v236
    %859 = vmatpush1.msra.mxu0 %v235
    %860 = vmatprep.subr.mxu0 %v238
    %861 = vmatpush1.msra.mxu0 %v237
    %862 = vmatprep.subr.mxu0 %v240
    %863 = vmatpush1.msra.mxu0 %v239
    %864 = vmatprep.subr.mxu0 %v242
    %865 = vmatpush1.msra.mxu0 %v241
    %866 = vmatprep.subr.mxu0 %v244
    %867 = vmatpush1.msra.mxu0 %v243
    %868 = vmatprep.subr.mxu0 %v246
    %869 = vmatpush1.msra.mxu0 %v245
    %870 = vmatprep.subr.mxu0 %v248
    %871 = vmatpush1.msra.mxu0 %v247
    %872 = vmatprep.subr.mxu0 %v250
    %873 = vmatpush1.msra.mxu0 %v249
    %874 = vmatprep.subr.mxu0 %v252
    %875 = vmatpush1.msra.mxu0 %v251
    %876 = vmatprep.subr.mxu0 %v254
    %877 = vmatpush1.msra.mxu0 %v253
    %878 = vmatprep.subr.mxu0 %v256
    %879 = vmatpush1.msra.mxu0 %v255
    %880 = vmatprep.subr.mxu0 %v258
    %881 = vmatpush1.msra.mxu0 %v257
    %882 = vmatprep.subr.mxu0 %v260
    %883 = vmatpush1.msra.mxu0 %v259
    %884 = vmatprep.subr.mxu0 %v262
    %885 = vmatpush1.msra.mxu0 %v261
    %886 = vmatprep.subr.mxu0 %v264
    %887 = vmatpush1.msra.mxu0 %v263
    %888 = vmatprep.subr.mxu0 %v266
    %889 = vmatpush1.msra.mxu0 %v265
    %890 = vmatprep.subr.mxu0 %v268
    %891 = vmatpush1.msra.mxu0 %v267
    %892 = vmatprep.subr.mxu0 %v270
    %893 = vmatpush1.msra.mxu0 %v269
    %894 = vmatprep.subr.mxu0 %v272
    %895 = vmatpush1.msra.mxu0 %v271
    %896 = vmatprep.subr.mxu0 %v274
    %897 = vmatpush1.msra.mxu0 %v273
    %898 = vmatprep.subr.mxu0 %v276
    %899 = vmatpush1.msra.mxu0 %v275
    %900 = vmatprep.subr.mxu0 %v278
    %901 = vmatpush1.msra.mxu0 %v277
    %902 = vmatprep.subr.mxu0 %v280
    %903 = vmatpush1.msra.mxu0 %v279
    %904 = vmatprep.subr.mxu0 %v282
    %905 = vmatpush1.msra.mxu0 %v281
    %906 = vmatprep.subr.mxu0 %v284
    %907 = vmatpush1.msra.mxu0 %v283
    %908 = vmatprep.subr.mxu0 %v286
    %909 = vmatpush1.msra.mxu0 %v285
    %910 = vmatprep.subr.mxu0 %v288
    %911 = vmatpush1.msra.mxu0 %v287
    %912 = vmatprep.subr.mxu0 %v290
    %913 = vmatpush1.msra.mxu0 %v289
    %914 = vmatprep.subr.mxu0 %v292
    %915 = vmatpush1.msra.mxu0 %v291
    %916 = vmatprep.mubr.f32.mxu0 %v713
    %917 = vmatmul.mubr.f32.gmra.mrb[0].mxu0 %v711
    %v918 = vpop.f32.mrb[0].mxu0
    %v919 = vadd.f32 %v848, %v918
    %v920 = vpop.f32.mrb[0].mxu0
    %v921 = vadd.f32 %v850, %v920
    %922 = vdwg.mxu0
    %923 = vmatprep.subr.mxu0 %v294
    %924 = vmatpush1.msra.mxu0 %v293
    %925 = vmatprep.subr.mxu0 %v296
    %926 = vmatpush1.msra.mxu0 %v295
    %927 = vmatprep.subr.mxu0 %v298
    %928 = vmatpush1.msra.mxu0 %v297
    %929 = vmatprep.subr.mxu0 %v300
    %930 = vmatpush1.msra.mxu0 %v299
    %931 = vmatprep.subr.mxu0 %v302
    %932 = vmatpush1.msra.mxu0 %v301
    %933 = vmatprep.subr.mxu0 %v304
    %934 = vmatpush1.msra.mxu0 %v303
    %935 = vmatprep.subr.mxu0 %v306
    %936 = vmatpush1.msra.mxu0 %v305
    %937 = vmatprep.subr.mxu0 %v308
    %938 = vmatpush1.msra.mxu0 %v307
    %939 = vmatprep.subr.mxu0 %v310
    %940 = vmatpush1.msra.mxu0 %v309
    %941 = vmatprep.subr.mxu0 %v312
    %942 = vmatpush1.msra.mxu0 %v311
    %943 = vmatprep.subr.mxu0 %v314
    %944 = vmatpush1.msra.mxu0 %v313
    %945 = vmatprep.subr.mxu0 %v316
    %946 = vmatpush1.msra.mxu0 %v315
    %947 = vmatprep.subr.mxu0 %v318
    %948 = vmatpush1.msra.mxu0 %v317
    %949 = vmatprep.subr.mxu0 %v320
    %950 = vmatpush1.msra.mxu0 %v319
    %951 = vmatprep.subr.mxu0 %v322
    %952 = vmatpush1.msra.mxu0 %v321
    %953 = vmatprep.subr.mxu0 %v324
    %954 = vmatpush1.msra.mxu0 %v323
    %955 = vmatprep.subr.mxu0 %v326
    %956 = vmatpush1.msra.mxu0 %v325
    %957 = vmatprep.subr.mxu0 %v328
    %958 = vmatpush1.msra.mxu0 %v327
    %959 = vmatprep.subr.mxu0 %v330
    %960 = vmatpush1.msra.mxu0 %v329
    %961 = vmatprep.subr.mxu0 %v332
    %962 = vmatpush1.msra.mxu0 %v331
    %963 = vmatprep.subr.mxu0 %v334
    %964 = vmatpush1.msra.mxu0 %v333
    %965 = vmatprep.subr.mxu0 %v336
    %966 = vmatpush1.msra.mxu0 %v335
    %967 = vmatprep.subr.mxu0 %v338
    %968 = vmatpush1.msra.mxu0 %v337
    %969 = vmatprep.subr.mxu0 %v340
    %970 = vmatpush1.msra.mxu0 %v339
    %971 = vmatprep.subr.mxu0 %v342
    %972 = vmatpush1.msra.mxu0 %v341
    %973 = vmatprep.subr.mxu0 %v344
    %974 = vmatpush1.msra.mxu0 %v343
    %975 = vmatprep.subr.mxu0 %v346
    %976 = vmatpush1.msra.mxu0 %v345
    %977 = vmatprep.subr.mxu0 %v348
    %978 = vmatpush1.msra.mxu0 %v347
    %979 = vmatprep.subr.mxu0 %v350
    %980 = vmatpush1.msra.mxu0 %v349
    %981 = vmatprep.subr.mxu0 %v352
    %982 = vmatpush1.msra.mxu0 %v351
    %983 = vmatprep.subr.mxu0 %v354
    %984 = vmatpush1.msra.mxu0 %v353
    %985 = vmatprep.subr.mxu0 %v356
    %986 = vmatpush1.msra.mxu0 %v355
    %987 = vmatprep.mubr.f32.mxu0 %v729
    %988 = vmatmul.mubr.f32.gmra.mrb[0].mxu0 %v721
    %v989 = vpop.f32.mrb[0].mxu0
    %v990 = vadd.f32 %v919, %v989
    %v991 = vpop.f32.mrb[0].mxu0
    %v992 = vadd.f32 %v921, %v991
    %993 = vdwg.mxu0
    %994 = vmatprep.subr.mxu0 %v358
    %995 = vmatpush1.msra.mxu0 %v357
    %996 = vmatprep.subr.mxu0 %v360
    %997 = vmatpush1.msra.mxu0 %v359
    %998 = vmatprep.subr.mxu0 %v362
    %999 = vmatpush1.msra.mxu0 %v361
    %1000 = vmatprep.subr.mxu0 %v364
    %1001 = vmatpush1.msra.mxu0 %v363
    %1002 = vmatprep.subr.mxu0 %v366
    %1003 = vmatpush1.msra.mxu0 %v365
    %1004 = vmatprep.subr.mxu0 %v368
    %1005 = vmatpush1.msra.mxu0 %v367
    %1006 = vmatprep.subr.mxu0 %v370
    %1007 = vmatpush1.msra.mxu0 %v369
    %1008 = vmatprep.subr.mxu0 %v372
    %1009 = vmatpush1.msra.mxu0 %v371
    %1010 = vmatprep.subr.mxu0 %v374
    %1011 = vmatpush1.msra.mxu0 %v373
    %1012 = vmatprep.subr.mxu0 %v376
    %1013 = vmatpush1.msra.mxu0 %v375
    %1014 = vmatprep.subr.mxu0 %v378
    %1015 = vmatpush1.msra.mxu0 %v377
    %1016 = vmatprep.subr.mxu0 %v380
    %1017 = vmatpush1.msra.mxu0 %v379
    %1018 = vmatprep.subr.mxu0 %v382
    %1019 = vmatpush1.msra.mxu0 %v381
    %1020 = vmatprep.subr.mxu0 %v384
    %1021 = vmatpush1.msra.mxu0 %v383
    %1022 = vmatprep.subr.mxu0 %v386
    %1023 = vmatpush1.msra.mxu0 %v385
    %1024 = vmatprep.subr.mxu0 %v388
    %1025 = vmatpush1.msra.mxu0 %v387
    %1026 = vmatprep.subr.mxu0 %v390
    %1027 = vmatpush1.msra.mxu0 %v389
    %1028 = vmatprep.subr.mxu0 %v392
    %1029 = vmatpush1.msra.mxu0 %v391
    %1030 = vmatprep.subr.mxu0 %v394
    %1031 = vmatpush1.msra.mxu0 %v393
    %1032 = vmatprep.subr.mxu0 %v396
    %1033 = vmatpush1.msra.mxu0 %v395
    %1034 = vmatprep.subr.mxu0 %v398
    %1035 = vmatpush1.msra.mxu0 %v397
    %1036 = vmatprep.subr.mxu0 %v400
    %1037 = vmatpush1.msra.mxu0 %v399
    %1038 = vmatprep.subr.mxu0 %v402
    %1039 = vmatpush1.msra.mxu0 %v401
    %1040 = vmatprep.subr.mxu0 %v404
    %1041 = vmatpush1.msra.mxu0 %v403
    %1042 = vmatprep.subr.mxu0 %v406
    %1043 = vmatpush1.msra.mxu0 %v405
    %1044 = vmatprep.subr.mxu0 %v408
    %1045 = vmatpush1.msra.mxu0 %v407
    %1046 = vmatprep.subr.mxu0 %v410
    %1047 = vmatpush1.msra.mxu0 %v409
    %1048 = vmatprep.subr.mxu0 %v412
    %1049 = vmatpush1.msra.mxu0 %v411
    %1050 = vmatprep.subr.mxu0 %v414
    %1051 = vmatpush1.msra.mxu0 %v413
    %1052 = vmatprep.subr.mxu0 %v416
    %1053 = vmatpush1.msra.mxu0 %v415
    %1054 = vmatprep.subr.mxu0 %v418
    %1055 = vmatpush1.msra.mxu0 %v417
    %1056 = vmatprep.subr.mxu0 %v420
    %1057 = vmatpush1.msra.mxu0 %v419
    %1058 = vmatprep.mubr.f32.mxu0 %v730
    %1059 = vmatmul.mubr.f32.gmra.mrb[0].mxu0 %v728
    %v1060 = vpop.f32.mrb[0].mxu0
    %v1061 = vadd.f32 %v990, %v1060
    %v1062 = vpop.f32.mrb[0].mxu0
    %v1063 = vadd.f32 %v992, %v1062
    %1064 = vdwg.mxu0
    %1065 = vmatprep.subr.mxu0 %v422
    %1066 = vmatpush1.msra.mxu0 %v421
    %1067 = vmatprep.subr.mxu0 %v424
    %1068 = vmatpush1.msra.mxu0 %v423
    %1069 = vmatprep.subr.mxu0 %v426
    %1070 = vmatpush1.msra.mxu0 %v425
    %1071 = vmatprep.subr.mxu0 %v428
    %1072 = vmatpush1.msra.mxu0 %v427
    %1073 = vmatprep.subr.mxu0 %v430
    %1074 = vmatpush1.msra.mxu0 %v429
    %1075 = vmatprep.subr.mxu0 %v432
    %1076 = vmatpush1.msra.mxu0 %v431
    %1077 = vmatprep.subr.mxu0 %v434
    %1078 = vmatpush1.msra.mxu0 %v433
    %1079 = vmatprep.subr.mxu0 %v436
    %1080 = vmatpush1.msra.mxu0 %v435
    %1081 = vmatprep.subr.mxu0 %v438
    %1082 = vmatpush1.msra.mxu0 %v437
    %1083 = vmatprep.subr.mxu0 %v440
    %1084 = vmatpush1.msra.mxu0 %v439
    %1085 = vmatprep.subr.mxu0 %v442
    %1086 = vmatpush1.msra.mxu0 %v441
    %1087 = vmatprep.subr.mxu0 %v444
    %1088 = vmatpush1.msra.mxu0 %v443
    %1089 = vmatprep.subr.mxu0 %v446
    %1090 = vmatpush1.msra.mxu0 %v445
    %1091 = vmatprep.subr.mxu0 %v448
    %1092 = vmatpush1.msra.mxu0 %v447
    %1093 = vmatprep.subr.mxu0 %v450
    %1094 = vmatpush1.msra.mxu0 %v449
    %1095 = vmatprep.subr.mxu0 %v452
    %1096 = vmatpush1.msra.mxu0 %v451
    %1097 = vmatprep.subr.mxu0 %v454
    %1098 = vmatpush1.msra.mxu0 %v453
    %1099 = vmatprep.subr.mxu0 %v456
    %1100 = vmatpush1.msra.mxu0 %v455
    %1101 = vmatprep.subr.mxu0 %v458
    %1102 = vmatpush1.msra.mxu0 %v457
    %1103 = vmatprep.subr.mxu0 %v460
    %1104 = vmatpush1.msra.mxu0 %v459
    %1105 = vmatprep.subr.mxu0 %v462
    %1106 = vmatpush1.msra.mxu0 %v461
    %1107 = vmatprep.subr.mxu0 %v464
    %1108 = vmatpush1.msra.mxu0 %v463
    %1109 = vmatprep.subr.mxu0 %v466
    %1110 = vmatpush1.msra.mxu0 %v465
    %1111 = vmatprep.subr.mxu0 %v468
    %1112 = vmatpush1.msra.mxu0 %v467
    %1113 = vmatprep.subr.mxu0 %v470
    %1114 = vmatpush1.msra.mxu0 %v469
    %1115 = vmatprep.subr.mxu0 %v472
    %1116 = vmatpush1.msra.mxu0 %v471
    %1117 = vmatprep.subr.mxu0 %v474
    %1118 = vmatpush1.msra.mxu0 %v473
    %1119 = vmatprep.subr.mxu0 %v476
    %1120 = vmatpush1.msra.mxu0 %v475
    %1121 = vmatprep.subr.mxu0 %v478
    %1122 = vmatpush1.msra.mxu0 %v477
    %1123 = vmatprep.subr.mxu0 %v480
    %1124 = vmatpush1.msra.mxu0 %v479
    %1125 = vmatprep.subr.mxu0 %v482
    %1126 = vmatpush1.msra.mxu0 %v481
    %1127 = vmatprep.subr.mxu0 %v484
    %1128 = vmatpush1.msra.mxu0 %v483
    %1129 = vmatprep.mubr.f32.mxu0 %v746
    %1130 = vmatmul.mubr.f32.gmra.mrb[0].mxu0 %v738
    %v1131 = vpop.f32.mrb[0].mxu0
    %v1132 = vadd.f32 %v1061, %v1131
    %v1133 = vpop.f32.mrb[0].mxu0
    %v1134 = vadd.f32 %v1063, %v1133
    %1135 = vdwg.mxu0
    %1136 = vmatprep.subr.mxu0 %v486
    %1137 = vmatpush1.msra.mxu0 %v485
    %1138 = vmatprep.subr.mxu0 %v488
    %1139 = vmatpush1.msra.mxu0 %v487
    %1140 = vmatprep.subr.mxu0 %v490
    %1141 = vmatpush1.msra.mxu0 %v489
    %1142 = vmatprep.subr.mxu0 %v492
    %1143 = vmatpush1.msra.mxu0 %v491
    %1144 = vmatprep.subr.mxu0 %v494
    %1145 = vmatpush1.msra.mxu0 %v493
    %1146 = vmatprep.subr.mxu0 %v496
    %1147 = vmatpush1.msra.mxu0 %v495
    %1148 = vmatprep.subr.mxu0 %v498
    %1149 = vmatpush1.msra.mxu0 %v497
    %1150 = vmatprep.subr.mxu0 %v500
    %1151 = vmatpush1.msra.mxu0 %v499
    %1152 = vmatprep.subr.mxu0 %v502
    %1153 = vmatpush1.msra.mxu0 %v501
    %1154 = vmatprep.subr.mxu0 %v504
    %1155 = vmatpush1.msra.mxu0 %v503
    %1156 = vmatprep.subr.mxu0 %v506
    %1157 = vmatpush1.msra.mxu0 %v505
    %1158 = vmatprep.subr.mxu0 %v508
    %1159 = vmatpush1.msra.mxu0 %v507
    %1160 = vmatprep.subr.mxu0 %v510
    %1161 = vmatpush1.msra.mxu0 %v509
    %1162 = vmatprep.subr.mxu0 %v512
    %1163 = vmatpush1.msra.mxu0 %v511
    %1164 = vmatprep.subr.mxu0 %v514
    %1165 = vmatpush1.msra.mxu0 %v513
    %1166 = vmatprep.subr.mxu0 %v516
    %1167 = vmatpush1.msra.mxu0 %v515
    %1168 = vmatprep.subr.mxu0 %v518
    %1169 = vmatpush1.msra.mxu0 %v517
    %1170 = vmatprep.subr.mxu0 %v520
    %1171 = vmatpush1.msra.mxu0 %v519
    %1172 = vmatprep.subr.mxu0 %v522
    %1173 = vmatpush1.msra.mxu0 %v521
    %1174 = vmatprep.subr.mxu0 %v524
    %1175 = vmatpush1.msra.mxu0 %v523
    %1176 = vmatprep.subr.mxu0 %v526
    %1177 = vmatpush1.msra.mxu0 %v525
    %1178 = vmatprep.subr.mxu0 %v528
    %1179 = vmatpush1.msra.mxu0 %v527
    %1180 = vmatprep.subr.mxu0 %v530
    %1181 = vmatpush1.msra.mxu0 %v529
    %1182 = vmatprep.subr.mxu0 %v532
    %1183 = vmatpush1.msra.mxu0 %v531
    %1184 = vmatprep.subr.mxu0 %v534
    %1185 = vmatpush1.msra.mxu0 %v533
    %1186 = vmatprep.subr.mxu0 %v536
    %1187 = vmatpush1.msra.mxu0 %v535
    %1188 = vmatprep.subr.mxu0 %v538
    %1189 = vmatpush1.msra.mxu0 %v537
    %1190 = vmatprep.subr.mxu0 %v540
    %1191 = vmatpush1.msra.mxu0 %v539
    %1192 = vmatprep.subr.mxu0 %v542
    %1193 = vmatpush1.msra.mxu0 %v541
    %1194 = vmatprep.subr.mxu0 %v544
    %1195 = vmatpush1.msra.mxu0 %v543
    %1196 = vmatprep.subr.mxu0 %v546
    %1197 = vmatpush1.msra.mxu0 %v545
    %1198 = vmatprep.subr.mxu0 %v548
    %1199 = vmatpush1.msra.mxu0 %v547
    %1200 = vmatprep.mubr.f32.mxu0 %v747
    %1201 = vmatmul.mubr.f32.gmra.mrb[0].mxu0 %v745
    %v1202 = vpop.f32.mrb[0].mxu0
    %v1203 = vadd.f32 %v1132, %v1202
    %v1204 = vpop.f32.mrb[0].mxu0
    %v1205 = vadd.f32 %v1134, %v1204
    %1206 = vdwg.mxu0
    %1207 = vmatprep.subr.mxu0 %v550
    %1208 = vmatpush1.msra.mxu0 %v549
    %1209 = vmatprep.subr.mxu0 %v552
    %1210 = vmatpush1.msra.mxu0 %v551
    %1211 = vmatprep.subr.mxu0 %v554
    %1212 = vmatpush1.msra.mxu0 %v553
    %1213 = vmatprep.subr.mxu0 %v556
    %1214 = vmatpush1.msra.mxu0 %v555
    %1215 = vmatprep.subr.mxu0 %v558
    %1216 = vmatpush1.msra.mxu0 %v557
    %1217 = vmatprep.subr.mxu0 %v560
    %1218 = vmatpush1.msra.mxu0 %v559
    %1219 = vmatprep.subr.mxu0 %v562
    %1220 = vmatpush1.msra.mxu0 %v561
    %1221 = vmatprep.subr.mxu0 %v564
    %1222 = vmatpush1.msra.mxu0 %v563
    %1223 = vmatprep.subr.mxu0 %v566
    %1224 = vmatpush1.msra.mxu0 %v565
    %1225 = vmatprep.subr.mxu0 %v568
    %1226 = vmatpush1.msra.mxu0 %v567
    %1227 = vmatprep.subr.mxu0 %v570
    %1228 = vmatpush1.msra.mxu0 %v569
    %1229 = vmatprep.subr.mxu0 %v572
    %1230 = vmatpush1.msra.mxu0 %v571
    %1231 = vmatprep.subr.mxu0 %v574
    %1232 = vmatpush1.msra.mxu0 %v573
    %1233 = vmatprep.subr.mxu0 %v576
    %1234 = vmatpush1.msra.mxu0 %v575
    %1235 = vmatprep.subr.mxu0 %v578
    %1236 = vmatpush1.msra.mxu0 %v577
    %1237 = vmatprep.subr.mxu0 %v580
    %1238 = vmatpush1.msra.mxu0 %v579
    %1239 = vmatprep.subr.mxu0 %v582
    %1240 = vmatpush1.msra.mxu0 %v581
    %1241 = vmatprep.subr.mxu0 %v584
    %1242 = vmatpush1.msra.mxu0 %v583
    %1243 = vmatprep.subr.mxu0 %v586
    %1244 = vmatpush1.msra.mxu0 %v585
    %1245 = vmatprep.subr.mxu0 %v588
    %1246 = vmatpush1.msra.mxu0 %v587
    %1247 = vmatprep.subr.mxu0 %v590
    %1248 = vmatpush1.msra.mxu0 %v589
    %1249 = vmatprep.subr.mxu0 %v592
    %1250 = vmatpush1.msra.mxu0 %v591
    %1251 = vmatprep.subr.mxu0 %v594
    %1252 = vmatpush1.msra.mxu0 %v593
    %1253 = vmatprep.subr.mxu0 %v596
    %1254 = vmatpush1.msra.mxu0 %v595
    %1255 = vmatprep.subr.mxu0 %v598
    %1256 = vmatpush1.msra.mxu0 %v597
    %1257 = vmatprep.subr.mxu0 %v600
    %1258 = vmatpush1.msra.mxu0 %v599
    %1259 = vmatprep.subr.mxu0 %v602
    %1260 = vmatpush1.msra.mxu0 %v601
    %1261 = vmatprep.subr.mxu0 %v604
    %1262 = vmatpush1.msra.mxu0 %v603
    %1263 = vmatprep.subr.mxu0 %v606
    %1264 = vmatpush1.msra.mxu0 %v605
    %1265 = vmatprep.subr.mxu0 %v608
    %1266 = vmatpush1.msra.mxu0 %v607
    %1267 = vmatprep.subr.mxu0 %v610
    %1268 = vmatpush1.msra.mxu0 %v609
    %1269 = vmatprep.subr.mxu0 %v612
    %1270 = vmatpush1.msra.mxu0 %v611
    %1271 = vmatprep.mubr.f32.mxu0 %v763
    %1272 = vmatmul.mubr.f32.gmra.mrb[0].mxu0 %v755
    %v1273 = vpop.f32.mrb[0].mxu0
    %v1274 = vadd.f32 %v1203, %v1273
    %v1275 = vpop.f32.mrb[0].mxu0
    %v1276 = vadd.f32 %v1205, %v1275
    %1277 = vdwg.mxu0
    %1278 = vmatprep.subr.mxu0 %v614
    %1279 = vmatpush1.msra.mxu0 %v613
    %1280 = vmatprep.subr.mxu0 %v616
    %1281 = vmatpush1.msra.mxu0 %v615
    %1282 = vmatprep.subr.mxu0 %v618
    %1283 = vmatpush1.msra.mxu0 %v617
    %1284 = vmatprep.subr.mxu0 %v620
    %1285 = vmatpush1.msra.mxu0 %v619
    %1286 = vmatprep.subr.mxu0 %v622
    %1287 = vmatpush1.msra.mxu0 %v621
    %1288 = vmatprep.subr.mxu0 %v624
    %1289 = vmatpush1.msra.mxu0 %v623
    %1290 = vmatprep.subr.mxu0 %v626
    %1291 = vmatpush1.msra.mxu0 %v625
    %1292 = vmatprep.subr.mxu0 %v628
    %1293 = vmatpush1.msra.mxu0 %v627
    %1294 = vmatprep.subr.mxu0 %v630
    %1295 = vmatpush1.msra.mxu0 %v629
    %1296 = vmatprep.subr.mxu0 %v632
    %1297 = vmatpush1.msra.mxu0 %v631
    %1298 = vmatprep.subr.mxu0 %v634
    %1299 = vmatpush1.msra.mxu0 %v633
    %1300 = vmatprep.subr.mxu0 %v636
    %1301 = vmatpush1.msra.mxu0 %v635
    %1302 = vmatprep.subr.mxu0 %v638
    %1303 = vmatpush1.msra.mxu0 %v637
    %1304 = vmatprep.subr.mxu0 %v640
    %1305 = vmatpush1.msra.mxu0 %v639
    %1306 = vmatprep.subr.mxu0 %v642
    %1307 = vmatpush1.msra.mxu0 %v641
    %1308 = vmatprep.subr.mxu0 %v644
    %1309 = vmatpush1.msra.mxu0 %v643
    %1310 = vmatprep.subr.mxu0 %v646
    %1311 = vmatpush1.msra.mxu0 %v645
    %1312 = vmatprep.subr.mxu0 %v648
    %1313 = vmatpush1.msra.mxu0 %v647
    %1314 = vmatprep.subr.mxu0 %v650
    %1315 = vmatpush1.msra.mxu0 %v649
    %1316 = vmatprep.subr.mxu0 %v652
    %1317 = vmatpush1.msra.mxu0 %v651
    %1318 = vmatprep.subr.mxu0 %v654
    %1319 = vmatpush1.msra.mxu0 %v653
    %1320 = vmatprep.subr.mxu0 %v656
    %1321 = vmatpush1.msra.mxu0 %v655
    %1322 = vmatprep.subr.mxu0 %v658
    %1323 = vmatpush1.msra.mxu0 %v657
    %1324 = vmatprep.subr.mxu0 %v660
    %1325 = vmatpush1.msra.mxu0 %v659
    %1326 = vmatprep.subr.mxu0 %v662
    %1327 = vmatpush1.msra.mxu0 %v661
    %1328 = vmatprep.subr.mxu0 %v664
    %1329 = vmatpush1.msra.mxu0 %v663
    %1330 = vmatprep.subr.mxu0 %v666
    %1331 = vmatpush1.msra.mxu0 %v665
    %1332 = vmatprep.subr.mxu0 %v668
    %1333 = vmatpush1.msra.mxu0 %v667
    %1334 = vmatprep.subr.mxu0 %v670
    %1335 = vmatpush1.msra.mxu0 %v669
    %1336 = vmatprep.subr.mxu0 %v672
    %1337 = vmatpush1.msra.mxu0 %v671
    %1338 = vmatprep.subr.mxu0 %v674
    %1339 = vmatpush1.msra.mxu0 %v673
    %1340 = vmatprep.subr.mxu0 %v676
    %1341 = vmatpush1.msra.mxu0 %v675
    %1342 = vmatprep.mubr.f32.mxu0 %v764
    %1343 = vmatmul.mubr.f32.gmra.mrb[0].mxu0 %v762
    %v1344 = vpop.f32.mrb[0].mxu0
    %v1345 = vadd.f32 %v1274, %v1344
    %v1346 = vpop.f32.mrb[0].mxu0
    %v1347 = vadd.f32 %v1276, %v1346
    %1348 = vdwg.mxu0
    %v1349 = vmax.f32 %v1345, 0.0
    %v1350 = vmax.f32 %v1347, 0.0
    %v1353 = vcombine.low %v1349, %v1350
    %v1355 = vunpack.c.l.s4 1983009808
    %v1356 = vunpack.c.0.s8 %v1355
    %v1357 = vlaneseq
    %v1358 = vshrl.u32 %v1357, 7
    %v1359 = vsub.s32 %v1356, %v1358
    %v1360 = vrot.slane %v1353, %v1359
    %1362 = vst [vmem:[#allocation2] sm:$0xf] %v1360
    %v1363 = vld [vmem:[%s0 + $0x10] sm:$0xff]
    %v1364 = vld [vmem:[%s0 + $0x18] sm:$0xff]
    %v1365 = vld [vmem:[%s0 + $0x20] sm:$0xff]
    %v1366 = vld [vmem:[%s0 + $0x28] sm:$0xff]
    %v1371 = vcombine.high %v1363, %v1363
    %v1373 = vunpack.c.l.s4 1983009808
    %v1374 = vunpack.c.0.s8 %v1373
    %v1375 = vlaneseq
    %v1376 = vshrl.u32 %v1375, 7
    %v1377 = vsub.s32 %v1374, %v1376
    %v1378 = vrot.slane %v1363, %v1377
    %v1380 = vunpack.c.l.s4 1983009808
    %v1381 = vunpack.c.0.s8 %v1380
    %v1382 = vlaneseq
    %v1383 = vshrl.u32 %v1382, 7
    %v1384 = vsub.s32 %v1381, %v1383
    %v1385 = vrot.slane %v1371, %v1384
    %v1386 = vcombine.high %v1378, %v1378
    %v1387 = vcombine.high %v1385, %v1385
    %v1388 = vcombine.high %v1364, %v1364
    %v1390 = vunpack.c.l.s4 1983009808
    %v1391 = vunpack.c.0.s8 %v1390
    %v1392 = vlaneseq
    %v1393 = vshrl.u32 %v1392, 7
    %v1394 = vsub.s32 %v1391, %v1393
    %v1395 = vrot.slane %v1364, %v1394
    %v1397 = vunpack.c.l.s4 1983009808
    %v1398 = vunpack.c.0.s8 %v1397
    %v1399 = vlaneseq
    %v1400 = vshrl.u32 %v1399, 7
    %v1401 = vsub.s32 %v1398, %v1400
    %v1402 = vrot.slane %v1388, %v1401
    %v1403 = vcombine.high %v1395, %v1395
    %v1404 = vcombine.high %v1402, %v1402
    %v1405 = vcombine.high %v1365, %v1365
    %v1407 = vunpack.c.l.s4 1983009808
    %v1408 = vunpack.c.0.s8 %v1407
    %v1409 = vlaneseq
    %v1410 = vshrl.u32 %v1409, 7
    %v1411 = vsub.s32 %v1408, %v1410
    %v1412 = vrot.slane %v1365, %v1411
    %v1414 = vunpack.c.l.s4 1983009808
    %v1415 = vunpack.c.0.s8 %v1414
    %v1416 = vlaneseq
    %v1417 = vshrl.u32 %v1416, 7
    %v1418 = vsub.s32 %v1415, %v1417
    %v1419 = vrot.slane %v1405, %v1418
    %v1420 = vcombine.high %v1412, %v1412
    %v1421 = vcombine.high %v1419, %v1419
    %v1422 = vcombine.high %v1366, %v1366
    %v1424 = vunpack.c.l.s4 1983009808
    %v1425 = vunpack.c.0.s8 %v1424
    %v1426 = vlaneseq
    %v1427 = vshrl.u32 %v1426, 7
    %v1428 = vsub.s32 %v1425, %v1427
    %v1429 = vrot.slane %v1366, %v1428
    %v1431 = vunpack.c.l.s4 1983009808
    %v1432 = vunpack.c.0.s8 %v1431
    %v1433 = vlaneseq
    %v1434 = vshrl.u32 %v1433, 7
    %v1435 = vsub.s32 %v1432, %v1434
    %v1436 = vrot.slane %v1422, %v1435
    %v1437 = vcombine.high %v1429, %v1429
    %v1438 = vcombine.high %v1436, %v1436
    %1455 = vmatprep.subr.mxu0 %v166
    %1456 = vmatpush1.msra.mxu0 %v165
    %1457 = vmatprep.subr.mxu0 %v168
    %1458 = vmatpush1.msra.mxu0 %v167
    %1459 = vmatprep.subr.mxu0 %v170
    %1460 = vmatpush1.msra.mxu0 %v169
    %1461 = vmatprep.subr.mxu0 %v172
    %1462 = vmatpush1.msra.mxu0 %v171
    %1463 = vmatprep.subr.mxu0 %v174
    %1464 = vmatpush1.msra.mxu0 %v173
    %1465 = vmatprep.subr.mxu0 %v176
    %1466 = vmatpush1.msra.mxu0 %v175
    %1467 = vmatprep.subr.mxu0 %v178
    %1468 = vmatpush1.msra.mxu0 %v177
    %1469 = vmatprep.subr.mxu0 %v180
    %1470 = vmatpush1.msra.mxu0 %v179
    %1471 = vmatprep.subr.mxu0 %v182
    %1472 = vmatpush1.msra.mxu0 %v181
    %1473 = vmatprep.subr.mxu0 %v184
    %1474 = vmatpush1.msra.mxu0 %v183
    %1475 = vmatprep.subr.mxu0 %v186
    %1476 = vmatpush1.msra.mxu0 %v185
    %1477 = vmatprep.subr.mxu0 %v188
    %1478 = vmatpush1.msra.mxu0 %v187
    %1479 = vmatprep.subr.mxu0 %v190
    %1480 = vmatpush1.msra.mxu0 %v189
    %1481 = vmatprep.subr.mxu0 %v192
    %1482 = vmatpush1.msra.mxu0 %v191
    %1483 = vmatprep.subr.mxu0 %v194
    %1484 = vmatpush1.msra.mxu0 %v193
    %1485 = vmatprep.subr.mxu0 %v196
    %1486 = vmatpush1.msra.mxu0 %v195
    %1487 = vmatprep.subr.mxu0 %v198
    %1488 = vmatpush1.msra.mxu0 %v197
    %1489 = vmatprep.subr.mxu0 %v200
    %1490 = vmatpush1.msra.mxu0 %v199
    %1491 = vmatprep.subr.mxu0 %v202
    %1492 = vmatpush1.msra.mxu0 %v201
    %1493 = vmatprep.subr.mxu0 %v204
    %1494 = vmatpush1.msra.mxu0 %v203
    %1495 = vmatprep.subr.mxu0 %v206
    %1496 = vmatpush1.msra.mxu0 %v205
    %1497 = vmatprep.subr.mxu0 %v208
    %1498 = vmatpush1.msra.mxu0 %v207
    %1499 = vmatprep.subr.mxu0 %v210
    %1500 = vmatpush1.msra.mxu0 %v209
    %1501 = vmatprep.subr.mxu0 %v212
    %1502 = vmatpush1.msra.mxu0 %v211
    %1503 = vmatprep.subr.mxu0 %v214
    %1504 = vmatpush1.msra.mxu0 %v213
    %1505 = vmatprep.subr.mxu0 %v216
    %1506 = vmatpush1.msra.mxu0 %v215
    %1507 = vmatprep.subr.mxu0 %v218
    %1508 = vmatpush1.msra.mxu0 %v217
    %1509 = vmatprep.subr.mxu0 %v220
    %1510 = vmatpush1.msra.mxu0 %v219
    %1511 = vmatprep.subr.mxu0 %v222
    %1512 = vmatpush1.msra.mxu0 %v221
    %1513 = vmatprep.subr.mxu0 %v224
    %1514 = vmatpush1.msra.mxu0 %v223
    %1515 = vmatprep.subr.mxu0 %v226
    %1516 = vmatpush1.msra.mxu0 %v225
    %1517 = vmatprep.subr.mxu0 %v228
    %1518 = vmatpush1.msra.mxu0 %v227
    %1519 = vmatprep.mubr.f32.mxu0 %v1386
    %1520 = vmatmul.mubr.f32.gmra.mrb[0].mxu0 %v1378
    %v1521 = vpop.f32.mrb[0].mxu0
    %v1522 = vadd.f32 %v686, %v1521
    %v1523 = vpop.f32.mrb[0].mxu0
    %v1524 = vadd.f32 %v690, %v1523
    %1525 = vdwg.mxu0
    %1526 = vmatprep.subr.mxu0 %v230
    %1527 = vmatpush1.msra.mxu0 %v229
    %1528 = vmatprep.subr.mxu0 %v232
    %1529 = vmatpush1.msra.mxu0 %v231
    %1530 = vmatprep.subr.mxu0 %v234
    %1531 = vmatpush1.msra.mxu0 %v233
    %1532 = vmatprep.subr.mxu0 %v236
    %1533 = vmatpush1.msra.mxu0 %v235
    %1534 = vmatprep.subr.mxu0 %v238
    %1535 = vmatpush1.msra.mxu0 %v237
    %1536 = vmatprep.subr.mxu0 %v240
    %1537 = vmatpush1.msra.mxu0 %v239
    %1538 = vmatprep.subr.mxu0 %v242
    %1539 = vmatpush1.msra.mxu0 %v241
    %1540 = vmatprep.subr.mxu0 %v244
    %1541 = vmatpush1.msra.mxu0 %v243
    %1542 = vmatprep.subr.mxu0 %v246
    %1543 = vmatpush1.msra.mxu0 %v245
    %1544 = vmatprep.subr.mxu0 %v248
    %1545 = vmatpush1.msra.mxu0 %v247
    %1546 = vmatprep.subr.mxu0 %v250
    %1547 = vmatpush1.msra.mxu0 %v249
    %1548 = vmatprep.subr.mxu0 %v252
    %1549 = vmatpush1.msra.mxu0 %v251
    %1550 = vmatprep.subr.mxu0 %v254
    %1551 = vmatpush1.msra.mxu0 %v253
    %1552 = vmatprep.subr.mxu0 %v256
    %1553 = vmatpush1.msra.mxu0 %v255
    %1554 = vmatprep.subr.mxu0 %v258
    %1555 = vmatpush1.msra.mxu0 %v257
    %1556 = vmatprep.subr.mxu0 %v260
    %1557 = vmatpush1.msra.mxu0 %v259
    %1558 = vmatprep.subr.mxu0 %v262
    %1559 = vmatpush1.msra.mxu0 %v261
    %1560 = vmatprep.subr.mxu0 %v264
    %1561 = vmatpush1.msra.mxu0 %v263
    %1562 = vmatprep.subr.mxu0 %v266
    %1563 = vmatpush1.msra.mxu0 %v265
    %1564 = vmatprep.subr.mxu0 %v268
    %1565 = vmatpush1.msra.mxu0 %v267
    %1566 = vmatprep.subr.mxu0 %v270
    %1567 = vmatpush1.msra.mxu0 %v269
    %1568 = vmatprep.subr.mxu0 %v272
    %1569 = vmatpush1.msra.mxu0 %v271
    %1570 = vmatprep.subr.mxu0 %v274
    %1571 = vmatpush1.msra.mxu0 %v273
    %1572 = vmatprep.subr.mxu0 %v276
    %1573 = vmatpush1.msra.mxu0 %v275
    %1574 = vmatprep.subr.mxu0 %v278
    %1575 = vmatpush1.msra.mxu0 %v277
    %1576 = vmatprep.subr.mxu0 %v280
    %1577 = vmatpush1.msra.mxu0 %v279
    %1578 = vmatprep.subr.mxu0 %v282
    %1579 = vmatpush1.msra.mxu0 %v281
    %1580 = vmatprep.subr.mxu0 %v284
    %1581 = vmatpush1.msra.mxu0 %v283
    %1582 = vmatprep.subr.mxu0 %v286
    %1583 = vmatpush1.msra.mxu0 %v285
    %1584 = vmatprep.subr.mxu0 %v288
    %1585 = vmatpush1.msra.mxu0 %v287
    %1586 = vmatprep.subr.mxu0 %v290
    %1587 = vmatpush1.msra.mxu0 %v289
    %1588 = vmatprep.subr.mxu0 %v292
    %1589 = vmatpush1.msra.mxu0 %v291
    %1590 = vmatprep.mubr.f32.mxu0 %v1387
    %1591 = vmatmul.mubr.f32.gmra.mrb[0].mxu0 %v1385
    %v1592 = vpop.f32.mrb[0].mxu0
    %v1593 = vadd.f32 %v1522, %v1592
    %v1594 = vpop.f32.mrb[0].mxu0
    %v1595 = vadd.f32 %v1524, %v1594
    %1596 = vdwg.mxu0
    %1597 = vmatprep.subr.mxu0 %v294
    %1598 = vmatpush1.msra.mxu0 %v293
    %1599 = vmatprep.subr.mxu0 %v296
    %1600 = vmatpush1.msra.mxu0 %v295
    %1601 = vmatprep.subr.mxu0 %v298
    %1602 = vmatpush1.msra.mxu0 %v297
    %1603 = vmatprep.subr.mxu0 %v300
    %1604 = vmatpush1.msra.mxu0 %v299
    %1605 = vmatprep.subr.mxu0 %v302
    %1606 = vmatpush1.msra.mxu0 %v301
    %1607 = vmatprep.subr.mxu0 %v304
    %1608 = vmatpush1.msra.mxu0 %v303
    %1609 = vmatprep.subr.mxu0 %v306
    %1610 = vmatpush1.msra.mxu0 %v305
    %1611 = vmatprep.subr.mxu0 %v308
    %1612 = vmatpush1.msra.mxu0 %v307
    %1613 = vmatprep.subr.mxu0 %v310
    %1614 = vmatpush1.msra.mxu0 %v309
    %1615 = vmatprep.subr.mxu0 %v312
    %1616 = vmatpush1.msra.mxu0 %v311
    %1617 = vmatprep.subr.mxu0 %v314
    %1618 = vmatpush1.msra.mxu0 %v313
    %1619 = vmatprep.subr.mxu0 %v316
    %1620 = vmatpush1.msra.mxu0 %v315
    %1621 = vmatprep.subr.mxu0 %v318
    %1622 = vmatpush1.msra.mxu0 %v317
    %1623 = vmatprep.subr.mxu0 %v320
    %1624 = vmatpush1.msra.mxu0 %v319
    %1625 = vmatprep.subr.mxu0 %v322
    %1626 = vmatpush1.msra.mxu0 %v321
    %1627 = vmatprep.subr.mxu0 %v324
    %1628 = vmatpush1.msra.mxu0 %v323
    %1629 = vmatprep.subr.mxu0 %v326
    %1630 = vmatpush1.msra.mxu0 %v325
    %1631 = vmatprep.subr.mxu0 %v328
    %1632 = vmatpush1.msra.mxu0 %v327
    %1633 = vmatprep.subr.mxu0 %v330
    %1634 = vmatpush1.msra.mxu0 %v329
    %1635 = vmatprep.subr.mxu0 %v332
    %1636 = vmatpush1.msra.mxu0 %v331
    %1637 = vmatprep.subr.mxu0 %v334
    %1638 = vmatpush1.msra.mxu0 %v333
    %1639 = vmatprep.subr.mxu0 %v336
    %1640 = vmatpush1.msra.mxu0 %v335
    %1641 = vmatprep.subr.mxu0 %v338
    %1642 = vmatpush1.msra.mxu0 %v337
    %1643 = vmatprep.subr.mxu0 %v340
    %1644 = vmatpush1.msra.mxu0 %v339
    %1645 = vmatprep.subr.mxu0 %v342
    %1646 = vmatpush1.msra.mxu0 %v341
    %1647 = vmatprep.subr.mxu0 %v344
    %1648 = vmatpush1.msra.mxu0 %v343
    %1649 = vmatprep.subr.mxu0 %v346
    %1650 = vmatpush1.msra.mxu0 %v345
    %1651 = vmatprep.subr.mxu0 %v348
    %1652 = vmatpush1.msra.mxu0 %v347
    %1653 = vmatprep.subr.mxu0 %v350
    %1654 = vmatpush1.msra.mxu0 %v349
    %1655 = vmatprep.subr.mxu0 %v352
    %1656 = vmatpush1.msra.mxu0 %v351
    %1657 = vmatprep.subr.mxu0 %v354
    %1658 = vmatpush1.msra.mxu0 %v353
    %1659 = vmatprep.subr.mxu0 %v356
    %1660 = vmatpush1.msra.mxu0 %v355
    %1661 = vmatprep.mubr.f32.mxu0 %v1403
    %1662 = vmatmul.mubr.f32.gmra.mrb[0].mxu0 %v1395
    %v1663 = vpop.f32.mrb[0].mxu0
    %v1664 = vadd.f32 %v1593, %v1663
    %v1665 = vpop.f32.mrb[0].mxu0
    %v1666 = vadd.f32 %v1595, %v1665
    %1667 = vdwg.mxu0
    %1668 = vmatprep.subr.mxu0 %v358
    %1669 = vmatpush1.msra.mxu0 %v357
    %1670 = vmatprep.subr.mxu0 %v360
    %1671 = vmatpush1.msra.mxu0 %v359
    %1672 = vmatprep.subr.mxu0 %v362
    %1673 = vmatpush1.msra.mxu0 %v361
    %1674 = vmatprep.subr.mxu0 %v364
    %1675 = vmatpush1.msra.mxu0 %v363
    %1676 = vmatprep.subr.mxu0 %v366
    %1677 = vmatpush1.msra.mxu0 %v365
    %1678 = vmatprep.subr.mxu0 %v368
    %1679 = vmatpush1.msra.mxu0 %v367
    %1680 = vmatprep.subr.mxu0 %v370
    %1681 = vmatpush1.msra.mxu0 %v369
    %1682 = vmatprep.subr.mxu0 %v372
    %1683 = vmatpush1.msra.mxu0 %v371
    %1684 = vmatprep.subr.mxu0 %v374
    %1685 = vmatpush1.msra.mxu0 %v373
    %1686 = vmatprep.subr.mxu0 %v376
    %1687 = vmatpush1.msra.mxu0 %v375
    %1688 = vmatprep.subr.mxu0 %v378
    %1689 = vmatpush1.msra.mxu0 %v377
    %1690 = vmatprep.subr.mxu0 %v380
    %1691 = vmatpush1.msra.mxu0 %v379
    %1692 = vmatprep.subr.mxu0 %v382
    %1693 = vmatpush1.msra.mxu0 %v381
    %1694 = vmatprep.subr.mxu0 %v384
    %1695 = vmatpush1.msra.mxu0 %v383
    %1696 = vmatprep.subr.mxu0 %v386
    %1697 = vmatpush1.msra.mxu0 %v385
    %1698 = vmatprep.subr.mxu0 %v388
    %1699 = vmatpush1.msra.mxu0 %v387
    %1700 = vmatprep.subr.mxu0 %v390
    %1701 = vmatpush1.msra.mxu0 %v389
    %1702 = vmatprep.subr.mxu0 %v392
    %1703 = vmatpush1.msra.mxu0 %v391
    %1704 = vmatprep.subr.mxu0 %v394
    %1705 = vmatpush1.msra.mxu0 %v393
    %1706 = vmatprep.subr.mxu0 %v396
    %1707 = vmatpush1.msra.mxu0 %v395
    %1708 = vmatprep.subr.mxu0 %v398
    %1709 = vmatpush1.msra.mxu0 %v397
    %1710 = vmatprep.subr.mxu0 %v400
    %1711 = vmatpush1.msra.mxu0 %v399
    %1712 = vmatprep.subr.mxu0 %v402
    %1713 = vmatpush1.msra.mxu0 %v401
    %1714 = vmatprep.subr.mxu0 %v404
    %1715 = vmatpush1.msra.mxu0 %v403
    %1716 = vmatprep.subr.mxu0 %v406
    %1717 = vmatpush1.msra.mxu0 %v405
    %1718 = vmatprep.subr.mxu0 %v408
    %1719 = vmatpush1.msra.mxu0 %v407
    %1720 = vmatprep.subr.mxu0 %v410
    %1721 = vmatpush1.msra.mxu0 %v409
    %1722 = vmatprep.subr.mxu0 %v412
    %1723 = vmatpush1.msra.mxu0 %v411
    %1724 = vmatprep.subr.mxu0 %v414
    %1725 = vmatpush1.msra.mxu0 %v413
    %1726 = vmatprep.subr.mxu0 %v416
    %1727 = vmatpush1.msra.mxu0 %v415
    %1728 = vmatprep.subr.mxu0 %v418
    %1729 = vmatpush1.msra.mxu0 %v417
    %1730 = vmatprep.subr.mxu0 %v420
    %1731 = vmatpush1.msra.mxu0 %v419
    %1732 = vmatprep.mubr.f32.mxu0 %v1404
    %1733 = vmatmul.mubr.f32.gmra.mrb[0].mxu0 %v1402
    %v1734 = vpop.f32.mrb[0].mxu0
    %v1735 = vadd.f32 %v1664, %v1734
    %v1736 = vpop.f32.mrb[0].mxu0
    %v1737 = vadd.f32 %v1666, %v1736
    %1738 = vdwg.mxu0
    %1739 = vmatprep.subr.mxu0 %v422
    %1740 = vmatpush1.msra.mxu0 %v421
    %1741 = vmatprep.subr.mxu0 %v424
    %1742 = vmatpush1.msra.mxu0 %v423
    %1743 = vmatprep.subr.mxu0 %v426
    %1744 = vmatpush1.msra.mxu0 %v425
    %1745 = vmatprep.subr.mxu0 %v428
    %1746 = vmatpush1.msra.mxu0 %v427
    %1747 = vmatprep.subr.mxu0 %v430
    %1748 = vmatpush1.msra.mxu0 %v429
    %1749 = vmatprep.subr.mxu0 %v432
    %1750 = vmatpush1.msra.mxu0 %v431
    %1751 = vmatprep.subr.mxu0 %v434
    %1752 = vmatpush1.msra.mxu0 %v433
    %1753 = vmatprep.subr.mxu0 %v436
    %1754 = vmatpush1.msra.mxu0 %v435
    %1755 = vmatprep.subr.mxu0 %v438
    %1756 = vmatpush1.msra.mxu0 %v437
    %1757 = vmatprep.subr.mxu0 %v440
    %1758 = vmatpush1.msra.mxu0 %v439
    %1759 = vmatprep.subr.mxu0 %v442
    %1760 = vmatpush1.msra.mxu0 %v441
    %1761 = vmatprep.subr.mxu0 %v444
    %1762 = vmatpush1.msra.mxu0 %v443
    %1763 = vmatprep.subr.mxu0 %v446
    %1764 = vmatpush1.msra.mxu0 %v445
    %1765 = vmatprep.subr.mxu0 %v448
    %1766 = vmatpush1.msra.mxu0 %v447
    %1767 = vmatprep.subr.mxu0 %v450
    %1768 = vmatpush1.msra.mxu0 %v449
    %1769 = vmatprep.subr.mxu0 %v452
    %1770 = vmatpush1.msra.mxu0 %v451
    %1771 = vmatprep.subr.mxu0 %v454
    %1772 = vmatpush1.msra.mxu0 %v453
    %1773 = vmatprep.subr.mxu0 %v456
    %1774 = vmatpush1.msra.mxu0 %v455
    %1775 = vmatprep.subr.mxu0 %v458
    %1776 = vmatpush1.msra.mxu0 %v457
    %1777 = vmatprep.subr.mxu0 %v460
    %1778 = vmatpush1.msra.mxu0 %v459
    %1779 = vmatprep.subr.mxu0 %v462
    %1780 = vmatpush1.msra.mxu0 %v461
    %1781 = vmatprep.subr.mxu0 %v464
    %1782 = vmatpush1.msra.mxu0 %v463
    %1783 = vmatprep.subr.mxu0 %v466
    %1784 = vmatpush1.msra.mxu0 %v465
    %1785 = vmatprep.subr.mxu0 %v468
    %1786 = vmatpush1.msra.mxu0 %v467
    %1787 = vmatprep.subr.mxu0 %v470
    %1788 = vmatpush1.msra.mxu0 %v469
    %1789 = vmatprep.subr.mxu0 %v472
    %1790 = vmatpush1.msra.mxu0 %v471
    %1791 = vmatprep.subr.mxu0 %v474
    %1792 = vmatpush1.msra.mxu0 %v473
    %1793 = vmatprep.subr.mxu0 %v476
    %1794 = vmatpush1.msra.mxu0 %v475
    %1795 = vmatprep.subr.mxu0 %v478
    %1796 = vmatpush1.msra.mxu0 %v477
    %1797 = vmatprep.subr.mxu0 %v480
    %1798 = vmatpush1.msra.mxu0 %v479
    %1799 = vmatprep.subr.mxu0 %v482
    %1800 = vmatpush1.msra.mxu0 %v481
    %1801 = vmatprep.subr.mxu0 %v484
    %1802 = vmatpush1.msra.mxu0 %v483
    %1803 = vmatprep.mubr.f32.mxu0 %v1420
    %1804 = vmatmul.mubr.f32.gmra.mrb[0].mxu0 %v1412
    %v1805 = vpop.f32.mrb[0].mxu0
    %v1806 = vadd.f32 %v1735, %v1805
    %v1807 = vpop.f32.mrb[0].mxu0
    %v1808 = vadd.f32 %v1737, %v1807
    %1809 = vdwg.mxu0
    %1810 = vmatprep.subr.mxu0 %v486
    %1811 = vmatpush1.msra.mxu0 %v485
    %1812 = vmatprep.subr.mxu0 %v488
    %1813 = vmatpush1.msra.mxu0 %v487
    %1814 = vmatprep.subr.mxu0 %v490
    %1815 = vmatpush1.msra.mxu0 %v489
    %1816 = vmatprep.subr.mxu0 %v492
    %1817 = vmatpush1.msra.mxu0 %v491
    %1818 = vmatprep.subr.mxu0 %v494
    %1819 = vmatpush1.msra.mxu0 %v493
    %1820 = vmatprep.subr.mxu0 %v496
    %1821 = vmatpush1.msra.mxu0 %v495
    %1822 = vmatprep.subr.mxu0 %v498
    %1823 = vmatpush1.msra.mxu0 %v497
    %1824 = vmatprep.subr.mxu0 %v500
    %1825 = vmatpush1.msra.mxu0 %v499
    %1826 = vmatprep.subr.mxu0 %v502
    %1827 = vmatpush1.msra.mxu0 %v501
    %1828 = vmatprep.subr.mxu0 %v504
    %1829 = vmatpush1.msra.mxu0 %v503
    %1830 = vmatprep.subr.mxu0 %v506
    %1831 = vmatpush1.msra.mxu0 %v505
    %1832 = vmatprep.subr.mxu0 %v508
    %1833 = vmatpush1.msra.mxu0 %v507
    %1834 = vmatprep.subr.mxu0 %v510
    %1835 = vmatpush1.msra.mxu0 %v509
    %1836 = vmatprep.subr.mxu0 %v512
    %1837 = vmatpush1.msra.mxu0 %v511
    %1838 = vmatprep.subr.mxu0 %v514
    %1839 = vmatpush1.msra.mxu0 %v513
    %1840 = vmatprep.subr.mxu0 %v516
    %1841 = vmatpush1.msra.mxu0 %v515
    %1842 = vmatprep.subr.mxu0 %v518
    %1843 = vmatpush1.msra.mxu0 %v517
    %1844 = vmatprep.subr.mxu0 %v520
    %1845 = vmatpush1.msra.mxu0 %v519
    %1846 = vmatprep.subr.mxu0 %v522
    %1847 = vmatpush1.msra.mxu0 %v521
    %1848 = vmatprep.subr.mxu0 %v524
    %1849 = vmatpush1.msra.mxu0 %v523
    %1850 = vmatprep.subr.mxu0 %v526
    %1851 = vmatpush1.msra.mxu0 %v525
    %1852 = vmatprep.subr.mxu0 %v528
    %1853 = vmatpush1.msra.mxu0 %v527
    %1854 = vmatprep.subr.mxu0 %v530
    %1855 = vmatpush1.msra.mxu0 %v529
    %1856 = vmatprep.subr.mxu0 %v532
    %1857 = vmatpush1.msra.mxu0 %v531
    %1858 = vmatprep.subr.mxu0 %v534
    %1859 = vmatpush1.msra.mxu0 %v533
    %1860 = vmatprep.subr.mxu0 %v536
    %1861 = vmatpush1.msra.mxu0 %v535
    %1862 = vmatprep.subr.mxu0 %v538
    %1863 = vmatpush1.msra.mxu0 %v537
    %1864 = vmatprep.subr.mxu0 %v540
    %1865 = vmatpush1.msra.mxu0 %v539
    %1866 = vmatprep.subr.mxu0 %v542
    %1867 = vmatpush1.msra.mxu0 %v541
    %1868 = vmatprep.subr.mxu0 %v544
    %1869 = vmatpush1.msra.mxu0 %v543
    %1870 = vmatprep.subr.mxu0 %v546
    %1871 = vmatpush1.msra.mxu0 %v545
    %1872 = vmatprep.subr.mxu0 %v548
    %1873 = vmatpush1.msra.mxu0 %v547
    %1874 = vmatprep.mubr.f32.mxu0 %v1421
    %1875 = vmatmul.mubr.f32.gmra.mrb[0].mxu0 %v1419
    %v1876 = vpop.f32.mrb[0].mxu0
    %v1877 = vadd.f32 %v1806, %v1876
    %v1878 = vpop.f32.mrb[0].mxu0
    %v1879 = vadd.f32 %v1808, %v1878
    %1880 = vdwg.mxu0
    %1881 = vmatprep.subr.mxu0 %v550
    %1882 = vmatpush1.msra.mxu0 %v549
    %1883 = vmatprep.subr.mxu0 %v552
    %1884 = vmatpush1.msra.mxu0 %v551
    %1885 = vmatprep.subr.mxu0 %v554
    %1886 = vmatpush1.msra.mxu0 %v553
    %1887 = vmatprep.subr.mxu0 %v556
    %1888 = vmatpush1.msra.mxu0 %v555
    %1889 = vmatprep.subr.mxu0 %v558
    %1890 = vmatpush1.msra.mxu0 %v557
    %1891 = vmatprep.subr.mxu0 %v560
    %1892 = vmatpush1.msra.mxu0 %v559
    %1893 = vmatprep.subr.mxu0 %v562
    %1894 = vmatpush1.msra.mxu0 %v561
    %1895 = vmatprep.subr.mxu0 %v564
    %1896 = vmatpush1.msra.mxu0 %v563
    %1897 = vmatprep.subr.mxu0 %v566
    %1898 = vmatpush1.msra.mxu0 %v565
    %1899 = vmatprep.subr.mxu0 %v568
    %1900 = vmatpush1.msra.mxu0 %v567
    %1901 = vmatprep.subr.mxu0 %v570
    %1902 = vmatpush1.msra.mxu0 %v569
    %1903 = vmatprep.subr.mxu0 %v572
    %1904 = vmatpush1.msra.mxu0 %v571
    %1905 = vmatprep.subr.mxu0 %v574
    %1906 = vmatpush1.msra.mxu0 %v573
    %1907 = vmatprep.subr.mxu0 %v576
    %1908 = vmatpush1.msra.mxu0 %v575
    %1909 = vmatprep.subr.mxu0 %v578
    %1910 = vmatpush1.msra.mxu0 %v577
    %1911 = vmatprep.subr.mxu0 %v580
    %1912 = vmatpush1.msra.mxu0 %v579
    %1913 = vmatprep.subr.mxu0 %v582
    %1914 = vmatpush1.msra.mxu0 %v581
    %1915 = vmatprep.subr.mxu0 %v584
    %1916 = vmatpush1.msra.mxu0 %v583
    %1917 = vmatprep.subr.mxu0 %v586
    %1918 = vmatpush1.msra.mxu0 %v585
    %1919 = vmatprep.subr.mxu0 %v588
    %1920 = vmatpush1.msra.mxu0 %v587
    %1921 = vmatprep.subr.mxu0 %v590
    %1922 = vmatpush1.msra.mxu0 %v589
    %1923 = vmatprep.subr.mxu0 %v592
    %1924 = vmatpush1.msra.mxu0 %v591
    %1925 = vmatprep.subr.mxu0 %v594
    %1926 = vmatpush1.msra.mxu0 %v593
    %1927 = vmatprep.subr.mxu0 %v596
    %1928 = vmatpush1.msra.mxu0 %v595
    %1929 = vmatprep.subr.mxu0 %v598
    %1930 = vmatpush1.msra.mxu0 %v597
    %1931 = vmatprep.subr.mxu0 %v600
    %1932 = vmatpush1.msra.mxu0 %v599
    %1933 = vmatprep.subr.mxu0 %v602
    %1934 = vmatpush1.msra.mxu0 %v601
    %1935 = vmatprep.subr.mxu0 %v604
    %1936 = vmatpush1.msra.mxu0 %v603
    %1937 = vmatprep.subr.mxu0 %v606
    %1938 = vmatpush1.msra.mxu0 %v605
    %1939 = vmatprep.subr.mxu0 %v608
    %1940 = vmatpush1.msra.mxu0 %v607
    %1941 = vmatprep.subr.mxu0 %v610
    %1942 = vmatpush1.msra.mxu0 %v609
    %1943 = vmatprep.subr.mxu0 %v612
    %1944 = vmatpush1.msra.mxu0 %v611
    %1945 = vmatprep.mubr.f32.mxu0 %v1437
    %1946 = vmatmul.mubr.f32.gmra.mrb[0].mxu0 %v1429
    %v1947 = vpop.f32.mrb[0].mxu0
    %v1948 = vadd.f32 %v1877, %v1947
    %v1949 = vpop.f32.mrb[0].mxu0
    %v1950 = vadd.f32 %v1879, %v1949
    %1951 = vdwg.mxu0
    %1952 = vmatprep.subr.mxu0 %v614
    %1953 = vmatpush1.msra.mxu0 %v613
    %1954 = vmatprep.subr.mxu0 %v616
    %1955 = vmatpush1.msra.mxu0 %v615
    %1956 = vmatprep.subr.mxu0 %v618
    %1957 = vmatpush1.msra.mxu0 %v617
    %1958 = vmatprep.subr.mxu0 %v620
    %1959 = vmatpush1.msra.mxu0 %v619
    %1960 = vmatprep.subr.mxu0 %v622
    %1961 = vmatpush1.msra.mxu0 %v621
    %1962 = vmatprep.subr.mxu0 %v624
    %1963 = vmatpush1.msra.mxu0 %v623
    %1964 = vmatprep.subr.mxu0 %v626
    %1965 = vmatpush1.msra.mxu0 %v625
    %1966 = vmatprep.subr.mxu0 %v628
    %1967 = vmatpush1.msra.mxu0 %v627
    %1968 = vmatprep.subr.mxu0 %v630
    %1969 = vmatpush1.msra.mxu0 %v629
    %1970 = vmatprep.subr.mxu0 %v632
    %1971 = vmatpush1.msra.mxu0 %v631
    %1972 = vmatprep.subr.mxu0 %v634
    %1973 = vmatpush1.msra.mxu0 %v633
    %1974 = vmatprep.subr.mxu0 %v636
    %1975 = vmatpush1.msra.mxu0 %v635
    %1976 = vmatprep.subr.mxu0 %v638
    %1977 = vmatpush1.msra.mxu0 %v637
    %1978 = vmatprep.subr.mxu0 %v640
    %1979 = vmatpush1.msra.mxu0 %v639
    %1980 = vmatprep.subr.mxu0 %v642
    %1981 = vmatpush1.msra.mxu0 %v641
    %1982 = vmatprep.subr.mxu0 %v644
    %1983 = vmatpush1.msra.mxu0 %v643
    %1984 = vmatprep.subr.mxu0 %v646
    %1985 = vmatpush1.msra.mxu0 %v645
    %1986 = vmatprep.subr.mxu0 %v648
    %1987 = vmatpush1.msra.mxu0 %v647
    %1988 = vmatprep.subr.mxu0 %v650
    %1989 = vmatpush1.msra.mxu0 %v649
    %1990 = vmatprep.subr.mxu0 %v652
    %1991 = vmatpush1.msra.mxu0 %v651
    %1992 = vmatprep.subr.mxu0 %v654
    %1993 = vmatpush1.msra.mxu0 %v653
    %1994 = vmatprep.subr.mxu0 %v656
    %1995 = vmatpush1.msra.mxu0 %v655
    %1996 = vmatprep.subr.mxu0 %v658
    %1997 = vmatpush1.msra.mxu0 %v657
    %1998 = vmatprep.subr.mxu0 %v660
    %1999 = vmatpush1.msra.mxu0 %v659
    %2000 = vmatprep.subr.mxu0 %v662
    %2001 = vmatpush1.msra.mxu0 %v661
    %2002 = vmatprep.subr.mxu0 %v664
    %2003 = vmatpush1.msra.mxu0 %v663
    %2004 = vmatprep.subr.mxu0 %v666
    %2005 = vmatpush1.msra.mxu0 %v665
    %2006 = vmatprep.subr.mxu0 %v668
    %2007 = vmatpush1.msra.mxu0 %v667
    %2008 = vmatprep.subr.mxu0 %v670
    %2009 = vmatpush1.msra.mxu0 %v669
    %2010 = vmatprep.subr.mxu0 %v672
    %2011 = vmatpush1.msra.mxu0 %v671
    %2012 = vmatprep.subr.mxu0 %v674
    %2013 = vmatpush1.msra.mxu0 %v673
    %2014 = vmatprep.subr.mxu0 %v676
    %2015 = vmatpush1.msra.mxu0 %v675
    %2016 = vmatprep.mubr.f32.mxu0 %v1438
    %2017 = vmatmul.mubr.f32.gmra.mrb[0].mxu0 %v1436
    %v2018 = vpop.f32.mrb[0].mxu0
    %v2019 = vadd.f32 %v1948, %v2018
    %v2020 = vpop.f32.mrb[0].mxu0
    %v2021 = vadd.f32 %v1950, %v2020
    %2022 = vdwg.mxu0
    %v2023 = vmax.f32 %v2019, 0.0
    %v2024 = vmax.f32 %v2021, 0.0
    %v2027 = vcombine.low %v2023, %v2024
    %v2029 = vunpack.c.l.s4 1983009808
    %v2030 = vunpack.c.0.s8 %v2029
    %v2031 = vlaneseq
    %v2032 = vshrl.u32 %v2031, 7
    %v2033 = vsub.s32 %v2030, %v2032
    %v2034 = vrot.slane %v2027, %v2033
    %2036 = vst [vmem:[#allocation2 + $0x4] sm:$0xf] %v2034
    %v2037 = vld [vmem:[%s0 + $0x20] sm:$0xff]
    %v2038 = vld [vmem:[%s0 + $0x28] sm:$0xff]
    %v2039 = vld [vmem:[%s0 + $0x30] sm:$0xff]
    %v2040 = vld [vmem:[%s0 + $0x38] sm:$0xff]
    %v2045 = vcombine.high %v2037, %v2037
    %v2047 = vunpack.c.l.s4 1983009808
    %v2048 = vunpack.c.0.s8 %v2047
    %v2049 = vlaneseq
    %v2050 = vshrl.u32 %v2049, 7
    %v2051 = vsub.s32 %v2048, %v2050
    %v2052 = vrot.slane %v2037, %v2051
    %v2054 = vunpack.c.l.s4 1983009808
    %v2055 = vunpack.c.0.s8 %v2054
    %v2056 = vlaneseq
    %v2057 = vshrl.u32 %v2056, 7
    %v2058 = vsub.s32 %v2055, %v2057
    %v2059 = vrot.slane %v2045, %v2058
    %v2060 = vcombine.high %v2052, %v2052
    %v2061 = vcombine.high %v2059, %v2059
    %v2062 = vcombine.high %v2038, %v2038
    %v2064 = vunpack.c.l.s4 1983009808
    %v2065 = vunpack.c.0.s8 %v2064
    %v2066 = vlaneseq
    %v2067 = vshrl.u32 %v2066, 7
    %v2068 = vsub.s32 %v2065, %v2067
    %v2069 = vrot.slane %v2038, %v2068
    %v2071 = vunpack.c.l.s4 1983009808
    %v2072 = vunpack.c.0.s8 %v2071
    %v2073 = vlaneseq
    %v2074 = vshrl.u32 %v2073, 7
    %v2075 = vsub.s32 %v2072, %v2074
    %v2076 = vrot.slane %v2062, %v2075
    %v2077 = vcombine.high %v2069, %v2069
    %v2078 = vcombine.high %v2076, %v2076
    %v2079 = vcombine.high %v2039, %v2039
    %v2081 = vunpack.c.l.s4 1983009808
    %v2082 = vunpack.c.0.s8 %v2081
    %v2083 = vlaneseq
    %v2084 = vshrl.u32 %v2083, 7
    %v2085 = vsub.s32 %v2082, %v2084
    %v2086 = vrot.slane %v2039, %v2085
    %v2088 = vunpack.c.l.s4 1983009808
    %v2089 = vunpack.c.0.s8 %v2088
    %v2090 = vlaneseq
    %v2091 = vshrl.u32 %v2090, 7
    %v2092 = vsub.s32 %v2089, %v2091
    %v2093 = vrot.slane %v2079, %v2092
    %v2094 = vcombine.high %v2086, %v2086
    %v2095 = vcombine.high %v2093, %v2093
    %v2096 = vcombine.high %v2040, %v2040
    %v2098 = vunpack.c.l.s4 1983009808
    %v2099 = vunpack.c.0.s8 %v2098
    %v2100 = vlaneseq
    %v2101 = vshrl.u32 %v2100, 7
    %v2102 = vsub.s32 %v2099, %v2101
    %v2103 = vrot.slane %v2040, %v2102
    %v2105 = vunpack.c.l.s4 1983009808
    %v2106 = vunpack.c.0.s8 %v2105
    %v2107 = vlaneseq
    %v2108 = vshrl.u32 %v2107, 7
    %v2109 = vsub.s32 %v2106, %v2108
    %v2110 = vrot.slane %v2096, %v2109
    %v2111 = vcombine.high %v2103, %v2103
    %v2112 = vcombine.high %v2110, %v2110
    %2129 = vmatprep.subr.mxu0 %v166
    %2130 = vmatpush1.msra.mxu0 %v165
    %2131 = vmatprep.subr.mxu0 %v168
    %2132 = vmatpush1.msra.mxu0 %v167
    %2133 = vmatprep.subr.mxu0 %v170
    %2134 = vmatpush1.msra.mxu0 %v169
    %2135 = vmatprep.subr.mxu0 %v172
    %2136 = vmatpush1.msra.mxu0 %v171
    %2137 = vmatprep.subr.mxu0 %v174
    %2138 = vmatpush1.msra.mxu0 %v173
    %2139 = vmatprep.subr.mxu0 %v176
    %2140 = vmatpush1.msra.mxu0 %v175
    %2141 = vmatprep.subr.mxu0 %v178
    %2142 = vmatpush1.msra.mxu0 %v177
    %2143 = vmatprep.subr.mxu0 %v180
    %2144 = vmatpush1.msra.mxu0 %v179
    %2145 = vmatprep.subr.mxu0 %v182
    %2146 = vmatpush1.msra.mxu0 %v181
    %2147 = vmatprep.subr.mxu0 %v184
    %2148 = vmatpush1.msra.mxu0 %v183
    %2149 = vmatprep.subr.mxu0 %v186
    %2150 = vmatpush1.msra.mxu0 %v185
    %2151 = vmatprep.subr.mxu0 %v188
    %2152 = vmatpush1.msra.mxu0 %v187
    %2153 = vmatprep.subr.mxu0 %v190
    %2154 = vmatpush1.msra.mxu0 %v189
    %2155 = vmatprep.subr.mxu0 %v192
    %2156 = vmatpush1.msra.mxu0 %v191
    %2157 = vmatprep.subr.mxu0 %v194
    %2158 = vmatpush1.msra.mxu0 %v193
    %2159 = vmatprep.subr.mxu0 %v196
    %2160 = vmatpush1.msra.mxu0 %v195
    %2161 = vmatprep.subr.mxu0 %v198
    %2162 = vmatpush1.msra.mxu0 %v197
    %2163 = vmatprep.subr.mxu0 %v200
    %2164 = vmatpush1.msra.mxu0 %v199
    %2165 = vmatprep.subr.mxu0 %v202
    %2166 = vmatpush1.msra.mxu0 %v201
    %2167 = vmatprep.subr.mxu0 %v204
    %2168 = vmatpush1.msra.mxu0 %v203
    %2169 = vmatprep.subr.mxu0 %v206
    %2170 = vmatpush1.msra.mxu0 %v205
    %2171 = vmatprep.subr.mxu0 %v208
    %2172 = vmatpush1.msra.mxu0 %v207
    %2173 = vmatprep.subr.mxu0 %v210
    %2174 = vmatpush1.msra.mxu0 %v209
    %2175 = vmatprep.subr.mxu0 %v212
    %2176 = vmatpush1.msra.mxu0 %v211
    %2177 = vmatprep.subr.mxu0 %v214
    %2178 = vmatpush1.msra.mxu0 %v213
    %2179 = vmatprep.subr.mxu0 %v216
    %2180 = vmatpush1.msra.mxu0 %v215
    %2181 = vmatprep.subr.mxu0 %v218
    %2182 = vmatpush1.msra.mxu0 %v217
    %2183 = vmatprep.subr.mxu0 %v220
    %2184 = vmatpush1.msra.mxu0 %v219
    %2185 = vmatprep.subr.mxu0 %v222
    %2186 = vmatpush1.msra.mxu0 %v221
    %2187 = vmatprep.subr.mxu0 %v224
    %2188 = vmatpush1.msra.mxu0 %v223
    %2189 = vmatprep.subr.mxu0 %v226
    %2190 = vmatpush1.msra.mxu0 %v225
    %2191 = vmatprep.subr.mxu0 %v228
    %2192 = vmatpush1.msra.mxu0 %v227
    %2193 = vmatprep.mubr.f32.mxu0 %v2060
    %2194 = vmatmul.mubr.f32.gmra.mrb[0].mxu0 %v2052
    %v2195 = vpop.f32.mrb[0].mxu0
    %v2196 = vadd.f32 %v686, %v2195
    %v2197 = vpop.f32.mrb[0].mxu0
    %v2198 = vadd.f32 %v690, %v2197
    %2199 = vdwg.mxu0
    %2200 = vmatprep.subr.mxu0 %v230
    %2201 = vmatpush1.msra.mxu0 %v229
    %2202 = vmatprep.subr.mxu0 %v232
    %2203 = vmatpush1.msra.mxu0 %v231
    %2204 = vmatprep.subr.mxu0 %v234
    %2205 = vmatpush1.msra.mxu0 %v233
    %2206 = vmatprep.subr.mxu0 %v236
    %2207 = vmatpush1.msra.mxu0 %v235
    %2208 = vmatprep.subr.mxu0 %v238
    %2209 = vmatpush1.msra.mxu0 %v237
    %2210 = vmatprep.subr.mxu0 %v240
    %2211 = vmatpush1.msra.mxu0 %v239
    %2212 = vmatprep.subr.mxu0 %v242
    %2213 = vmatpush1.msra.mxu0 %v241
    %2214 = vmatprep.subr.mxu0 %v244
    %2215 = vmatpush1.msra.mxu0 %v243
    %2216 = vmatprep.subr.mxu0 %v246
    %2217 = vmatpush1.msra.mxu0 %v245
    %2218 = vmatprep.subr.mxu0 %v248
    %2219 = vmatpush1.msra.mxu0 %v247
    %2220 = vmatprep.subr.mxu0 %v250
    %2221 = vmatpush1.msra.mxu0 %v249
    %2222 = vmatprep.subr.mxu0 %v252
    %2223 = vmatpush1.msra.mxu0 %v251
    %2224 = vmatprep.subr.mxu0 %v254
    %2225 = vmatpush1.msra.mxu0 %v253
    %2226 = vmatprep.subr.mxu0 %v256
    %2227 = vmatpush1.msra.mxu0 %v255
    %2228 = vmatprep.subr.mxu0 %v258
    %2229 = vmatpush1.msra.mxu0 %v257
    %2230 = vmatprep.subr.mxu0 %v260
    %2231 = vmatpush1.msra.mxu0 %v259
    %2232 = vmatprep.subr.mxu0 %v262
    %2233 = vmatpush1.msra.mxu0 %v261
    %2234 = vmatprep.subr.mxu0 %v264
    %2235 = vmatpush1.msra.mxu0 %v263
    %2236 = vmatprep.subr.mxu0 %v266
    %2237 = vmatpush1.msra.mxu0 %v265
    %2238 = vmatprep.subr.mxu0 %v268
    %2239 = vmatpush1.msra.mxu0 %v267
    %2240 = vmatprep.subr.mxu0 %v270
    %2241 = vmatpush1.msra.mxu0 %v269
    %2242 = vmatprep.subr.mxu0 %v272
    %2243 = vmatpush1.msra.mxu0 %v271
    %2244 = vmatprep.subr.mxu0 %v274
    %2245 = vmatpush1.msra.mxu0 %v273
    %2246 = vmatprep.subr.mxu0 %v276
    %2247 = vmatpush1.msra.mxu0 %v275
    %2248 = vmatprep.subr.mxu0 %v278
    %2249 = vmatpush1.msra.mxu0 %v277
    %2250 = vmatprep.subr.mxu0 %v280
    %2251 = vmatpush1.msra.mxu0 %v279
    %2252 = vmatprep.subr.mxu0 %v282
    %2253 = vmatpush1.msra.mxu0 %v281
    %2254 = vmatprep.subr.mxu0 %v284
    %2255 = vmatpush1.msra.mxu0 %v283
    %2256 = vmatprep.subr.mxu0 %v286
    %2257 = vmatpush1.msra.mxu0 %v285
    %2258 = vmatprep.subr.mxu0 %v288
    %2259 = vmatpush1.msra.mxu0 %v287
    %2260 = vmatprep.subr.mxu0 %v290
    %2261 = vmatpush1.msra.mxu0 %v289
    %2262 = vmatprep.subr.mxu0 %v292
    %2263 = vmatpush1.msra.mxu0 %v291
    %2264 = vmatprep.mubr.f32.mxu0 %v2061
    %2265 = vmatmul.mubr.f32.gmra.mrb[0].mxu0 %v2059
    %v2266 = vpop.f32.mrb[0].mxu0
    %v2267 = vadd.f32 %v2196, %v2266
    %v2268 = vpop.f32.mrb[0].mxu0
    %v2269 = vadd.f32 %v2198, %v2268
    %2270 = vdwg.mxu0
    %2271 = vmatprep.subr.mxu0 %v294
    %2272 = vmatpush1.msra.mxu0 %v293
    %2273 = vmatprep.subr.mxu0 %v296
    %2274 = vmatpush1.msra.mxu0 %v295
    %2275 = vmatprep.subr.mxu0 %v298
    %2276 = vmatpush1.msra.mxu0 %v297
    %2277 = vmatprep.subr.mxu0 %v300
    %2278 = vmatpush1.msra.mxu0 %v299
    %2279 = vmatprep.subr.mxu0 %v302
    %2280 = vmatpush1.msra.mxu0 %v301
    %2281 = vmatprep.subr.mxu0 %v304
    %2282 = vmatpush1.msra.mxu0 %v303
    %2283 = vmatprep.subr.mxu0 %v306
    %2284 = vmatpush1.msra.mxu0 %v305
    %2285 = vmatprep.subr.mxu0 %v308
    %2286 = vmatpush1.msra.mxu0 %v307
    %2287 = vmatprep.subr.mxu0 %v310
    %2288 = vmatpush1.msra.mxu0 %v309
    %2289 = vmatprep.subr.mxu0 %v312
    %2290 = vmatpush1.msra.mxu0 %v311
    %2291 = vmatprep.subr.mxu0 %v314
    %2292 = vmatpush1.msra.mxu0 %v313
    %2293 = vmatprep.subr.mxu0 %v316
    %2294 = vmatpush1.msra.mxu0 %v315
    %2295 = vmatprep.subr.mxu0 %v318
    %2296 = vmatpush1.msra.mxu0 %v317
    %2297 = vmatprep.subr.mxu0 %v320
    %2298 = vmatpush1.msra.mxu0 %v319
    %2299 = vmatprep.subr.mxu0 %v322
    %2300 = vmatpush1.msra.mxu0 %v321
    %2301 = vmatprep.subr.mxu0 %v324
    %2302 = vmatpush1.msra.mxu0 %v323
    %2303 = vmatprep.subr.mxu0 %v326
    %2304 = vmatpush1.msra.mxu0 %v325
    %2305 = vmatprep.subr.mxu0 %v328
    %2306 = vmatpush1.msra.mxu0 %v327
    %2307 = vmatprep.subr.mxu0 %v330
    %2308 = vmatpush1.msra.mxu0 %v329
    %2309 = vmatprep.subr.mxu0 %v332
    %2310 = vmatpush1.msra.mxu0 %v331
    %2311 = vmatprep.subr.mxu0 %v334
    %2312 = vmatpush1.msra.mxu0 %v333
    %2313 = vmatprep.subr.mxu0 %v336
    %2314 = vmatpush1.msra.mxu0 %v335
    %2315 = vmatprep.subr.mxu0 %v338
    %2316 = vmatpush1.msra.mxu0 %v337
    %2317 = vmatprep.subr.mxu0 %v340
    %2318 = vmatpush1.msra.mxu0 %v339
    %2319 = vmatprep.subr.mxu0 %v342
    %2320 = vmatpush1.msra.mxu0 %v341
    %2321 = vmatprep.subr.mxu0 %v344
    %2322 = vmatpush1.msra.mxu0 %v343
    %2323 = vmatprep.subr.mxu0 %v346
    %2324 = vmatpush1.msra.mxu0 %v345
    %2325 = vmatprep.subr.mxu0 %v348
    %2326 = vmatpush1.msra.mxu0 %v347
    %2327 = vmatprep.subr.mxu0 %v350
    %2328 = vmatpush1.msra.mxu0 %v349
    %2329 = vmatprep.subr.mxu0 %v352
    %2330 = vmatpush1.msra.mxu0 %v351
    %2331 = vmatprep.subr.mxu0 %v354
    %2332 = vmatpush1.msra.mxu0 %v353
    %2333 = vmatprep.subr.mxu0 %v356
    %2334 = vmatpush1.msra.mxu0 %v355
    %2335 = vmatprep.mubr.f32.mxu0 %v2077
    %2336 = vmatmul.mubr.f32.gmra.mrb[0].mxu0 %v2069
    %v2337 = vpop.f32.mrb[0].mxu0
    %v2338 = vadd.f32 %v2267, %v2337
    %v2339 = vpop.f32.mrb[0].mxu0
    %v2340 = vadd.f32 %v2269, %v2339
    %2341 = vdwg.mxu0
    %2342 = vmatprep.subr.mxu0 %v358
    %2343 = vmatpush1.msra.mxu0 %v357
    %2344 = vmatprep.subr.mxu0 %v360
    %2345 = vmatpush1.msra.mxu0 %v359
    %2346 = vmatprep.subr.mxu0 %v362
    %2347 = vmatpush1.msra.mxu0 %v361
    %2348 = vmatprep.subr.mxu0 %v364
    %2349 = vmatpush1.msra.mxu0 %v363
    %2350 = vmatprep.subr.mxu0 %v366
    %2351 = vmatpush1.msra.mxu0 %v365
    %2352 = vmatprep.subr.mxu0 %v368
    %2353 = vmatpush1.msra.mxu0 %v367
    %2354 = vmatprep.subr.mxu0 %v370
    %2355 = vmatpush1.msra.mxu0 %v369
    %2356 = vmatprep.subr.mxu0 %v372
    %2357 = vmatpush1.msra.mxu0 %v371
    %2358 = vmatprep.subr.mxu0 %v374
    %2359 = vmatpush1.msra.mxu0 %v373
    %2360 = vmatprep.subr.mxu0 %v376
    %2361 = vmatpush1.msra.mxu0 %v375
    %2362 = vmatprep.subr.mxu0 %v378
    %2363 = vmatpush1.msra.mxu0 %v377
    %2364 = vmatprep.subr.mxu0 %v380
    %2365 = vmatpush1.msra.mxu0 %v379
    %2366 = vmatprep.subr.mxu0 %v382
    %2367 = vmatpush1.msra.mxu0 %v381
    %2368 = vmatprep.subr.mxu0 %v384
    %2369 = vmatpush1.msra.mxu0 %v383
    %2370 = vmatprep.subr.mxu0 %v386
    %2371 = vmatpush1.msra.mxu0 %v385
    %2372 = vmatprep.subr.mxu0 %v388
    %2373 = vmatpush1.msra.mxu0 %v387
    %2374 = vmatprep.subr.mxu0 %v390
    %2375 = vmatpush1.msra.mxu0 %v389
    %2376 = vmatprep.subr.mxu0 %v392
    %2377 = vmatpush1.msra.mxu0 %v391
    %2378 = vmatprep.subr.mxu0 %v394
    %2379 = vmatpush1.msra.mxu0 %v393
    %2380 = vmatprep.subr.mxu0 %v396
    %2381 = vmatpush1.msra.mxu0 %v395
    %2382 = vmatprep.subr.mxu0 %v398
    %2383 = vmatpush1.msra.mxu0 %v397
    %2384 = vmatprep.subr.mxu0 %v400
    %2385 = vmatpush1.msra.mxu0 %v399
    %2386 = vmatprep.subr.mxu0 %v402
    %2387 = vmatpush1.msra.mxu0 %v401
    %2388 = vmatprep.subr.mxu0 %v404
    %2389 = vmatpush1.msra.mxu0 %v403
    %2390 = vmatprep.subr.mxu0 %v406
    %2391 = vmatpush1.msra.mxu0 %v405
    %2392 = vmatprep.subr.mxu0 %v408
    %2393 = vmatpush1.msra.mxu0 %v407
    %2394 = vmatprep.subr.mxu0 %v410
    %2395 = vmatpush1.msra.mxu0 %v409
    %2396 = vmatprep.subr.mxu0 %v412
    %2397 = vmatpush1.msra.mxu0 %v411
    %2398 = vmatprep.subr.mxu0 %v414
    %2399 = vmatpush1.msra.mxu0 %v413
    %2400 = vmatprep.subr.mxu0 %v416
    %2401 = vmatpush1.msra.mxu0 %v415
    %2402 = vmatprep.subr.mxu0 %v418
    %2403 = vmatpush1.msra.mxu0 %v417
    %2404 = vmatprep.subr.mxu0 %v420
    %2405 = vmatpush1.msra.mxu0 %v419
    %2406 = vmatprep.mubr.f32.mxu0 %v2078
    %2407 = vmatmul.mubr.f32.gmra.mrb[0].mxu0 %v2076
    %v2408 = vpop.f32.mrb[0].mxu0
    %v2409 = vadd.f32 %v2338, %v2408
    %v2410 = vpop.f32.mrb[0].mxu0
    %v2411 = vadd.f32 %v2340, %v2410
    %2412 = vdwg.mxu0
    %2413 = vmatprep.subr.mxu0 %v422
    %2414 = vmatpush1.msra.mxu0 %v421
    %2415 = vmatprep.subr.mxu0 %v424
    %2416 = vmatpush1.msra.mxu0 %v423
    %2417 = vmatprep.subr.mxu0 %v426
    %2418 = vmatpush1.msra.mxu0 %v425
    %2419 = vmatprep.subr.mxu0 %v428
    %2420 = vmatpush1.msra.mxu0 %v427
    %2421 = vmatprep.subr.mxu0 %v430
    %2422 = vmatpush1.msra.mxu0 %v429
    %2423 = vmatprep.subr.mxu0 %v432
    %2424 = vmatpush1.msra.mxu0 %v431
    %2425 = vmatprep.subr.mxu0 %v434
    %2426 = vmatpush1.msra.mxu0 %v433
    %2427 = vmatprep.subr.mxu0 %v436
    %2428 = vmatpush1.msra.mxu0 %v435
    %2429 = vmatprep.subr.mxu0 %v438
    %2430 = vmatpush1.msra.mxu0 %v437
    %2431 = vmatprep.subr.mxu0 %v440
    %2432 = vmatpush1.msra.mxu0 %v439
    %2433 = vmatprep.subr.mxu0 %v442
    %2434 = vmatpush1.msra.mxu0 %v441
    %2435 = vmatprep.subr.mxu0 %v444
    %2436 = vmatpush1.msra.mxu0 %v443
    %2437 = vmatprep.subr.mxu0 %v446
    %2438 = vmatpush1.msra.mxu0 %v445
    %2439 = vmatprep.subr.mxu0 %v448
    %2440 = vmatpush1.msra.mxu0 %v447
    %2441 = vmatprep.subr.mxu0 %v450
    %2442 = vmatpush1.msra.mxu0 %v449
    %2443 = vmatprep.subr.mxu0 %v452
    %2444 = vmatpush1.msra.mxu0 %v451
    %2445 = vmatprep.subr.mxu0 %v454
    %2446 = vmatpush1.msra.mxu0 %v453
    %2447 = vmatprep.subr.mxu0 %v456
    %2448 = vmatpush1.msra.mxu0 %v455
    %2449 = vmatprep.subr.mxu0 %v458
    %2450 = vmatpush1.msra.mxu0 %v457
    %2451 = vmatprep.subr.mxu0 %v460
    %2452 = vmatpush1.msra.mxu0 %v459
    %2453 = vmatprep.subr.mxu0 %v462
    %2454 = vmatpush1.msra.mxu0 %v461
    %2455 = vmatprep.subr.mxu0 %v464
    %2456 = vmatpush1.msra.mxu0 %v463
    %2457 = vmatprep.subr.mxu0 %v466
    %2458 = vmatpush1.msra.mxu0 %v465
    %2459 = vmatprep.subr.mxu0 %v468
    %2460 = vmatpush1.msra.mxu0 %v467
    %2461 = vmatprep.subr.mxu0 %v470
    %2462 = vmatpush1.msra.mxu0 %v469
    %2463 = vmatprep.subr.mxu0 %v472
    %2464 = vmatpush1.msra.mxu0 %v471
    %2465 = vmatprep.subr.mxu0 %v474
    %2466 = vmatpush1.msra.mxu0 %v473
    %2467 = vmatprep.subr.mxu0 %v476
    %2468 = vmatpush1.msra.mxu0 %v475
    %2469 = vmatprep.subr.mxu0 %v478
    %2470 = vmatpush1.msra.mxu0 %v477
    %2471 = vmatprep.subr.mxu0 %v480
    %2472 = vmatpush1.msra.mxu0 %v479
    %2473 = vmatprep.subr.mxu0 %v482
    %2474 = vmatpush1.msra.mxu0 %v481
    %2475 = vmatprep.subr.mxu0 %v484
    %2476 = vmatpush1.msra.mxu0 %v483
    %2477 = vmatprep.mubr.f32.mxu0 %v2094
    %2478 = vmatmul.mubr.f32.gmra.mrb[0].mxu0 %v2086
    %v2479 = vpop.f32.mrb[0].mxu0
    %v2480 = vadd.f32 %v2409, %v2479
    %v2481 = vpop.f32.mrb[0].mxu0
    %v2482 = vadd.f32 %v2411, %v2481
    %2483 = vdwg.mxu0
    %2484 = vmatprep.subr.mxu0 %v486
    %2485 = vmatpush1.msra.mxu0 %v485
    %2486 = vmatprep.subr.mxu0 %v488
    %2487 = vmatpush1.msra.mxu0 %v487
    %2488 = vmatprep.subr.mxu0 %v490
    %2489 = vmatpush1.msra.mxu0 %v489
    %2490 = vmatprep.subr.mxu0 %v492
    %2491 = vmatpush1.msra.mxu0 %v491
    %2492 = vmatprep.subr.mxu0 %v494
    %2493 = vmatpush1.msra.mxu0 %v493
    %2494 = vmatprep.subr.mxu0 %v496
    %2495 = vmatpush1.msra.mxu0 %v495
    %2496 = vmatprep.subr.mxu0 %v498
    %2497 = vmatpush1.msra.mxu0 %v497
    %2498 = vmatprep.subr.mxu0 %v500
    %2499 = vmatpush1.msra.mxu0 %v499
    %2500 = vmatprep.subr.mxu0 %v502
    %2501 = vmatpush1.msra.mxu0 %v501
    %2502 = vmatprep.subr.mxu0 %v504
    %2503 = vmatpush1.msra.mxu0 %v503
    %2504 = vmatprep.subr.mxu0 %v506
    %2505 = vmatpush1.msra.mxu0 %v505
    %2506 = vmatprep.subr.mxu0 %v508
    %2507 = vmatpush1.msra.mxu0 %v507
    %2508 = vmatprep.subr.mxu0 %v510
    %2509 = vmatpush1.msra.mxu0 %v509
    %2510 = vmatprep.subr.mxu0 %v512
    %2511 = vmatpush1.msra.mxu0 %v511
    %2512 = vmatprep.subr.mxu0 %v514
    %2513 = vmatpush1.msra.mxu0 %v513
    %2514 = vmatprep.subr.mxu0 %v516
    %2515 = vmatpush1.msra.mxu0 %v515
    %2516 = vmatprep.subr.mxu0 %v518
    %2517 = vmatpush1.msra.mxu0 %v517
    %2518 = vmatprep.subr.mxu0 %v520
    %2519 = vmatpush1.msra.mxu0 %v519
    %2520 = vmatprep.subr.mxu0 %v522
    %2521 = vmatpush1.msra.mxu0 %v521
    %2522 = vmatprep.subr.mxu0 %v524
    %2523 = vmatpush1.msra.mxu0 %v523
    %2524 = vmatprep.subr.mxu0 %v526
    %2525 = vmatpush1.msra.mxu0 %v525
    %2526 = vmatprep.subr.mxu0 %v528
    %2527 = vmatpush1.msra.mxu0 %v527
    %2528 = vmatprep.subr.mxu0 %v530
    %2529 = vmatpush1.msra.mxu0 %v529
    %2530 = vmatprep.subr.mxu0 %v532
    %2531 = vmatpush1.msra.mxu0 %v531
    %2532 = vmatprep.subr.mxu0 %v534
    %2533 = vmatpush1.msra.mxu0 %v533
    %2534 = vmatprep.subr.mxu0 %v536
    %2535 = vmatpush1.msra.mxu0 %v535
    %2536 = vmatprep.subr.mxu0 %v538
    %2537 = vmatpush1.msra.mxu0 %v537
    %2538 = vmatprep.subr.mxu0 %v540
    %2539 = vmatpush1.msra.mxu0 %v539
    %2540 = vmatprep.subr.mxu0 %v542
    %2541 = vmatpush1.msra.mxu0 %v541
    %2542 = vmatprep.subr.mxu0 %v544
    %2543 = vmatpush1.msra.mxu0 %v543
    %2544 = vmatprep.subr.mxu0 %v546
    %2545 = vmatpush1.msra.mxu0 %v545
    %2546 = vmatprep.subr.mxu0 %v548
    %2547 = vmatpush1.msra.mxu0 %v547
    %2548 = vmatprep.mubr.f32.mxu0 %v2095
    %2549 = vmatmul.mubr.f32.gmra.mrb[0].mxu0 %v2093
    %v2550 = vpop.f32.mrb[0].mxu0
    %v2551 = vadd.f32 %v2480, %v2550
    %v2552 = vpop.f32.mrb[0].mxu0
    %v2553 = vadd.f32 %v2482, %v2552
    %2554 = vdwg.mxu0
    %2555 = vmatprep.subr.mxu0 %v550
    %2556 = vmatpush1.msra.mxu0 %v549
    %2557 = vmatprep.subr.mxu0 %v552
    %2558 = vmatpush1.msra.mxu0 %v551
    %2559 = vmatprep.subr.mxu0 %v554
    %2560 = vmatpush1.msra.mxu0 %v553
    %2561 = vmatprep.subr.mxu0 %v556
    %2562 = vmatpush1.msra.mxu0 %v555
    %2563 = vmatprep.subr.mxu0 %v558
    %2564 = vmatpush1.msra.mxu0 %v557
    %2565 = vmatprep.subr.mxu0 %v560
    %2566 = vmatpush1.msra.mxu0 %v559
    %2567 = vmatprep.subr.mxu0 %v562
    %2568 = vmatpush1.msra.mxu0 %v561
    %2569 = vmatprep.subr.mxu0 %v564
    %2570 = vmatpush1.msra.mxu0 %v563
    %2571 = vmatprep.subr.mxu0 %v566
    %2572 = vmatpush1.msra.mxu0 %v565
    %2573 = vmatprep.subr.mxu0 %v568
    %2574 = vmatpush1.msra.mxu0 %v567
    %2575 = vmatprep.subr.mxu0 %v570
    %2576 = vmatpush1.msra.mxu0 %v569
    %2577 = vmatprep.subr.mxu0 %v572
    %2578 = vmatpush1.msra.mxu0 %v571
    %2579 = vmatprep.subr.mxu0 %v574
    %2580 = vmatpush1.msra.mxu0 %v573
    %2581 = vmatprep.subr.mxu0 %v576
    %2582 = vmatpush1.msra.mxu0 %v575
    %2583 = vmatprep.subr.mxu0 %v578
    %2584 = vmatpush1.msra.mxu0 %v577
    %2585 = vmatprep.subr.mxu0 %v580
    %2586 = vmatpush1.msra.mxu0 %v579
    %2587 = vmatprep.subr.mxu0 %v582
    %2588 = vmatpush1.msra.mxu0 %v581
    %2589 = vmatprep.subr.mxu0 %v584
    %2590 = vmatpush1.msra.mxu0 %v583
    %2591 = vmatprep.subr.mxu0 %v586
    %2592 = vmatpush1.msra.mxu0 %v585
    %2593 = vmatprep.subr.mxu0 %v588
    %2594 = vmatpush1.msra.mxu0 %v587
    %2595 = vmatprep.subr.mxu0 %v590
    %2596 = vmatpush1.msra.mxu0 %v589
    %2597 = vmatprep.subr.mxu0 %v592
    %2598 = vmatpush1.msra.mxu0 %v591
    %2599 = vmatprep.subr.mxu0 %v594
    %2600 = vmatpush1.msra.mxu0 %v593
    %2601 = vmatprep.subr.mxu0 %v596
    %2602 = vmatpush1.msra.mxu0 %v595
    %2603 = vmatprep.subr.mxu0 %v598
    %2604 = vmatpush1.msra.mxu0 %v597
    %2605 = vmatprep.subr.mxu0 %v600
    %2606 = vmatpush1.msra.mxu0 %v599
    %2607 = vmatprep.subr.mxu0 %v602
    %2608 = vmatpush1.msra.mxu0 %v601
    %2609 = vmatprep.subr.mxu0 %v604
    %2610 = vmatpush1.msra.mxu0 %v603
    %2611 = vmatprep.subr.mxu0 %v606
    %2612 = vmatpush1.msra.mxu0 %v605
    %2613 = vmatprep.subr.mxu0 %v608
    %2614 = vmatpush1.msra.mxu0 %v607
    %2615 = vmatprep.subr.mxu0 %v610
    %2616 = vmatpush1.msra.mxu0 %v609
    %2617 = vmatprep.subr.mxu0 %v612
    %2618 = vmatpush1.msra.mxu0 %v611
    %2619 = vmatprep.mubr.f32.mxu0 %v2111
    %2620 = vmatmul.mubr.f32.gmra.mrb[0].mxu0 %v2103
    %v2621 = vpop.f32.mrb[0].mxu0
    %v2622 = vadd.f32 %v2551, %v2621
    %v2623 = vpop.f32.mrb[0].mxu0
    %v2624 = vadd.f32 %v2553, %v2623
    %2625 = vdwg.mxu0
    %2626 = vmatprep.subr.mxu0 %v614
    %2627 = vmatpush1.msra.mxu0 %v613
    %2628 = vmatprep.subr.mxu0 %v616
    %2629 = vmatpush1.msra.mxu0 %v615
    %2630 = vmatprep.subr.mxu0 %v618
    %2631 = vmatpush1.msra.mxu0 %v617
    %2632 = vmatprep.subr.mxu0 %v620
    %2633 = vmatpush1.msra.mxu0 %v619
    %2634 = vmatprep.subr.mxu0 %v622
    %2635 = vmatpush1.msra.mxu0 %v621
    %2636 = vmatprep.subr.mxu0 %v624
    %2637 = vmatpush1.msra.mxu0 %v623
    %2638 = vmatprep.subr.mxu0 %v626
    %2639 = vmatpush1.msra.mxu0 %v625
    %2640 = vmatprep.subr.mxu0 %v628
    %2641 = vmatpush1.msra.mxu0 %v627
    %2642 = vmatprep.subr.mxu0 %v630
    %2643 = vmatpush1.msra.mxu0 %v629
    %2644 = vmatprep.subr.mxu0 %v632
    %2645 = vmatpush1.msra.mxu0 %v631
    %2646 = vmatprep.subr.mxu0 %v634
    %2647 = vmatpush1.msra.mxu0 %v633
    %2648 = vmatprep.subr.mxu0 %v636
    %2649 = vmatpush1.msra.mxu0 %v635
    %2650 = vmatprep.subr.mxu0 %v638
    %2651 = vmatpush1.msra.mxu0 %v637
    %2652 = vmatprep.subr.mxu0 %v640
    %2653 = vmatpush1.msra.mxu0 %v639
    %2654 = vmatprep.subr.mxu0 %v642
    %2655 = vmatpush1.msra.mxu0 %v641
    %2656 = vmatprep.subr.mxu0 %v644
    %2657 = vmatpush1.msra.mxu0 %v643
    %2658 = vmatprep.subr.mxu0 %v646
    %2659 = vmatpush1.msra.mxu0 %v645
    %2660 = vmatprep.subr.mxu0 %v648
    %2661 = vmatpush1.msra.mxu0 %v647
    %2662 = vmatprep.subr.mxu0 %v650
    %2663 = vmatpush1.msra.mxu0 %v649
    %2664 = vmatprep.subr.mxu0 %v652
    %2665 = vmatpush1.msra.mxu0 %v651
    %2666 = vmatprep.subr.mxu0 %v654
    %2667 = vmatpush1.msra.mxu0 %v653
    %2668 = vmatprep.subr.mxu0 %v656
    %2669 = vmatpush1.msra.mxu0 %v655
    %2670 = vmatprep.subr.mxu0 %v658
    %2671 = vmatpush1.msra.mxu0 %v657
    %2672 = vmatprep.subr.mxu0 %v660
    %2673 = vmatpush1.msra.mxu0 %v659
    %2674 = vmatprep.subr.mxu0 %v662
    %2675 = vmatpush1.msra.mxu0 %v661
    %2676 = vmatprep.subr.mxu0 %v664
    %2677 = vmatpush1.msra.mxu0 %v663
    %2678 = vmatprep.subr.mxu0 %v666
    %2679 = vmatpush1.msra.mxu0 %v665
    %2680 = vmatprep.subr.mxu0 %v668
    %2681 = vmatpush1.msra.mxu0 %v667
    %2682 = vmatprep.subr.mxu0 %v670
    %2683 = vmatpush1.msra.mxu0 %v669
    %2684 = vmatprep.subr.mxu0 %v672
    %2685 = vmatpush1.msra.mxu0 %v671
    %2686 = vmatprep.subr.mxu0 %v674
    %2687 = vmatpush1.msra.mxu0 %v673
    %2688 = vmatprep.subr.mxu0 %v676
    %2689 = vmatpush1.msra.mxu0 %v675
    %2690 = vmatprep.mubr.f32.mxu0 %v2112
    %2691 = vmatmul.mubr.f32.gmra.mrb[0].mxu0 %v2110
    %v2692 = vpop.f32.mrb[0].mxu0
    %v2693 = vadd.f32 %v2622, %v2692
    %v2694 = vpop.f32.mrb[0].mxu0
    %v2695 = vadd.f32 %v2624, %v2694
    %2696 = vdwg.mxu0
    %v2697 = vmax.f32 %v2693, 0.0
    %v2698 = vmax.f32 %v2695, 0.0
    %v2701 = vcombine.low %v2697, %v2698
    %v2703 = vunpack.c.l.s4 1983009808
    %v2704 = vunpack.c.0.s8 %v2703
    %v2705 = vlaneseq
    %v2706 = vshrl.u32 %v2705, 7
    %v2707 = vsub.s32 %v2704, %v2706
    %v2708 = vrot.slane %v2701, %v2707
    %2710 = vst [vmem:[#allocation2 + $0x8] sm:$0xf] %v2708
    %v2711 = vld [vmem:[%s0 + $0x30] sm:$0xff]
    %v2712 = vld [vmem:[%s0 + $0x38] sm:$0xff]
    %v2713 = vld [vmem:[%s0 + $0x40] sm:$0xff]
    %v2714 = vld [vmem:[%s0 + $0x48] sm:$0xff]
    %v2719 = vcombine.high %v2711, %v2711
    %v2721 = vunpack.c.l.s4 1983009808
    %v2722 = vunpack.c.0.s8 %v2721
    %v2723 = vlaneseq
    %v2724 = vshrl.u32 %v2723, 7
    %v2725 = vsub.s32 %v2722, %v2724
    %v2726 = vrot.slane %v2711, %v2725
    %v2728 = vunpack.c.l.s4 1983009808
    %v2729 = vunpack.c.0.s8 %v2728
    %v2730 = vlaneseq
    %v2731 = vshrl.u32 %v2730, 7
    %v2732 = vsub.s32 %v2729, %v2731
    %v2733 = vrot.slane %v2719, %v2732
    %v2734 = vcombine.high %v2726, %v2726
    %v2735 = vcombine.high %v2733, %v2733
    %v2736 = vcombine.high %v2712, %v2712
    %v2738 = vunpack.c.l.s4 1983009808
    %v2739 = vunpack.c.0.s8 %v2738
    %v2740 = vlaneseq
    %v2741 = vshrl.u32 %v2740, 7
    %v2742 = vsub.s32 %v2739, %v2741
    %v2743 = vrot.slane %v2712, %v2742
    %v2745 = vunpack.c.l.s4 1983009808
    %v2746 = vunpack.c.0.s8 %v2745
    %v2747 = vlaneseq
    %v2748 = vshrl.u32 %v2747, 7
    %v2749 = vsub.s32 %v2746, %v2748
    %v2750 = vrot.slane %v2736, %v2749
    %v2751 = vcombine.high %v2743, %v2743
    %v2752 = vcombine.high %v2750, %v2750
    %v2753 = vcombine.high %v2713, %v2713
    %v2755 = vunpack.c.l.s4 1983009808
    %v2756 = vunpack.c.0.s8 %v2755
    %v2757 = vlaneseq
    %v2758 = vshrl.u32 %v2757, 7
    %v2759 = vsub.s32 %v2756, %v2758
    %v2760 = vrot.slane %v2713, %v2759
    %v2762 = vunpack.c.l.s4 1983009808
    %v2763 = vunpack.c.0.s8 %v2762
    %v2764 = vlaneseq
    %v2765 = vshrl.u32 %v2764, 7
    %v2766 = vsub.s32 %v2763, %v2765
    %v2767 = vrot.slane %v2753, %v2766
    %v2768 = vcombine.high %v2760, %v2760
    %v2769 = vcombine.high %v2767, %v2767
    %v2770 = vcombine.high %v2714, %v2714
    %v2772 = vunpack.c.l.s4 1983009808
    %v2773 = vunpack.c.0.s8 %v2772
    %v2774 = vlaneseq
    %v2775 = vshrl.u32 %v2774, 7
    %v2776 = vsub.s32 %v2773, %v2775
    %v2777 = vrot.slane %v2714, %v2776
    %v2779 = vunpack.c.l.s4 1983009808
    %v2780 = vunpack.c.0.s8 %v2779
    %v2781 = vlaneseq
    %v2782 = vshrl.u32 %v2781, 7
    %v2783 = vsub.s32 %v2780, %v2782
    %v2784 = vrot.slane %v2770, %v2783
    %v2785 = vcombine.high %v2777, %v2777
    %v2786 = vcombine.high %v2784, %v2784
    %2803 = vmatprep.subr.mxu0 %v166
    %2804 = vmatpush1.msra.mxu0 %v165
    %2805 = vmatprep.subr.mxu0 %v168
    %2806 = vmatpush1.msra.mxu0 %v167
    %2807 = vmatprep.subr.mxu0 %v170
    %2808 = vmatpush1.msra.mxu0 %v169
    %2809 = vmatprep.subr.mxu0 %v172
    %2810 = vmatpush1.msra.mxu0 %v171
    %2811 = vmatprep.subr.mxu0 %v174
    %2812 = vmatpush1.msra.mxu0 %v173
    %2813 = vmatprep.subr.mxu0 %v176
    %2814 = vmatpush1.msra.mxu0 %v175
    %2815 = vmatprep.subr.mxu0 %v178
    %2816 = vmatpush1.msra.mxu0 %v177
    %2817 = vmatprep.subr.mxu0 %v180
    %2818 = vmatpush1.msra.mxu0 %v179
    %2819 = vmatprep.subr.mxu0 %v182
    %2820 = vmatpush1.msra.mxu0 %v181
    %2821 = vmatprep.subr.mxu0 %v184
    %2822 = vmatpush1.msra.mxu0 %v183
    %2823 = vmatprep.subr.mxu0 %v186
    %2824 = vmatpush1.msra.mxu0 %v185
    %2825 = vmatprep.subr.mxu0 %v188
    %2826 = vmatpush1.msra.mxu0 %v187
    %2827 = vmatprep.subr.mxu0 %v190
    %2828 = vmatpush1.msra.mxu0 %v189
    %2829 = vmatprep.subr.mxu0 %v192
    %2830 = vmatpush1.msra.mxu0 %v191
    %2831 = vmatprep.subr.mxu0 %v194
    %2832 = vmatpush1.msra.mxu0 %v193
    %2833 = vmatprep.subr.mxu0 %v196
    %2834 = vmatpush1.msra.mxu0 %v195
    %2835 = vmatprep.subr.mxu0 %v198
    %2836 = vmatpush1.msra.mxu0 %v197
    %2837 = vmatprep.subr.mxu0 %v200
    %2838 = vmatpush1.msra.mxu0 %v199
    %2839 = vmatprep.subr.mxu0 %v202
    %2840 = vmatpush1.msra.mxu0 %v201
    %2841 = vmatprep.subr.mxu0 %v204
    %2842 = vmatpush1.msra.mxu0 %v203
    %2843 = vmatprep.subr.mxu0 %v206
    %2844 = vmatpush1.msra.mxu0 %v205
    %2845 = vmatprep.subr.mxu0 %v208
    %2846 = vmatpush1.msra.mxu0 %v207
    %2847 = vmatprep.subr.mxu0 %v210
    %2848 = vmatpush1.msra.mxu0 %v209
    %2849 = vmatprep.subr.mxu0 %v212
    %2850 = vmatpush1.msra.mxu0 %v211
    %2851 = vmatprep.subr.mxu0 %v214
    %2852 = vmatpush1.msra.mxu0 %v213
    %2853 = vmatprep.subr.mxu0 %v216
    %2854 = vmatpush1.msra.mxu0 %v215
    %2855 = vmatprep.subr.mxu0 %v218
    %2856 = vmatpush1.msra.mxu0 %v217
    %2857 = vmatprep.subr.mxu0 %v220
    %2858 = vmatpush1.msra.mxu0 %v219
    %2859 = vmatprep.subr.mxu0 %v222
    %2860 = vmatpush1.msra.mxu0 %v221
    %2861 = vmatprep.subr.mxu0 %v224
    %2862 = vmatpush1.msra.mxu0 %v223
    %2863 = vmatprep.subr.mxu0 %v226
    %2864 = vmatpush1.msra.mxu0 %v225
    %2865 = vmatprep.subr.mxu0 %v228
    %2866 = vmatpush1.msra.mxu0 %v227
    %2867 = vmatprep.mubr.f32.mxu0 %v2734
    %2868 = vmatmul.mubr.f32.gmra.mrb[0].mxu0 %v2726
    %v2869 = vpop.f32.mrb[0].mxu0
    %v2870 = vadd.f32 %v686, %v2869
    %v2871 = vpop.f32.mrb[0].mxu0
    %v2872 = vadd.f32 %v690, %v2871
    %2873 = vdwg.mxu0
    %2874 = vmatprep.subr.mxu0 %v230
    %2875 = vmatpush1.msra.mxu0 %v229
    %2876 = vmatprep.subr.mxu0 %v232
    %2877 = vmatpush1.msra.mxu0 %v231
    %2878 = vmatprep.subr.mxu0 %v234
    %2879 = vmatpush1.msra.mxu0 %v233
    %2880 = vmatprep.subr.mxu0 %v236
    %2881 = vmatpush1.msra.mxu0 %v235
    %2882 = vmatprep.subr.mxu0 %v238
    %2883 = vmatpush1.msra.mxu0 %v237
    %2884 = vmatprep.subr.mxu0 %v240
    %2885 = vmatpush1.msra.mxu0 %v239
    %2886 = vmatprep.subr.mxu0 %v242
    %2887 = vmatpush1.msra.mxu0 %v241
    %2888 = vmatprep.subr.mxu0 %v244
    %2889 = vmatpush1.msra.mxu0 %v243
    %2890 = vmatprep.subr.mxu0 %v246
    %2891 = vmatpush1.msra.mxu0 %v245
    %2892 = vmatprep.subr.mxu0 %v248
    %2893 = vmatpush1.msra.mxu0 %v247
    %2894 = vmatprep.subr.mxu0 %v250
    %2895 = vmatpush1.msra.mxu0 %v249
    %2896 = vmatprep.subr.mxu0 %v252
    %2897 = vmatpush1.msra.mxu0 %v251
    %2898 = vmatprep.subr.mxu0 %v254
    %2899 = vmatpush1.msra.mxu0 %v253
    %2900 = vmatprep.subr.mxu0 %v256
    %2901 = vmatpush1.msra.mxu0 %v255
    %2902 = vmatprep.subr.mxu0 %v258
    %2903 = vmatpush1.msra.mxu0 %v257
    %2904 = vmatprep.subr.mxu0 %v260
    %2905 = vmatpush1.msra.mxu0 %v259
    %2906 = vmatprep.subr.mxu0 %v262
    %2907 = vmatpush1.msra.mxu0 %v261
    %2908 = vmatprep.subr.mxu0 %v264
    %2909 = vmatpush1.msra.mxu0 %v263
    %2910 = vmatprep.subr.mxu0 %v266
    %2911 = vmatpush1.msra.mxu0 %v265
    %2912 = vmatprep.subr.mxu0 %v268
    %2913 = vmatpush1.msra.mxu0 %v267
    %2914 = vmatprep.subr.mxu0 %v270
    %2915 = vmatpush1.msra.mxu0 %v269
    %2916 = vmatprep.subr.mxu0 %v272
    %2917 = vmatpush1.msra.mxu0 %v271
    %2918 = vmatprep.subr.mxu0 %v274
    %2919 = vmatpush1.msra.mxu0 %v273
    %2920 = vmatprep.subr.mxu0 %v276
    %2921 = vmatpush1.msra.mxu0 %v275
    %2922 = vmatprep.subr.mxu0 %v278
    %2923 = vmatpush1.msra.mxu0 %v277
    %2924 = vmatprep.subr.mxu0 %v280
    %2925 = vmatpush1.msra.mxu0 %v279
    %2926 = vmatprep.subr.mxu0 %v282
    %2927 = vmatpush1.msra.mxu0 %v281
    %2928 = vmatprep.subr.mxu0 %v284
    %2929 = vmatpush1.msra.mxu0 %v283
    %2930 = vmatprep.subr.mxu0 %v286
    %2931 = vmatpush1.msra.mxu0 %v285
    %2932 = vmatprep.subr.mxu0 %v288
    %2933 = vmatpush1.msra.mxu0 %v287
    %2934 = vmatprep.subr.mxu0 %v290
    %2935 = vmatpush1.msra.mxu0 %v289
    %2936 = vmatprep.subr.mxu0 %v292
    %2937 = vmatpush1.msra.mxu0 %v291
    %2938 = vmatprep.mubr.f32.mxu0 %v2735
    %2939 = vmatmul.mubr.f32.gmra.mrb[0].mxu0 %v2733
    %v2940 = vpop.f32.mrb[0].mxu0
    %v2941 = vadd.f32 %v2870, %v2940
    %v2942 = vpop.f32.mrb[0].mxu0
    %v2943 = vadd.f32 %v2872, %v2942
    %2944 = vdwg.mxu0
    %2945 = vmatprep.subr.mxu0 %v294
    %2946 = vmatpush1.msra.mxu0 %v293
    %2947 = vmatprep.subr.mxu0 %v296
    %2948 = vmatpush1.msra.mxu0 %v295
    %2949 = vmatprep.subr.mxu0 %v298
    %2950 = vmatpush1.msra.mxu0 %v297
    %2951 = vmatprep.subr.mxu0 %v300
    %2952 = vmatpush1.msra.mxu0 %v299
    %2953 = vmatprep.subr.mxu0 %v302
    %2954 = vmatpush1.msra.mxu0 %v301
    %2955 = vmatprep.subr.mxu0 %v304
    %2956 = vmatpush1.msra.mxu0 %v303
    %2957 = vmatprep.subr.mxu0 %v306
    %2958 = vmatpush1.msra.mxu0 %v305
    %2959 = vmatprep.subr.mxu0 %v308
    %2960 = vmatpush1.msra.mxu0 %v307
    %2961 = vmatprep.subr.mxu0 %v310
    %2962 = vmatpush1.msra.mxu0 %v309
    %2963 = vmatprep.subr.mxu0 %v312
    %2964 = vmatpush1.msra.mxu0 %v311
    %2965 = vmatprep.subr.mxu0 %v314
    %2966 = vmatpush1.msra.mxu0 %v313
    %2967 = vmatprep.subr.mxu0 %v316
    %2968 = vmatpush1.msra.mxu0 %v315
    %2969 = vmatprep.subr.mxu0 %v318
    %2970 = vmatpush1.msra.mxu0 %v317
    %2971 = vmatprep.subr.mxu0 %v320
    %2972 = vmatpush1.msra.mxu0 %v319
    %2973 = vmatprep.subr.mxu0 %v322
    %2974 = vmatpush1.msra.mxu0 %v321
    %2975 = vmatprep.subr.mxu0 %v324
    %2976 = vmatpush1.msra.mxu0 %v323
    %2977 = vmatprep.subr.mxu0 %v326
    %2978 = vmatpush1.msra.mxu0 %v325
    %2979 = vmatprep.subr.mxu0 %v328
    %2980 = vmatpush1.msra.mxu0 %v327
    %2981 = vmatprep.subr.mxu0 %v330
    %2982 = vmatpush1.msra.mxu0 %v329
    %2983 = vmatprep.subr.mxu0 %v332
    %2984 = vmatpush1.msra.mxu0 %v331
    %2985 = vmatprep.subr.mxu0 %v334
    %2986 = vmatpush1.msra.mxu0 %v333
    %2987 = vmatprep.subr.mxu0 %v336
    %2988 = vmatpush1.msra.mxu0 %v335
    %2989 = vmatprep.subr.mxu0 %v338
    %2990 = vmatpush1.msra.mxu0 %v337
    %2991 = vmatprep.subr.mxu0 %v340
    %2992 = vmatpush1.msra.mxu0 %v339
    %2993 = vmatprep.subr.mxu0 %v342
    %2994 = vmatpush1.msra.mxu0 %v341
    %2995 = vmatprep.subr.mxu0 %v344
    %2996 = vmatpush1.msra.mxu0 %v343
    %2997 = vmatprep.subr.mxu0 %v346
    %2998 = vmatpush1.msra.mxu0 %v345
    %2999 = vmatprep.subr.mxu0 %v348
    %3000 = vmatpush1.msra.mxu0 %v347
    %3001 = vmatprep.subr.mxu0 %v350
    %3002 = vmatpush1.msra.mxu0 %v349
    %3003 = vmatprep.subr.mxu0 %v352
    %3004 = vmatpush1.msra.mxu0 %v351
    %3005 = vmatprep.subr.mxu0 %v354
    %3006 = vmatpush1.msra.mxu0 %v353
    %3007 = vmatprep.subr.mxu0 %v356
    %3008 = vmatpush1.msra.mxu0 %v355
    %3009 = vmatprep.mubr.f32.mxu0 %v2751
    %3010 = vmatmul.mubr.f32.gmra.mrb[0].mxu0 %v2743
    %v3011 = vpop.f32.mrb[0].mxu0
    %v3012 = vadd.f32 %v2941, %v3011
    %v3013 = vpop.f32.mrb[0].mxu0
    %v3014 = vadd.f32 %v2943, %v3013
    %3015 = vdwg.mxu0
    %3016 = vmatprep.subr.mxu0 %v358
    %3017 = vmatpush1.msra.mxu0 %v357
    %3018 = vmatprep.subr.mxu0 %v360
    %3019 = vmatpush1.msra.mxu0 %v359
    %3020 = vmatprep.subr.mxu0 %v362
    %3021 = vmatpush1.msra.mxu0 %v361
    %3022 = vmatprep.subr.mxu0 %v364
    %3023 = vmatpush1.msra.mxu0 %v363
    %3024 = vmatprep.subr.mxu0 %v366
    %3025 = vmatpush1.msra.mxu0 %v365
    %3026 = vmatprep.subr.mxu0 %v368
    %3027 = vmatpush1.msra.mxu0 %v367
    %3028 = vmatprep.subr.mxu0 %v370
    %3029 = vmatpush1.msra.mxu0 %v369
    %3030 = vmatprep.subr.mxu0 %v372
    %3031 = vmatpush1.msra.mxu0 %v371
    %3032 = vmatprep.subr.mxu0 %v374
    %3033 = vmatpush1.msra.mxu0 %v373
    %3034 = vmatprep.subr.mxu0 %v376
    %3035 = vmatpush1.msra.mxu0 %v375
    %3036 = vmatprep.subr.mxu0 %v378
    %3037 = vmatpush1.msra.mxu0 %v377
    %3038 = vmatprep.subr.mxu0 %v380
    %3039 = vmatpush1.msra.mxu0 %v379
    %3040 = vmatprep.subr.mxu0 %v382
    %3041 = vmatpush1.msra.mxu0 %v381
    %3042 = vmatprep.subr.mxu0 %v384
    %3043 = vmatpush1.msra.mxu0 %v383
    %3044 = vmatprep.subr.mxu0 %v386
    %3045 = vmatpush1.msra.mxu0 %v385
    %3046 = vmatprep.subr.mxu0 %v388
    %3047 = vmatpush1.msra.mxu0 %v387
    %3048 = vmatprep.subr.mxu0 %v390
    %3049 = vmatpush1.msra.mxu0 %v389
    %3050 = vmatprep.subr.mxu0 %v392
    %3051 = vmatpush1.msra.mxu0 %v391
    %3052 = vmatprep.subr.mxu0 %v394
    %3053 = vmatpush1.msra.mxu0 %v393
    %3054 = vmatprep.subr.mxu0 %v396
    %3055 = vmatpush1.msra.mxu0 %v395
    %3056 = vmatprep.subr.mxu0 %v398
    %3057 = vmatpush1.msra.mxu0 %v397
    %3058 = vmatprep.subr.mxu0 %v400
    %3059 = vmatpush1.msra.mxu0 %v399
    %3060 = vmatprep.subr.mxu0 %v402
    %3061 = vmatpush1.msra.mxu0 %v401
    %3062 = vmatprep.subr.mxu0 %v404
    %3063 = vmatpush1.msra.mxu0 %v403
    %3064 = vmatprep.subr.mxu0 %v406
    %3065 = vmatpush1.msra.mxu0 %v405
    %3066 = vmatprep.subr.mxu0 %v408
    %3067 = vmatpush1.msra.mxu0 %v407
    %3068 = vmatprep.subr.mxu0 %v410
    %3069 = vmatpush1.msra.mxu0 %v409
    %3070 = vmatprep.subr.mxu0 %v412
    %3071 = vmatpush1.msra.mxu0 %v411
    %3072 = vmatprep.subr.mxu0 %v414
    %3073 = vmatpush1.msra.mxu0 %v413
    %3074 = vmatprep.subr.mxu0 %v416
    %3075 = vmatpush1.msra.mxu0 %v415
    %3076 = vmatprep.subr.mxu0 %v418
    %3077 = vmatpush1.msra.mxu0 %v417
    %3078 = vmatprep.subr.mxu0 %v420
    %3079 = vmatpush1.msra.mxu0 %v419
    %3080 = vmatprep.mubr.f32.mxu0 %v2752
    %3081 = vmatmul.mubr.f32.gmra.mrb[0].mxu0 %v2750
    %v3082 = vpop.f32.mrb[0].mxu0
    %v3083 = vadd.f32 %v3012, %v3082
    %v3084 = vpop.f32.mrb[0].mxu0
    %v3085 = vadd.f32 %v3014, %v3084
    %3086 = vdwg.mxu0
    %3087 = vmatprep.subr.mxu0 %v422
    %3088 = vmatpush1.msra.mxu0 %v421
    %3089 = vmatprep.subr.mxu0 %v424
    %3090 = vmatpush1.msra.mxu0 %v423
    %3091 = vmatprep.subr.mxu0 %v426
    %3092 = vmatpush1.msra.mxu0 %v425
    %3093 = vmatprep.subr.mxu0 %v428
    %3094 = vmatpush1.msra.mxu0 %v427
    %3095 = vmatprep.subr.mxu0 %v430
    %3096 = vmatpush1.msra.mxu0 %v429
    %3097 = vmatprep.subr.mxu0 %v432
    %3098 = vmatpush1.msra.mxu0 %v431
    %3099 = vmatprep.subr.mxu0 %v434
    %3100 = vmatpush1.msra.mxu0 %v433
    %3101 = vmatprep.subr.mxu0 %v436
    %3102 = vmatpush1.msra.mxu0 %v435
    %3103 = vmatprep.subr.mxu0 %v438
    %3104 = vmatpush1.msra.mxu0 %v437
    %3105 = vmatprep.subr.mxu0 %v440
    %3106 = vmatpush1.msra.mxu0 %v439
    %3107 = vmatprep.subr.mxu0 %v442
    %3108 = vmatpush1.msra.mxu0 %v441
    %3109 = vmatprep.subr.mxu0 %v444
    %3110 = vmatpush1.msra.mxu0 %v443
    %3111 = vmatprep.subr.mxu0 %v446
    %3112 = vmatpush1.msra.mxu0 %v445
    %3113 = vmatprep.subr.mxu0 %v448
    %3114 = vmatpush1.msra.mxu0 %v447
    %3115 = vmatprep.subr.mxu0 %v450
    %3116 = vmatpush1.msra.mxu0 %v449
    %3117 = vmatprep.subr.mxu0 %v452
    %3118 = vmatpush1.msra.mxu0 %v451
    %3119 = vmatprep.subr.mxu0 %v454
    %3120 = vmatpush1.msra.mxu0 %v453
    %3121 = vmatprep.subr.mxu0 %v456
    %3122 = vmatpush1.msra.mxu0 %v455
    %3123 = vmatprep.subr.mxu0 %v458
    %3124 = vmatpush1.msra.mxu0 %v457
    %3125 = vmatprep.subr.mxu0 %v460
    %3126 = vmatpush1.msra.mxu0 %v459
    %3127 = vmatprep.subr.mxu0 %v462
    %3128 = vmatpush1.msra.mxu0 %v461
    %3129 = vmatprep.subr.mxu0 %v464
    %3130 = vmatpush1.msra.mxu0 %v463
    %3131 = vmatprep.subr.mxu0 %v466
    %3132 = vmatpush1.msra.mxu0 %v465
    %3133 = vmatprep.subr.mxu0 %v468
    %3134 = vmatpush1.msra.mxu0 %v467
    %3135 = vmatprep.subr.mxu0 %v470
    %3136 = vmatpush1.msra.mxu0 %v469
    %3137 = vmatprep.subr.mxu0 %v472
    %3138 = vmatpush1.msra.mxu0 %v471
    %3139 = vmatprep.subr.mxu0 %v474
    %3140 = vmatpush1.msra.mxu0 %v473
    %3141 = vmatprep.subr.mxu0 %v476
    %3142 = vmatpush1.msra.mxu0 %v475
    %3143 = vmatprep.subr.mxu0 %v478
    %3144 = vmatpush1.msra.mxu0 %v477
    %3145 = vmatprep.subr.mxu0 %v480
    %3146 = vmatpush1.msra.mxu0 %v479
    %3147 = vmatprep.subr.mxu0 %v482
    %3148 = vmatpush1.msra.mxu0 %v481
    %3149 = vmatprep.subr.mxu0 %v484
    %3150 = vmatpush1.msra.mxu0 %v483
    %3151 = vmatprep.mubr.f32.mxu0 %v2768
    %3152 = vmatmul.mubr.f32.gmra.mrb[0].mxu0 %v2760
    %v3153 = vpop.f32.mrb[0].mxu0
    %v3154 = vadd.f32 %v3083, %v3153
    %v3155 = vpop.f32.mrb[0].mxu0
    %v3156 = vadd.f32 %v3085, %v3155
    %3157 = vdwg.mxu0
    %3158 = vmatprep.subr.mxu0 %v486
    %3159 = vmatpush1.msra.mxu0 %v485
    %3160 = vmatprep.subr.mxu0 %v488
    %3161 = vmatpush1.msra.mxu0 %v487
    %3162 = vmatprep.subr.mxu0 %v490
    %3163 = vmatpush1.msra.mxu0 %v489
    %3164 = vmatprep.subr.mxu0 %v492
    %3165 = vmatpush1.msra.mxu0 %v491
    %3166 = vmatprep.subr.mxu0 %v494
    %3167 = vmatpush1.msra.mxu0 %v493
    %3168 = vmatprep.subr.mxu0 %v496
    %3169 = vmatpush1.msra.mxu0 %v495
    %3170 = vmatprep.subr.mxu0 %v498
    %3171 = vmatpush1.msra.mxu0 %v497
    %3172 = vmatprep.subr.mxu0 %v500
    %3173 = vmatpush1.msra.mxu0 %v499
    %3174 = vmatprep.subr.mxu0 %v502
    %3175 = vmatpush1.msra.mxu0 %v501
    %3176 = vmatprep.subr.mxu0 %v504
    %3177 = vmatpush1.msra.mxu0 %v503
    %3178 = vmatprep.subr.mxu0 %v506
    %3179 = vmatpush1.msra.mxu0 %v505
    %3180 = vmatprep.subr.mxu0 %v508
    %3181 = vmatpush1.msra.mxu0 %v507
    %3182 = vmatprep.subr.mxu0 %v510
    %3183 = vmatpush1.msra.mxu0 %v509
    %3184 = vmatprep.subr.mxu0 %v512
    %3185 = vmatpush1.msra.mxu0 %v511
    %3186 = vmatprep.subr.mxu0 %v514
    %3187 = vmatpush1.msra.mxu0 %v513
    %3188 = vmatprep.subr.mxu0 %v516
    %3189 = vmatpush1.msra.mxu0 %v515
    %3190 = vmatprep.subr.mxu0 %v518
    %3191 = vmatpush1.msra.mxu0 %v517
    %3192 = vmatprep.subr.mxu0 %v520
    %3193 = vmatpush1.msra.mxu0 %v519
    %3194 = vmatprep.subr.mxu0 %v522
    %3195 = vmatpush1.msra.mxu0 %v521
    %3196 = vmatprep.subr.mxu0 %v524
    %3197 = vmatpush1.msra.mxu0 %v523
    %3198 = vmatprep.subr.mxu0 %v526
    %3199 = vmatpush1.msra.mxu0 %v525
    %3200 = vmatprep.subr.mxu0 %v528
    %3201 = vmatpush1.msra.mxu0 %v527
    %3202 = vmatprep.subr.mxu0 %v530
    %3203 = vmatpush1.msra.mxu0 %v529
    %3204 = vmatprep.subr.mxu0 %v532
    %3205 = vmatpush1.msra.mxu0 %v531
    %3206 = vmatprep.subr.mxu0 %v534
    %3207 = vmatpush1.msra.mxu0 %v533
    %3208 = vmatprep.subr.mxu0 %v536
    %3209 = vmatpush1.msra.mxu0 %v535
    %3210 = vmatprep.subr.mxu0 %v538
    %3211 = vmatpush1.msra.mxu0 %v537
    %3212 = vmatprep.subr.mxu0 %v540
    %3213 = vmatpush1.msra.mxu0 %v539
    %3214 = vmatprep.subr.mxu0 %v542
    %3215 = vmatpush1.msra.mxu0 %v541
    %3216 = vmatprep.subr.mxu0 %v544
    %3217 = vmatpush1.msra.mxu0 %v543
    %3218 = vmatprep.subr.mxu0 %v546
    %3219 = vmatpush1.msra.mxu0 %v545
    %3220 = vmatprep.subr.mxu0 %v548
    %3221 = vmatpush1.msra.mxu0 %v547
    %3222 = vmatprep.mubr.f32.mxu0 %v2769
    %3223 = vmatmul.mubr.f32.gmra.mrb[0].mxu0 %v2767
    %v3224 = vpop.f32.mrb[0].mxu0
    %v3225 = vadd.f32 %v3154, %v3224
    %v3226 = vpop.f32.mrb[0].mxu0
    %v3227 = vadd.f32 %v3156, %v3226
    %3228 = vdwg.mxu0
    %3229 = vmatprep.subr.mxu0 %v550
    %3230 = vmatpush1.msra.mxu0 %v549
    %3231 = vmatprep.subr.mxu0 %v552
    %3232 = vmatpush1.msra.mxu0 %v551
    %3233 = vmatprep.subr.mxu0 %v554
    %3234 = vmatpush1.msra.mxu0 %v553
    %3235 = vmatprep.subr.mxu0 %v556
    %3236 = vmatpush1.msra.mxu0 %v555
    %3237 = vmatprep.subr.mxu0 %v558
    %3238 = vmatpush1.msra.mxu0 %v557
    %3239 = vmatprep.subr.mxu0 %v560
    %3240 = vmatpush1.msra.mxu0 %v559
    %3241 = vmatprep.subr.mxu0 %v562
    %3242 = vmatpush1.msra.mxu0 %v561
    %3243 = vmatprep.subr.mxu0 %v564
    %3244 = vmatpush1.msra.mxu0 %v563
    %3245 = vmatprep.subr.mxu0 %v566
    %3246 = vmatpush1.msra.mxu0 %v565
    %3247 = vmatprep.subr.mxu0 %v568
    %3248 = vmatpush1.msra.mxu0 %v567
    %3249 = vmatprep.subr.mxu0 %v570
    %3250 = vmatpush1.msra.mxu0 %v569
    %3251 = vmatprep.subr.mxu0 %v572
    %3252 = vmatpush1.msra.mxu0 %v571
    %3253 = vmatprep.subr.mxu0 %v574
    %3254 = vmatpush1.msra.mxu0 %v573
    %3255 = vmatprep.subr.mxu0 %v576
    %3256 = vmatpush1.msra.mxu0 %v575
    %3257 = vmatprep.subr.mxu0 %v578
    %3258 = vmatpush1.msra.mxu0 %v577
    %3259 = vmatprep.subr.mxu0 %v580
    %3260 = vmatpush1.msra.mxu0 %v579
    %3261 = vmatprep.subr.mxu0 %v582
    %3262 = vmatpush1.msra.mxu0 %v581
    %3263 = vmatprep.subr.mxu0 %v584
    %3264 = vmatpush1.msra.mxu0 %v583
    %3265 = vmatprep.subr.mxu0 %v586
    %3266 = vmatpush1.msra.mxu0 %v585
    %3267 = vmatprep.subr.mxu0 %v588
    %3268 = vmatpush1.msra.mxu0 %v587
    %3269 = vmatprep.subr.mxu0 %v590
    %3270 = vmatpush1.msra.mxu0 %v589
    %3271 = vmatprep.subr.mxu0 %v592
    %3272 = vmatpush1.msra.mxu0 %v591
    %3273 = vmatprep.subr.mxu0 %v594
    %3274 = vmatpush1.msra.mxu0 %v593
    %3275 = vmatprep.subr.mxu0 %v596
    %3276 = vmatpush1.msra.mxu0 %v595
    %3277 = vmatprep.subr.mxu0 %v598
    %3278 = vmatpush1.msra.mxu0 %v597
    %3279 = vmatprep.subr.mxu0 %v600
    %3280 = vmatpush1.msra.mxu0 %v599
    %3281 = vmatprep.subr.mxu0 %v602
    %3282 = vmatpush1.msra.mxu0 %v601
    %3283 = vmatprep.subr.mxu0 %v604
    %3284 = vmatpush1.msra.mxu0 %v603
    %3285 = vmatprep.subr.mxu0 %v606
    %3286 = vmatpush1.msra.mxu0 %v605
    %3287 = vmatprep.subr.mxu0 %v608
    %3288 = vmatpush1.msra.mxu0 %v607
    %3289 = vmatprep.subr.mxu0 %v610
    %3290 = vmatpush1.msra.mxu0 %v609
    %3291 = vmatprep.subr.mxu0 %v612
    %3292 = vmatpush1.msra.mxu0 %v611
    %3293 = vmatprep.mubr.f32.mxu0 %v2785
    %3294 = vmatmul.mubr.f32.gmra.mrb[0].mxu0 %v2777
    %v3295 = vpop.f32.mrb[0].mxu0
    %v3296 = vadd.f32 %v3225, %v3295
    %v3297 = vpop.f32.mrb[0].mxu0
    %v3298 = vadd.f32 %v3227, %v3297
    %3299 = vdwg.mxu0
    %3300 = vmatprep.subr.mxu0 %v614
    %3301 = vmatpush1.msra.mxu0 %v613
    %3302 = vmatprep.subr.mxu0 %v616
    %3303 = vmatpush1.msra.mxu0 %v615
    %3304 = vmatprep.subr.mxu0 %v618
    %3305 = vmatpush1.msra.mxu0 %v617
    %3306 = vmatprep.subr.mxu0 %v620
    %3307 = vmatpush1.msra.mxu0 %v619
    %3308 = vmatprep.subr.mxu0 %v622
    %3309 = vmatpush1.msra.mxu0 %v621
    %3310 = vmatprep.subr.mxu0 %v624
    %3311 = vmatpush1.msra.mxu0 %v623
    %3312 = vmatprep.subr.mxu0 %v626
    %3313 = vmatpush1.msra.mxu0 %v625
    %3314 = vmatprep.subr.mxu0 %v628
    %3315 = vmatpush1.msra.mxu0 %v627
    %3316 = vmatprep.subr.mxu0 %v630
    %3317 = vmatpush1.msra.mxu0 %v629
    %3318 = vmatprep.subr.mxu0 %v632
    %3319 = vmatpush1.msra.mxu0 %v631
    %3320 = vmatprep.subr.mxu0 %v634
    %3321 = vmatpush1.msra.mxu0 %v633
    %3322 = vmatprep.subr.mxu0 %v636
    %3323 = vmatpush1.msra.mxu0 %v635
    %3324 = vmatprep.subr.mxu0 %v638
    %3325 = vmatpush1.msra.mxu0 %v637
    %3326 = vmatprep.subr.mxu0 %v640
    %3327 = vmatpush1.msra.mxu0 %v639
    %3328 = vmatprep.subr.mxu0 %v642
    %3329 = vmatpush1.msra.mxu0 %v641
    %3330 = vmatprep.subr.mxu0 %v644
    %3331 = vmatpush1.msra.mxu0 %v643
    %3332 = vmatprep.subr.mxu0 %v646
    %3333 = vmatpush1.msra.mxu0 %v645
    %3334 = vmatprep.subr.mxu0 %v648
    %3335 = vmatpush1.msra.mxu0 %v647
    %3336 = vmatprep.subr.mxu0 %v650
    %3337 = vmatpush1.msra.mxu0 %v649
    %3338 = vmatprep.subr.mxu0 %v652
    %3339 = vmatpush1.msra.mxu0 %v651
    %3340 = vmatprep.subr.mxu0 %v654
    %3341 = vmatpush1.msra.mxu0 %v653
    %3342 = vmatprep.subr.mxu0 %v656
    %3343 = vmatpush1.msra.mxu0 %v655
    %3344 = vmatprep.subr.mxu0 %v658
    %3345 = vmatpush1.msra.mxu0 %v657
    %3346 = vmatprep.subr.mxu0 %v660
    %3347 = vmatpush1.msra.mxu0 %v659
    %3348 = vmatprep.subr.mxu0 %v662
    %3349 = vmatpush1.msra.mxu0 %v661
    %3350 = vmatprep.subr.mxu0 %v664
    %3351 = vmatpush1.msra.mxu0 %v663
    %3352 = vmatprep.subr.mxu0 %v666
    %3353 = vmatpush1.msra.mxu0 %v665
    %3354 = vmatprep.subr.mxu0 %v668
    %3355 = vmatpush1.msra.mxu0 %v667
    %3356 = vmatprep.subr.mxu0 %v670
    %3357 = vmatpush1.msra.mxu0 %v669
    %3358 = vmatprep.subr.mxu0 %v672
    %3359 = vmatpush1.msra.mxu0 %v671
    %3360 = vmatprep.subr.mxu0 %v674
    %3361 = vmatpush1.msra.mxu0 %v673
    %3362 = vmatprep.subr.mxu0 %v676
    %3363 = vmatpush1.msra.mxu0 %v675
    %3364 = vmatprep.mubr.f32.mxu0 %v2786
    %3365 = vmatmul.mubr.f32.gmra.mrb[0].mxu0 %v2784
    %v3366 = vpop.f32.mrb[0].mxu0
    %v3367 = vadd.f32 %v3296, %v3366
    %v3368 = vpop.f32.mrb[0].mxu0
    %v3369 = vadd.f32 %v3298, %v3368
    %3370 = vdwg.mxu0
    %v3371 = vmax.f32 %v3367, 0.0
    %v3372 = vmax.f32 %v3369, 0.0
    %v3375 = vcombine.low %v3371, %v3372
    %v3377 = vunpack.c.l.s4 1983009808
    %v3378 = vunpack.c.0.s8 %v3377
    %v3379 = vlaneseq
    %v3380 = vshrl.u32 %v3379, 7
    %v3381 = vsub.s32 %v3378, %v3380
    %v3382 = vrot.slane %v3375, %v3381
    %3384 = vst [vmem:[#allocation2 + $0xc] sm:$0xf] %v3382
    %v3385 = vld [vmem:[%s0 + $0x40] sm:$0xff]
    %v3386 = vld [vmem:[%s0 + $0x48] sm:$0xff]
    %v3387 = vld [vmem:[%s0 + $0x50] sm:$0xff]
    %v3388 = vld [vmem:[%s0 + $0x58] sm:$0xff]
    %v3393 = vcombine.high %v3385, %v3385
    %v3395 = vunpack.c.l.s4 1983009808
    %v3396 = vunpack.c.0.s8 %v3395
    %v3397 = vlaneseq
    %v3398 = vshrl.u32 %v3397, 7
    %v3399 = vsub.s32 %v3396, %v3398
    %v3400 = vrot.slane %v3385, %v3399
    %v3402 = vunpack.c.l.s4 1983009808
    %v3403 = vunpack.c.0.s8 %v3402
    %v3404 = vlaneseq
    %v3405 = vshrl.u32 %v3404, 7
    %v3406 = vsub.s32 %v3403, %v3405
    %v3407 = vrot.slane %v3393, %v3406
    %v3408 = vcombine.high %v3400, %v3400
    %v3409 = vcombine.high %v3407, %v3407
    %v3410 = vcombine.high %v3386, %v3386
    %v3412 = vunpack.c.l.s4 1983009808
    %v3413 = vunpack.c.0.s8 %v3412
    %v3414 = vlaneseq
    %v3415 = vshrl.u32 %v3414, 7
    %v3416 = vsub.s32 %v3413, %v3415
    %v3417 = vrot.slane %v3386, %v3416
    %v3419 = vunpack.c.l.s4 1983009808
    %v3420 = vunpack.c.0.s8 %v3419
    %v3421 = vlaneseq
    %v3422 = vshrl.u32 %v3421, 7
    %v3423 = vsub.s32 %v3420, %v3422
    %v3424 = vrot.slane %v3410, %v3423
    %v3425 = vcombine.high %v3417, %v3417
    %v3426 = vcombine.high %v3424, %v3424
    %v3427 = vcombine.high %v3387, %v3387
    %v3429 = vunpack.c.l.s4 1983009808
    %v3430 = vunpack.c.0.s8 %v3429
    %v3431 = vlaneseq
    %v3432 = vshrl.u32 %v3431, 7
    %v3433 = vsub.s32 %v3430, %v3432
    %v3434 = vrot.slane %v3387, %v3433
    %v3436 = vunpack.c.l.s4 1983009808
    %v3437 = vunpack.c.0.s8 %v3436
    %v3438 = vlaneseq
    %v3439 = vshrl.u32 %v3438, 7
    %v3440 = vsub.s32 %v3437, %v3439
    %v3441 = vrot.slane %v3427, %v3440
    %v3442 = vcombine.high %v3434, %v3434
    %v3443 = vcombine.high %v3441, %v3441
    %v3444 = vcombine.high %v3388, %v3388
    %v3446 = vunpack.c.l.s4 1983009808
    %v3447 = vunpack.c.0.s8 %v3446
    %v3448 = vlaneseq
    %v3449 = vshrl.u32 %v3448, 7
    %v3450 = vsub.s32 %v3447, %v3449
    %v3451 = vrot.slane %v3388, %v3450
    %v3453 = vunpack.c.l.s4 1983009808
    %v3454 = vunpack.c.0.s8 %v3453
    %v3455 = vlaneseq
    %v3456 = vshrl.u32 %v3455, 7
    %v3457 = vsub.s32 %v3454, %v3456
    %v3458 = vrot.slane %v3444, %v3457
    %v3459 = vcombine.high %v3451, %v3451
    %v3460 = vcombine.high %v3458, %v3458
    %3477 = vmatprep.subr.mxu0 %v166
    %3478 = vmatpush1.msra.mxu0 %v165
    %3479 = vmatprep.subr.mxu0 %v168
    %3480 = vmatpush1.msra.mxu0 %v167
    %3481 = vmatprep.subr.mxu0 %v170
    %3482 = vmatpush1.msra.mxu0 %v169
    %3483 = vmatprep.subr.mxu0 %v172
    %3484 = vmatpush1.msra.mxu0 %v171
    %3485 = vmatprep.subr.mxu0 %v174
    %3486 = vmatpush1.msra.mxu0 %v173
    %3487 = vmatprep.subr.mxu0 %v176
    %3488 = vmatpush1.msra.mxu0 %v175
    %3489 = vmatprep.subr.mxu0 %v178
    %3490 = vmatpush1.msra.mxu0 %v177
    %3491 = vmatprep.subr.mxu0 %v180
    %3492 = vmatpush1.msra.mxu0 %v179
    %3493 = vmatprep.subr.mxu0 %v182
    %3494 = vmatpush1.msra.mxu0 %v181
    %3495 = vmatprep.subr.mxu0 %v184
    %3496 = vmatpush1.msra.mxu0 %v183
    %3497 = vmatprep.subr.mxu0 %v186
    %3498 = vmatpush1.msra.mxu0 %v185
    %3499 = vmatprep.subr.mxu0 %v188
    %3500 = vmatpush1.msra.mxu0 %v187
    %3501 = vmatprep.subr.mxu0 %v190
    %3502 = vmatpush1.msra.mxu0 %v189
    %3503 = vmatprep.subr.mxu0 %v192
    %3504 = vmatpush1.msra.mxu0 %v191
    %3505 = vmatprep.subr.mxu0 %v194
    %3506 = vmatpush1.msra.mxu0 %v193
    %3507 = vmatprep.subr.mxu0 %v196
    %3508 = vmatpush1.msra.mxu0 %v195
    %3509 = vmatprep.subr.mxu0 %v198
    %3510 = vmatpush1.msra.mxu0 %v197
    %3511 = vmatprep.subr.mxu0 %v200
    %3512 = vmatpush1.msra.mxu0 %v199
    %3513 = vmatprep.subr.mxu0 %v202
    %3514 = vmatpush1.msra.mxu0 %v201
    %3515 = vmatprep.subr.mxu0 %v204
    %3516 = vmatpush1.msra.mxu0 %v203
    %3517 = vmatprep.subr.mxu0 %v206
    %3518 = vmatpush1.msra.mxu0 %v205
    %3519 = vmatprep.subr.mxu0 %v208
    %3520 = vmatpush1.msra.mxu0 %v207
    %3521 = vmatprep.subr.mxu0 %v210
    %3522 = vmatpush1.msra.mxu0 %v209
    %3523 = vmatprep.subr.mxu0 %v212
    %3524 = vmatpush1.msra.mxu0 %v211
    %3525 = vmatprep.subr.mxu0 %v214
    %3526 = vmatpush1.msra.mxu0 %v213
    %3527 = vmatprep.subr.mxu0 %v216
    %3528 = vmatpush1.msra.mxu0 %v215
    %3529 = vmatprep.subr.mxu0 %v218
    %3530 = vmatpush1.msra.mxu0 %v217
    %3531 = vmatprep.subr.mxu0 %v220
    %3532 = vmatpush1.msra.mxu0 %v219
    %3533 = vmatprep.subr.mxu0 %v222
    %3534 = vmatpush1.msra.mxu0 %v221
    %3535 = vmatprep.subr.mxu0 %v224
    %3536 = vmatpush1.msra.mxu0 %v223
    %3537 = vmatprep.subr.mxu0 %v226
    %3538 = vmatpush1.msra.mxu0 %v225
    %3539 = vmatprep.subr.mxu0 %v228
    %3540 = vmatpush1.msra.mxu0 %v227
    %3541 = vmatprep.mubr.f32.mxu0 %v3408
    %3542 = vmatmul.mubr.f32.gmra.mrb[0].mxu0 %v3400
    %v3543 = vpop.f32.mrb[0].mxu0
    %v3544 = vadd.f32 %v686, %v3543
    %v3545 = vpop.f32.mrb[0].mxu0
    %v3546 = vadd.f32 %v690, %v3545
    %3547 = vdwg.mxu0
    %3548 = vmatprep.subr.mxu0 %v230
    %3549 = vmatpush1.msra.mxu0 %v229
    %3550 = vmatprep.subr.mxu0 %v232
    %3551 = vmatpush1.msra.mxu0 %v231
    %3552 = vmatprep.subr.mxu0 %v234
    %3553 = vmatpush1.msra.mxu0 %v233
    %3554 = vmatprep.subr.mxu0 %v236
    %3555 = vmatpush1.msra.mxu0 %v235
    %3556 = vmatprep.subr.mxu0 %v238
    %3557 = vmatpush1.msra.mxu0 %v237
    %3558 = vmatprep.subr.mxu0 %v240
    %3559 = vmatpush1.msra.mxu0 %v239
    %3560 = vmatprep.subr.mxu0 %v242
    %3561 = vmatpush1.msra.mxu0 %v241
    %3562 = vmatprep.subr.mxu0 %v244
    %3563 = vmatpush1.msra.mxu0 %v243
    %3564 = vmatprep.subr.mxu0 %v246
    %3565 = vmatpush1.msra.mxu0 %v245
    %3566 = vmatprep.subr.mxu0 %v248
    %3567 = vmatpush1.msra.mxu0 %v247
    %3568 = vmatprep.subr.mxu0 %v250
    %3569 = vmatpush1.msra.mxu0 %v249
    %3570 = vmatprep.subr.mxu0 %v252
    %3571 = vmatpush1.msra.mxu0 %v251
    %3572 = vmatprep.subr.mxu0 %v254
    %3573 = vmatpush1.msra.mxu0 %v253
    %3574 = vmatprep.subr.mxu0 %v256
    %3575 = vmatpush1.msra.mxu0 %v255
    %3576 = vmatprep.subr.mxu0 %v258
    %3577 = vmatpush1.msra.mxu0 %v257
    %3578 = vmatprep.subr.mxu0 %v260
    %3579 = vmatpush1.msra.mxu0 %v259
    %3580 = vmatprep.subr.mxu0 %v262
    %3581 = vmatpush1.msra.mxu0 %v261
    %3582 = vmatprep.subr.mxu0 %v264
    %3583 = vmatpush1.msra.mxu0 %v263
    %3584 = vmatprep.subr.mxu0 %v266
    %3585 = vmatpush1.msra.mxu0 %v265
    %3586 = vmatprep.subr.mxu0 %v268
    %3587 = vmatpush1.msra.mxu0 %v267
    %3588 = vmatprep.subr.mxu0 %v270
    %3589 = vmatpush1.msra.mxu0 %v269
    %3590 = vmatprep.subr.mxu0 %v272
    %3591 = vmatpush1.msra.mxu0 %v271
    %3592 = vmatprep.subr.mxu0 %v274
    %3593 = vmatpush1.msra.mxu0 %v273
    %3594 = vmatprep.subr.mxu0 %v276
    %3595 = vmatpush1.msra.mxu0 %v275
    %3596 = vmatprep.subr.mxu0 %v278
    %3597 = vmatpush1.msra.mxu0 %v277
    %3598 = vmatprep.subr.mxu0 %v280
    %3599 = vmatpush1.msra.mxu0 %v279
    %3600 = vmatprep.subr.mxu0 %v282
    %3601 = vmatpush1.msra.mxu0 %v281
    %3602 = vmatprep.subr.mxu0 %v284
    %3603 = vmatpush1.msra.mxu0 %v283
    %3604 = vmatprep.subr.mxu0 %v286
    %3605 = vmatpush1.msra.mxu0 %v285
    %3606 = vmatprep.subr.mxu0 %v288
    %3607 = vmatpush1.msra.mxu0 %v287
    %3608 = vmatprep.subr.mxu0 %v290
    %3609 = vmatpush1.msra.mxu0 %v289
    %3610 = vmatprep.subr.mxu0 %v292
    %3611 = vmatpush1.msra.mxu0 %v291
    %3612 = vmatprep.mubr.f32.mxu0 %v3409
    %3613 = vmatmul.mubr.f32.gmra.mrb[0].mxu0 %v3407
    %v3614 = vpop.f32.mrb[0].mxu0
    %v3615 = vadd.f32 %v3544, %v3614
    %v3616 = vpop.f32.mrb[0].mxu0
    %v3617 = vadd.f32 %v3546, %v3616
    %3618 = vdwg.mxu0
    %3619 = vmatprep.subr.mxu0 %v294
    %3620 = vmatpush1.msra.mxu0 %v293
    %3621 = vmatprep.subr.mxu0 %v296
    %3622 = vmatpush1.msra.mxu0 %v295
    %3623 = vmatprep.subr.mxu0 %v298
    %3624 = vmatpush1.msra.mxu0 %v297
    %3625 = vmatprep.subr.mxu0 %v300
    %3626 = vmatpush1.msra.mxu0 %v299
    %3627 = vmatprep.subr.mxu0 %v302
    %3628 = vmatpush1.msra.mxu0 %v301
    %3629 = vmatprep.subr.mxu0 %v304
    %3630 = vmatpush1.msra.mxu0 %v303
    %3631 = vmatprep.subr.mxu0 %v306
    %3632 = vmatpush1.msra.mxu0 %v305
    %3633 = vmatprep.subr.mxu0 %v308
    %3634 = vmatpush1.msra.mxu0 %v307
    %3635 = vmatprep.subr.mxu0 %v310
    %3636 = vmatpush1.msra.mxu0 %v309
    %3637 = vmatprep.subr.mxu0 %v312
    %3638 = vmatpush1.msra.mxu0 %v311
    %3639 = vmatprep.subr.mxu0 %v314
    %3640 = vmatpush1.msra.mxu0 %v313
    %3641 = vmatprep.subr.mxu0 %v316
    %3642 = vmatpush1.msra.mxu0 %v315
    %3643 = vmatprep.subr.mxu0 %v318
    %3644 = vmatpush1.msra.mxu0 %v317
    %3645 = vmatprep.subr.mxu0 %v320
    %3646 = vmatpush1.msra.mxu0 %v319
    %3647 = vmatprep.subr.mxu0 %v322
    %3648 = vmatpush1.msra.mxu0 %v321
    %3649 = vmatprep.subr.mxu0 %v324
    %3650 = vmatpush1.msra.mxu0 %v323
    %3651 = vmatprep.subr.mxu0 %v326
    %3652 = vmatpush1.msra.mxu0 %v325
    %3653 = vmatprep.subr.mxu0 %v328
    %3654 = vmatpush1.msra.mxu0 %v327
    %3655 = vmatprep.subr.mxu0 %v330
    %3656 = vmatpush1.msra.mxu0 %v329
    %3657 = vmatprep.subr.mxu0 %v332
    %3658 = vmatpush1.msra.mxu0 %v331
    %3659 = vmatprep.subr.mxu0 %v334
    %3660 = vmatpush1.msra.mxu0 %v333
    %3661 = vmatprep.subr.mxu0 %v336
    %3662 = vmatpush1.msra.mxu0 %v335
    %3663 = vmatprep.subr.mxu0 %v338
    %3664 = vmatpush1.msra.mxu0 %v337
    %3665 = vmatprep.subr.mxu0 %v340
    %3666 = vmatpush1.msra.mxu0 %v339
    %3667 = vmatprep.subr.mxu0 %v342
    %3668 = vmatpush1.msra.mxu0 %v341
    %3669 = vmatprep.subr.mxu0 %v344
    %3670 = vmatpush1.msra.mxu0 %v343
    %3671 = vmatprep.subr.mxu0 %v346
    %3672 = vmatpush1.msra.mxu0 %v345
    %3673 = vmatprep.subr.mxu0 %v348
    %3674 = vmatpush1.msra.mxu0 %v347
    %3675 = vmatprep.subr.mxu0 %v350
    %3676 = vmatpush1.msra.mxu0 %v349
    %3677 = vmatprep.subr.mxu0 %v352
    %3678 = vmatpush1.msra.mxu0 %v351
    %3679 = vmatprep.subr.mxu0 %v354
    %3680 = vmatpush1.msra.mxu0 %v353
    %3681 = vmatprep.subr.mxu0 %v356
    %3682 = vmatpush1.msra.mxu0 %v355
    %3683 = vmatprep.mubr.f32.mxu0 %v3425
    %3684 = vmatmul.mubr.f32.gmra.mrb[0].mxu0 %v3417
    %v3685 = vpop.f32.mrb[0].mxu0
    %v3686 = vadd.f32 %v3615, %v3685
    %v3687 = vpop.f32.mrb[0].mxu0
    %v3688 = vadd.f32 %v3617, %v3687
    %3689 = vdwg.mxu0
    %3690 = vmatprep.subr.mxu0 %v358
    %3691 = vmatpush1.msra.mxu0 %v357
    %3692 = vmatprep.subr.mxu0 %v360
    %3693 = vmatpush1.msra.mxu0 %v359
    %3694 = vmatprep.subr.mxu0 %v362
    %3695 = vmatpush1.msra.mxu0 %v361
    %3696 = vmatprep.subr.mxu0 %v364
    %3697 = vmatpush1.msra.mxu0 %v363
    %3698 = vmatprep.subr.mxu0 %v366
    %3699 = vmatpush1.msra.mxu0 %v365
    %3700 = vmatprep.subr.mxu0 %v368
    %3701 = vmatpush1.msra.mxu0 %v367
    %3702 = vmatprep.subr.mxu0 %v370
    %3703 = vmatpush1.msra.mxu0 %v369
    %3704 = vmatprep.subr.mxu0 %v372
    %3705 = vmatpush1.msra.mxu0 %v371
    %3706 = vmatprep.subr.mxu0 %v374
    %3707 = vmatpush1.msra.mxu0 %v373
    %3708 = vmatprep.subr.mxu0 %v376
    %3709 = vmatpush1.msra.mxu0 %v375
    %3710 = vmatprep.subr.mxu0 %v378
    %3711 = vmatpush1.msra.mxu0 %v377
    %3712 = vmatprep.subr.mxu0 %v380
    %3713 = vmatpush1.msra.mxu0 %v379
    %3714 = vmatprep.subr.mxu0 %v382
    %3715 = vmatpush1.msra.mxu0 %v381
    %3716 = vmatprep.subr.mxu0 %v384
    %3717 = vmatpush1.msra.mxu0 %v383
    %3718 = vmatprep.subr.mxu0 %v386
    %3719 = vmatpush1.msra.mxu0 %v385
    %3720 = vmatprep.subr.mxu0 %v388
    %3721 = vmatpush1.msra.mxu0 %v387
    %3722 = vmatprep.subr.mxu0 %v390
    %3723 = vmatpush1.msra.mxu0 %v389
    %3724 = vmatprep.subr.mxu0 %v392
    %3725 = vmatpush1.msra.mxu0 %v391
    %3726 = vmatprep.subr.mxu0 %v394
    %3727 = vmatpush1.msra.mxu0 %v393
    %3728 = vmatprep.subr.mxu0 %v396
    %3729 = vmatpush1.msra.mxu0 %v395
    %3730 = vmatprep.subr.mxu0 %v398
    %3731 = vmatpush1.msra.mxu0 %v397
    %3732 = vmatprep.subr.mxu0 %v400
    %3733 = vmatpush1.msra.mxu0 %v399
    %3734 = vmatprep.subr.mxu0 %v402
    %3735 = vmatpush1.msra.mxu0 %v401
    %3736 = vmatprep.subr.mxu0 %v404
    %3737 = vmatpush1.msra.mxu0 %v403
    %3738 = vmatprep.subr.mxu0 %v406
    %3739 = vmatpush1.msra.mxu0 %v405
    %3740 = vmatprep.subr.mxu0 %v408
    %3741 = vmatpush1.msra.mxu0 %v407
    %3742 = vmatprep.subr.mxu0 %v410
    %3743 = vmatpush1.msra.mxu0 %v409
    %3744 = vmatprep.subr.mxu0 %v412
    %3745 = vmatpush1.msra.mxu0 %v411
    %3746 = vmatprep.subr.mxu0 %v414
    %3747 = vmatpush1.msra.mxu0 %v413
    %3748 = vmatprep.subr.mxu0 %v416
    %3749 = vmatpush1.msra.mxu0 %v415
    %3750 = vmatprep.subr.mxu0 %v418
    %3751 = vmatpush1.msra.mxu0 %v417
    %3752 = vmatprep.subr.mxu0 %v420
    %3753 = vmatpush1.msra.mxu0 %v419
    %3754 = vmatprep.mubr.f32.mxu0 %v3426
    %3755 = vmatmul.mubr.f32.gmra.mrb[0].mxu0 %v3424
    %v3756 = vpop.f32.mrb[0].mxu0
    %v3757 = vadd.f32 %v3686, %v3756
    %v3758 = vpop.f32.mrb[0].mxu0
    %v3759 = vadd.f32 %v3688, %v3758
    %3760 = vdwg.mxu0
    %3761 = vmatprep.subr.mxu0 %v422
    %3762 = vmatpush1.msra.mxu0 %v421
    %3763 = vmatprep.subr.mxu0 %v424
    %3764 = vmatpush1.msra.mxu0 %v423
    %3765 = vmatprep.subr.mxu0 %v426
    %3766 = vmatpush1.msra.mxu0 %v425
    %3767 = vmatprep.subr.mxu0 %v428
    %3768 = vmatpush1.msra.mxu0 %v427
    %3769 = vmatprep.subr.mxu0 %v430
    %3770 = vmatpush1.msra.mxu0 %v429
    %3771 = vmatprep.subr.mxu0 %v432
    %3772 = vmatpush1.msra.mxu0 %v431
    %3773 = vmatprep.subr.mxu0 %v434
    %3774 = vmatpush1.msra.mxu0 %v433
    %3775 = vmatprep.subr.mxu0 %v436
    %3776 = vmatpush1.msra.mxu0 %v435
    %3777 = vmatprep.subr.mxu0 %v438
    %3778 = vmatpush1.msra.mxu0 %v437
    %3779 = vmatprep.subr.mxu0 %v440
    %3780 = vmatpush1.msra.mxu0 %v439
    %3781 = vmatprep.subr.mxu0 %v442
    %3782 = vmatpush1.msra.mxu0 %v441
    %3783 = vmatprep.subr.mxu0 %v444
    %3784 = vmatpush1.msra.mxu0 %v443
    %3785 = vmatprep.subr.mxu0 %v446
    %3786 = vmatpush1.msra.mxu0 %v445
    %3787 = vmatprep.subr.mxu0 %v448
    %3788 = vmatpush1.msra.mxu0 %v447
    %3789 = vmatprep.subr.mxu0 %v450
    %3790 = vmatpush1.msra.mxu0 %v449
    %3791 = vmatprep.subr.mxu0 %v452
    %3792 = vmatpush1.msra.mxu0 %v451
    %3793 = vmatprep.subr.mxu0 %v454
    %3794 = vmatpush1.msra.mxu0 %v453
    %3795 = vmatprep.subr.mxu0 %v456
    %3796 = vmatpush1.msra.mxu0 %v455
    %3797 = vmatprep.subr.mxu0 %v458
    %3798 = vmatpush1.msra.mxu0 %v457
    %3799 = vmatprep.subr.mxu0 %v460
    %3800 = vmatpush1.msra.mxu0 %v459
    %3801 = vmatprep.subr.mxu0 %v462
    %3802 = vmatpush1.msra.mxu0 %v461
    %3803 = vmatprep.subr.mxu0 %v464
    %3804 = vmatpush1.msra.mxu0 %v463
    %3805 = vmatprep.subr.mxu0 %v466
    %3806 = vmatpush1.msra.mxu0 %v465
    %3807 = vmatprep.subr.mxu0 %v468
    %3808 = vmatpush1.msra.mxu0 %v467
    %3809 = vmatprep.subr.mxu0 %v470
    %3810 = vmatpush1.msra.mxu0 %v469
    %3811 = vmatprep.subr.mxu0 %v472
    %3812 = vmatpush1.msra.mxu0 %v471
    %3813 = vmatprep.subr.mxu0 %v474
    %3814 = vmatpush1.msra.mxu0 %v473
    %3815 = vmatprep.subr.mxu0 %v476
    %3816 = vmatpush1.msra.mxu0 %v475
    %3817 = vmatprep.subr.mxu0 %v478
    %3818 = vmatpush1.msra.mxu0 %v477
    %3819 = vmatprep.subr.mxu0 %v480
    %3820 = vmatpush1.msra.mxu0 %v479
    %3821 = vmatprep.subr.mxu0 %v482
    %3822 = vmatpush1.msra.mxu0 %v481
    %3823 = vmatprep.subr.mxu0 %v484
    %3824 = vmatpush1.msra.mxu0 %v483
    %3825 = vmatprep.mubr.f32.mxu0 %v3442
    %3826 = vmatmul.mubr.f32.gmra.mrb[0].mxu0 %v3434
    %v3827 = vpop.f32.mrb[0].mxu0
    %v3828 = vadd.f32 %v3757, %v3827
    %v3829 = vpop.f32.mrb[0].mxu0
    %v3830 = vadd.f32 %v3759, %v3829
    %3831 = vdwg.mxu0
    %3832 = vmatprep.subr.mxu0 %v486
    %3833 = vmatpush1.msra.mxu0 %v485
    %3834 = vmatprep.subr.mxu0 %v488
    %3835 = vmatpush1.msra.mxu0 %v487
    %3836 = vmatprep.subr.mxu0 %v490
    %3837 = vmatpush1.msra.mxu0 %v489
    %3838 = vmatprep.subr.mxu0 %v492
    %3839 = vmatpush1.msra.mxu0 %v491
    %3840 = vmatprep.subr.mxu0 %v494
    %3841 = vmatpush1.msra.mxu0 %v493
    %3842 = vmatprep.subr.mxu0 %v496
    %3843 = vmatpush1.msra.mxu0 %v495
    %3844 = vmatprep.subr.mxu0 %v498
    %3845 = vmatpush1.msra.mxu0 %v497
    %3846 = vmatprep.subr.mxu0 %v500
    %3847 = vmatpush1.msra.mxu0 %v499
    %3848 = vmatprep.subr.mxu0 %v502
    %3849 = vmatpush1.msra.mxu0 %v501
    %3850 = vmatprep.subr.mxu0 %v504
    %3851 = vmatpush1.msra.mxu0 %v503
    %3852 = vmatprep.subr.mxu0 %v506
    %3853 = vmatpush1.msra.mxu0 %v505
    %3854 = vmatprep.subr.mxu0 %v508
    %3855 = vmatpush1.msra.mxu0 %v507
    %3856 = vmatprep.subr.mxu0 %v510
    %3857 = vmatpush1.msra.mxu0 %v509
    %3858 = vmatprep.subr.mxu0 %v512
    %3859 = vmatpush1.msra.mxu0 %v511
    %3860 = vmatprep.subr.mxu0 %v514
    %3861 = vmatpush1.msra.mxu0 %v513
    %3862 = vmatprep.subr.mxu0 %v516
    %3863 = vmatpush1.msra.mxu0 %v515
    %3864 = vmatprep.subr.mxu0 %v518
    %3865 = vmatpush1.msra.mxu0 %v517
    %3866 = vmatprep.subr.mxu0 %v520
    %3867 = vmatpush1.msra.mxu0 %v519
    %3868 = vmatprep.subr.mxu0 %v522
    %3869 = vmatpush1.msra.mxu0 %v521
    %3870 = vmatprep.subr.mxu0 %v524
    %3871 = vmatpush1.msra.mxu0 %v523
    %3872 = vmatprep.subr.mxu0 %v526
    %3873 = vmatpush1.msra.mxu0 %v525
    %3874 = vmatprep.subr.mxu0 %v528
    %3875 = vmatpush1.msra.mxu0 %v527
    %3876 = vmatprep.subr.mxu0 %v530
    %3877 = vmatpush1.msra.mxu0 %v529
    %3878 = vmatprep.subr.mxu0 %v532
    %3879 = vmatpush1.msra.mxu0 %v531
    %3880 = vmatprep.subr.mxu0 %v534
    %3881 = vmatpush1.msra.mxu0 %v533
    %3882 = vmatprep.subr.mxu0 %v536
    %3883 = vmatpush1.msra.mxu0 %v535
    %3884 = vmatprep.subr.mxu0 %v538
    %3885 = vmatpush1.msra.mxu0 %v537
    %3886 = vmatprep.subr.mxu0 %v540
    %3887 = vmatpush1.msra.mxu0 %v539
    %3888 = vmatprep.subr.mxu0 %v542
    %3889 = vmatpush1.msra.mxu0 %v541
    %3890 = vmatprep.subr.mxu0 %v544
    %3891 = vmatpush1.msra.mxu0 %v543
    %3892 = vmatprep.subr.mxu0 %v546
    %3893 = vmatpush1.msra.mxu0 %v545
    %3894 = vmatprep.subr.mxu0 %v548
    %3895 = vmatpush1.msra.mxu0 %v547
    %3896 = vmatprep.mubr.f32.mxu0 %v3443
    %3897 = vmatmul.mubr.f32.gmra.mrb[0].mxu0 %v3441
    %v3898 = vpop.f32.mrb[0].mxu0
    %v3899 = vadd.f32 %v3828, %v3898
    %v3900 = vpop.f32.mrb[0].mxu0
    %v3901 = vadd.f32 %v3830, %v3900
    %3902 = vdwg.mxu0
    %3903 = vmatprep.subr.mxu0 %v550
    %3904 = vmatpush1.msra.mxu0 %v549
    %3905 = vmatprep.subr.mxu0 %v552
    %3906 = vmatpush1.msra.mxu0 %v551
    %3907 = vmatprep.subr.mxu0 %v554
    %3908 = vmatpush1.msra.mxu0 %v553
    %3909 = vmatprep.subr.mxu0 %v556
    %3910 = vmatpush1.msra.mxu0 %v555
    %3911 = vmatprep.subr.mxu0 %v558
    %3912 = vmatpush1.msra.mxu0 %v557
    %3913 = vmatprep.subr.mxu0 %v560
    %3914 = vmatpush1.msra.mxu0 %v559
    %3915 = vmatprep.subr.mxu0 %v562
    %3916 = vmatpush1.msra.mxu0 %v561
    %3917 = vmatprep.subr.mxu0 %v564
    %3918 = vmatpush1.msra.mxu0 %v563
    %3919 = vmatprep.subr.mxu0 %v566
    %3920 = vmatpush1.msra.mxu0 %v565
    %3921 = vmatprep.subr.mxu0 %v568
    %3922 = vmatpush1.msra.mxu0 %v567
    %3923 = vmatprep.subr.mxu0 %v570
    %3924 = vmatpush1.msra.mxu0 %v569
    %3925 = vmatprep.subr.mxu0 %v572
    %3926 = vmatpush1.msra.mxu0 %v571
    %3927 = vmatprep.subr.mxu0 %v574
    %3928 = vmatpush1.msra.mxu0 %v573
    %3929 = vmatprep.subr.mxu0 %v576
    %3930 = vmatpush1.msra.mxu0 %v575
    %3931 = vmatprep.subr.mxu0 %v578
    %3932 = vmatpush1.msra.mxu0 %v577
    %3933 = vmatprep.subr.mxu0 %v580
    %3934 = vmatpush1.msra.mxu0 %v579
    %3935 = vmatprep.subr.mxu0 %v582
    %3936 = vmatpush1.msra.mxu0 %v581
    %3937 = vmatprep.subr.mxu0 %v584
    %3938 = vmatpush1.msra.mxu0 %v583
    %3939 = vmatprep.subr.mxu0 %v586
    %3940 = vmatpush1.msra.mxu0 %v585
    %3941 = vmatprep.subr.mxu0 %v588
    %3942 = vmatpush1.msra.mxu0 %v587
    %3943 = vmatprep.subr.mxu0 %v590
    %3944 = vmatpush1.msra.mxu0 %v589
    %3945 = vmatprep.subr.mxu0 %v592
    %3946 = vmatpush1.msra.mxu0 %v591
    %3947 = vmatprep.subr.mxu0 %v594
    %3948 = vmatpush1.msra.mxu0 %v593
    %3949 = vmatprep.subr.mxu0 %v596
    %3950 = vmatpush1.msra.mxu0 %v595
    %3951 = vmatprep.subr.mxu0 %v598
    %3952 = vmatpush1.msra.mxu0 %v597
    %3953 = vmatprep.subr.mxu0 %v600
    %3954 = vmatpush1.msra.mxu0 %v599
    %3955 = vmatprep.subr.mxu0 %v602
    %3956 = vmatpush1.msra.mxu0 %v601
    %3957 = vmatprep.subr.mxu0 %v604
    %3958 = vmatpush1.msra.mxu0 %v603
    %3959 = vmatprep.subr.mxu0 %v606
    %3960 = vmatpush1.msra.mxu0 %v605
    %3961 = vmatprep.subr.mxu0 %v608
    %3962 = vmatpush1.msra.mxu0 %v607
    %3963 = vmatprep.subr.mxu0 %v610
    %3964 = vmatpush1.msra.mxu0 %v609
    %3965 = vmatprep.subr.mxu0 %v612
    %3966 = vmatpush1.msra.mxu0 %v611
    %3967 = vmatprep.mubr.f32.mxu0 %v3459
    %3968 = vmatmul.mubr.f32.gmra.mrb[0].mxu0 %v3451
    %v3969 = vpop.f32.mrb[0].mxu0
    %v3970 = vadd.f32 %v3899, %v3969
    %v3971 = vpop.f32.mrb[0].mxu0
    %v3972 = vadd.f32 %v3901, %v3971
    %3973 = vdwg.mxu0
    %3974 = vmatprep.subr.mxu0 %v614
    %3975 = vmatpush1.msra.mxu0 %v613
    %3976 = vmatprep.subr.mxu0 %v616
    %3977 = vmatpush1.msra.mxu0 %v615
    %3978 = vmatprep.subr.mxu0 %v618
    %3979 = vmatpush1.msra.mxu0 %v617
    %3980 = vmatprep.subr.mxu0 %v620
    %3981 = vmatpush1.msra.mxu0 %v619
    %3982 = vmatprep.subr.mxu0 %v622
    %3983 = vmatpush1.msra.mxu0 %v621
    %3984 = vmatprep.subr.mxu0 %v624
    %3985 = vmatpush1.msra.mxu0 %v623
    %3986 = vmatprep.subr.mxu0 %v626
    %3987 = vmatpush1.msra.mxu0 %v625
    %3988 = vmatprep.subr.mxu0 %v628
    %3989 = vmatpush1.msra.mxu0 %v627
    %3990 = vmatprep.subr.mxu0 %v630
    %3991 = vmatpush1.msra.mxu0 %v629
    %3992 = vmatprep.subr.mxu0 %v632
    %3993 = vmatpush1.msra.mxu0 %v631
    %3994 = vmatprep.subr.mxu0 %v634
    %3995 = vmatpush1.msra.mxu0 %v633
    %3996 = vmatprep.subr.mxu0 %v636
    %3997 = vmatpush1.msra.mxu0 %v635
    %3998 = vmatprep.subr.mxu0 %v638
    %3999 = vmatpush1.msra.mxu0 %v637
    %4000 = vmatprep.subr.mxu0 %v640
    %4001 = vmatpush1.msra.mxu0 %v639
    %4002 = vmatprep.subr.mxu0 %v642
    %4003 = vmatpush1.msra.mxu0 %v641
    %4004 = vmatprep.subr.mxu0 %v644
    %4005 = vmatpush1.msra.mxu0 %v643
    %4006 = vmatprep.subr.mxu0 %v646
    %4007 = vmatpush1.msra.mxu0 %v645
    %4008 = vmatprep.subr.mxu0 %v648
    %4009 = vmatpush1.msra.mxu0 %v647
    %4010 = vmatprep.subr.mxu0 %v650
    %4011 = vmatpush1.msra.mxu0 %v649
    %4012 = vmatprep.subr.mxu0 %v652
    %4013 = vmatpush1.msra.mxu0 %v651
    %4014 = vmatprep.subr.mxu0 %v654
    %4015 = vmatpush1.msra.mxu0 %v653
    %4016 = vmatprep.subr.mxu0 %v656
    %4017 = vmatpush1.msra.mxu0 %v655
    %4018 = vmatprep.subr.mxu0 %v658
    %4019 = vmatpush1.msra.mxu0 %v657
    %4020 = vmatprep.subr.mxu0 %v660
    %4021 = vmatpush1.msra.mxu0 %v659
    %4022 = vmatprep.subr.mxu0 %v662
    %4023 = vmatpush1.msra.mxu0 %v661
    %4024 = vmatprep.subr.mxu0 %v664
    %4025 = vmatpush1.msra.mxu0 %v663
    %4026 = vmatprep.subr.mxu0 %v666
    %4027 = vmatpush1.msra.mxu0 %v665
    %4028 = vmatprep.subr.mxu0 %v668
    %4029 = vmatpush1.msra.mxu0 %v667
    %4030 = vmatprep.subr.mxu0 %v670
    %4031 = vmatpush1.msra.mxu0 %v669
    %4032 = vmatprep.subr.mxu0 %v672
    %4033 = vmatpush1.msra.mxu0 %v671
    %4034 = vmatprep.subr.mxu0 %v674
    %4035 = vmatpush1.msra.mxu0 %v673
    %4036 = vmatprep.subr.mxu0 %v676
    %4037 = vmatpush1.msra.mxu0 %v675
    %4038 = vmatprep.mubr.f32.mxu0 %v3460
    %4039 = vmatmul.mubr.f32.gmra.mrb[0].mxu0 %v3458
    %v4040 = vpop.f32.mrb[0].mxu0
    %v4041 = vadd.f32 %v3970, %v4040
    %v4042 = vpop.f32.mrb[0].mxu0
    %v4043 = vadd.f32 %v3972, %v4042
    %4044 = vdwg.mxu0
    %v4045 = vmax.f32 %v4041, 0.0
    %v4046 = vmax.f32 %v4043, 0.0
    %v4049 = vcombine.low %v4045, %v4046
    %v4051 = vunpack.c.l.s4 1983009808
    %v4052 = vunpack.c.0.s8 %v4051
    %v4053 = vlaneseq
    %v4054 = vshrl.u32 %v4053, 7
    %v4055 = vsub.s32 %v4052, %v4054
    %v4056 = vrot.slane %v4049, %v4055
    %4058 = vst [vmem:[#allocation2 + $0x10] sm:$0xf] %v4056
    %v4059 = vld [vmem:[%s0 + $0x50] sm:$0xff]
    %v4060 = vld [vmem:[%s0 + $0x58] sm:$0xff]
    %v4061 = vld [vmem:[%s0 + $0x60] sm:$0xff]
    %v4062 = vld [vmem:[%s0 + $0x68] sm:$0xff]
    %v4067 = vcombine.high %v4059, %v4059
    %v4069 = vunpack.c.l.s4 1983009808
    %v4070 = vunpack.c.0.s8 %v4069
    %v4071 = vlaneseq
    %v4072 = vshrl.u32 %v4071, 7
    %v4073 = vsub.s32 %v4070, %v4072
    %v4074 = vrot.slane %v4059, %v4073
    %v4076 = vunpack.c.l.s4 1983009808
    %v4077 = vunpack.c.0.s8 %v4076
    %v4078 = vlaneseq
    %v4079 = vshrl.u32 %v4078, 7
    %v4080 = vsub.s32 %v4077, %v4079
    %v4081 = vrot.slane %v4067, %v4080
    %v4082 = vcombine.high %v4074, %v4074
    %v4083 = vcombine.high %v4081, %v4081
    %v4084 = vcombine.high %v4060, %v4060
    %v4086 = vunpack.c.l.s4 1983009808
    %v4087 = vunpack.c.0.s8 %v4086
    %v4088 = vlaneseq
    %v4089 = vshrl.u32 %v4088, 7
    %v4090 = vsub.s32 %v4087, %v4089
    %v4091 = vrot.slane %v4060, %v4090
    %v4093 = vunpack.c.l.s4 1983009808
    %v4094 = vunpack.c.0.s8 %v4093
    %v4095 = vlaneseq
    %v4096 = vshrl.u32 %v4095, 7
    %v4097 = vsub.s32 %v4094, %v4096
    %v4098 = vrot.slane %v4084, %v4097
    %v4099 = vcombine.high %v4091, %v4091
    %v4100 = vcombine.high %v4098, %v4098
    %v4101 = vcombine.high %v4061, %v4061
    %v4103 = vunpack.c.l.s4 1983009808
    %v4104 = vunpack.c.0.s8 %v4103
    %v4105 = vlaneseq
    %v4106 = vshrl.u32 %v4105, 7
    %v4107 = vsub.s32 %v4104, %v4106
    %v4108 = vrot.slane %v4061, %v4107
    %v4110 = vunpack.c.l.s4 1983009808
    %v4111 = vunpack.c.0.s8 %v4110
    %v4112 = vlaneseq
    %v4113 = vshrl.u32 %v4112, 7
    %v4114 = vsub.s32 %v4111, %v4113
    %v4115 = vrot.slane %v4101, %v4114
    %v4116 = vcombine.high %v4108, %v4108
    %v4117 = vcombine.high %v4115, %v4115
    %v4118 = vcombine.high %v4062, %v4062
    %v4120 = vunpack.c.l.s4 1983009808
    %v4121 = vunpack.c.0.s8 %v4120
    %v4122 = vlaneseq
    %v4123 = vshrl.u32 %v4122, 7
    %v4124 = vsub.s32 %v4121, %v4123
    %v4125 = vrot.slane %v4062, %v4124
    %v4127 = vunpack.c.l.s4 1983009808
    %v4128 = vunpack.c.0.s8 %v4127
    %v4129 = vlaneseq
    %v4130 = vshrl.u32 %v4129, 7
    %v4131 = vsub.s32 %v4128, %v4130
    %v4132 = vrot.slane %v4118, %v4131
    %v4133 = vcombine.high %v4125, %v4125
    %v4134 = vcombine.high %v4132, %v4132
    %4151 = vmatprep.subr.mxu0 %v166
    %4152 = vmatpush1.msra.mxu0 %v165
    %4153 = vmatprep.subr.mxu0 %v168
    %4154 = vmatpush1.msra.mxu0 %v167
    %4155 = vmatprep.subr.mxu0 %v170
    %4156 = vmatpush1.msra.mxu0 %v169
    %4157 = vmatprep.subr.mxu0 %v172
    %4158 = vmatpush1.msra.mxu0 %v171
    %4159 = vmatprep.subr.mxu0 %v174
    %4160 = vmatpush1.msra.mxu0 %v173
    %4161 = vmatprep.subr.mxu0 %v176
    %4162 = vmatpush1.msra.mxu0 %v175
    %4163 = vmatprep.subr.mxu0 %v178
    %4164 = vmatpush1.msra.mxu0 %v177
    %4165 = vmatprep.subr.mxu0 %v180
    %4166 = vmatpush1.msra.mxu0 %v179
    %4167 = vmatprep.subr.mxu0 %v182
    %4168 = vmatpush1.msra.mxu0 %v181
    %4169 = vmatprep.subr.mxu0 %v184
    %4170 = vmatpush1.msra.mxu0 %v183
    %4171 = vmatprep.subr.mxu0 %v186
    %4172 = vmatpush1.msra.mxu0 %v185
    %4173 = vmatprep.subr.mxu0 %v188
    %4174 = vmatpush1.msra.mxu0 %v187
    %4175 = vmatprep.subr.mxu0 %v190
    %4176 = vmatpush1.msra.mxu0 %v189
    %4177 = vmatprep.subr.mxu0 %v192
    %4178 = vmatpush1.msra.mxu0 %v191
    %4179 = vmatprep.subr.mxu0 %v194
    %4180 = vmatpush1.msra.mxu0 %v193
    %4181 = vmatprep.subr.mxu0 %v196
    %4182 = vmatpush1.msra.mxu0 %v195
    %4183 = vmatprep.subr.mxu0 %v198
    %4184 = vmatpush1.msra.mxu0 %v197
    %4185 = vmatprep.subr.mxu0 %v200
    %4186 = vmatpush1.msra.mxu0 %v199
    %4187 = vmatprep.subr.mxu0 %v202
    %4188 = vmatpush1.msra.mxu0 %v201
    %4189 = vmatprep.subr.mxu0 %v204
    %4190 = vmatpush1.msra.mxu0 %v203
    %4191 = vmatprep.subr.mxu0 %v206
    %4192 = vmatpush1.msra.mxu0 %v205
    %4193 = vmatprep.subr.mxu0 %v208
    %4194 = vmatpush1.msra.mxu0 %v207
    %4195 = vmatprep.subr.mxu0 %v210
    %4196 = vmatpush1.msra.mxu0 %v209
    %4197 = vmatprep.subr.mxu0 %v212
    %4198 = vmatpush1.msra.mxu0 %v211
    %4199 = vmatprep.subr.mxu0 %v214
    %4200 = vmatpush1.msra.mxu0 %v213
    %4201 = vmatprep.subr.mxu0 %v216
    %4202 = vmatpush1.msra.mxu0 %v215
    %4203 = vmatprep.subr.mxu0 %v218
    %4204 = vmatpush1.msra.mxu0 %v217
    %4205 = vmatprep.subr.mxu0 %v220
    %4206 = vmatpush1.msra.mxu0 %v219
    %4207 = vmatprep.subr.mxu0 %v222
    %4208 = vmatpush1.msra.mxu0 %v221
    %4209 = vmatprep.subr.mxu0 %v224
    %4210 = vmatpush1.msra.mxu0 %v223
    %4211 = vmatprep.subr.mxu0 %v226
    %4212 = vmatpush1.msra.mxu0 %v225
    %4213 = vmatprep.subr.mxu0 %v228
    %4214 = vmatpush1.msra.mxu0 %v227
    %4215 = vmatprep.mubr.f32.mxu0 %v4082
    %4216 = vmatmul.mubr.f32.gmra.mrb[0].mxu0 %v4074
    %v4217 = vpop.f32.mrb[0].mxu0
    %v4218 = vadd.f32 %v686, %v4217
    %v4219 = vpop.f32.mrb[0].mxu0
    %v4220 = vadd.f32 %v690, %v4219
    %4221 = vdwg.mxu0
    %4222 = vmatprep.subr.mxu0 %v230
    %4223 = vmatpush1.msra.mxu0 %v229
    %4224 = vmatprep.subr.mxu0 %v232
    %4225 = vmatpush1.msra.mxu0 %v231
    %4226 = vmatprep.subr.mxu0 %v234
    %4227 = vmatpush1.msra.mxu0 %v233
    %4228 = vmatprep.subr.mxu0 %v236
    %4229 = vmatpush1.msra.mxu0 %v235
    %4230 = vmatprep.subr.mxu0 %v238
    %4231 = vmatpush1.msra.mxu0 %v237
    %4232 = vmatprep.subr.mxu0 %v240
    %4233 = vmatpush1.msra.mxu0 %v239
    %4234 = vmatprep.subr.mxu0 %v242
    %4235 = vmatpush1.msra.mxu0 %v241
    %4236 = vmatprep.subr.mxu0 %v244
    %4237 = vmatpush1.msra.mxu0 %v243
    %4238 = vmatprep.subr.mxu0 %v246
    %4239 = vmatpush1.msra.mxu0 %v245
    %4240 = vmatprep.subr.mxu0 %v248
    %4241 = vmatpush1.msra.mxu0 %v247
    %4242 = vmatprep.subr.mxu0 %v250
    %4243 = vmatpush1.msra.mxu0 %v249
    %4244 = vmatprep.subr.mxu0 %v252
    %4245 = vmatpush1.msra.mxu0 %v251
    %4246 = vmatprep.subr.mxu0 %v254
    %4247 = vmatpush1.msra.mxu0 %v253
    %4248 = vmatprep.subr.mxu0 %v256
    %4249 = vmatpush1.msra.mxu0 %v255
    %4250 = vmatprep.subr.mxu0 %v258
    %4251 = vmatpush1.msra.mxu0 %v257
    %4252 = vmatprep.subr.mxu0 %v260
    %4253 = vmatpush1.msra.mxu0 %v259
    %4254 = vmatprep.subr.mxu0 %v262
    %4255 = vmatpush1.msra.mxu0 %v261
    %4256 = vmatprep.subr.mxu0 %v264
    %4257 = vmatpush1.msra.mxu0 %v263
    %4258 = vmatprep.subr.mxu0 %v266
    %4259 = vmatpush1.msra.mxu0 %v265
    %4260 = vmatprep.subr.mxu0 %v268
    %4261 = vmatpush1.msra.mxu0 %v267
    %4262 = vmatprep.subr.mxu0 %v270
    %4263 = vmatpush1.msra.mxu0 %v269
    %4264 = vmatprep.subr.mxu0 %v272
    %4265 = vmatpush1.msra.mxu0 %v271
    %4266 = vmatprep.subr.mxu0 %v274
    %4267 = vmatpush1.msra.mxu0 %v273
    %4268 = vmatprep.subr.mxu0 %v276
    %4269 = vmatpush1.msra.mxu0 %v275
    %4270 = vmatprep.subr.mxu0 %v278
    %4271 = vmatpush1.msra.mxu0 %v277
    %4272 = vmatprep.subr.mxu0 %v280
    %4273 = vmatpush1.msra.mxu0 %v279
    %4274 = vmatprep.subr.mxu0 %v282
    %4275 = vmatpush1.msra.mxu0 %v281
    %4276 = vmatprep.subr.mxu0 %v284
    %4277 = vmatpush1.msra.mxu0 %v283
    %4278 = vmatprep.subr.mxu0 %v286
    %4279 = vmatpush1.msra.mxu0 %v285
    %4280 = vmatprep.subr.mxu0 %v288
    %4281 = vmatpush1.msra.mxu0 %v287
    %4282 = vmatprep.subr.mxu0 %v290
    %4283 = vmatpush1.msra.mxu0 %v289
    %4284 = vmatprep.subr.mxu0 %v292
    %4285 = vmatpush1.msra.mxu0 %v291
    %4286 = vmatprep.mubr.f32.mxu0 %v4083
    %4287 = vmatmul.mubr.f32.gmra.mrb[0].mxu0 %v4081
    %v4288 = vpop.f32.mrb[0].mxu0
    %v4289 = vadd.f32 %v4218, %v4288
    %v4290 = vpop.f32.mrb[0].mxu0
    %v4291 = vadd.f32 %v4220, %v4290
    %4292 = vdwg.mxu0
    %4293 = vmatprep.subr.mxu0 %v294
    %4294 = vmatpush1.msra.mxu0 %v293
    %4295 = vmatprep.subr.mxu0 %v296
    %4296 = vmatpush1.msra.mxu0 %v295
    %4297 = vmatprep.subr.mxu0 %v298
    %4298 = vmatpush1.msra.mxu0 %v297
    %4299 = vmatprep.subr.mxu0 %v300
    %4300 = vmatpush1.msra.mxu0 %v299
    %4301 = vmatprep.subr.mxu0 %v302
    %4302 = vmatpush1.msra.mxu0 %v301
    %4303 = vmatprep.subr.mxu0 %v304
    %4304 = vmatpush1.msra.mxu0 %v303
    %4305 = vmatprep.subr.mxu0 %v306
    %4306 = vmatpush1.msra.mxu0 %v305
    %4307 = vmatprep.subr.mxu0 %v308
    %4308 = vmatpush1.msra.mxu0 %v307
    %4309 = vmatprep.subr.mxu0 %v310
    %4310 = vmatpush1.msra.mxu0 %v309
    %4311 = vmatprep.subr.mxu0 %v312
    %4312 = vmatpush1.msra.mxu0 %v311
    %4313 = vmatprep.subr.mxu0 %v314
    %4314 = vmatpush1.msra.mxu0 %v313
    %4315 = vmatprep.subr.mxu0 %v316
    %4316 = vmatpush1.msra.mxu0 %v315
    %4317 = vmatprep.subr.mxu0 %v318
    %4318 = vmatpush1.msra.mxu0 %v317
    %4319 = vmatprep.subr.mxu0 %v320
    %4320 = vmatpush1.msra.mxu0 %v319
    %4321 = vmatprep.subr.mxu0 %v322
    %4322 = vmatpush1.msra.mxu0 %v321
    %4323 = vmatprep.subr.mxu0 %v324
    %4324 = vmatpush1.msra.mxu0 %v323
    %4325 = vmatprep.subr.mxu0 %v326
    %4326 = vmatpush1.msra.mxu0 %v325
    %4327 = vmatprep.subr.mxu0 %v328
    %4328 = vmatpush1.msra.mxu0 %v327
    %4329 = vmatprep.subr.mxu0 %v330
    %4330 = vmatpush1.msra.mxu0 %v329
    %4331 = vmatprep.subr.mxu0 %v332
    %4332 = vmatpush1.msra.mxu0 %v331
    %4333 = vmatprep.subr.mxu0 %v334
    %4334 = vmatpush1.msra.mxu0 %v333
    %4335 = vmatprep.subr.mxu0 %v336
    %4336 = vmatpush1.msra.mxu0 %v335
    %4337 = vmatprep.subr.mxu0 %v338
    %4338 = vmatpush1.msra.mxu0 %v337
    %4339 = vmatprep.subr.mxu0 %v340
    %4340 = vmatpush1.msra.mxu0 %v339
    %4341 = vmatprep.subr.mxu0 %v342
    %4342 = vmatpush1.msra.mxu0 %v341
    %4343 = vmatprep.subr.mxu0 %v344
    %4344 = vmatpush1.msra.mxu0 %v343
    %4345 = vmatprep.subr.mxu0 %v346
    %4346 = vmatpush1.msra.mxu0 %v345
    %4347 = vmatprep.subr.mxu0 %v348
    %4348 = vmatpush1.msra.mxu0 %v347
    %4349 = vmatprep.subr.mxu0 %v350
    %4350 = vmatpush1.msra.mxu0 %v349
    %4351 = vmatprep.subr.mxu0 %v352
    %4352 = vmatpush1.msra.mxu0 %v351
    %4353 = vmatprep.subr.mxu0 %v354
    %4354 = vmatpush1.msra.mxu0 %v353
    %4355 = vmatprep.subr.mxu0 %v356
    %4356 = vmatpush1.msra.mxu0 %v355
    %4357 = vmatprep.mubr.f32.mxu0 %v4099
    %4358 = vmatmul.mubr.f32.gmra.mrb[0].mxu0 %v4091
    %v4359 = vpop.f32.mrb[0].mxu0
    %v4360 = vadd.f32 %v4289, %v4359
    %v4361 = vpop.f32.mrb[0].mxu0
    %v4362 = vadd.f32 %v4291, %v4361
    %4363 = vdwg.mxu0
    %4364 = vmatprep.subr.mxu0 %v358
    %4365 = vmatpush1.msra.mxu0 %v357
    %4366 = vmatprep.subr.mxu0 %v360
    %4367 = vmatpush1.msra.mxu0 %v359
    %4368 = vmatprep.subr.mxu0 %v362
    %4369 = vmatpush1.msra.mxu0 %v361
    %4370 = vmatprep.subr.mxu0 %v364
    %4371 = vmatpush1.msra.mxu0 %v363
    %4372 = vmatprep.subr.mxu0 %v366
    %4373 = vmatpush1.msra.mxu0 %v365
    %4374 = vmatprep.subr.mxu0 %v368
    %4375 = vmatpush1.msra.mxu0 %v367
    %4376 = vmatprep.subr.mxu0 %v370
    %4377 = vmatpush1.msra.mxu0 %v369
    %4378 = vmatprep.subr.mxu0 %v372
    %4379 = vmatpush1.msra.mxu0 %v371
    %4380 = vmatprep.subr.mxu0 %v374
    %4381 = vmatpush1.msra.mxu0 %v373
    %4382 = vmatprep.subr.mxu0 %v376
    %4383 = vmatpush1.msra.mxu0 %v375
    %4384 = vmatprep.subr.mxu0 %v378
    %4385 = vmatpush1.msra.mxu0 %v377
    %4386 = vmatprep.subr.mxu0 %v380
    %4387 = vmatpush1.msra.mxu0 %v379
    %4388 = vmatprep.subr.mxu0 %v382
    %4389 = vmatpush1.msra.mxu0 %v381
    %4390 = vmatprep.subr.mxu0 %v384
    %4391 = vmatpush1.msra.mxu0 %v383
    %4392 = vmatprep.subr.mxu0 %v386
    %4393 = vmatpush1.msra.mxu0 %v385
    %4394 = vmatprep.subr.mxu0 %v388
    %4395 = vmatpush1.msra.mxu0 %v387
    %4396 = vmatprep.subr.mxu0 %v390
    %4397 = vmatpush1.msra.mxu0 %v389
    %4398 = vmatprep.subr.mxu0 %v392
    %4399 = vmatpush1.msra.mxu0 %v391
    %4400 = vmatprep.subr.mxu0 %v394
    %4401 = vmatpush1.msra.mxu0 %v393
    %4402 = vmatprep.subr.mxu0 %v396
    %4403 = vmatpush1.msra.mxu0 %v395
    %4404 = vmatprep.subr.mxu0 %v398
    %4405 = vmatpush1.msra.mxu0 %v397
    %4406 = vmatprep.subr.mxu0 %v400
    %4407 = vmatpush1.msra.mxu0 %v399
    %4408 = vmatprep.subr.mxu0 %v402
    %4409 = vmatpush1.msra.mxu0 %v401
    %4410 = vmatprep.subr.mxu0 %v404
    %4411 = vmatpush1.msra.mxu0 %v403
    %4412 = vmatprep.subr.mxu0 %v406
    %4413 = vmatpush1.msra.mxu0 %v405
    %4414 = vmatprep.subr.mxu0 %v408
    %4415 = vmatpush1.msra.mxu0 %v407
    %4416 = vmatprep.subr.mxu0 %v410
    %4417 = vmatpush1.msra.mxu0 %v409
    %4418 = vmatprep.subr.mxu0 %v412
    %4419 = vmatpush1.msra.mxu0 %v411
    %4420 = vmatprep.subr.mxu0 %v414
    %4421 = vmatpush1.msra.mxu0 %v413
    %4422 = vmatprep.subr.mxu0 %v416
    %4423 = vmatpush1.msra.mxu0 %v415
    %4424 = vmatprep.subr.mxu0 %v418
    %4425 = vmatpush1.msra.mxu0 %v417
    %4426 = vmatprep.subr.mxu0 %v420
    %4427 = vmatpush1.msra.mxu0 %v419
    %4428 = vmatprep.mubr.f32.mxu0 %v4100
    %4429 = vmatmul.mubr.f32.gmra.mrb[0].mxu0 %v4098
    %v4430 = vpop.f32.mrb[0].mxu0
    %v4431 = vadd.f32 %v4360, %v4430
    %v4432 = vpop.f32.mrb[0].mxu0
    %v4433 = vadd.f32 %v4362, %v4432
    %4434 = vdwg.mxu0
    %4435 = vmatprep.subr.mxu0 %v422
    %4436 = vmatpush1.msra.mxu0 %v421
    %4437 = vmatprep.subr.mxu0 %v424
    %4438 = vmatpush1.msra.mxu0 %v423
    %4439 = vmatprep.subr.mxu0 %v426
    %4440 = vmatpush1.msra.mxu0 %v425
    %4441 = vmatprep.subr.mxu0 %v428
    %4442 = vmatpush1.msra.mxu0 %v427
    %4443 = vmatprep.subr.mxu0 %v430
    %4444 = vmatpush1.msra.mxu0 %v429
    %4445 = vmatprep.subr.mxu0 %v432
    %4446 = vmatpush1.msra.mxu0 %v431
    %4447 = vmatprep.subr.mxu0 %v434
    %4448 = vmatpush1.msra.mxu0 %v433
    %4449 = vmatprep.subr.mxu0 %v436
    %4450 = vmatpush1.msra.mxu0 %v435
    %4451 = vmatprep.subr.mxu0 %v438
    %4452 = vmatpush1.msra.mxu0 %v437
    %4453 = vmatprep.subr.mxu0 %v440
    %4454 = vmatpush1.msra.mxu0 %v439
    %4455 = vmatprep.subr.mxu0 %v442
    %4456 = vmatpush1.msra.mxu0 %v441
    %4457 = vmatprep.subr.mxu0 %v444
    %4458 = vmatpush1.msra.mxu0 %v443
    %4459 = vmatprep.subr.mxu0 %v446
    %4460 = vmatpush1.msra.mxu0 %v445
    %4461 = vmatprep.subr.mxu0 %v448
    %4462 = vmatpush1.msra.mxu0 %v447
    %4463 = vmatprep.subr.mxu0 %v450
    %4464 = vmatpush1.msra.mxu0 %v449
    %4465 = vmatprep.subr.mxu0 %v452
    %4466 = vmatpush1.msra.mxu0 %v451
    %4467 = vmatprep.subr.mxu0 %v454
    %4468 = vmatpush1.msra.mxu0 %v453
    %4469 = vmatprep.subr.mxu0 %v456
    %4470 = vmatpush1.msra.mxu0 %v455
    %4471 = vmatprep.subr.mxu0 %v458
    %4472 = vmatpush1.msra.mxu0 %v457
    %4473 = vmatprep.subr.mxu0 %v460
    %4474 = vmatpush1.msra.mxu0 %v459
    %4475 = vmatprep.subr.mxu0 %v462
    %4476 = vmatpush1.msra.mxu0 %v461
    %4477 = vmatprep.subr.mxu0 %v464
    %4478 = vmatpush1.msra.mxu0 %v463
    %4479 = vmatprep.subr.mxu0 %v466
    %4480 = vmatpush1.msra.mxu0 %v465
    %4481 = vmatprep.subr.mxu0 %v468
    %4482 = vmatpush1.msra.mxu0 %v467
    %4483 = vmatprep.subr.mxu0 %v470
    %4484 = vmatpush1.msra.mxu0 %v469
    %4485 = vmatprep.subr.mxu0 %v472
    %4486 = vmatpush1.msra.mxu0 %v471
    %4487 = vmatprep.subr.mxu0 %v474
    %4488 = vmatpush1.msra.mxu0 %v473
    %4489 = vmatprep.subr.mxu0 %v476
    %4490 = vmatpush1.msra.mxu0 %v475
    %4491 = vmatprep.subr.mxu0 %v478
    %4492 = vmatpush1.msra.mxu0 %v477
    %4493 = vmatprep.subr.mxu0 %v480
    %4494 = vmatpush1.msra.mxu0 %v479
    %4495 = vmatprep.subr.mxu0 %v482
    %4496 = vmatpush1.msra.mxu0 %v481
    %4497 = vmatprep.subr.mxu0 %v484
    %4498 = vmatpush1.msra.mxu0 %v483
    %4499 = vmatprep.mubr.f32.mxu0 %v4116
    %4500 = vmatmul.mubr.f32.gmra.mrb[0].mxu0 %v4108
    %v4501 = vpop.f32.mrb[0].mxu0
    %v4502 = vadd.f32 %v4431, %v4501
    %v4503 = vpop.f32.mrb[0].mxu0
    %v4504 = vadd.f32 %v4433, %v4503
    %4505 = vdwg.mxu0
    %4506 = vmatprep.subr.mxu0 %v486
    %4507 = vmatpush1.msra.mxu0 %v485
    %4508 = vmatprep.subr.mxu0 %v488
    %4509 = vmatpush1.msra.mxu0 %v487
    %4510 = vmatprep.subr.mxu0 %v490
    %4511 = vmatpush1.msra.mxu0 %v489
    %4512 = vmatprep.subr.mxu0 %v492
    %4513 = vmatpush1.msra.mxu0 %v491
    %4514 = vmatprep.subr.mxu0 %v494
    %4515 = vmatpush1.msra.mxu0 %v493
    %4516 = vmatprep.subr.mxu0 %v496
    %4517 = vmatpush1.msra.mxu0 %v495
    %4518 = vmatprep.subr.mxu0 %v498
    %4519 = vmatpush1.msra.mxu0 %v497
    %4520 = vmatprep.subr.mxu0 %v500
    %4521 = vmatpush1.msra.mxu0 %v499
    %4522 = vmatprep.subr.mxu0 %v502
    %4523 = vmatpush1.msra.mxu0 %v501
    %4524 = vmatprep.subr.mxu0 %v504
    %4525 = vmatpush1.msra.mxu0 %v503
    %4526 = vmatprep.subr.mxu0 %v506
    %4527 = vmatpush1.msra.mxu0 %v505
    %4528 = vmatprep.subr.mxu0 %v508
    %4529 = vmatpush1.msra.mxu0 %v507
    %4530 = vmatprep.subr.mxu0 %v510
    %4531 = vmatpush1.msra.mxu0 %v509
    %4532 = vmatprep.subr.mxu0 %v512
    %4533 = vmatpush1.msra.mxu0 %v511
    %4534 = vmatprep.subr.mxu0 %v514
    %4535 = vmatpush1.msra.mxu0 %v513
    %4536 = vmatprep.subr.mxu0 %v516
    %4537 = vmatpush1.msra.mxu0 %v515
    %4538 = vmatprep.subr.mxu0 %v518
    %4539 = vmatpush1.msra.mxu0 %v517
    %4540 = vmatprep.subr.mxu0 %v520
    %4541 = vmatpush1.msra.mxu0 %v519
    %4542 = vmatprep.subr.mxu0 %v522
    %4543 = vmatpush1.msra.mxu0 %v521
    %4544 = vmatprep.subr.mxu0 %v524
    %4545 = vmatpush1.msra.mxu0 %v523
    %4546 = vmatprep.subr.mxu0 %v526
    %4547 = vmatpush1.msra.mxu0 %v525
    %4548 = vmatprep.subr.mxu0 %v528
    %4549 = vmatpush1.msra.mxu0 %v527
    %4550 = vmatprep.subr.mxu0 %v530
    %4551 = vmatpush1.msra.mxu0 %v529
    %4552 = vmatprep.subr.mxu0 %v532
    %4553 = vmatpush1.msra.mxu0 %v531
    %4554 = vmatprep.subr.mxu0 %v534
    %4555 = vmatpush1.msra.mxu0 %v533
    %4556 = vmatprep.subr.mxu0 %v536
    %4557 = vmatpush1.msra.mxu0 %v535
    %4558 = vmatprep.subr.mxu0 %v538
    %4559 = vmatpush1.msra.mxu0 %v537
    %4560 = vmatprep.subr.mxu0 %v540
    %4561 = vmatpush1.msra.mxu0 %v539
    %4562 = vmatprep.subr.mxu0 %v542
    %4563 = vmatpush1.msra.mxu0 %v541
    %4564 = vmatprep.subr.mxu0 %v544
    %4565 = vmatpush1.msra.mxu0 %v543
    %4566 = vmatprep.subr.mxu0 %v546
    %4567 = vmatpush1.msra.mxu0 %v545
    %4568 = vmatprep.subr.mxu0 %v548
    %4569 = vmatpush1.msra.mxu0 %v547
    %4570 = vmatprep.mubr.f32.mxu0 %v4117
    %4571 = vmatmul.mubr.f32.gmra.mrb[0].mxu0 %v4115
    %v4572 = vpop.f32.mrb[0].mxu0
    %v4573 = vadd.f32 %v4502, %v4572
    %v4574 = vpop.f32.mrb[0].mxu0
    %v4575 = vadd.f32 %v4504, %v4574
    %4576 = vdwg.mxu0
    %4577 = vmatprep.subr.mxu0 %v550
    %4578 = vmatpush1.msra.mxu0 %v549
    %4579 = vmatprep.subr.mxu0 %v552
    %4580 = vmatpush1.msra.mxu0 %v551
    %4581 = vmatprep.subr.mxu0 %v554
    %4582 = vmatpush1.msra.mxu0 %v553
    %4583 = vmatprep.subr.mxu0 %v556
    %4584 = vmatpush1.msra.mxu0 %v555
    %4585 = vmatprep.subr.mxu0 %v558
    %4586 = vmatpush1.msra.mxu0 %v557
    %4587 = vmatprep.subr.mxu0 %v560
    %4588 = vmatpush1.msra.mxu0 %v559
    %4589 = vmatprep.subr.mxu0 %v562
    %4590 = vmatpush1.msra.mxu0 %v561
    %4591 = vmatprep.subr.mxu0 %v564
    %4592 = vmatpush1.msra.mxu0 %v563
    %4593 = vmatprep.subr.mxu0 %v566
    %4594 = vmatpush1.msra.mxu0 %v565
    %4595 = vmatprep.subr.mxu0 %v568
    %4596 = vmatpush1.msra.mxu0 %v567
    %4597 = vmatprep.subr.mxu0 %v570
    %4598 = vmatpush1.msra.mxu0 %v569
    %4599 = vmatprep.subr.mxu0 %v572
    %4600 = vmatpush1.msra.mxu0 %v571
    %4601 = vmatprep.subr.mxu0 %v574
    %4602 = vmatpush1.msra.mxu0 %v573
    %4603 = vmatprep.subr.mxu0 %v576
    %4604 = vmatpush1.msra.mxu0 %v575
    %4605 = vmatprep.subr.mxu0 %v578
    %4606 = vmatpush1.msra.mxu0 %v577
    %4607 = vmatprep.subr.mxu0 %v580
    %4608 = vmatpush1.msra.mxu0 %v579
    %4609 = vmatprep.subr.mxu0 %v582
    %4610 = vmatpush1.msra.mxu0 %v581
    %4611 = vmatprep.subr.mxu0 %v584
    %4612 = vmatpush1.msra.mxu0 %v583
    %4613 = vmatprep.subr.mxu0 %v586
    %4614 = vmatpush1.msra.mxu0 %v585
    %4615 = vmatprep.subr.mxu0 %v588
    %4616 = vmatpush1.msra.mxu0 %v587
    %4617 = vmatprep.subr.mxu0 %v590
    %4618 = vmatpush1.msra.mxu0 %v589
    %4619 = vmatprep.subr.mxu0 %v592
    %4620 = vmatpush1.msra.mxu0 %v591
    %4621 = vmatprep.subr.mxu0 %v594
    %4622 = vmatpush1.msra.mxu0 %v593
    %4623 = vmatprep.subr.mxu0 %v596
    %4624 = vmatpush1.msra.mxu0 %v595
    %4625 = vmatprep.subr.mxu0 %v598
    %4626 = vmatpush1.msra.mxu0 %v597
    %4627 = vmatprep.subr.mxu0 %v600
    %4628 = vmatpush1.msra.mxu0 %v599
    %4629 = vmatprep.subr.mxu0 %v602
    %4630 = vmatpush1.msra.mxu0 %v601
    %4631 = vmatprep.subr.mxu0 %v604
    %4632 = vmatpush1.msra.mxu0 %v603
    %4633 = vmatprep.subr.mxu0 %v606
    %4634 = vmatpush1.msra.mxu0 %v605
    %4635 = vmatprep.subr.mxu0 %v608
    %4636 = vmatpush1.msra.mxu0 %v607
    %4637 = vmatprep.subr.mxu0 %v610
    %4638 = vmatpush1.msra.mxu0 %v609
    %4639 = vmatprep.subr.mxu0 %v612
    %4640 = vmatpush1.msra.mxu0 %v611
    %4641 = vmatprep.mubr.f32.mxu0 %v4133
    %4642 = vmatmul.mubr.f32.gmra.mrb[0].mxu0 %v4125
    %v4643 = vpop.f32.mrb[0].mxu0
    %v4644 = vadd.f32 %v4573, %v4643
    %v4645 = vpop.f32.mrb[0].mxu0
    %v4646 = vadd.f32 %v4575, %v4645
    %4647 = vdwg.mxu0
    %4648 = vmatprep.subr.mxu0 %v614
    %4649 = vmatpush1.msra.mxu0 %v613
    %4650 = vmatprep.subr.mxu0 %v616
    %4651 = vmatpush1.msra.mxu0 %v615
    %4652 = vmatprep.subr.mxu0 %v618
    %4653 = vmatpush1.msra.mxu0 %v617
    %4654 = vmatprep.subr.mxu0 %v620
    %4655 = vmatpush1.msra.mxu0 %v619
    %4656 = vmatprep.subr.mxu0 %v622
    %4657 = vmatpush1.msra.mxu0 %v621
    %4658 = vmatprep.subr.mxu0 %v624
    %4659 = vmatpush1.msra.mxu0 %v623
    %4660 = vmatprep.subr.mxu0 %v626
    %4661 = vmatpush1.msra.mxu0 %v625
    %4662 = vmatprep.subr.mxu0 %v628
    %4663 = vmatpush1.msra.mxu0 %v627
    %4664 = vmatprep.subr.mxu0 %v630
    %4665 = vmatpush1.msra.mxu0 %v629
    %4666 = vmatprep.subr.mxu0 %v632
    %4667 = vmatpush1.msra.mxu0 %v631
    %4668 = vmatprep.subr.mxu0 %v634
    %4669 = vmatpush1.msra.mxu0 %v633
    %4670 = vmatprep.subr.mxu0 %v636
    %4671 = vmatpush1.msra.mxu0 %v635
    %4672 = vmatprep.subr.mxu0 %v638
    %4673 = vmatpush1.msra.mxu0 %v637
    %4674 = vmatprep.subr.mxu0 %v640
    %4675 = vmatpush1.msra.mxu0 %v639
    %4676 = vmatprep.subr.mxu0 %v642
    %4677 = vmatpush1.msra.mxu0 %v641
    %4678 = vmatprep.subr.mxu0 %v644
    %4679 = vmatpush1.msra.mxu0 %v643
    %4680 = vmatprep.subr.mxu0 %v646
    %4681 = vmatpush1.msra.mxu0 %v645
    %4682 = vmatprep.subr.mxu0 %v648
    %4683 = vmatpush1.msra.mxu0 %v647
    %4684 = vmatprep.subr.mxu0 %v650
    %4685 = vmatpush1.msra.mxu0 %v649
    %4686 = vmatprep.subr.mxu0 %v652
    %4687 = vmatpush1.msra.mxu0 %v651
    %4688 = vmatprep.subr.mxu0 %v654
    %4689 = vmatpush1.msra.mxu0 %v653
    %4690 = vmatprep.subr.mxu0 %v656
    %4691 = vmatpush1.msra.mxu0 %v655
    %4692 = vmatprep.subr.mxu0 %v658
    %4693 = vmatpush1.msra.mxu0 %v657
    %4694 = vmatprep.subr.mxu0 %v660
    %4695 = vmatpush1.msra.mxu0 %v659
    %4696 = vmatprep.subr.mxu0 %v662
    %4697 = vmatpush1.msra.mxu0 %v661
    %4698 = vmatprep.subr.mxu0 %v664
    %4699 = vmatpush1.msra.mxu0 %v663
    %4700 = vmatprep.subr.mxu0 %v666
    %4701 = vmatpush1.msra.mxu0 %v665
    %4702 = vmatprep.subr.mxu0 %v668
    %4703 = vmatpush1.msra.mxu0 %v667
    %4704 = vmatprep.subr.mxu0 %v670
    %4705 = vmatpush1.msra.mxu0 %v669
    %4706 = vmatprep.subr.mxu0 %v672
    %4707 = vmatpush1.msra.mxu0 %v671
    %4708 = vmatprep.subr.mxu0 %v674
    %4709 = vmatpush1.msra.mxu0 %v673
    %4710 = vmatprep.subr.mxu0 %v676
    %4711 = vmatpush1.msra.mxu0 %v675
    %4712 = vmatprep.mubr.f32.mxu0 %v4134
    %4713 = vmatmul.mubr.f32.gmra.mrb[0].mxu0 %v4132
    %v4714 = vpop.f32.mrb[0].mxu0
    %v4715 = vadd.f32 %v4644, %v4714
    %v4716 = vpop.f32.mrb[0].mxu0
    %v4717 = vadd.f32 %v4646, %v4716
    %4718 = vdwg.mxu0
    %v4719 = vmax.f32 %v4715, 0.0
    %v4720 = vmax.f32 %v4717, 0.0
    %v4723 = vcombine.low %v4719, %v4720
    %v4725 = vunpack.c.l.s4 1983009808
    %v4726 = vunpack.c.0.s8 %v4725
    %v4727 = vlaneseq
    %v4728 = vshrl.u32 %v4727, 7
    %v4729 = vsub.s32 %v4726, %v4728
    %v4730 = vrot.slane %v4723, %v4729
    %4732 = vst [vmem:[#allocation2 + $0x14] sm:$0xf] %v4730
    %v4733 = vld [vmem:[%s0 + $0x60] sm:$0xff]
    %v4734 = vld [vmem:[%s0 + $0x68] sm:$0xff]
    %v4735 = vld [vmem:[%s0 + $0x70] sm:$0xff]
    %v4736 = vld [vmem:[%s0 + $0x78] sm:$0xff]
    %v4741 = vcombine.high %v4733, %v4733
    %v4743 = vunpack.c.l.s4 1983009808
    %v4744 = vunpack.c.0.s8 %v4743
    %v4745 = vlaneseq
    %v4746 = vshrl.u32 %v4745, 7
    %v4747 = vsub.s32 %v4744, %v4746
    %v4748 = vrot.slane %v4733, %v4747
    %v4750 = vunpack.c.l.s4 1983009808
    %v4751 = vunpack.c.0.s8 %v4750
    %v4752 = vlaneseq
    %v4753 = vshrl.u32 %v4752, 7
    %v4754 = vsub.s32 %v4751, %v4753
    %v4755 = vrot.slane %v4741, %v4754
    %v4756 = vcombine.high %v4748, %v4748
    %v4757 = vcombine.high %v4755, %v4755
    %v4758 = vcombine.high %v4734, %v4734
    %v4760 = vunpack.c.l.s4 1983009808
    %v4761 = vunpack.c.0.s8 %v4760
    %v4762 = vlaneseq
    %v4763 = vshrl.u32 %v4762, 7
    %v4764 = vsub.s32 %v4761, %v4763
    %v4765 = vrot.slane %v4734, %v4764
    %v4767 = vunpack.c.l.s4 1983009808
    %v4768 = vunpack.c.0.s8 %v4767
    %v4769 = vlaneseq
    %v4770 = vshrl.u32 %v4769, 7
    %v4771 = vsub.s32 %v4768, %v4770
    %v4772 = vrot.slane %v4758, %v4771
    %v4773 = vcombine.high %v4765, %v4765
    %v4774 = vcombine.high %v4772, %v4772
    %v4775 = vcombine.high %v4735, %v4735
    %v4777 = vunpack.c.l.s4 1983009808
    %v4778 = vunpack.c.0.s8 %v4777
    %v4779 = vlaneseq
    %v4780 = vshrl.u32 %v4779, 7
    %v4781 = vsub.s32 %v4778, %v4780
    %v4782 = vrot.slane %v4735, %v4781
    %v4784 = vunpack.c.l.s4 1983009808
    %v4785 = vunpack.c.0.s8 %v4784
    %v4786 = vlaneseq
    %v4787 = vshrl.u32 %v4786, 7
    %v4788 = vsub.s32 %v4785, %v4787
    %v4789 = vrot.slane %v4775, %v4788
    %v4790 = vcombine.high %v4782, %v4782
    %v4791 = vcombine.high %v4789, %v4789
    %v4792 = vcombine.high %v4736, %v4736
    %v4794 = vunpack.c.l.s4 1983009808
    %v4795 = vunpack.c.0.s8 %v4794
    %v4796 = vlaneseq
    %v4797 = vshrl.u32 %v4796, 7
    %v4798 = vsub.s32 %v4795, %v4797
    %v4799 = vrot.slane %v4736, %v4798
    %v4801 = vunpack.c.l.s4 1983009808
    %v4802 = vunpack.c.0.s8 %v4801
    %v4803 = vlaneseq
    %v4804 = vshrl.u32 %v4803, 7
    %v4805 = vsub.s32 %v4802, %v4804
    %v4806 = vrot.slane %v4792, %v4805
    %v4807 = vcombine.high %v4799, %v4799
    %v4808 = vcombine.high %v4806, %v4806
    %4825 = vmatprep.subr.mxu0 %v166
    %4826 = vmatpush1.msra.mxu0 %v165
    %4827 = vmatprep.subr.mxu0 %v168
    %4828 = vmatpush1.msra.mxu0 %v167
    %4829 = vmatprep.subr.mxu0 %v170
    %4830 = vmatpush1.msra.mxu0 %v169
    %4831 = vmatprep.subr.mxu0 %v172
    %4832 = vmatpush1.msra.mxu0 %v171
    %4833 = vmatprep.subr.mxu0 %v174
    %4834 = vmatpush1.msra.mxu0 %v173
    %4835 = vmatprep.subr.mxu0 %v176
    %4836 = vmatpush1.msra.mxu0 %v175
    %4837 = vmatprep.subr.mxu0 %v178
    %4838 = vmatpush1.msra.mxu0 %v177
    %4839 = vmatprep.subr.mxu0 %v180
    %4840 = vmatpush1.msra.mxu0 %v179
    %4841 = vmatprep.subr.mxu0 %v182
    %4842 = vmatpush1.msra.mxu0 %v181
    %4843 = vmatprep.subr.mxu0 %v184
    %4844 = vmatpush1.msra.mxu0 %v183
    %4845 = vmatprep.subr.mxu0 %v186
    %4846 = vmatpush1.msra.mxu0 %v185
    %4847 = vmatprep.subr.mxu0 %v188
    %4848 = vmatpush1.msra.mxu0 %v187
    %4849 = vmatprep.subr.mxu0 %v190
    %4850 = vmatpush1.msra.mxu0 %v189
    %4851 = vmatprep.subr.mxu0 %v192
    %4852 = vmatpush1.msra.mxu0 %v191
    %4853 = vmatprep.subr.mxu0 %v194
    %4854 = vmatpush1.msra.mxu0 %v193
    %4855 = vmatprep.subr.mxu0 %v196
    %4856 = vmatpush1.msra.mxu0 %v195
    %4857 = vmatprep.subr.mxu0 %v198
    %4858 = vmatpush1.msra.mxu0 %v197
    %4859 = vmatprep.subr.mxu0 %v200
    %4860 = vmatpush1.msra.mxu0 %v199
    %4861 = vmatprep.subr.mxu0 %v202
    %4862 = vmatpush1.msra.mxu0 %v201
    %4863 = vmatprep.subr.mxu0 %v204
    %4864 = vmatpush1.msra.mxu0 %v203
    %4865 = vmatprep.subr.mxu0 %v206
    %4866 = vmatpush1.msra.mxu0 %v205
    %4867 = vmatprep.subr.mxu0 %v208
    %4868 = vmatpush1.msra.mxu0 %v207
    %4869 = vmatprep.subr.mxu0 %v210
    %4870 = vmatpush1.msra.mxu0 %v209
    %4871 = vmatprep.subr.mxu0 %v212
    %4872 = vmatpush1.msra.mxu0 %v211
    %4873 = vmatprep.subr.mxu0 %v214
    %4874 = vmatpush1.msra.mxu0 %v213
    %4875 = vmatprep.subr.mxu0 %v216
    %4876 = vmatpush1.msra.mxu0 %v215
    %4877 = vmatprep.subr.mxu0 %v218
    %4878 = vmatpush1.msra.mxu0 %v217
    %4879 = vmatprep.subr.mxu0 %v220
    %4880 = vmatpush1.msra.mxu0 %v219
    %4881 = vmatprep.subr.mxu0 %v222
    %4882 = vmatpush1.msra.mxu0 %v221
    %4883 = vmatprep.subr.mxu0 %v224
    %4884 = vmatpush1.msra.mxu0 %v223
    %4885 = vmatprep.subr.mxu0 %v226
    %4886 = vmatpush1.msra.mxu0 %v225
    %4887 = vmatprep.subr.mxu0 %v228
    %4888 = vmatpush1.msra.mxu0 %v227
    %4889 = vmatprep.mubr.f32.mxu0 %v4756
    %4890 = vmatmul.mubr.f32.gmra.mrb[0].mxu0 %v4748
    %v4891 = vpop.f32.mrb[0].mxu0
    %v4892 = vadd.f32 %v686, %v4891
    %v4893 = vpop.f32.mrb[0].mxu0
    %v4894 = vadd.f32 %v690, %v4893
    %4895 = vdwg.mxu0
    %4896 = vmatprep.subr.mxu0 %v230
    %4897 = vmatpush1.msra.mxu0 %v229
    %4898 = vmatprep.subr.mxu0 %v232
    %4899 = vmatpush1.msra.mxu0 %v231
    %4900 = vmatprep.subr.mxu0 %v234
    %4901 = vmatpush1.msra.mxu0 %v233
    %4902 = vmatprep.subr.mxu0 %v236
    %4903 = vmatpush1.msra.mxu0 %v235
    %4904 = vmatprep.subr.mxu0 %v238
    %4905 = vmatpush1.msra.mxu0 %v237
    %4906 = vmatprep.subr.mxu0 %v240
    %4907 = vmatpush1.msra.mxu0 %v239
    %4908 = vmatprep.subr.mxu0 %v242
    %4909 = vmatpush1.msra.mxu0 %v241
    %4910 = vmatprep.subr.mxu0 %v244
    %4911 = vmatpush1.msra.mxu0 %v243
    %4912 = vmatprep.subr.mxu0 %v246
    %4913 = vmatpush1.msra.mxu0 %v245
    %4914 = vmatprep.subr.mxu0 %v248
    %4915 = vmatpush1.msra.mxu0 %v247
    %4916 = vmatprep.subr.mxu0 %v250
    %4917 = vmatpush1.msra.mxu0 %v249
    %4918 = vmatprep.subr.mxu0 %v252
    %4919 = vmatpush1.msra.mxu0 %v251
    %4920 = vmatprep.subr.mxu0 %v254
    %4921 = vmatpush1.msra.mxu0 %v253
    %4922 = vmatprep.subr.mxu0 %v256
    %4923 = vmatpush1.msra.mxu0 %v255
    %4924 = vmatprep.subr.mxu0 %v258
    %4925 = vmatpush1.msra.mxu0 %v257
    %4926 = vmatprep.subr.mxu0 %v260
    %4927 = vmatpush1.msra.mxu0 %v259
    %4928 = vmatprep.subr.mxu0 %v262
    %4929 = vmatpush1.msra.mxu0 %v261
    %4930 = vmatprep.subr.mxu0 %v264
    %4931 = vmatpush1.msra.mxu0 %v263
    %4932 = vmatprep.subr.mxu0 %v266
    %4933 = vmatpush1.msra.mxu0 %v265
    %4934 = vmatprep.subr.mxu0 %v268
    %4935 = vmatpush1.msra.mxu0 %v267
    %4936 = vmatprep.subr.mxu0 %v270
    %4937 = vmatpush1.msra.mxu0 %v269
    %4938 = vmatprep.subr.mxu0 %v272
    %4939 = vmatpush1.msra.mxu0 %v271
    %4940 = vmatprep.subr.mxu0 %v274
    %4941 = vmatpush1.msra.mxu0 %v273
    %4942 = vmatprep.subr.mxu0 %v276
    %4943 = vmatpush1.msra.mxu0 %v275
    %4944 = vmatprep.subr.mxu0 %v278
    %4945 = vmatpush1.msra.mxu0 %v277
    %4946 = vmatprep.subr.mxu0 %v280
    %4947 = vmatpush1.msra.mxu0 %v279
    %4948 = vmatprep.subr.mxu0 %v282
    %4949 = vmatpush1.msra.mxu0 %v281
    %4950 = vmatprep.subr.mxu0 %v284
    %4951 = vmatpush1.msra.mxu0 %v283
    %4952 = vmatprep.subr.mxu0 %v286
    %4953 = vmatpush1.msra.mxu0 %v285
    %4954 = vmatprep.subr.mxu0 %v288
    %4955 = vmatpush1.msra.mxu0 %v287
    %4956 = vmatprep.subr.mxu0 %v290
    %4957 = vmatpush1.msra.mxu0 %v289
    %4958 = vmatprep.subr.mxu0 %v292
    %4959 = vmatpush1.msra.mxu0 %v291
    %4960 = vmatprep.mubr.f32.mxu0 %v4757
    %4961 = vmatmul.mubr.f32.gmra.mrb[0].mxu0 %v4755
    %v4962 = vpop.f32.mrb[0].mxu0
    %v4963 = vadd.f32 %v4892, %v4962
    %v4964 = vpop.f32.mrb[0].mxu0
    %v4965 = vadd.f32 %v4894, %v4964
    %4966 = vdwg.mxu0
    %4967 = vmatprep.subr.mxu0 %v294
    %4968 = vmatpush1.msra.mxu0 %v293
    %4969 = vmatprep.subr.mxu0 %v296
    %4970 = vmatpush1.msra.mxu0 %v295
    %4971 = vmatprep.subr.mxu0 %v298
    %4972 = vmatpush1.msra.mxu0 %v297
    %4973 = vmatprep.subr.mxu0 %v300
    %4974 = vmatpush1.msra.mxu0 %v299
    %4975 = vmatprep.subr.mxu0 %v302
    %4976 = vmatpush1.msra.mxu0 %v301
    %4977 = vmatprep.subr.mxu0 %v304
    %4978 = vmatpush1.msra.mxu0 %v303
    %4979 = vmatprep.subr.mxu0 %v306
    %4980 = vmatpush1.msra.mxu0 %v305
    %4981 = vmatprep.subr.mxu0 %v308
    %4982 = vmatpush1.msra.mxu0 %v307
    %4983 = vmatprep.subr.mxu0 %v310
    %4984 = vmatpush1.msra.mxu0 %v309
    %4985 = vmatprep.subr.mxu0 %v312
    %4986 = vmatpush1.msra.mxu0 %v311
    %4987 = vmatprep.subr.mxu0 %v314
    %4988 = vmatpush1.msra.mxu0 %v313
    %4989 = vmatprep.subr.mxu0 %v316
    %4990 = vmatpush1.msra.mxu0 %v315
    %4991 = vmatprep.subr.mxu0 %v318
    %4992 = vmatpush1.msra.mxu0 %v317
    %4993 = vmatprep.subr.mxu0 %v320
    %4994 = vmatpush1.msra.mxu0 %v319
    %4995 = vmatprep.subr.mxu0 %v322
    %4996 = vmatpush1.msra.mxu0 %v321
    %4997 = vmatprep.subr.mxu0 %v324
    %4998 = vmatpush1.msra.mxu0 %v323
    %4999 = vmatprep.subr.mxu0 %v326
    %5000 = vmatpush1.msra.mxu0 %v325
    %5001 = vmatprep.subr.mxu0 %v328
    %5002 = vmatpush1.msra.mxu0 %v327
    %5003 = vmatprep.subr.mxu0 %v330
    %5004 = vmatpush1.msra.mxu0 %v329
    %5005 = vmatprep.subr.mxu0 %v332
    %5006 = vmatpush1.msra.mxu0 %v331
    %5007 = vmatprep.subr.mxu0 %v334
    %5008 = vmatpush1.msra.mxu0 %v333
    %5009 = vmatprep.subr.mxu0 %v336
    %5010 = vmatpush1.msra.mxu0 %v335
    %5011 = vmatprep.subr.mxu0 %v338
    %5012 = vmatpush1.msra.mxu0 %v337
    %5013 = vmatprep.subr.mxu0 %v340
    %5014 = vmatpush1.msra.mxu0 %v339
    %5015 = vmatprep.subr.mxu0 %v342
    %5016 = vmatpush1.msra.mxu0 %v341
    %5017 = vmatprep.subr.mxu0 %v344
    %5018 = vmatpush1.msra.mxu0 %v343
    %5019 = vmatprep.subr.mxu0 %v346
    %5020 = vmatpush1.msra.mxu0 %v345
    %5021 = vmatprep.subr.mxu0 %v348
    %5022 = vmatpush1.msra.mxu0 %v347
    %5023 = vmatprep.subr.mxu0 %v350
    %5024 = vmatpush1.msra.mxu0 %v349
    %5025 = vmatprep.subr.mxu0 %v352
    %5026 = vmatpush1.msra.mxu0 %v351
    %5027 = vmatprep.subr.mxu0 %v354
    %5028 = vmatpush1.msra.mxu0 %v353
    %5029 = vmatprep.subr.mxu0 %v356
    %5030 = vmatpush1.msra.mxu0 %v355
    %5031 = vmatprep.mubr.f32.mxu0 %v4773
    %5032 = vmatmul.mubr.f32.gmra.mrb[0].mxu0 %v4765
    %v5033 = vpop.f32.mrb[0].mxu0
    %v5034 = vadd.f32 %v4963, %v5033
    %v5035 = vpop.f32.mrb[0].mxu0
    %v5036 = vadd.f32 %v4965, %v5035
    %5037 = vdwg.mxu0
    %5038 = vmatprep.subr.mxu0 %v358
    %5039 = vmatpush1.msra.mxu0 %v357
    %5040 = vmatprep.subr.mxu0 %v360
    %5041 = vmatpush1.msra.mxu0 %v359
    %5042 = vmatprep.subr.mxu0 %v362
    %5043 = vmatpush1.msra.mxu0 %v361
    %5044 = vmatprep.subr.mxu0 %v364
    %5045 = vmatpush1.msra.mxu0 %v363
    %5046 = vmatprep.subr.mxu0 %v366
    %5047 = vmatpush1.msra.mxu0 %v365
    %5048 = vmatprep.subr.mxu0 %v368
    %5049 = vmatpush1.msra.mxu0 %v367
    %5050 = vmatprep.subr.mxu0 %v370
    %5051 = vmatpush1.msra.mxu0 %v369
    %5052 = vmatprep.subr.mxu0 %v372
    %5053 = vmatpush1.msra.mxu0 %v371
    %5054 = vmatprep.subr.mxu0 %v374
    %5055 = vmatpush1.msra.mxu0 %v373
    %5056 = vmatprep.subr.mxu0 %v376
    %5057 = vmatpush1.msra.mxu0 %v375
    %5058 = vmatprep.subr.mxu0 %v378
    %5059 = vmatpush1.msra.mxu0 %v377
    %5060 = vmatprep.subr.mxu0 %v380
    %5061 = vmatpush1.msra.mxu0 %v379
    %5062 = vmatprep.subr.mxu0 %v382
    %5063 = vmatpush1.msra.mxu0 %v381
    %5064 = vmatprep.subr.mxu0 %v384
    %5065 = vmatpush1.msra.mxu0 %v383
    %5066 = vmatprep.subr.mxu0 %v386
    %5067 = vmatpush1.msra.mxu0 %v385
    %5068 = vmatprep.subr.mxu0 %v388
    %5069 = vmatpush1.msra.mxu0 %v387
    %5070 = vmatprep.subr.mxu0 %v390
    %5071 = vmatpush1.msra.mxu0 %v389
    %5072 = vmatprep.subr.mxu0 %v392
    %5073 = vmatpush1.msra.mxu0 %v391
    %5074 = vmatprep.subr.mxu0 %v394
    %5075 = vmatpush1.msra.mxu0 %v393
    %5076 = vmatprep.subr.mxu0 %v396
    %5077 = vmatpush1.msra.mxu0 %v395
    %5078 = vmatprep.subr.mxu0 %v398
    %5079 = vmatpush1.msra.mxu0 %v397
    %5080 = vmatprep.subr.mxu0 %v400
    %5081 = vmatpush1.msra.mxu0 %v399
    %5082 = vmatprep.subr.mxu0 %v402
    %5083 = vmatpush1.msra.mxu0 %v401
    %5084 = vmatprep.subr.mxu0 %v404
    %5085 = vmatpush1.msra.mxu0 %v403
    %5086 = vmatprep.subr.mxu0 %v406
    %5087 = vmatpush1.msra.mxu0 %v405
    %5088 = vmatprep.subr.mxu0 %v408
    %5089 = vmatpush1.msra.mxu0 %v407
    %5090 = vmatprep.subr.mxu0 %v410
    %5091 = vmatpush1.msra.mxu0 %v409
    %5092 = vmatprep.subr.mxu0 %v412
    %5093 = vmatpush1.msra.mxu0 %v411
    %5094 = vmatprep.subr.mxu0 %v414
    %5095 = vmatpush1.msra.mxu0 %v413
    %5096 = vmatprep.subr.mxu0 %v416
    %5097 = vmatpush1.msra.mxu0 %v415
    %5098 = vmatprep.subr.mxu0 %v418
    %5099 = vmatpush1.msra.mxu0 %v417
    %5100 = vmatprep.subr.mxu0 %v420
    %5101 = vmatpush1.msra.mxu0 %v419
    %5102 = vmatprep.mubr.f32.mxu0 %v4774
    %5103 = vmatmul.mubr.f32.gmra.mrb[0].mxu0 %v4772
    %v5104 = vpop.f32.mrb[0].mxu0
    %v5105 = vadd.f32 %v5034, %v5104
    %v5106 = vpop.f32.mrb[0].mxu0
    %v5107 = vadd.f32 %v5036, %v5106
    %5108 = vdwg.mxu0
    %5109 = vmatprep.subr.mxu0 %v422
    %5110 = vmatpush1.msra.mxu0 %v421
    %5111 = vmatprep.subr.mxu0 %v424
    %5112 = vmatpush1.msra.mxu0 %v423
    %5113 = vmatprep.subr.mxu0 %v426
    %5114 = vmatpush1.msra.mxu0 %v425
    %5115 = vmatprep.subr.mxu0 %v428
    %5116 = vmatpush1.msra.mxu0 %v427
    %5117 = vmatprep.subr.mxu0 %v430
    %5118 = vmatpush1.msra.mxu0 %v429
    %5119 = vmatprep.subr.mxu0 %v432
    %5120 = vmatpush1.msra.mxu0 %v431
    %5121 = vmatprep.subr.mxu0 %v434
    %5122 = vmatpush1.msra.mxu0 %v433
    %5123 = vmatprep.subr.mxu0 %v436
    %5124 = vmatpush1.msra.mxu0 %v435
    %5125 = vmatprep.subr.mxu0 %v438
    %5126 = vmatpush1.msra.mxu0 %v437
    %5127 = vmatprep.subr.mxu0 %v440
    %5128 = vmatpush1.msra.mxu0 %v439
    %5129 = vmatprep.subr.mxu0 %v442
    %5130 = vmatpush1.msra.mxu0 %v441
    %5131 = vmatprep.subr.mxu0 %v444
    %5132 = vmatpush1.msra.mxu0 %v443
    %5133 = vmatprep.subr.mxu0 %v446
    %5134 = vmatpush1.msra.mxu0 %v445
    %5135 = vmatprep.subr.mxu0 %v448
    %5136 = vmatpush1.msra.mxu0 %v447
    %5137 = vmatprep.subr.mxu0 %v450
    %5138 = vmatpush1.msra.mxu0 %v449
    %5139 = vmatprep.subr.mxu0 %v452
    %5140 = vmatpush1.msra.mxu0 %v451
    %5141 = vmatprep.subr.mxu0 %v454
    %5142 = vmatpush1.msra.mxu0 %v453
    %5143 = vmatprep.subr.mxu0 %v456
    %5144 = vmatpush1.msra.mxu0 %v455
    %5145 = vmatprep.subr.mxu0 %v458
    %5146 = vmatpush1.msra.mxu0 %v457
    %5147 = vmatprep.subr.mxu0 %v460
    %5148 = vmatpush1.msra.mxu0 %v459
    %5149 = vmatprep.subr.mxu0 %v462
    %5150 = vmatpush1.msra.mxu0 %v461
    %5151 = vmatprep.subr.mxu0 %v464
    %5152 = vmatpush1.msra.mxu0 %v463
    %5153 = vmatprep.subr.mxu0 %v466
    %5154 = vmatpush1.msra.mxu0 %v465
    %5155 = vmatprep.subr.mxu0 %v468
    %5156 = vmatpush1.msra.mxu0 %v467
    %5157 = vmatprep.subr.mxu0 %v470
    %5158 = vmatpush1.msra.mxu0 %v469
    %5159 = vmatprep.subr.mxu0 %v472
    %5160 = vmatpush1.msra.mxu0 %v471
    %5161 = vmatprep.subr.mxu0 %v474
    %5162 = vmatpush1.msra.mxu0 %v473
    %5163 = vmatprep.subr.mxu0 %v476
    %5164 = vmatpush1.msra.mxu0 %v475
    %5165 = vmatprep.subr.mxu0 %v478
    %5166 = vmatpush1.msra.mxu0 %v477
    %5167 = vmatprep.subr.mxu0 %v480
    %5168 = vmatpush1.msra.mxu0 %v479
    %5169 = vmatprep.subr.mxu0 %v482
    %5170 = vmatpush1.msra.mxu0 %v481
    %5171 = vmatprep.subr.mxu0 %v484
    %5172 = vmatpush1.msra.mxu0 %v483
    %5173 = vmatprep.mubr.f32.mxu0 %v4790
    %5174 = vmatmul.mubr.f32.gmra.mrb[0].mxu0 %v4782
    %v5175 = vpop.f32.mrb[0].mxu0
    %v5176 = vadd.f32 %v5105, %v5175
    %v5177 = vpop.f32.mrb[0].mxu0
    %v5178 = vadd.f32 %v5107, %v5177
    %5179 = vdwg.mxu0
    %5180 = vmatprep.subr.mxu0 %v486
    %5181 = vmatpush1.msra.mxu0 %v485
    %5182 = vmatprep.subr.mxu0 %v488
    %5183 = vmatpush1.msra.mxu0 %v487
    %5184 = vmatprep.subr.mxu0 %v490
    %5185 = vmatpush1.msra.mxu0 %v489
    %5186 = vmatprep.subr.mxu0 %v492
    %5187 = vmatpush1.msra.mxu0 %v491
    %5188 = vmatprep.subr.mxu0 %v494
    %5189 = vmatpush1.msra.mxu0 %v493
    %5190 = vmatprep.subr.mxu0 %v496
    %5191 = vmatpush1.msra.mxu0 %v495
    %5192 = vmatprep.subr.mxu0 %v498
    %5193 = vmatpush1.msra.mxu0 %v497
    %5194 = vmatprep.subr.mxu0 %v500
    %5195 = vmatpush1.msra.mxu0 %v499
    %5196 = vmatprep.subr.mxu0 %v502
    %5197 = vmatpush1.msra.mxu0 %v501
    %5198 = vmatprep.subr.mxu0 %v504
    %5199 = vmatpush1.msra.mxu0 %v503
    %5200 = vmatprep.subr.mxu0 %v506
    %5201 = vmatpush1.msra.mxu0 %v505
    %5202 = vmatprep.subr.mxu0 %v508
    %5203 = vmatpush1.msra.mxu0 %v507
    %5204 = vmatprep.subr.mxu0 %v510
    %5205 = vmatpush1.msra.mxu0 %v509
    %5206 = vmatprep.subr.mxu0 %v512
    %5207 = vmatpush1.msra.mxu0 %v511
    %5208 = vmatprep.subr.mxu0 %v514
    %5209 = vmatpush1.msra.mxu0 %v513
    %5210 = vmatprep.subr.mxu0 %v516
    %5211 = vmatpush1.msra.mxu0 %v515
    %5212 = vmatprep.subr.mxu0 %v518
    %5213 = vmatpush1.msra.mxu0 %v517
    %5214 = vmatprep.subr.mxu0 %v520
    %5215 = vmatpush1.msra.mxu0 %v519
    %5216 = vmatprep.subr.mxu0 %v522
    %5217 = vmatpush1.msra.mxu0 %v521
    %5218 = vmatprep.subr.mxu0 %v524
    %5219 = vmatpush1.msra.mxu0 %v523
    %5220 = vmatprep.subr.mxu0 %v526
    %5221 = vmatpush1.msra.mxu0 %v525
    %5222 = vmatprep.subr.mxu0 %v528
    %5223 = vmatpush1.msra.mxu0 %v527
    %5224 = vmatprep.subr.mxu0 %v530
    %5225 = vmatpush1.msra.mxu0 %v529
    %5226 = vmatprep.subr.mxu0 %v532
    %5227 = vmatpush1.msra.mxu0 %v531
    %5228 = vmatprep.subr.mxu0 %v534
    %5229 = vmatpush1.msra.mxu0 %v533
    %5230 = vmatprep.subr.mxu0 %v536
    %5231 = vmatpush1.msra.mxu0 %v535
    %5232 = vmatprep.subr.mxu0 %v538
    %5233 = vmatpush1.msra.mxu0 %v537
    %5234 = vmatprep.subr.mxu0 %v540
    %5235 = vmatpush1.msra.mxu0 %v539
    %5236 = vmatprep.subr.mxu0 %v542
    %5237 = vmatpush1.msra.mxu0 %v541
    %5238 = vmatprep.subr.mxu0 %v544
    %5239 = vmatpush1.msra.mxu0 %v543
    %5240 = vmatprep.subr.mxu0 %v546
    %5241 = vmatpush1.msra.mxu0 %v545
    %5242 = vmatprep.subr.mxu0 %v548
    %5243 = vmatpush1.msra.mxu0 %v547
    %5244 = vmatprep.mubr.f32.mxu0 %v4791
    %5245 = vmatmul.mubr.f32.gmra.mrb[0].mxu0 %v4789
    %v5246 = vpop.f32.mrb[0].mxu0
    %v5247 = vadd.f32 %v5176, %v5246
    %v5248 = vpop.f32.mrb[0].mxu0
    %v5249 = vadd.f32 %v5178, %v5248
    %5250 = vdwg.mxu0
    %5251 = vmatprep.subr.mxu0 %v550
    %5252 = vmatpush1.msra.mxu0 %v549
    %5253 = vmatprep.subr.mxu0 %v552
    %5254 = vmatpush1.msra.mxu0 %v551
    %5255 = vmatprep.subr.mxu0 %v554
    %5256 = vmatpush1.msra.mxu0 %v553
    %5257 = vmatprep.subr.mxu0 %v556
    %5258 = vmatpush1.msra.mxu0 %v555
    %5259 = vmatprep.subr.mxu0 %v558
    %5260 = vmatpush1.msra.mxu0 %v557
    %5261 = vmatprep.subr.mxu0 %v560
    %5262 = vmatpush1.msra.mxu0 %v559
    %5263 = vmatprep.subr.mxu0 %v562
    %5264 = vmatpush1.msra.mxu0 %v561
    %5265 = vmatprep.subr.mxu0 %v564
    %5266 = vmatpush1.msra.mxu0 %v563
    %5267 = vmatprep.subr.mxu0 %v566
    %5268 = vmatpush1.msra.mxu0 %v565
    %5269 = vmatprep.subr.mxu0 %v568
    %5270 = vmatpush1.msra.mxu0 %v567
    %5271 = vmatprep.subr.mxu0 %v570
    %5272 = vmatpush1.msra.mxu0 %v569
    %5273 = vmatprep.subr.mxu0 %v572
    %5274 = vmatpush1.msra.mxu0 %v571
    %5275 = vmatprep.subr.mxu0 %v574
    %5276 = vmatpush1.msra.mxu0 %v573
    %5277 = vmatprep.subr.mxu0 %v576
    %5278 = vmatpush1.msra.mxu0 %v575
    %5279 = vmatprep.subr.mxu0 %v578
    %5280 = vmatpush1.msra.mxu0 %v577
    %5281 = vmatprep.subr.mxu0 %v580
    %5282 = vmatpush1.msra.mxu0 %v579
    %5283 = vmatprep.subr.mxu0 %v582
    %5284 = vmatpush1.msra.mxu0 %v581
    %5285 = vmatprep.subr.mxu0 %v584
    %5286 = vmatpush1.msra.mxu0 %v583
    %5287 = vmatprep.subr.mxu0 %v586
    %5288 = vmatpush1.msra.mxu0 %v585
    %5289 = vmatprep.subr.mxu0 %v588
    %5290 = vmatpush1.msra.mxu0 %v587
    %5291 = vmatprep.subr.mxu0 %v590
    %5292 = vmatpush1.msra.mxu0 %v589
    %5293 = vmatprep.subr.mxu0 %v592
    %5294 = vmatpush1.msra.mxu0 %v591
    %5295 = vmatprep.subr.mxu0 %v594
    %5296 = vmatpush1.msra.mxu0 %v593
    %5297 = vmatprep.subr.mxu0 %v596
    %5298 = vmatpush1.msra.mxu0 %v595
    %5299 = vmatprep.subr.mxu0 %v598
    %5300 = vmatpush1.msra.mxu0 %v597
    %5301 = vmatprep.subr.mxu0 %v600
    %5302 = vmatpush1.msra.mxu0 %v599
    %5303 = vmatprep.subr.mxu0 %v602
    %5304 = vmatpush1.msra.mxu0 %v601
    %5305 = vmatprep.subr.mxu0 %v604
    %5306 = vmatpush1.msra.mxu0 %v603
    %5307 = vmatprep.subr.mxu0 %v606
    %5308 = vmatpush1.msra.mxu0 %v605
    %5309 = vmatprep.subr.mxu0 %v608
    %5310 = vmatpush1.msra.mxu0 %v607
    %5311 = vmatprep.subr.mxu0 %v610
    %5312 = vmatpush1.msra.mxu0 %v609
    %5313 = vmatprep.subr.mxu0 %v612
    %5314 = vmatpush1.msra.mxu0 %v611
    %5315 = vmatprep.mubr.f32.mxu0 %v4807
    %5316 = vmatmul.mubr.f32.gmra.mrb[0].mxu0 %v4799
    %v5317 = vpop.f32.mrb[0].mxu0
    %v5318 = vadd.f32 %v5247, %v5317
    %v5319 = vpop.f32.mrb[0].mxu0
    %v5320 = vadd.f32 %v5249, %v5319
    %5321 = vdwg.mxu0
    %5322 = vmatprep.subr.mxu0 %v614
    %5323 = vmatpush1.msra.mxu0 %v613
    %5324 = vmatprep.subr.mxu0 %v616
    %5325 = vmatpush1.msra.mxu0 %v615
    %5326 = vmatprep.subr.mxu0 %v618
    %5327 = vmatpush1.msra.mxu0 %v617
    %5328 = vmatprep.subr.mxu0 %v620
    %5329 = vmatpush1.msra.mxu0 %v619
    %5330 = vmatprep.subr.mxu0 %v622
    %5331 = vmatpush1.msra.mxu0 %v621
    %5332 = vmatprep.subr.mxu0 %v624
    %5333 = vmatpush1.msra.mxu0 %v623
    %5334 = vmatprep.subr.mxu0 %v626
    %5335 = vmatpush1.msra.mxu0 %v625
    %5336 = vmatprep.subr.mxu0 %v628
    %5337 = vmatpush1.msra.mxu0 %v627
    %5338 = vmatprep.subr.mxu0 %v630
    %5339 = vmatpush1.msra.mxu0 %v629
    %5340 = vmatprep.subr.mxu0 %v632
    %5341 = vmatpush1.msra.mxu0 %v631
    %5342 = vmatprep.subr.mxu0 %v634
    %5343 = vmatpush1.msra.mxu0 %v633
    %5344 = vmatprep.subr.mxu0 %v636
    %5345 = vmatpush1.msra.mxu0 %v635
    %5346 = vmatprep.subr.mxu0 %v638
    %5347 = vmatpush1.msra.mxu0 %v637
    %5348 = vmatprep.subr.mxu0 %v640
    %5349 = vmatpush1.msra.mxu0 %v639
    %5350 = vmatprep.subr.mxu0 %v642
    %5351 = vmatpush1.msra.mxu0 %v641
    %5352 = vmatprep.subr.mxu0 %v644
    %5353 = vmatpush1.msra.mxu0 %v643
    %5354 = vmatprep.subr.mxu0 %v646
    %5355 = vmatpush1.msra.mxu0 %v645
    %5356 = vmatprep.subr.mxu0 %v648
    %5357 = vmatpush1.msra.mxu0 %v647
    %5358 = vmatprep.subr.mxu0 %v650
    %5359 = vmatpush1.msra.mxu0 %v649
    %5360 = vmatprep.subr.mxu0 %v652
    %5361 = vmatpush1.msra.mxu0 %v651
    %5362 = vmatprep.subr.mxu0 %v654
    %5363 = vmatpush1.msra.mxu0 %v653
    %5364 = vmatprep.subr.mxu0 %v656
    %5365 = vmatpush1.msra.mxu0 %v655
    %5366 = vmatprep.subr.mxu0 %v658
    %5367 = vmatpush1.msra.mxu0 %v657
    %5368 = vmatprep.subr.mxu0 %v660
    %5369 = vmatpush1.msra.mxu0 %v659
    %5370 = vmatprep.subr.mxu0 %v662
    %5371 = vmatpush1.msra.mxu0 %v661
    %5372 = vmatprep.subr.mxu0 %v664
    %5373 = vmatpush1.msra.mxu0 %v663
    %5374 = vmatprep.subr.mxu0 %v666
    %5375 = vmatpush1.msra.mxu0 %v665
    %5376 = vmatprep.subr.mxu0 %v668
    %5377 = vmatpush1.msra.mxu0 %v667
    %5378 = vmatprep.subr.mxu0 %v670
    %5379 = vmatpush1.msra.mxu0 %v669
    %5380 = vmatprep.subr.mxu0 %v672
    %5381 = vmatpush1.msra.mxu0 %v671
    %5382 = vmatprep.subr.mxu0 %v674
    %5383 = vmatpush1.msra.mxu0 %v673
    %5384 = vmatprep.subr.mxu0 %v676
    %5385 = vmatpush1.msra.mxu0 %v675
    %5386 = vmatprep.mubr.f32.mxu0 %v4808
    %5387 = vmatmul.mubr.f32.gmra.mrb[0].mxu0 %v4806
    %v5388 = vpop.f32.mrb[0].mxu0
    %v5389 = vadd.f32 %v5318, %v5388
    %v5390 = vpop.f32.mrb[0].mxu0
    %v5391 = vadd.f32 %v5320, %v5390
    %5392 = vdwg.mxu0
    %v5393 = vmax.f32 %v5389, 0.0
    %v5394 = vmax.f32 %v5391, 0.0
    %v5397 = vcombine.low %v5393, %v5394
    %v5399 = vunpack.c.l.s4 1983009808
    %v5400 = vunpack.c.0.s8 %v5399
    %v5401 = vlaneseq
    %v5402 = vshrl.u32 %v5401, 7
    %v5403 = vsub.s32 %v5400, %v5402
    %v5404 = vrot.slane %v5397, %v5403
    %5406 = vst [vmem:[#allocation2 + $0x18] sm:$0xf] %v5404
    %v5407 = vld [vmem:[%s0 + $0x70] sm:$0xff]
    %v5408 = vld [vmem:[%s0 + $0x78] sm:$0xff]
    %v5409 = vld [vmem:[%s0 + $0x80] sm:$0xff]
    %v5410 = vld [vmem:[%s0 + $0x88] sm:$0xff]
    %v5415 = vcombine.high %v5407, %v5407
    %v5417 = vunpack.c.l.s4 1983009808
    %v5418 = vunpack.c.0.s8 %v5417
    %v5419 = vlaneseq
    %v5420 = vshrl.u32 %v5419, 7
    %v5421 = vsub.s32 %v5418, %v5420
    %v5422 = vrot.slane %v5407, %v5421
    %v5424 = vunpack.c.l.s4 1983009808
    %v5425 = vunpack.c.0.s8 %v5424
    %v5426 = vlaneseq
    %v5427 = vshrl.u32 %v5426, 7
    %v5428 = vsub.s32 %v5425, %v5427
    %v5429 = vrot.slane %v5415, %v5428
    %v5430 = vcombine.high %v5422, %v5422
    %v5431 = vcombine.high %v5429, %v5429
    %v5432 = vcombine.high %v5408, %v5408
    %v5434 = vunpack.c.l.s4 1983009808
    %v5435 = vunpack.c.0.s8 %v5434
    %v5436 = vlaneseq
    %v5437 = vshrl.u32 %v5436, 7
    %v5438 = vsub.s32 %v5435, %v5437
    %v5439 = vrot.slane %v5408, %v5438
    %v5441 = vunpack.c.l.s4 1983009808
    %v5442 = vunpack.c.0.s8 %v5441
    %v5443 = vlaneseq
    %v5444 = vshrl.u32 %v5443, 7
    %v5445 = vsub.s32 %v5442, %v5444
    %v5446 = vrot.slane %v5432, %v5445
    %v5447 = vcombine.high %v5439, %v5439
    %v5448 = vcombine.high %v5446, %v5446
    %v5449 = vcombine.high %v5409, %v5409
    %v5451 = vunpack.c.l.s4 1983009808
    %v5452 = vunpack.c.0.s8 %v5451
    %v5453 = vlaneseq
    %v5454 = vshrl.u32 %v5453, 7
    %v5455 = vsub.s32 %v5452, %v5454
    %v5456 = vrot.slane %v5409, %v5455
    %v5458 = vunpack.c.l.s4 1983009808
    %v5459 = vunpack.c.0.s8 %v5458
    %v5460 = vlaneseq
    %v5461 = vshrl.u32 %v5460, 7
    %v5462 = vsub.s32 %v5459, %v5461
    %v5463 = vrot.slane %v5449, %v5462
    %v5464 = vcombine.high %v5456, %v5456
    %v5465 = vcombine.high %v5463, %v5463
    %v5466 = vcombine.high %v5410, %v5410
    %v5468 = vunpack.c.l.s4 1983009808
    %v5469 = vunpack.c.0.s8 %v5468
    %v5470 = vlaneseq
    %v5471 = vshrl.u32 %v5470, 7
    %v5472 = vsub.s32 %v5469, %v5471
    %v5473 = vrot.slane %v5410, %v5472
    %v5475 = vunpack.c.l.s4 1983009808
    %v5476 = vunpack.c.0.s8 %v5475
    %v5477 = vlaneseq
    %v5478 = vshrl.u32 %v5477, 7
    %v5479 = vsub.s32 %v5476, %v5478
    %v5480 = vrot.slane %v5466, %v5479
    %v5481 = vcombine.high %v5473, %v5473
    %v5482 = vcombine.high %v5480, %v5480
    %5499 = vmatprep.subr.mxu0 %v166
    %5500 = vmatpush1.msra.mxu0 %v165
    %5501 = vmatprep.subr.mxu0 %v168
    %5502 = vmatpush1.msra.mxu0 %v167
    %5503 = vmatprep.subr.mxu0 %v170
    %5504 = vmatpush1.msra.mxu0 %v169
    %5505 = vmatprep.subr.mxu0 %v172
    %5506 = vmatpush1.msra.mxu0 %v171
    %5507 = vmatprep.subr.mxu0 %v174
    %5508 = vmatpush1.msra.mxu0 %v173
    %5509 = vmatprep.subr.mxu0 %v176
    %5510 = vmatpush1.msra.mxu0 %v175
    %5511 = vmatprep.subr.mxu0 %v178
    %5512 = vmatpush1.msra.mxu0 %v177
    %5513 = vmatprep.subr.mxu0 %v180
    %5514 = vmatpush1.msra.mxu0 %v179
    %5515 = vmatprep.subr.mxu0 %v182
    %5516 = vmatpush1.msra.mxu0 %v181
    %5517 = vmatprep.subr.mxu0 %v184
    %5518 = vmatpush1.msra.mxu0 %v183
    %5519 = vmatprep.subr.mxu0 %v186
    %5520 = vmatpush1.msra.mxu0 %v185
    %5521 = vmatprep.subr.mxu0 %v188
    %5522 = vmatpush1.msra.mxu0 %v187
    %5523 = vmatprep.subr.mxu0 %v190
    %5524 = vmatpush1.msra.mxu0 %v189
    %5525 = vmatprep.subr.mxu0 %v192
    %5526 = vmatpush1.msra.mxu0 %v191
    %5527 = vmatprep.subr.mxu0 %v194
    %5528 = vmatpush1.msra.mxu0 %v193
    %5529 = vmatprep.subr.mxu0 %v196
    %5530 = vmatpush1.msra.mxu0 %v195
    %5531 = vmatprep.subr.mxu0 %v198
    %5532 = vmatpush1.msra.mxu0 %v197
    %5533 = vmatprep.subr.mxu0 %v200
    %5534 = vmatpush1.msra.mxu0 %v199
    %5535 = vmatprep.subr.mxu0 %v202
    %5536 = vmatpush1.msra.mxu0 %v201
    %5537 = vmatprep.subr.mxu0 %v204
    %5538 = vmatpush1.msra.mxu0 %v203
    %5539 = vmatprep.subr.mxu0 %v206
    %5540 = vmatpush1.msra.mxu0 %v205
    %5541 = vmatprep.subr.mxu0 %v208
    %5542 = vmatpush1.msra.mxu0 %v207
    %5543 = vmatprep.subr.mxu0 %v210
    %5544 = vmatpush1.msra.mxu0 %v209
    %5545 = vmatprep.subr.mxu0 %v212
    %5546 = vmatpush1.msra.mxu0 %v211
    %5547 = vmatprep.subr.mxu0 %v214
    %5548 = vmatpush1.msra.mxu0 %v213
    %5549 = vmatprep.subr.mxu0 %v216
    %5550 = vmatpush1.msra.mxu0 %v215
    %5551 = vmatprep.subr.mxu0 %v218
    %5552 = vmatpush1.msra.mxu0 %v217
    %5553 = vmatprep.subr.mxu0 %v220
    %5554 = vmatpush1.msra.mxu0 %v219
    %5555 = vmatprep.subr.mxu0 %v222
    %5556 = vmatpush1.msra.mxu0 %v221
    %5557 = vmatprep.subr.mxu0 %v224
    %5558 = vmatpush1.msra.mxu0 %v223
    %5559 = vmatprep.subr.mxu0 %v226
    %5560 = vmatpush1.msra.mxu0 %v225
    %5561 = vmatprep.subr.mxu0 %v228
    %5562 = vmatpush1.msra.mxu0 %v227
    %5563 = vmatprep.mubr.f32.mxu0 %v5430
    %5564 = vmatmul.mubr.f32.gmra.mrb[0].mxu0 %v5422
    %v5565 = vpop.f32.mrb[0].mxu0
    %v5566 = vadd.f32 %v686, %v5565
    %v5567 = vpop.f32.mrb[0].mxu0
    %v5568 = vadd.f32 %v690, %v5567
    %5569 = vdwg.mxu0
    %5570 = vmatprep.subr.mxu0 %v230
    %5571 = vmatpush1.msra.mxu0 %v229
    %5572 = vmatprep.subr.mxu0 %v232
    %5573 = vmatpush1.msra.mxu0 %v231
    %5574 = vmatprep.subr.mxu0 %v234
    %5575 = vmatpush1.msra.mxu0 %v233
    %5576 = vmatprep.subr.mxu0 %v236
    %5577 = vmatpush1.msra.mxu0 %v235
    %5578 = vmatprep.subr.mxu0 %v238
    %5579 = vmatpush1.msra.mxu0 %v237
    %5580 = vmatprep.subr.mxu0 %v240
    %5581 = vmatpush1.msra.mxu0 %v239
    %5582 = vmatprep.subr.mxu0 %v242
    %5583 = vmatpush1.msra.mxu0 %v241
    %5584 = vmatprep.subr.mxu0 %v244
    %5585 = vmatpush1.msra.mxu0 %v243
    %5586 = vmatprep.subr.mxu0 %v246
    %5587 = vmatpush1.msra.mxu0 %v245
    %5588 = vmatprep.subr.mxu0 %v248
    %5589 = vmatpush1.msra.mxu0 %v247
    %5590 = vmatprep.subr.mxu0 %v250
    %5591 = vmatpush1.msra.mxu0 %v249
    %5592 = vmatprep.subr.mxu0 %v252
    %5593 = vmatpush1.msra.mxu0 %v251
    %5594 = vmatprep.subr.mxu0 %v254
    %5595 = vmatpush1.msra.mxu0 %v253
    %5596 = vmatprep.subr.mxu0 %v256
    %5597 = vmatpush1.msra.mxu0 %v255
    %5598 = vmatprep.subr.mxu0 %v258
    %5599 = vmatpush1.msra.mxu0 %v257
    %5600 = vmatprep.subr.mxu0 %v260
    %5601 = vmatpush1.msra.mxu0 %v259
    %5602 = vmatprep.subr.mxu0 %v262
    %5603 = vmatpush1.msra.mxu0 %v261
    %5604 = vmatprep.subr.mxu0 %v264
    %5605 = vmatpush1.msra.mxu0 %v263
    %5606 = vmatprep.subr.mxu0 %v266
    %5607 = vmatpush1.msra.mxu0 %v265
    %5608 = vmatprep.subr.mxu0 %v268
    %5609 = vmatpush1.msra.mxu0 %v267
    %5610 = vmatprep.subr.mxu0 %v270
    %5611 = vmatpush1.msra.mxu0 %v269
    %5612 = vmatprep.subr.mxu0 %v272
    %5613 = vmatpush1.msra.mxu0 %v271
    %5614 = vmatprep.subr.mxu0 %v274
    %5615 = vmatpush1.msra.mxu0 %v273
    %5616 = vmatprep.subr.mxu0 %v276
    %5617 = vmatpush1.msra.mxu0 %v275
    %5618 = vmatprep.subr.mxu0 %v278
    %5619 = vmatpush1.msra.mxu0 %v277
    %5620 = vmatprep.subr.mxu0 %v280
    %5621 = vmatpush1.msra.mxu0 %v279
    %5622 = vmatprep.subr.mxu0 %v282
    %5623 = vmatpush1.msra.mxu0 %v281
    %5624 = vmatprep.subr.mxu0 %v284
    %5625 = vmatpush1.msra.mxu0 %v283
    %5626 = vmatprep.subr.mxu0 %v286
    %5627 = vmatpush1.msra.mxu0 %v285
    %5628 = vmatprep.subr.mxu0 %v288
    %5629 = vmatpush1.msra.mxu0 %v287
    %5630 = vmatprep.subr.mxu0 %v290
    %5631 = vmatpush1.msra.mxu0 %v289
    %5632 = vmatprep.subr.mxu0 %v292
    %5633 = vmatpush1.msra.mxu0 %v291
    %5634 = vmatprep.mubr.f32.mxu0 %v5431
    %5635 = vmatmul.mubr.f32.gmra.mrb[0].mxu0 %v5429
    %v5636 = vpop.f32.mrb[0].mxu0
    %v5637 = vadd.f32 %v5566, %v5636
    %v5638 = vpop.f32.mrb[0].mxu0
    %v5639 = vadd.f32 %v5568, %v5638
    %5640 = vdwg.mxu0
    %5641 = vmatprep.subr.mxu0 %v294
    %5642 = vmatpush1.msra.mxu0 %v293
    %5643 = vmatprep.subr.mxu0 %v296
    %5644 = vmatpush1.msra.mxu0 %v295
    %5645 = vmatprep.subr.mxu0 %v298
    %5646 = vmatpush1.msra.mxu0 %v297
    %5647 = vmatprep.subr.mxu0 %v300
    %5648 = vmatpush1.msra.mxu0 %v299
    %5649 = vmatprep.subr.mxu0 %v302
    %5650 = vmatpush1.msra.mxu0 %v301
    %5651 = vmatprep.subr.mxu0 %v304
    %5652 = vmatpush1.msra.mxu0 %v303
    %5653 = vmatprep.subr.mxu0 %v306
    %5654 = vmatpush1.msra.mxu0 %v305
    %5655 = vmatprep.subr.mxu0 %v308
    %5656 = vmatpush1.msra.mxu0 %v307
    %5657 = vmatprep.subr.mxu0 %v310
    %5658 = vmatpush1.msra.mxu0 %v309
    %5659 = vmatprep.subr.mxu0 %v312
    %5660 = vmatpush1.msra.mxu0 %v311
    %5661 = vmatprep.subr.mxu0 %v314
    %5662 = vmatpush1.msra.mxu0 %v313
    %5663 = vmatprep.subr.mxu0 %v316
    %5664 = vmatpush1.msra.mxu0 %v315
    %5665 = vmatprep.subr.mxu0 %v318
    %5666 = vmatpush1.msra.mxu0 %v317
    %5667 = vmatprep.subr.mxu0 %v320
    %5668 = vmatpush1.msra.mxu0 %v319
    %5669 = vmatprep.subr.mxu0 %v322
    %5670 = vmatpush1.msra.mxu0 %v321
    %5671 = vmatprep.subr.mxu0 %v324
    %5672 = vmatpush1.msra.mxu0 %v323
    %5673 = vmatprep.subr.mxu0 %v326
    %5674 = vmatpush1.msra.mxu0 %v325
    %5675 = vmatprep.subr.mxu0 %v328
    %5676 = vmatpush1.msra.mxu0 %v327
    %5677 = vmatprep.subr.mxu0 %v330
    %5678 = vmatpush1.msra.mxu0 %v329
    %5679 = vmatprep.subr.mxu0 %v332
    %5680 = vmatpush1.msra.mxu0 %v331
    %5681 = vmatprep.subr.mxu0 %v334
    %5682 = vmatpush1.msra.mxu0 %v333
    %5683 = vmatprep.subr.mxu0 %v336
    %5684 = vmatpush1.msra.mxu0 %v335
    %5685 = vmatprep.subr.mxu0 %v338
    %5686 = vmatpush1.msra.mxu0 %v337
    %5687 = vmatprep.subr.mxu0 %v340
    %5688 = vmatpush1.msra.mxu0 %v339
    %5689 = vmatprep.subr.mxu0 %v342
    %5690 = vmatpush1.msra.mxu0 %v341
    %5691 = vmatprep.subr.mxu0 %v344
    %5692 = vmatpush1.msra.mxu0 %v343
    %5693 = vmatprep.subr.mxu0 %v346
    %5694 = vmatpush1.msra.mxu0 %v345
    %5695 = vmatprep.subr.mxu0 %v348
    %5696 = vmatpush1.msra.mxu0 %v347
    %5697 = vmatprep.subr.mxu0 %v350
    %5698 = vmatpush1.msra.mxu0 %v349
    %5699 = vmatprep.subr.mxu0 %v352
    %5700 = vmatpush1.msra.mxu0 %v351
    %5701 = vmatprep.subr.mxu0 %v354
    %5702 = vmatpush1.msra.mxu0 %v353
    %5703 = vmatprep.subr.mxu0 %v356
    %5704 = vmatpush1.msra.mxu0 %v355
    %5705 = vmatprep.mubr.f32.mxu0 %v5447
    %5706 = vmatmul.mubr.f32.gmra.mrb[0].mxu0 %v5439
    %v5707 = vpop.f32.mrb[0].mxu0
    %v5708 = vadd.f32 %v5637, %v5707
    %v5709 = vpop.f32.mrb[0].mxu0
    %v5710 = vadd.f32 %v5639, %v5709
    %5711 = vdwg.mxu0
    %5712 = vmatprep.subr.mxu0 %v358
    %5713 = vmatpush1.msra.mxu0 %v357
    %5714 = vmatprep.subr.mxu0 %v360
    %5715 = vmatpush1.msra.mxu0 %v359
    %5716 = vmatprep.subr.mxu0 %v362
    %5717 = vmatpush1.msra.mxu0 %v361
    %5718 = vmatprep.subr.mxu0 %v364
    %5719 = vmatpush1.msra.mxu0 %v363
    %5720 = vmatprep.subr.mxu0 %v366
    %5721 = vmatpush1.msra.mxu0 %v365
    %5722 = vmatprep.subr.mxu0 %v368
    %5723 = vmatpush1.msra.mxu0 %v367
    %5724 = vmatprep.subr.mxu0 %v370
    %5725 = vmatpush1.msra.mxu0 %v369
    %5726 = vmatprep.subr.mxu0 %v372
    %5727 = vmatpush1.msra.mxu0 %v371
    %5728 = vmatprep.subr.mxu0 %v374
    %5729 = vmatpush1.msra.mxu0 %v373
    %5730 = vmatprep.subr.mxu0 %v376
    %5731 = vmatpush1.msra.mxu0 %v375
    %5732 = vmatprep.subr.mxu0 %v378
    %5733 = vmatpush1.msra.mxu0 %v377
    %5734 = vmatprep.subr.mxu0 %v380
    %5735 = vmatpush1.msra.mxu0 %v379
    %5736 = vmatprep.subr.mxu0 %v382
    %5737 = vmatpush1.msra.mxu0 %v381
    %5738 = vmatprep.subr.mxu0 %v384
    %5739 = vmatpush1.msra.mxu0 %v383
    %5740 = vmatprep.subr.mxu0 %v386
    %5741 = vmatpush1.msra.mxu0 %v385
    %5742 = vmatprep.subr.mxu0 %v388
    %5743 = vmatpush1.msra.mxu0 %v387
    %5744 = vmatprep.subr.mxu0 %v390
    %5745 = vmatpush1.msra.mxu0 %v389
    %5746 = vmatprep.subr.mxu0 %v392
    %5747 = vmatpush1.msra.mxu0 %v391
    %5748 = vmatprep.subr.mxu0 %v394
    %5749 = vmatpush1.msra.mxu0 %v393
    %5750 = vmatprep.subr.mxu0 %v396
    %5751 = vmatpush1.msra.mxu0 %v395
    %5752 = vmatprep.subr.mxu0 %v398
    %5753 = vmatpush1.msra.mxu0 %v397
    %5754 = vmatprep.subr.mxu0 %v400
    %5755 = vmatpush1.msra.mxu0 %v399
    %5756 = vmatprep.subr.mxu0 %v402
    %5757 = vmatpush1.msra.mxu0 %v401
    %5758 = vmatprep.subr.mxu0 %v404
    %5759 = vmatpush1.msra.mxu0 %v403
    %5760 = vmatprep.subr.mxu0 %v406
    %5761 = vmatpush1.msra.mxu0 %v405
    %5762 = vmatprep.subr.mxu0 %v408
    %5763 = vmatpush1.msra.mxu0 %v407
    %5764 = vmatprep.subr.mxu0 %v410
    %5765 = vmatpush1.msra.mxu0 %v409
    %5766 = vmatprep.subr.mxu0 %v412
    %5767 = vmatpush1.msra.mxu0 %v411
    %5768 = vmatprep.subr.mxu0 %v414
    %5769 = vmatpush1.msra.mxu0 %v413
    %5770 = vmatprep.subr.mxu0 %v416
    %5771 = vmatpush1.msra.mxu0 %v415
    %5772 = vmatprep.subr.mxu0 %v418
    %5773 = vmatpush1.msra.mxu0 %v417
    %5774 = vmatprep.subr.mxu0 %v420
    %5775 = vmatpush1.msra.mxu0 %v419
    %5776 = vmatprep.mubr.f32.mxu0 %v5448
    %5777 = vmatmul.mubr.f32.gmra.mrb[0].mxu0 %v5446
    %v5778 = vpop.f32.mrb[0].mxu0
    %v5779 = vadd.f32 %v5708, %v5778
    %v5780 = vpop.f32.mrb[0].mxu0
    %v5781 = vadd.f32 %v5710, %v5780
    %5782 = vdwg.mxu0
    %5783 = vmatprep.subr.mxu0 %v422
    %5784 = vmatpush1.msra.mxu0 %v421
    %5785 = vmatprep.subr.mxu0 %v424
    %5786 = vmatpush1.msra.mxu0 %v423
    %5787 = vmatprep.subr.mxu0 %v426
    %5788 = vmatpush1.msra.mxu0 %v425
    %5789 = vmatprep.subr.mxu0 %v428
    %5790 = vmatpush1.msra.mxu0 %v427
    %5791 = vmatprep.subr.mxu0 %v430
    %5792 = vmatpush1.msra.mxu0 %v429
    %5793 = vmatprep.subr.mxu0 %v432
    %5794 = vmatpush1.msra.mxu0 %v431
    %5795 = vmatprep.subr.mxu0 %v434
    %5796 = vmatpush1.msra.mxu0 %v433
    %5797 = vmatprep.subr.mxu0 %v436
    %5798 = vmatpush1.msra.mxu0 %v435
    %5799 = vmatprep.subr.mxu0 %v438
    %5800 = vmatpush1.msra.mxu0 %v437
    %5801 = vmatprep.subr.mxu0 %v440
    %5802 = vmatpush1.msra.mxu0 %v439
    %5803 = vmatprep.subr.mxu0 %v442
    %5804 = vmatpush1.msra.mxu0 %v441
    %5805 = vmatprep.subr.mxu0 %v444
    %5806 = vmatpush1.msra.mxu0 %v443
    %5807 = vmatprep.subr.mxu0 %v446
    %5808 = vmatpush1.msra.mxu0 %v445
    %5809 = vmatprep.subr.mxu0 %v448
    %5810 = vmatpush1.msra.mxu0 %v447
    %5811 = vmatprep.subr.mxu0 %v450
    %5812 = vmatpush1.msra.mxu0 %v449
    %5813 = vmatprep.subr.mxu0 %v452
    %5814 = vmatpush1.msra.mxu0 %v451
    %5815 = vmatprep.subr.mxu0 %v454
    %5816 = vmatpush1.msra.mxu0 %v453
    %5817 = vmatprep.subr.mxu0 %v456
    %5818 = vmatpush1.msra.mxu0 %v455
    %5819 = vmatprep.subr.mxu0 %v458
    %5820 = vmatpush1.msra.mxu0 %v457
    %5821 = vmatprep.subr.mxu0 %v460
    %5822 = vmatpush1.msra.mxu0 %v459
    %5823 = vmatprep.subr.mxu0 %v462
    %5824 = vmatpush1.msra.mxu0 %v461
    %5825 = vmatprep.subr.mxu0 %v464
    %5826 = vmatpush1.msra.mxu0 %v463
    %5827 = vmatprep.subr.mxu0 %v466
    %5828 = vmatpush1.msra.mxu0 %v465
    %5829 = vmatprep.subr.mxu0 %v468
    %5830 = vmatpush1.msra.mxu0 %v467
    %5831 = vmatprep.subr.mxu0 %v470
    %5832 = vmatpush1.msra.mxu0 %v469
    %5833 = vmatprep.subr.mxu0 %v472
    %5834 = vmatpush1.msra.mxu0 %v471
    %5835 = vmatprep.subr.mxu0 %v474
    %5836 = vmatpush1.msra.mxu0 %v473
    %5837 = vmatprep.subr.mxu0 %v476
    %5838 = vmatpush1.msra.mxu0 %v475
    %5839 = vmatprep.subr.mxu0 %v478
    %5840 = vmatpush1.msra.mxu0 %v477
    %5841 = vmatprep.subr.mxu0 %v480
    %5842 = vmatpush1.msra.mxu0 %v479
    %5843 = vmatprep.subr.mxu0 %v482
    %5844 = vmatpush1.msra.mxu0 %v481
    %5845 = vmatprep.subr.mxu0 %v484
    %5846 = vmatpush1.msra.mxu0 %v483
    %5847 = vmatprep.mubr.f32.mxu0 %v5464
    %5848 = vmatmul.mubr.f32.gmra.mrb[0].mxu0 %v5456
    %v5849 = vpop.f32.mrb[0].mxu0
    %v5850 = vadd.f32 %v5779, %v5849
    %v5851 = vpop.f32.mrb[0].mxu0
    %v5852 = vadd.f32 %v5781, %v5851
    %5853 = vdwg.mxu0
    %5854 = vmatprep.subr.mxu0 %v486
    %5855 = vmatpush1.msra.mxu0 %v485
    %5856 = vmatprep.subr.mxu0 %v488
    %5857 = vmatpush1.msra.mxu0 %v487
    %5858 = vmatprep.subr.mxu0 %v490
    %5859 = vmatpush1.msra.mxu0 %v489
    %5860 = vmatprep.subr.mxu0 %v492
    %5861 = vmatpush1.msra.mxu0 %v491
    %5862 = vmatprep.subr.mxu0 %v494
    %5863 = vmatpush1.msra.mxu0 %v493
    %5864 = vmatprep.subr.mxu0 %v496
    %5865 = vmatpush1.msra.mxu0 %v495
    %5866 = vmatprep.subr.mxu0 %v498
    %5867 = vmatpush1.msra.mxu0 %v497
    %5868 = vmatprep.subr.mxu0 %v500
    %5869 = vmatpush1.msra.mxu0 %v499
    %5870 = vmatprep.subr.mxu0 %v502
    %5871 = vmatpush1.msra.mxu0 %v501
    %5872 = vmatprep.subr.mxu0 %v504
    %5873 = vmatpush1.msra.mxu0 %v503
    %5874 = vmatprep.subr.mxu0 %v506
    %5875 = vmatpush1.msra.mxu0 %v505
    %5876 = vmatprep.subr.mxu0 %v508
    %5877 = vmatpush1.msra.mxu0 %v507
    %5878 = vmatprep.subr.mxu0 %v510
    %5879 = vmatpush1.msra.mxu0 %v509
    %5880 = vmatprep.subr.mxu0 %v512
    %5881 = vmatpush1.msra.mxu0 %v511
    %5882 = vmatprep.subr.mxu0 %v514
    %5883 = vmatpush1.msra.mxu0 %v513
    %5884 = vmatprep.subr.mxu0 %v516
    %5885 = vmatpush1.msra.mxu0 %v515
    %5886 = vmatprep.subr.mxu0 %v518
    %5887 = vmatpush1.msra.mxu0 %v517
    %5888 = vmatprep.subr.mxu0 %v520
    %5889 = vmatpush1.msra.mxu0 %v519
    %5890 = vmatprep.subr.mxu0 %v522
    %5891 = vmatpush1.msra.mxu0 %v521
    %5892 = vmatprep.subr.mxu0 %v524
    %5893 = vmatpush1.msra.mxu0 %v523
    %5894 = vmatprep.subr.mxu0 %v526
    %5895 = vmatpush1.msra.mxu0 %v525
    %5896 = vmatprep.subr.mxu0 %v528
    %5897 = vmatpush1.msra.mxu0 %v527
    %5898 = vmatprep.subr.mxu0 %v530
    %5899 = vmatpush1.msra.mxu0 %v529
    %5900 = vmatprep.subr.mxu0 %v532
    %5901 = vmatpush1.msra.mxu0 %v531
    %5902 = vmatprep.subr.mxu0 %v534
    %5903 = vmatpush1.msra.mxu0 %v533
    %5904 = vmatprep.subr.mxu0 %v536
    %5905 = vmatpush1.msra.mxu0 %v535
    %5906 = vmatprep.subr.mxu0 %v538
    %5907 = vmatpush1.msra.mxu0 %v537
    %5908 = vmatprep.subr.mxu0 %v540
    %5909 = vmatpush1.msra.mxu0 %v539
    %5910 = vmatprep.subr.mxu0 %v542
    %5911 = vmatpush1.msra.mxu0 %v541
    %5912 = vmatprep.subr.mxu0 %v544
    %5913 = vmatpush1.msra.mxu0 %v543
    %5914 = vmatprep.subr.mxu0 %v546
    %5915 = vmatpush1.msra.mxu0 %v545
    %5916 = vmatprep.subr.mxu0 %v548
    %5917 = vmatpush1.msra.mxu0 %v547
    %5918 = vmatprep.mubr.f32.mxu0 %v5465
    %5919 = vmatmul.mubr.f32.gmra.mrb[0].mxu0 %v5463
    %v5920 = vpop.f32.mrb[0].mxu0
    %v5921 = vadd.f32 %v5850, %v5920
    %v5922 = vpop.f32.mrb[0].mxu0
    %v5923 = vadd.f32 %v5852, %v5922
    %5924 = vdwg.mxu0
    %5925 = vmatprep.subr.mxu0 %v550
    %5926 = vmatpush1.msra.mxu0 %v549
    %5927 = vmatprep.subr.mxu0 %v552
    %5928 = vmatpush1.msra.mxu0 %v551
    %5929 = vmatprep.subr.mxu0 %v554
    %5930 = vmatpush1.msra.mxu0 %v553
    %5931 = vmatprep.subr.mxu0 %v556
    %5932 = vmatpush1.msra.mxu0 %v555
    %5933 = vmatprep.subr.mxu0 %v558
    %5934 = vmatpush1.msra.mxu0 %v557
    %5935 = vmatprep.subr.mxu0 %v560
    %5936 = vmatpush1.msra.mxu0 %v559
    %5937 = vmatprep.subr.mxu0 %v562
    %5938 = vmatpush1.msra.mxu0 %v561
    %5939 = vmatprep.subr.mxu0 %v564
    %5940 = vmatpush1.msra.mxu0 %v563
    %5941 = vmatprep.subr.mxu0 %v566
    %5942 = vmatpush1.msra.mxu0 %v565
    %5943 = vmatprep.subr.mxu0 %v568
    %5944 = vmatpush1.msra.mxu0 %v567
    %5945 = vmatprep.subr.mxu0 %v570
    %5946 = vmatpush1.msra.mxu0 %v569
    %5947 = vmatprep.subr.mxu0 %v572
    %5948 = vmatpush1.msra.mxu0 %v571
    %5949 = vmatprep.subr.mxu0 %v574
    %5950 = vmatpush1.msra.mxu0 %v573
    %5951 = vmatprep.subr.mxu0 %v576
    %5952 = vmatpush1.msra.mxu0 %v575
    %5953 = vmatprep.subr.mxu0 %v578
    %5954 = vmatpush1.msra.mxu0 %v577
    %5955 = vmatprep.subr.mxu0 %v580
    %5956 = vmatpush1.msra.mxu0 %v579
    %5957 = vmatprep.subr.mxu0 %v582
    %5958 = vmatpush1.msra.mxu0 %v581
    %5959 = vmatprep.subr.mxu0 %v584
    %5960 = vmatpush1.msra.mxu0 %v583
    %5961 = vmatprep.subr.mxu0 %v586
    %5962 = vmatpush1.msra.mxu0 %v585
    %5963 = vmatprep.subr.mxu0 %v588
    %5964 = vmatpush1.msra.mxu0 %v587
    %5965 = vmatprep.subr.mxu0 %v590
    %5966 = vmatpush1.msra.mxu0 %v589
    %5967 = vmatprep.subr.mxu0 %v592
    %5968 = vmatpush1.msra.mxu0 %v591
    %5969 = vmatprep.subr.mxu0 %v594
    %5970 = vmatpush1.msra.mxu0 %v593
    %5971 = vmatprep.subr.mxu0 %v596
    %5972 = vmatpush1.msra.mxu0 %v595
    %5973 = vmatprep.subr.mxu0 %v598
    %5974 = vmatpush1.msra.mxu0 %v597
    %5975 = vmatprep.subr.mxu0 %v600
    %5976 = vmatpush1.msra.mxu0 %v599
    %5977 = vmatprep.subr.mxu0 %v602
    %5978 = vmatpush1.msra.mxu0 %v601
    %5979 = vmatprep.subr.mxu0 %v604
    %5980 = vmatpush1.msra.mxu0 %v603
    %5981 = vmatprep.subr.mxu0 %v606
    %5982 = vmatpush1.msra.mxu0 %v605
    %5983 = vmatprep.subr.mxu0 %v608
    %5984 = vmatpush1.msra.mxu0 %v607
    %5985 = vmatprep.subr.mxu0 %v610
    %5986 = vmatpush1.msra.mxu0 %v609
    %5987 = vmatprep.subr.mxu0 %v612
    %5988 = vmatpush1.msra.mxu0 %v611
    %5989 = vmatprep.mubr.f32.mxu0 %v5481
    %5990 = vmatmul.mubr.f32.gmra.mrb[0].mxu0 %v5473
    %v5991 = vpop.f32.mrb[0].mxu0
    %v5992 = vadd.f32 %v5921, %v5991
    %v5993 = vpop.f32.mrb[0].mxu0
    %v5994 = vadd.f32 %v5923, %v5993
    %5995 = vdwg.mxu0
    %5996 = vmatprep.subr.mxu0 %v614
    %5997 = vmatpush1.msra.mxu0 %v613
    %5998 = vmatprep.subr.mxu0 %v616
    %5999 = vmatpush1.msra.mxu0 %v615
    %6000 = vmatprep.subr.mxu0 %v618
    %6001 = vmatpush1.msra.mxu0 %v617
    %6002 = vmatprep.subr.mxu0 %v620
    %6003 = vmatpush1.msra.mxu0 %v619
    %6004 = vmatprep.subr.mxu0 %v622
    %6005 = vmatpush1.msra.mxu0 %v621
    %6006 = vmatprep.subr.mxu0 %v624
    %6007 = vmatpush1.msra.mxu0 %v623
    %6008 = vmatprep.subr.mxu0 %v626
    %6009 = vmatpush1.msra.mxu0 %v625
    %6010 = vmatprep.subr.mxu0 %v628
    %6011 = vmatpush1.msra.mxu0 %v627
    %6012 = vmatprep.subr.mxu0 %v630
    %6013 = vmatpush1.msra.mxu0 %v629
    %6014 = vmatprep.subr.mxu0 %v632
    %6015 = vmatpush1.msra.mxu0 %v631
    %6016 = vmatprep.subr.mxu0 %v634
    %6017 = vmatpush1.msra.mxu0 %v633
    %6018 = vmatprep.subr.mxu0 %v636
    %6019 = vmatpush1.msra.mxu0 %v635
    %6020 = vmatprep.subr.mxu0 %v638
    %6021 = vmatpush1.msra.mxu0 %v637
    %6022 = vmatprep.subr.mxu0 %v640
    %6023 = vmatpush1.msra.mxu0 %v639
    %6024 = vmatprep.subr.mxu0 %v642
    %6025 = vmatpush1.msra.mxu0 %v641
    %6026 = vmatprep.subr.mxu0 %v644
    %6027 = vmatpush1.msra.mxu0 %v643
    %6028 = vmatprep.subr.mxu0 %v646
    %6029 = vmatpush1.msra.mxu0 %v645
    %6030 = vmatprep.subr.mxu0 %v648
    %6031 = vmatpush1.msra.mxu0 %v647
    %6032 = vmatprep.subr.mxu0 %v650
    %6033 = vmatpush1.msra.mxu0 %v649
    %6034 = vmatprep.subr.mxu0 %v652
    %6035 = vmatpush1.msra.mxu0 %v651
    %6036 = vmatprep.subr.mxu0 %v654
    %6037 = vmatpush1.msra.mxu0 %v653
    %6038 = vmatprep.subr.mxu0 %v656
    %6039 = vmatpush1.msra.mxu0 %v655
    %6040 = vmatprep.subr.mxu0 %v658
    %6041 = vmatpush1.msra.mxu0 %v657
    %6042 = vmatprep.subr.mxu0 %v660
    %6043 = vmatpush1.msra.mxu0 %v659
    %6044 = vmatprep.subr.mxu0 %v662
    %6045 = vmatpush1.msra.mxu0 %v661
    %6046 = vmatprep.subr.mxu0 %v664
    %6047 = vmatpush1.msra.mxu0 %v663
    %6048 = vmatprep.subr.mxu0 %v666
    %6049 = vmatpush1.msra.mxu0 %v665
    %6050 = vmatprep.subr.mxu0 %v668
    %6051 = vmatpush1.msra.mxu0 %v667
    %6052 = vmatprep.subr.mxu0 %v670
    %6053 = vmatpush1.msra.mxu0 %v669
    %6054 = vmatprep.subr.mxu0 %v672
    %6055 = vmatpush1.msra.mxu0 %v671
    %6056 = vmatprep.subr.mxu0 %v674
    %6057 = vmatpush1.msra.mxu0 %v673
    %6058 = vmatprep.subr.mxu0 %v676
    %6059 = vmatpush1.msra.mxu0 %v675
    %6060 = vmatprep.mubr.f32.mxu0 %v5482
    %6061 = vmatmul.mubr.f32.gmra.mrb[0].mxu0 %v5480
    %v6062 = vpop.f32.mrb[0].mxu0
    %v6063 = vadd.f32 %v5992, %v6062
    %v6064 = vpop.f32.mrb[0].mxu0
    %v6065 = vadd.f32 %v5994, %v6064
    %6066 = vdwg.mxu0
    %v6067 = vmax.f32 %v6063, 0.0
    %v6068 = vmax.f32 %v6065, 0.0
    %v6071 = vcombine.low %v6067, %v6068
    %v6073 = vunpack.c.l.s4 1983009808
    %v6074 = vunpack.c.0.s8 %v6073
    %v6075 = vlaneseq
    %v6076 = vshrl.u32 %v6075, 7
    %v6077 = vsub.s32 %v6074, %v6076
    %v6078 = vrot.slane %v6071, %v6077
    %6080 = vst [vmem:[#allocation2 + $0x1c] sm:$0xf] %v6078
    %v6081 = vld [vmem:[#allocation9] sm:$0xff]
    %v6082 = vld [vmem:[#allocation9 + $0x8] sm:$0xff]
    %v6083 = vld [vmem:[#allocation9 + $0x10] sm:$0xff]
    %v6084 = vld [vmem:[#allocation9 + $0x18] sm:$0xff]
    %v6085 = vld [vmem:[#allocation9 + $0x20] sm:$0xff]
    %v6086 = vld [vmem:[#allocation9 + $0x28] sm:$0xff]
    %v6087 = vld [vmem:[#allocation9 + $0x30] sm:$0xff]
    %v6088 = vld [vmem:[#allocation9 + $0x38] sm:$0xff]
    %v6089 = vld [vmem:[#allocation9 + $0x40] sm:$0xff]
    %v6090 = vld [vmem:[#allocation9 + $0x48] sm:$0xff]
    %v6091 = vld [vmem:[#allocation9 + $0x50] sm:$0xff]
    %v6092 = vld [vmem:[#allocation9 + $0x58] sm:$0xff]
    %v6093 = vld [vmem:[#allocation9 + $0x60] sm:$0xff]
    %v6094 = vld [vmem:[#allocation9 + $0x68] sm:$0xff]
    %v6095 = vld [vmem:[#allocation9 + $0x70] sm:$0xff]
    %v6096 = vld [vmem:[#allocation9 + $0x78] sm:$0xff]
    %v6097 = vld [vmem:[#allocation9 + $0x80] sm:$0xff]
    %v6098 = vld [vmem:[#allocation9 + $0x88] sm:$0xff]
    %v6099 = vld [vmem:[#allocation9 + $0x90] sm:$0xff]
    %v6100 = vld [vmem:[#allocation9 + $0x98] sm:$0xff]
    %v6101 = vld [vmem:[#allocation9 + $0xa0] sm:$0xff]
    %v6102 = vld [vmem:[#allocation9 + $0xa8] sm:$0xff]
    %v6103 = vld [vmem:[#allocation9 + $0xb0] sm:$0xff]
    %v6104 = vld [vmem:[#allocation9 + $0xb8] sm:$0xff]
    %v6105 = vld [vmem:[#allocation9 + $0xc0] sm:$0xff]
    %v6106 = vld [vmem:[#allocation9 + $0xc8] sm:$0xff]
    %v6107 = vld [vmem:[#allocation9 + $0xd0] sm:$0xff]
    %v6108 = vld [vmem:[#allocation9 + $0xd8] sm:$0xff]
    %v6109 = vld [vmem:[#allocation9 + $0xe0] sm:$0xff]
    %v6110 = vld [vmem:[#allocation9 + $0xe8] sm:$0xff]
    %v6111 = vld [vmem:[#allocation9 + $0xf0] sm:$0xff]
    %v6112 = vld [vmem:[#allocation9 + $0xf8] sm:$0xff]
    %v6113 = vld [vmem:[#allocation9 + $0x100] sm:$0xff]
    %v6114 = vld [vmem:[#allocation9 + $0x108] sm:$0xff]
    %v6115 = vld [vmem:[#allocation9 + $0x110] sm:$0xff]
    %v6116 = vld [vmem:[#allocation9 + $0x118] sm:$0xff]
    %v6117 = vld [vmem:[#allocation9 + $0x120] sm:$0xff]
    %v6118 = vld [vmem:[#allocation9 + $0x128] sm:$0xff]
    %v6119 = vld [vmem:[#allocation9 + $0x130] sm:$0xff]
    %v6120 = vld [vmem:[#allocation9 + $0x138] sm:$0xff]
    %v6121 = vld [vmem:[#allocation9 + $0x140] sm:$0xff]
    %v6122 = vld [vmem:[#allocation9 + $0x148] sm:$0xff]
    %v6123 = vld [vmem:[#allocation9 + $0x150] sm:$0xff]
    %v6124 = vld [vmem:[#allocation9 + $0x158] sm:$0xff]
    %v6125 = vld [vmem:[#allocation9 + $0x160] sm:$0xff]
    %v6126 = vld [vmem:[#allocation9 + $0x168] sm:$0xff]
    %v6127 = vld [vmem:[#allocation9 + $0x170] sm:$0xff]
    %v6128 = vld [vmem:[#allocation9 + $0x178] sm:$0xff]
    %v6129 = vld [vmem:[#allocation9 + $0x180] sm:$0xff]
    %v6130 = vld [vmem:[#allocation9 + $0x188] sm:$0xff]
    %v6131 = vld [vmem:[#allocation9 + $0x190] sm:$0xff]
    %v6132 = vld [vmem:[#allocation9 + $0x198] sm:$0xff]
    %v6133 = vld [vmem:[#allocation9 + $0x1a0] sm:$0xff]
    %v6134 = vld [vmem:[#allocation9 + $0x1a8] sm:$0xff]
    %v6135 = vld [vmem:[#allocation9 + $0x1b0] sm:$0xff]
    %v6136 = vld [vmem:[#allocation9 + $0x1b8] sm:$0xff]
    %v6137 = vld [vmem:[#allocation9 + $0x1c0] sm:$0xff]
    %v6138 = vld [vmem:[#allocation9 + $0x1c8] sm:$0xff]
    %v6139 = vld [vmem:[#allocation9 + $0x1d0] sm:$0xff]
    %v6140 = vld [vmem:[#allocation9 + $0x1d8] sm:$0xff]
    %v6141 = vld [vmem:[#allocation9 + $0x1e0] sm:$0xff]
    %v6142 = vld [vmem:[#allocation9 + $0x1e8] sm:$0xff]
    %v6143 = vld [vmem:[#allocation9 + $0x1f0] sm:$0xff]
    %v6144 = vld [vmem:[#allocation9 + $0x1f8] sm:$0xff]
    %v6145 = vld [vmem:[#allocation9 + $0x200] sm:$0xff]
    %v6146 = vld [vmem:[#allocation9 + $0x208] sm:$0xff]
    %v6147 = vld [vmem:[#allocation9 + $0x210] sm:$0xff]
    %v6148 = vld [vmem:[#allocation9 + $0x218] sm:$0xff]
    %v6149 = vld [vmem:[#allocation9 + $0x220] sm:$0xff]
    %v6150 = vld [vmem:[#allocation9 + $0x228] sm:$0xff]
    %v6151 = vld [vmem:[#allocation9 + $0x230] sm:$0xff]
    %v6152 = vld [vmem:[#allocation9 + $0x238] sm:$0xff]
    %v6153 = vld [vmem:[#allocation9 + $0x240] sm:$0xff]
    %v6154 = vld [vmem:[#allocation9 + $0x248] sm:$0xff]
    %v6155 = vld [vmem:[#allocation9 + $0x250] sm:$0xff]
    %v6156 = vld [vmem:[#allocation9 + $0x258] sm:$0xff]
    %v6157 = vld [vmem:[#allocation9 + $0x260] sm:$0xff]
    %v6158 = vld [vmem:[#allocation9 + $0x268] sm:$0xff]
    %v6159 = vld [vmem:[#allocation9 + $0x270] sm:$0xff]
    %v6160 = vld [vmem:[#allocation9 + $0x278] sm:$0xff]
    %v6161 = vld [vmem:[#allocation9 + $0x280] sm:$0xff]
    %v6162 = vld [vmem:[#allocation9 + $0x288] sm:$0xff]
    %v6163 = vld [vmem:[#allocation9 + $0x290] sm:$0xff]
    %v6164 = vld [vmem:[#allocation9 + $0x298] sm:$0xff]
    %v6165 = vld [vmem:[#allocation9 + $0x2a0] sm:$0xff]
    %v6166 = vld [vmem:[#allocation9 + $0x2a8] sm:$0xff]
    %v6167 = vld [vmem:[#allocation9 + $0x2b0] sm:$0xff]
    %v6168 = vld [vmem:[#allocation9 + $0x2b8] sm:$0xff]
    %v6169 = vld [vmem:[#allocation9 + $0x2c0] sm:$0xff]
    %v6170 = vld [vmem:[#allocation9 + $0x2c8] sm:$0xff]
    %v6171 = vld [vmem:[#allocation9 + $0x2d0] sm:$0xff]
    %v6172 = vld [vmem:[#allocation9 + $0x2d8] sm:$0xff]
    %v6173 = vld [vmem:[#allocation9 + $0x2e0] sm:$0xff]
    %v6174 = vld [vmem:[#allocation9 + $0x2e8] sm:$0xff]
    %v6175 = vld [vmem:[#allocation9 + $0x2f0] sm:$0xff]
    %v6176 = vld [vmem:[#allocation9 + $0x2f8] sm:$0xff]
    %v6177 = vld [vmem:[#allocation9 + $0x300] sm:$0xff]
    %v6178 = vld [vmem:[#allocation9 + $0x308] sm:$0xff]
    %v6179 = vld [vmem:[#allocation9 + $0x310] sm:$0xff]
    %v6180 = vld [vmem:[#allocation9 + $0x318] sm:$0xff]
    %v6181 = vld [vmem:[#allocation9 + $0x320] sm:$0xff]
    %v6182 = vld [vmem:[#allocation9 + $0x328] sm:$0xff]
    %v6183 = vld [vmem:[#allocation9 + $0x330] sm:$0xff]
    %v6184 = vld [vmem:[#allocation9 + $0x338] sm:$0xff]
    %v6185 = vld [vmem:[#allocation9 + $0x340] sm:$0xff]
    %v6186 = vld [vmem:[#allocation9 + $0x348] sm:$0xff]
    %v6187 = vld [vmem:[#allocation9 + $0x350] sm:$0xff]
    %v6188 = vld [vmem:[#allocation9 + $0x358] sm:$0xff]
    %v6189 = vld [vmem:[#allocation9 + $0x360] sm:$0xff]
    %v6190 = vld [vmem:[#allocation9 + $0x368] sm:$0xff]
    %v6191 = vld [vmem:[#allocation9 + $0x370] sm:$0xff]
    %v6192 = vld [vmem:[#allocation9 + $0x378] sm:$0xff]
    %v6193 = vld [vmem:[#allocation9 + $0x380] sm:$0xff]
    %v6194 = vld [vmem:[#allocation9 + $0x388] sm:$0xff]
    %v6195 = vld [vmem:[#allocation9 + $0x390] sm:$0xff]
    %v6196 = vld [vmem:[#allocation9 + $0x398] sm:$0xff]
    %v6197 = vld [vmem:[#allocation9 + $0x3a0] sm:$0xff]
    %v6198 = vld [vmem:[#allocation9 + $0x3a8] sm:$0xff]
    %v6199 = vld [vmem:[#allocation9 + $0x3b0] sm:$0xff]
    %v6200 = vld [vmem:[#allocation9 + $0x3b8] sm:$0xff]
    %v6201 = vld [vmem:[#allocation9 + $0x3c0] sm:$0xff]
    %v6202 = vld [vmem:[#allocation9 + $0x3c8] sm:$0xff]
    %v6203 = vld [vmem:[#allocation9 + $0x3d0] sm:$0xff]
    %v6204 = vld [vmem:[#allocation9 + $0x3d8] sm:$0xff]
    %v6205 = vld [vmem:[#allocation9 + $0x3e0] sm:$0xff]
    %v6206 = vld [vmem:[#allocation9 + $0x3e8] sm:$0xff]
    %v6207 = vld [vmem:[#allocation9 + $0x3f0] sm:$0xff]
    %v6208 = vld [vmem:[#allocation9 + $0x3f8] sm:$0xff]
    %v6209 = vld [vmem:[#allocation9 + $0x400] sm:$0xff]
    %v6210 = vld [vmem:[#allocation9 + $0x408] sm:$0xff]
    %v6211 = vld [vmem:[#allocation9 + $0x410] sm:$0xff]
    %v6212 = vld [vmem:[#allocation9 + $0x418] sm:$0xff]
    %v6213 = vld [vmem:[#allocation9 + $0x420] sm:$0xff]
    %v6214 = vld [vmem:[#allocation9 + $0x428] sm:$0xff]
    %v6215 = vld [vmem:[#allocation9 + $0x430] sm:$0xff]
    %v6216 = vld [vmem:[#allocation9 + $0x438] sm:$0xff]
    %v6217 = vld [vmem:[#allocation9 + $0x440] sm:$0xff]
    %v6218 = vld [vmem:[#allocation9 + $0x448] sm:$0xff]
    %v6219 = vld [vmem:[#allocation9 + $0x450] sm:$0xff]
    %v6220 = vld [vmem:[#allocation9 + $0x458] sm:$0xff]
    %v6221 = vld [vmem:[#allocation9 + $0x460] sm:$0xff]
    %v6222 = vld [vmem:[#allocation9 + $0x468] sm:$0xff]
    %v6223 = vld [vmem:[#allocation9 + $0x470] sm:$0xff]
    %v6224 = vld [vmem:[#allocation9 + $0x478] sm:$0xff]
    %v6225 = vld [vmem:[#allocation9 + $0x480] sm:$0xff]
    %v6226 = vld [vmem:[#allocation9 + $0x488] sm:$0xff]
    %v6227 = vld [vmem:[#allocation9 + $0x490] sm:$0xff]
    %v6228 = vld [vmem:[#allocation9 + $0x498] sm:$0xff]
    %v6229 = vld [vmem:[#allocation9 + $0x4a0] sm:$0xff]
    %v6230 = vld [vmem:[#allocation9 + $0x4a8] sm:$0xff]
    %v6231 = vld [vmem:[#allocation9 + $0x4b0] sm:$0xff]
    %v6232 = vld [vmem:[#allocation9 + $0x4b8] sm:$0xff]
    %v6233 = vld [vmem:[#allocation9 + $0x4c0] sm:$0xff]
    %v6234 = vld [vmem:[#allocation9 + $0x4c8] sm:$0xff]
    %v6235 = vld [vmem:[#allocation9 + $0x4d0] sm:$0xff]
    %v6236 = vld [vmem:[#allocation9 + $0x4d8] sm:$0xff]
    %v6237 = vld [vmem:[#allocation9 + $0x4e0] sm:$0xff]
    %v6238 = vld [vmem:[#allocation9 + $0x4e8] sm:$0xff]
    %v6239 = vld [vmem:[#allocation9 + $0x4f0] sm:$0xff]
    %v6240 = vld [vmem:[#allocation9 + $0x4f8] sm:$0xff]
    %v6241 = vld [vmem:[#allocation9 + $0x500] sm:$0xff]
    %v6242 = vld [vmem:[#allocation9 + $0x508] sm:$0xff]
    %v6243 = vld [vmem:[#allocation9 + $0x510] sm:$0xff]
    %v6244 = vld [vmem:[#allocation9 + $0x518] sm:$0xff]
    %v6245 = vld [vmem:[#allocation9 + $0x520] sm:$0xff]
    %v6246 = vld [vmem:[#allocation9 + $0x528] sm:$0xff]
    %v6247 = vld [vmem:[#allocation9 + $0x530] sm:$0xff]
    %v6248 = vld [vmem:[#allocation9 + $0x538] sm:$0xff]
    %v6249 = vld [vmem:[#allocation9 + $0x540] sm:$0xff]
    %v6250 = vld [vmem:[#allocation9 + $0x548] sm:$0xff]
    %v6251 = vld [vmem:[#allocation9 + $0x550] sm:$0xff]
    %v6252 = vld [vmem:[#allocation9 + $0x558] sm:$0xff]
    %v6253 = vld [vmem:[#allocation9 + $0x560] sm:$0xff]
    %v6254 = vld [vmem:[#allocation9 + $0x568] sm:$0xff]
    %v6255 = vld [vmem:[#allocation9 + $0x570] sm:$0xff]
    %v6256 = vld [vmem:[#allocation9 + $0x578] sm:$0xff]
    %v6257 = vld [vmem:[#allocation9 + $0x580] sm:$0xff]
    %v6258 = vld [vmem:[#allocation9 + $0x588] sm:$0xff]
    %v6259 = vld [vmem:[#allocation9 + $0x590] sm:$0xff]
    %v6260 = vld [vmem:[#allocation9 + $0x598] sm:$0xff]
    %v6261 = vld [vmem:[#allocation9 + $0x5a0] sm:$0xff]
    %v6262 = vld [vmem:[#allocation9 + $0x5a8] sm:$0xff]
    %v6263 = vld [vmem:[#allocation9 + $0x5b0] sm:$0xff]
    %v6264 = vld [vmem:[#allocation9 + $0x5b8] sm:$0xff]
    %v6265 = vld [vmem:[#allocation9 + $0x5c0] sm:$0xff]
    %v6266 = vld [vmem:[#allocation9 + $0x5c8] sm:$0xff]
    %v6267 = vld [vmem:[#allocation9 + $0x5d0] sm:$0xff]
    %v6268 = vld [vmem:[#allocation9 + $0x5d8] sm:$0xff]
    %v6269 = vld [vmem:[#allocation9 + $0x5e0] sm:$0xff]
    %v6270 = vld [vmem:[#allocation9 + $0x5e8] sm:$0xff]
    %v6271 = vld [vmem:[#allocation9 + $0x5f0] sm:$0xff]
    %v6272 = vld [vmem:[#allocation9 + $0x5f8] sm:$0xff]
    %v6273 = vld [vmem:[#allocation9 + $0x600] sm:$0xff]
    %v6274 = vld [vmem:[#allocation9 + $0x608] sm:$0xff]
    %v6275 = vld [vmem:[#allocation9 + $0x610] sm:$0xff]
    %v6276 = vld [vmem:[#allocation9 + $0x618] sm:$0xff]
    %v6277 = vld [vmem:[#allocation9 + $0x620] sm:$0xff]
    %v6278 = vld [vmem:[#allocation9 + $0x628] sm:$0xff]
    %v6279 = vld [vmem:[#allocation9 + $0x630] sm:$0xff]
    %v6280 = vld [vmem:[#allocation9 + $0x638] sm:$0xff]
    %v6281 = vld [vmem:[#allocation9 + $0x640] sm:$0xff]
    %v6282 = vld [vmem:[#allocation9 + $0x648] sm:$0xff]
    %v6283 = vld [vmem:[#allocation9 + $0x650] sm:$0xff]
    %v6284 = vld [vmem:[#allocation9 + $0x658] sm:$0xff]
    %v6285 = vld [vmem:[#allocation9 + $0x660] sm:$0xff]
    %v6286 = vld [vmem:[#allocation9 + $0x668] sm:$0xff]
    %v6287 = vld [vmem:[#allocation9 + $0x670] sm:$0xff]
    %v6288 = vld [vmem:[#allocation9 + $0x678] sm:$0xff]
    %v6289 = vld [vmem:[#allocation9 + $0x680] sm:$0xff]
    %v6290 = vld [vmem:[#allocation9 + $0x688] sm:$0xff]
    %v6291 = vld [vmem:[#allocation9 + $0x690] sm:$0xff]
    %v6292 = vld [vmem:[#allocation9 + $0x698] sm:$0xff]
    %v6293 = vld [vmem:[#allocation9 + $0x6a0] sm:$0xff]
    %v6294 = vld [vmem:[#allocation9 + $0x6a8] sm:$0xff]
    %v6295 = vld [vmem:[#allocation9 + $0x6b0] sm:$0xff]
    %v6296 = vld [vmem:[#allocation9 + $0x6b8] sm:$0xff]
    %v6297 = vld [vmem:[#allocation9 + $0x6c0] sm:$0xff]
    %v6298 = vld [vmem:[#allocation9 + $0x6c8] sm:$0xff]
    %v6299 = vld [vmem:[#allocation9 + $0x6d0] sm:$0xff]
    %v6300 = vld [vmem:[#allocation9 + $0x6d8] sm:$0xff]
    %v6301 = vld [vmem:[#allocation9 + $0x6e0] sm:$0xff]
    %v6302 = vld [vmem:[#allocation9 + $0x6e8] sm:$0xff]
    %v6303 = vld [vmem:[#allocation9 + $0x6f0] sm:$0xff]
    %v6304 = vld [vmem:[#allocation9 + $0x6f8] sm:$0xff]
    %v6305 = vld [vmem:[#allocation9 + $0x700] sm:$0xff]
    %v6306 = vld [vmem:[#allocation9 + $0x708] sm:$0xff]
    %v6307 = vld [vmem:[#allocation9 + $0x710] sm:$0xff]
    %v6308 = vld [vmem:[#allocation9 + $0x718] sm:$0xff]
    %v6309 = vld [vmem:[#allocation9 + $0x720] sm:$0xff]
    %v6310 = vld [vmem:[#allocation9 + $0x728] sm:$0xff]
    %v6311 = vld [vmem:[#allocation9 + $0x730] sm:$0xff]
    %v6312 = vld [vmem:[#allocation9 + $0x738] sm:$0xff]
    %v6313 = vld [vmem:[#allocation9 + $0x740] sm:$0xff]
    %v6314 = vld [vmem:[#allocation9 + $0x748] sm:$0xff]
    %v6315 = vld [vmem:[#allocation9 + $0x750] sm:$0xff]
    %v6316 = vld [vmem:[#allocation9 + $0x758] sm:$0xff]
    %v6317 = vld [vmem:[#allocation9 + $0x760] sm:$0xff]
    %v6318 = vld [vmem:[#allocation9 + $0x768] sm:$0xff]
    %v6319 = vld [vmem:[#allocation9 + $0x770] sm:$0xff]
    %v6320 = vld [vmem:[#allocation9 + $0x778] sm:$0xff]
    %v6321 = vld [vmem:[#allocation9 + $0x780] sm:$0xff]
    %v6322 = vld [vmem:[#allocation9 + $0x788] sm:$0xff]
    %v6323 = vld [vmem:[#allocation9 + $0x790] sm:$0xff]
    %v6324 = vld [vmem:[#allocation9 + $0x798] sm:$0xff]
    %v6325 = vld [vmem:[#allocation9 + $0x7a0] sm:$0xff]
    %v6326 = vld [vmem:[#allocation9 + $0x7a8] sm:$0xff]
    %v6327 = vld [vmem:[#allocation9 + $0x7b0] sm:$0xff]
    %v6328 = vld [vmem:[#allocation9 + $0x7b8] sm:$0xff]
    %v6329 = vld [vmem:[#allocation9 + $0x7c0] sm:$0xff]
    %v6330 = vld [vmem:[#allocation9 + $0x7c8] sm:$0xff]
    %v6331 = vld [vmem:[#allocation9 + $0x7d0] sm:$0xff]
    %v6332 = vld [vmem:[#allocation9 + $0x7d8] sm:$0xff]
    %v6333 = vld [vmem:[#allocation9 + $0x7e0] sm:$0xff]
    %v6334 = vld [vmem:[#allocation9 + $0x7e8] sm:$0xff]
    %v6335 = vld [vmem:[#allocation9 + $0x7f0] sm:$0xff]
    %v6336 = vld [vmem:[#allocation9 + $0x7f8] sm:$0xff]
    %v6337 = vld [vmem:[#allocation10] sm:$0x3]
    %v6338 = vld [vmem:[#allocation2] sm:$0xff]
    %v6339 = vld [vmem:[#allocation2 + $0x8] sm:$0xff]
    %v6341 = vlaneseq
    %v6342 = vshrl.u32 %v6341, 7
    %v6343 = vsub.s32 0, %v6342
    %v6344 = vrot.slane %v6337, %v6343
    %v6345 = vlaneseq
    %v6346 = vshrl.u32 %v6345, 7
    %v6347 = vsub.s32 1, %v6346
    %v6348 = vrot.slane %v6337, %v6347
    %v6353 = vcombine.high %v6338, %v6338
    %v6355 = vunpack.c.l.s4 1983009808
    %v6356 = vunpack.c.0.s8 %v6355
    %v6357 = vlaneseq
    %v6358 = vshrl.u32 %v6357, 7
    %v6359 = vsub.s32 %v6356, %v6358
    %v6360 = vrot.slane %v6338, %v6359
    %v6362 = vunpack.c.l.s4 1983009808
    %v6363 = vunpack.c.0.s8 %v6362
    %v6364 = vlaneseq
    %v6365 = vshrl.u32 %v6364, 7
    %v6366 = vsub.s32 %v6363, %v6365
    %v6367 = vrot.slane %v6353, %v6366
    %v6368 = vcombine.high %v6360, %v6360
    %v6369 = vcombine.high %v6367, %v6367
    %v6370 = vcombine.high %v6339, %v6339
    %v6372 = vunpack.c.l.s4 1983009808
    %v6373 = vunpack.c.0.s8 %v6372
    %v6374 = vlaneseq
    %v6375 = vshrl.u32 %v6374, 7
    %v6376 = vsub.s32 %v6373, %v6375
    %v6377 = vrot.slane %v6339, %v6376
    %v6379 = vunpack.c.l.s4 1983009808
    %v6380 = vunpack.c.0.s8 %v6379
    %v6381 = vlaneseq
    %v6382 = vshrl.u32 %v6381, 7
    %v6383 = vsub.s32 %v6380, %v6382
    %v6384 = vrot.slane %v6370, %v6383
    %v6385 = vcombine.high %v6377, %v6377
    %v6386 = vcombine.high %v6384, %v6384
    %6395 = vmatprep.subr.mxu0 %v6082
    %6396 = vmatpush1.msra.mxu0 %v6081
    %6397 = vmatprep.subr.mxu0 %v6084
    %6398 = vmatpush1.msra.mxu0 %v6083
    %6399 = vmatprep.subr.mxu0 %v6086
    %6400 = vmatpush1.msra.mxu0 %v6085
    %6401 = vmatprep.subr.mxu0 %v6088
    %6402 = vmatpush1.msra.mxu0 %v6087
    %6403 = vmatprep.subr.mxu0 %v6090
    %6404 = vmatpush1.msra.mxu0 %v6089
    %6405 = vmatprep.subr.mxu0 %v6092
    %6406 = vmatpush1.msra.mxu0 %v6091
    %6407 = vmatprep.subr.mxu0 %v6094
    %6408 = vmatpush1.msra.mxu0 %v6093
    %6409 = vmatprep.subr.mxu0 %v6096
    %6410 = vmatpush1.msra.mxu0 %v6095
    %6411 = vmatprep.subr.mxu0 %v6098
    %6412 = vmatpush1.msra.mxu0 %v6097
    %6413 = vmatprep.subr.mxu0 %v6100
    %6414 = vmatpush1.msra.mxu0 %v6099
    %6415 = vmatprep.subr.mxu0 %v6102
    %6416 = vmatpush1.msra.mxu0 %v6101
    %6417 = vmatprep.subr.mxu0 %v6104
    %6418 = vmatpush1.msra.mxu0 %v6103
    %6419 = vmatprep.subr.mxu0 %v6106
    %6420 = vmatpush1.msra.mxu0 %v6105
    %6421 = vmatprep.subr.mxu0 %v6108
    %6422 = vmatpush1.msra.mxu0 %v6107
    %6423 = vmatprep.subr.mxu0 %v6110
    %6424 = vmatpush1.msra.mxu0 %v6109
    %6425 = vmatprep.subr.mxu0 %v6112
    %6426 = vmatpush1.msra.mxu0 %v6111
    %6427 = vmatprep.subr.mxu0 %v6114
    %6428 = vmatpush1.msra.mxu0 %v6113
    %6429 = vmatprep.subr.mxu0 %v6116
    %6430 = vmatpush1.msra.mxu0 %v6115
    %6431 = vmatprep.subr.mxu0 %v6118
    %6432 = vmatpush1.msra.mxu0 %v6117
    %6433 = vmatprep.subr.mxu0 %v6120
    %6434 = vmatpush1.msra.mxu0 %v6119
    %6435 = vmatprep.subr.mxu0 %v6122
    %6436 = vmatpush1.msra.mxu0 %v6121
    %6437 = vmatprep.subr.mxu0 %v6124
    %6438 = vmatpush1.msra.mxu0 %v6123
    %6439 = vmatprep.subr.mxu0 %v6126
    %6440 = vmatpush1.msra.mxu0 %v6125
    %6441 = vmatprep.subr.mxu0 %v6128
    %6442 = vmatpush1.msra.mxu0 %v6127
    %6443 = vmatprep.subr.mxu0 %v6130
    %6444 = vmatpush1.msra.mxu0 %v6129
    %6445 = vmatprep.subr.mxu0 %v6132
    %6446 = vmatpush1.msra.mxu0 %v6131
    %6447 = vmatprep.subr.mxu0 %v6134
    %6448 = vmatpush1.msra.mxu0 %v6133
    %6449 = vmatprep.subr.mxu0 %v6136
    %6450 = vmatpush1.msra.mxu0 %v6135
    %6451 = vmatprep.subr.mxu0 %v6138
    %6452 = vmatpush1.msra.mxu0 %v6137
    %6453 = vmatprep.subr.mxu0 %v6140
    %6454 = vmatpush1.msra.mxu0 %v6139
    %6455 = vmatprep.subr.mxu0 %v6142
    %6456 = vmatpush1.msra.mxu0 %v6141
    %6457 = vmatprep.subr.mxu0 %v6144
    %6458 = vmatpush1.msra.mxu0 %v6143
    %6459 = vmatprep.mubr.f32.mxu0 %v6368
    %6460 = vmatmul.mubr.f32.gmra.mrb[0].mxu0 %v6360
    %v6461 = vpop.f32.mrb[0].mxu0
    %v6462 = vadd.f32 %v6344, %v6461
    %v6463 = vpop.f32.mrb[0].mxu0
    %v6464 = vadd.f32 %v6348, %v6463
    %6465 = vdwg.mxu0
    %6466 = vmatprep.subr.mxu0 %v6146
    %6467 = vmatpush1.msra.mxu0 %v6145
    %6468 = vmatprep.subr.mxu0 %v6148
    %6469 = vmatpush1.msra.mxu0 %v6147
    %6470 = vmatprep.subr.mxu0 %v6150
    %6471 = vmatpush1.msra.mxu0 %v6149
    %6472 = vmatprep.subr.mxu0 %v6152
    %6473 = vmatpush1.msra.mxu0 %v6151
    %6474 = vmatprep.subr.mxu0 %v6154
    %6475 = vmatpush1.msra.mxu0 %v6153
    %6476 = vmatprep.subr.mxu0 %v6156
    %6477 = vmatpush1.msra.mxu0 %v6155
    %6478 = vmatprep.subr.mxu0 %v6158
    %6479 = vmatpush1.msra.mxu0 %v6157
    %6480 = vmatprep.subr.mxu0 %v6160
    %6481 = vmatpush1.msra.mxu0 %v6159
    %6482 = vmatprep.subr.mxu0 %v6162
    %6483 = vmatpush1.msra.mxu0 %v6161
    %6484 = vmatprep.subr.mxu0 %v6164
    %6485 = vmatpush1.msra.mxu0 %v6163
    %6486 = vmatprep.subr.mxu0 %v6166
    %6487 = vmatpush1.msra.mxu0 %v6165
    %6488 = vmatprep.subr.mxu0 %v6168
    %6489 = vmatpush1.msra.mxu0 %v6167
    %6490 = vmatprep.subr.mxu0 %v6170
    %6491 = vmatpush1.msra.mxu0 %v6169
    %6492 = vmatprep.subr.mxu0 %v6172
    %6493 = vmatpush1.msra.mxu0 %v6171
    %6494 = vmatprep.subr.mxu0 %v6174
    %6495 = vmatpush1.msra.mxu0 %v6173
    %6496 = vmatprep.subr.mxu0 %v6176
    %6497 = vmatpush1.msra.mxu0 %v6175
    %6498 = vmatprep.subr.mxu0 %v6178
    %6499 = vmatpush1.msra.mxu0 %v6177
    %6500 = vmatprep.subr.mxu0 %v6180
    %6501 = vmatpush1.msra.mxu0 %v6179
    %6502 = vmatprep.subr.mxu0 %v6182
    %6503 = vmatpush1.msra.mxu0 %v6181
    %6504 = vmatprep.subr.mxu0 %v6184
    %6505 = vmatpush1.msra.mxu0 %v6183
    %6506 = vmatprep.subr.mxu0 %v6186
    %6507 = vmatpush1.msra.mxu0 %v6185
    %6508 = vmatprep.subr.mxu0 %v6188
    %6509 = vmatpush1.msra.mxu0 %v6187
    %6510 = vmatprep.subr.mxu0 %v6190
    %6511 = vmatpush1.msra.mxu0 %v6189
    %6512 = vmatprep.subr.mxu0 %v6192
    %6513 = vmatpush1.msra.mxu0 %v6191
    %6514 = vmatprep.subr.mxu0 %v6194
    %6515 = vmatpush1.msra.mxu0 %v6193
    %6516 = vmatprep.subr.mxu0 %v6196
    %6517 = vmatpush1.msra.mxu0 %v6195
    %6518 = vmatprep.subr.mxu0 %v6198
    %6519 = vmatpush1.msra.mxu0 %v6197
    %6520 = vmatprep.subr.mxu0 %v6200
    %6521 = vmatpush1.msra.mxu0 %v6199
    %6522 = vmatprep.subr.mxu0 %v6202
    %6523 = vmatpush1.msra.mxu0 %v6201
    %6524 = vmatprep.subr.mxu0 %v6204
    %6525 = vmatpush1.msra.mxu0 %v6203
    %6526 = vmatprep.subr.mxu0 %v6206
    %6527 = vmatpush1.msra.mxu0 %v6205
    %6528 = vmatprep.subr.mxu0 %v6208
    %6529 = vmatpush1.msra.mxu0 %v6207
    %6530 = vmatprep.mubr.f32.mxu0 %v6369
    %6531 = vmatmul.mubr.f32.gmra.mrb[0].mxu0 %v6367
    %v6532 = vpop.f32.mrb[0].mxu0
    %v6533 = vadd.f32 %v6462, %v6532
    %v6534 = vpop.f32.mrb[0].mxu0
    %v6535 = vadd.f32 %v6464, %v6534
    %6536 = vdwg.mxu0
    %6537 = vmatprep.subr.mxu0 %v6210
    %6538 = vmatpush1.msra.mxu0 %v6209
    %6539 = vmatprep.subr.mxu0 %v6212
    %6540 = vmatpush1.msra.mxu0 %v6211
    %6541 = vmatprep.subr.mxu0 %v6214
    %6542 = vmatpush1.msra.mxu0 %v6213
    %6543 = vmatprep.subr.mxu0 %v6216
    %6544 = vmatpush1.msra.mxu0 %v6215
    %6545 = vmatprep.subr.mxu0 %v6218
    %6546 = vmatpush1.msra.mxu0 %v6217
    %6547 = vmatprep.subr.mxu0 %v6220
    %6548 = vmatpush1.msra.mxu0 %v6219
    %6549 = vmatprep.subr.mxu0 %v6222
    %6550 = vmatpush1.msra.mxu0 %v6221
    %6551 = vmatprep.subr.mxu0 %v6224
    %6552 = vmatpush1.msra.mxu0 %v6223
    %6553 = vmatprep.subr.mxu0 %v6226
    %6554 = vmatpush1.msra.mxu0 %v6225
    %6555 = vmatprep.subr.mxu0 %v6228
    %6556 = vmatpush1.msra.mxu0 %v6227
    %6557 = vmatprep.subr.mxu0 %v6230
    %6558 = vmatpush1.msra.mxu0 %v6229
    %6559 = vmatprep.subr.mxu0 %v6232
    %6560 = vmatpush1.msra.mxu0 %v6231
    %6561 = vmatprep.subr.mxu0 %v6234
    %6562 = vmatpush1.msra.mxu0 %v6233
    %6563 = vmatprep.subr.mxu0 %v6236
    %6564 = vmatpush1.msra.mxu0 %v6235
    %6565 = vmatprep.subr.mxu0 %v6238
    %6566 = vmatpush1.msra.mxu0 %v6237
    %6567 = vmatprep.subr.mxu0 %v6240
    %6568 = vmatpush1.msra.mxu0 %v6239
    %6569 = vmatprep.subr.mxu0 %v6242
    %6570 = vmatpush1.msra.mxu0 %v6241
    %6571 = vmatprep.subr.mxu0 %v6244
    %6572 = vmatpush1.msra.mxu0 %v6243
    %6573 = vmatprep.subr.mxu0 %v6246
    %6574 = vmatpush1.msra.mxu0 %v6245
    %6575 = vmatprep.subr.mxu0 %v6248
    %6576 = vmatpush1.msra.mxu0 %v6247
    %6577 = vmatprep.subr.mxu0 %v6250
    %6578 = vmatpush1.msra.mxu0 %v6249
    %6579 = vmatprep.subr.mxu0 %v6252
    %6580 = vmatpush1.msra.mxu0 %v6251
    %6581 = vmatprep.subr.mxu0 %v6254
    %6582 = vmatpush1.msra.mxu0 %v6253
    %6583 = vmatprep.subr.mxu0 %v6256
    %6584 = vmatpush1.msra.mxu0 %v6255
    %6585 = vmatprep.subr.mxu0 %v6258
    %6586 = vmatpush1.msra.mxu0 %v6257
    %6587 = vmatprep.subr.mxu0 %v6260
    %6588 = vmatpush1.msra.mxu0 %v6259
    %6589 = vmatprep.subr.mxu0 %v6262
    %6590 = vmatpush1.msra.mxu0 %v6261
    %6591 = vmatprep.subr.mxu0 %v6264
    %6592 = vmatpush1.msra.mxu0 %v6263
    %6593 = vmatprep.subr.mxu0 %v6266
    %6594 = vmatpush1.msra.mxu0 %v6265
    %6595 = vmatprep.subr.mxu0 %v6268
    %6596 = vmatpush1.msra.mxu0 %v6267
    %6597 = vmatprep.subr.mxu0 %v6270
    %6598 = vmatpush1.msra.mxu0 %v6269
    %6599 = vmatprep.subr.mxu0 %v6272
    %6600 = vmatpush1.msra.mxu0 %v6271
    %6601 = vmatprep.mubr.f32.mxu0 %v6385
    %6602 = vmatmul.mubr.f32.gmra.mrb[0].mxu0 %v6377
    %v6603 = vpop.f32.mrb[0].mxu0
    %v6604 = vadd.f32 %v6533, %v6603
    %v6605 = vpop.f32.mrb[0].mxu0
    %v6606 = vadd.f32 %v6535, %v6605
    %6607 = vdwg.mxu0
    %6608 = vmatprep.subr.mxu0 %v6274
    %6609 = vmatpush1.msra.mxu0 %v6273
    %6610 = vmatprep.subr.mxu0 %v6276
    %6611 = vmatpush1.msra.mxu0 %v6275
    %6612 = vmatprep.subr.mxu0 %v6278
    %6613 = vmatpush1.msra.mxu0 %v6277
    %6614 = vmatprep.subr.mxu0 %v6280
    %6615 = vmatpush1.msra.mxu0 %v6279
    %6616 = vmatprep.subr.mxu0 %v6282
    %6617 = vmatpush1.msra.mxu0 %v6281
    %6618 = vmatprep.subr.mxu0 %v6284
    %6619 = vmatpush1.msra.mxu0 %v6283
    %6620 = vmatprep.subr.mxu0 %v6286
    %6621 = vmatpush1.msra.mxu0 %v6285
    %6622 = vmatprep.subr.mxu0 %v6288
    %6623 = vmatpush1.msra.mxu0 %v6287
    %6624 = vmatprep.subr.mxu0 %v6290
    %6625 = vmatpush1.msra.mxu0 %v6289
    %6626 = vmatprep.subr.mxu0 %v6292
    %6627 = vmatpush1.msra.mxu0 %v6291
    %6628 = vmatprep.subr.mxu0 %v6294
    %6629 = vmatpush1.msra.mxu0 %v6293
    %6630 = vmatprep.subr.mxu0 %v6296
    %6631 = vmatpush1.msra.mxu0 %v6295
    %6632 = vmatprep.subr.mxu0 %v6298
    %6633 = vmatpush1.msra.mxu0 %v6297
    %6634 = vmatprep.subr.mxu0 %v6300
    %6635 = vmatpush1.msra.mxu0 %v6299
    %6636 = vmatprep.subr.mxu0 %v6302
    %6637 = vmatpush1.msra.mxu0 %v6301
    %6638 = vmatprep.subr.mxu0 %v6304
    %6639 = vmatpush1.msra.mxu0 %v6303
    %6640 = vmatprep.subr.mxu0 %v6306
    %6641 = vmatpush1.msra.mxu0 %v6305
    %6642 = vmatprep.subr.mxu0 %v6308
    %6643 = vmatpush1.msra.mxu0 %v6307
    %6644 = vmatprep.subr.mxu0 %v6310
    %6645 = vmatpush1.msra.mxu0 %v6309
    %6646 = vmatprep.subr.mxu0 %v6312
    %6647 = vmatpush1.msra.mxu0 %v6311
    %6648 = vmatprep.subr.mxu0 %v6314
    %6649 = vmatpush1.msra.mxu0 %v6313
    %6650 = vmatprep.subr.mxu0 %v6316
    %6651 = vmatpush1.msra.mxu0 %v6315
    %6652 = vmatprep.subr.mxu0 %v6318
    %6653 = vmatpush1.msra.mxu0 %v6317
    %6654 = vmatprep.subr.mxu0 %v6320
    %6655 = vmatpush1.msra.mxu0 %v6319
    %6656 = vmatprep.subr.mxu0 %v6322
    %6657 = vmatpush1.msra.mxu0 %v6321
    %6658 = vmatprep.subr.mxu0 %v6324
    %6659 = vmatpush1.msra.mxu0 %v6323
    %6660 = vmatprep.subr.mxu0 %v6326
    %6661 = vmatpush1.msra.mxu0 %v6325
    %6662 = vmatprep.subr.mxu0 %v6328
    %6663 = vmatpush1.msra.mxu0 %v6327
    %6664 = vmatprep.subr.mxu0 %v6330
    %6665 = vmatpush1.msra.mxu0 %v6329
    %6666 = vmatprep.subr.mxu0 %v6332
    %6667 = vmatpush1.msra.mxu0 %v6331
    %6668 = vmatprep.subr.mxu0 %v6334
    %6669 = vmatpush1.msra.mxu0 %v6333
    %6670 = vmatprep.subr.mxu0 %v6336
    %6671 = vmatpush1.msra.mxu0 %v6335
    %6672 = vmatprep.mubr.f32.mxu0 %v6386
    %6673 = vmatmul.mubr.f32.gmra.mrb[0].mxu0 %v6384
    %v6674 = vpop.f32.mrb[0].mxu0
    %v6675 = vadd.f32 %v6604, %v6674
    %v6676 = vpop.f32.mrb[0].mxu0
    %v6677 = vadd.f32 %v6606, %v6676
    %6678 = vdwg.mxu0
    %v6679 = vmax.f32 %v6675, 0.0
    %v6680 = vmax.f32 %v6677, 0.0
    %v6683 = vcombine.low %v6679, %v6680
    %v6685 = vunpack.c.l.s4 1983009808
    %v6686 = vunpack.c.0.s8 %v6685
    %v6687 = vlaneseq
    %v6688 = vshrl.u32 %v6687, 7
    %v6689 = vsub.s32 %v6686, %v6688
    %v6690 = vrot.slane %v6683, %v6689
    %6692 = vst [vmem:[#allocation3] sm:$0xf] %v6690
    %v6693 = vld [vmem:[#allocation2 + $0x8] sm:$0xff]
    %v6694 = vld [vmem:[#allocation2 + $0x10] sm:$0xff]
    %v6697 = vcombine.high %v6693, %v6693
    %v6699 = vunpack.c.l.s4 1983009808
    %v6700 = vunpack.c.0.s8 %v6699
    %v6701 = vlaneseq
    %v6702 = vshrl.u32 %v6701, 7
    %v6703 = vsub.s32 %v6700, %v6702
    %v6704 = vrot.slane %v6693, %v6703
    %v6706 = vunpack.c.l.s4 1983009808
    %v6707 = vunpack.c.0.s8 %v6706
    %v6708 = vlaneseq
    %v6709 = vshrl.u32 %v6708, 7
    %v6710 = vsub.s32 %v6707, %v6709
    %v6711 = vrot.slane %v6697, %v6710
    %v6712 = vcombine.high %v6704, %v6704
    %v6713 = vcombine.high %v6711, %v6711
    %v6714 = vcombine.high %v6694, %v6694
    %v6716 = vunpack.c.l.s4 1983009808
    %v6717 = vunpack.c.0.s8 %v6716
    %v6718 = vlaneseq
    %v6719 = vshrl.u32 %v6718, 7
    %v6720 = vsub.s32 %v6717, %v6719
    %v6721 = vrot.slane %v6694, %v6720
    %v6723 = vunpack.c.l.s4 1983009808
    %v6724 = vunpack.c.0.s8 %v6723
    %v6725 = vlaneseq
    %v6726 = vshrl.u32 %v6725, 7
    %v6727 = vsub.s32 %v6724, %v6726
    %v6728 = vrot.slane %v6714, %v6727
    %v6729 = vcombine.high %v6721, %v6721
    %v6730 = vcombine.high %v6728, %v6728
    %6739 = vmatprep.subr.mxu0 %v6082
    %6740 = vmatpush1.msra.mxu0 %v6081
    %6741 = vmatprep.subr.mxu0 %v6084
    %6742 = vmatpush1.msra.mxu0 %v6083
    %6743 = vmatprep.subr.mxu0 %v6086
    %6744 = vmatpush1.msra.mxu0 %v6085
    %6745 = vmatprep.subr.mxu0 %v6088
    %6746 = vmatpush1.msra.mxu0 %v6087
    %6747 = vmatprep.subr.mxu0 %v6090
    %6748 = vmatpush1.msra.mxu0 %v6089
    %6749 = vmatprep.subr.mxu0 %v6092
    %6750 = vmatpush1.msra.mxu0 %v6091
    %6751 = vmatprep.subr.mxu0 %v6094
    %6752 = vmatpush1.msra.mxu0 %v6093
    %6753 = vmatprep.subr.mxu0 %v6096
    %6754 = vmatpush1.msra.mxu0 %v6095
    %6755 = vmatprep.subr.mxu0 %v6098
    %6756 = vmatpush1.msra.mxu0 %v6097
    %6757 = vmatprep.subr.mxu0 %v6100
    %6758 = vmatpush1.msra.mxu0 %v6099
    %6759 = vmatprep.subr.mxu0 %v6102
    %6760 = vmatpush1.msra.mxu0 %v6101
    %6761 = vmatprep.subr.mxu0 %v6104
    %6762 = vmatpush1.msra.mxu0 %v6103
    %6763 = vmatprep.subr.mxu0 %v6106
    %6764 = vmatpush1.msra.mxu0 %v6105
    %6765 = vmatprep.subr.mxu0 %v6108
    %6766 = vmatpush1.msra.mxu0 %v6107
    %6767 = vmatprep.subr.mxu0 %v6110
    %6768 = vmatpush1.msra.mxu0 %v6109
    %6769 = vmatprep.subr.mxu0 %v6112
    %6770 = vmatpush1.msra.mxu0 %v6111
    %6771 = vmatprep.subr.mxu0 %v6114
    %6772 = vmatpush1.msra.mxu0 %v6113
    %6773 = vmatprep.subr.mxu0 %v6116
    %6774 = vmatpush1.msra.mxu0 %v6115
    %6775 = vmatprep.subr.mxu0 %v6118
    %6776 = vmatpush1.msra.mxu0 %v6117
    %6777 = vmatprep.subr.mxu0 %v6120
    %6778 = vmatpush1.msra.mxu0 %v6119
    %6779 = vmatprep.subr.mxu0 %v6122
    %6780 = vmatpush1.msra.mxu0 %v6121
    %6781 = vmatprep.subr.mxu0 %v6124
    %6782 = vmatpush1.msra.mxu0 %v6123
    %6783 = vmatprep.subr.mxu0 %v6126
    %6784 = vmatpush1.msra.mxu0 %v6125
    %6785 = vmatprep.subr.mxu0 %v6128
    %6786 = vmatpush1.msra.mxu0 %v6127
    %6787 = vmatprep.subr.mxu0 %v6130
    %6788 = vmatpush1.msra.mxu0 %v6129
    %6789 = vmatprep.subr.mxu0 %v6132
    %6790 = vmatpush1.msra.mxu0 %v6131
    %6791 = vmatprep.subr.mxu0 %v6134
    %6792 = vmatpush1.msra.mxu0 %v6133
    %6793 = vmatprep.subr.mxu0 %v6136
    %6794 = vmatpush1.msra.mxu0 %v6135
    %6795 = vmatprep.subr.mxu0 %v6138
    %6796 = vmatpush1.msra.mxu0 %v6137
    %6797 = vmatprep.subr.mxu0 %v6140
    %6798 = vmatpush1.msra.mxu0 %v6139
    %6799 = vmatprep.subr.mxu0 %v6142
    %6800 = vmatpush1.msra.mxu0 %v6141
    %6801 = vmatprep.subr.mxu0 %v6144
    %6802 = vmatpush1.msra.mxu0 %v6143
    %6803 = vmatprep.mubr.f32.mxu0 %v6712
    %6804 = vmatmul.mubr.f32.gmra.mrb[0].mxu0 %v6704
    %v6805 = vpop.f32.mrb[0].mxu0
    %v6806 = vadd.f32 %v6344, %v6805
    %v6807 = vpop.f32.mrb[0].mxu0
    %v6808 = vadd.f32 %v6348, %v6807
    %6809 = vdwg.mxu0
    %6810 = vmatprep.subr.mxu0 %v6146
    %6811 = vmatpush1.msra.mxu0 %v6145
    %6812 = vmatprep.subr.mxu0 %v6148
    %6813 = vmatpush1.msra.mxu0 %v6147
    %6814 = vmatprep.subr.mxu0 %v6150
    %6815 = vmatpush1.msra.mxu0 %v6149
    %6816 = vmatprep.subr.mxu0 %v6152
    %6817 = vmatpush1.msra.mxu0 %v6151
    %6818 = vmatprep.subr.mxu0 %v6154
    %6819 = vmatpush1.msra.mxu0 %v6153
    %6820 = vmatprep.subr.mxu0 %v6156
    %6821 = vmatpush1.msra.mxu0 %v6155
    %6822 = vmatprep.subr.mxu0 %v6158
    %6823 = vmatpush1.msra.mxu0 %v6157
    %6824 = vmatprep.subr.mxu0 %v6160
    %6825 = vmatpush1.msra.mxu0 %v6159
    %6826 = vmatprep.subr.mxu0 %v6162
    %6827 = vmatpush1.msra.mxu0 %v6161
    %6828 = vmatprep.subr.mxu0 %v6164
    %6829 = vmatpush1.msra.mxu0 %v6163
    %6830 = vmatprep.subr.mxu0 %v6166
    %6831 = vmatpush1.msra.mxu0 %v6165
    %6832 = vmatprep.subr.mxu0 %v6168
    %6833 = vmatpush1.msra.mxu0 %v6167
    %6834 = vmatprep.subr.mxu0 %v6170
    %6835 = vmatpush1.msra.mxu0 %v6169
    %6836 = vmatprep.subr.mxu0 %v6172
    %6837 = vmatpush1.msra.mxu0 %v6171
    %6838 = vmatprep.subr.mxu0 %v6174
    %6839 = vmatpush1.msra.mxu0 %v6173
    %6840 = vmatprep.subr.mxu0 %v6176
    %6841 = vmatpush1.msra.mxu0 %v6175
    %6842 = vmatprep.subr.mxu0 %v6178
    %6843 = vmatpush1.msra.mxu0 %v6177
    %6844 = vmatprep.subr.mxu0 %v6180
    %6845 = vmatpush1.msra.mxu0 %v6179
    %6846 = vmatprep.subr.mxu0 %v6182
    %6847 = vmatpush1.msra.mxu0 %v6181
    %6848 = vmatprep.subr.mxu0 %v6184
    %6849 = vmatpush1.msra.mxu0 %v6183
    %6850 = vmatprep.subr.mxu0 %v6186
    %6851 = vmatpush1.msra.mxu0 %v6185
    %6852 = vmatprep.subr.mxu0 %v6188
    %6853 = vmatpush1.msra.mxu0 %v6187
    %6854 = vmatprep.subr.mxu0 %v6190
    %6855 = vmatpush1.msra.mxu0 %v6189
    %6856 = vmatprep.subr.mxu0 %v6192
    %6857 = vmatpush1.msra.mxu0 %v6191
    %6858 = vmatprep.subr.mxu0 %v6194
    %6859 = vmatpush1.msra.mxu0 %v6193
    %6860 = vmatprep.subr.mxu0 %v6196
    %6861 = vmatpush1.msra.mxu0 %v6195
    %6862 = vmatprep.subr.mxu0 %v6198
    %6863 = vmatpush1.msra.mxu0 %v6197
    %6864 = vmatprep.subr.mxu0 %v6200
    %6865 = vmatpush1.msra.mxu0 %v6199
    %6866 = vmatprep.subr.mxu0 %v6202
    %6867 = vmatpush1.msra.mxu0 %v6201
    %6868 = vmatprep.subr.mxu0 %v6204
    %6869 = vmatpush1.msra.mxu0 %v6203
    %6870 = vmatprep.subr.mxu0 %v6206
    %6871 = vmatpush1.msra.mxu0 %v6205
    %6872 = vmatprep.subr.mxu0 %v6208
    %6873 = vmatpush1.msra.mxu0 %v6207
    %6874 = vmatprep.mubr.f32.mxu0 %v6713
    %6875 = vmatmul.mubr.f32.gmra.mrb[0].mxu0 %v6711
    %v6876 = vpop.f32.mrb[0].mxu0
    %v6877 = vadd.f32 %v6806, %v6876
    %v6878 = vpop.f32.mrb[0].mxu0
    %v6879 = vadd.f32 %v6808, %v6878
    %6880 = vdwg.mxu0
    %6881 = vmatprep.subr.mxu0 %v6210
    %6882 = vmatpush1.msra.mxu0 %v6209
    %6883 = vmatprep.subr.mxu0 %v6212
    %6884 = vmatpush1.msra.mxu0 %v6211
    %6885 = vmatprep.subr.mxu0 %v6214
    %6886 = vmatpush1.msra.mxu0 %v6213
    %6887 = vmatprep.subr.mxu0 %v6216
    %6888 = vmatpush1.msra.mxu0 %v6215
    %6889 = vmatprep.subr.mxu0 %v6218
    %6890 = vmatpush1.msra.mxu0 %v6217
    %6891 = vmatprep.subr.mxu0 %v6220
    %6892 = vmatpush1.msra.mxu0 %v6219
    %6893 = vmatprep.subr.mxu0 %v6222
    %6894 = vmatpush1.msra.mxu0 %v6221
    %6895 = vmatprep.subr.mxu0 %v6224
    %6896 = vmatpush1.msra.mxu0 %v6223
    %6897 = vmatprep.subr.mxu0 %v6226
    %6898 = vmatpush1.msra.mxu0 %v6225
    %6899 = vmatprep.subr.mxu0 %v6228
    %6900 = vmatpush1.msra.mxu0 %v6227
    %6901 = vmatprep.subr.mxu0 %v6230
    %6902 = vmatpush1.msra.mxu0 %v6229
    %6903 = vmatprep.subr.mxu0 %v6232
    %6904 = vmatpush1.msra.mxu0 %v6231
    %6905 = vmatprep.subr.mxu0 %v6234
    %6906 = vmatpush1.msra.mxu0 %v6233
    %6907 = vmatprep.subr.mxu0 %v6236
    %6908 = vmatpush1.msra.mxu0 %v6235
    %6909 = vmatprep.subr.mxu0 %v6238
    %6910 = vmatpush1.msra.mxu0 %v6237
    %6911 = vmatprep.subr.mxu0 %v6240
    %6912 = vmatpush1.msra.mxu0 %v6239
    %6913 = vmatprep.subr.mxu0 %v6242
    %6914 = vmatpush1.msra.mxu0 %v6241
    %6915 = vmatprep.subr.mxu0 %v6244
    %6916 = vmatpush1.msra.mxu0 %v6243
    %6917 = vmatprep.subr.mxu0 %v6246
    %6918 = vmatpush1.msra.mxu0 %v6245
    %6919 = vmatprep.subr.mxu0 %v6248
    %6920 = vmatpush1.msra.mxu0 %v6247
    %6921 = vmatprep.subr.mxu0 %v6250
    %6922 = vmatpush1.msra.mxu0 %v6249
    %6923 = vmatprep.subr.mxu0 %v6252
    %6924 = vmatpush1.msra.mxu0 %v6251
    %6925 = vmatprep.subr.mxu0 %v6254
    %6926 = vmatpush1.msra.mxu0 %v6253
    %6927 = vmatprep.subr.mxu0 %v6256
    %6928 = vmatpush1.msra.mxu0 %v6255
    %6929 = vmatprep.subr.mxu0 %v6258
    %6930 = vmatpush1.msra.mxu0 %v6257
    %6931 = vmatprep.subr.mxu0 %v6260
    %6932 = vmatpush1.msra.mxu0 %v6259
    %6933 = vmatprep.subr.mxu0 %v6262
    %6934 = vmatpush1.msra.mxu0 %v6261
    %6935 = vmatprep.subr.mxu0 %v6264
    %6936 = vmatpush1.msra.mxu0 %v6263
    %6937 = vmatprep.subr.mxu0 %v6266
    %6938 = vmatpush1.msra.mxu0 %v6265
    %6939 = vmatprep.subr.mxu0 %v6268
    %6940 = vmatpush1.msra.mxu0 %v6267
    %6941 = vmatprep.subr.mxu0 %v6270
    %6942 = vmatpush1.msra.mxu0 %v6269
    %6943 = vmatprep.subr.mxu0 %v6272
    %6944 = vmatpush1.msra.mxu0 %v6271
    %6945 = vmatprep.mubr.f32.mxu0 %v6729
    %6946 = vmatmul.mubr.f32.gmra.mrb[0].mxu0 %v6721
    %v6947 = vpop.f32.mrb[0].mxu0
    %v6948 = vadd.f32 %v6877, %v6947
    %v6949 = vpop.f32.mrb[0].mxu0
    %v6950 = vadd.f32 %v6879, %v6949
    %6951 = vdwg.mxu0
    %6952 = vmatprep.subr.mxu0 %v6274
    %6953 = vmatpush1.msra.mxu0 %v6273
    %6954 = vmatprep.subr.mxu0 %v6276
    %6955 = vmatpush1.msra.mxu0 %v6275
    %6956 = vmatprep.subr.mxu0 %v6278
    %6957 = vmatpush1.msra.mxu0 %v6277
    %6958 = vmatprep.subr.mxu0 %v6280
    %6959 = vmatpush1.msra.mxu0 %v6279
    %6960 = vmatprep.subr.mxu0 %v6282
    %6961 = vmatpush1.msra.mxu0 %v6281
    %6962 = vmatprep.subr.mxu0 %v6284
    %6963 = vmatpush1.msra.mxu0 %v6283
    %6964 = vmatprep.subr.mxu0 %v6286
    %6965 = vmatpush1.msra.mxu0 %v6285
    %6966 = vmatprep.subr.mxu0 %v6288
    %6967 = vmatpush1.msra.mxu0 %v6287
    %6968 = vmatprep.subr.mxu0 %v6290
    %6969 = vmatpush1.msra.mxu0 %v6289
    %6970 = vmatprep.subr.mxu0 %v6292
    %6971 = vmatpush1.msra.mxu0 %v6291
    %6972 = vmatprep.subr.mxu0 %v6294
    %6973 = vmatpush1.msra.mxu0 %v6293
    %6974 = vmatprep.subr.mxu0 %v6296
    %6975 = vmatpush1.msra.mxu0 %v6295
    %6976 = vmatprep.subr.mxu0 %v6298
    %6977 = vmatpush1.msra.mxu0 %v6297
    %6978 = vmatprep.subr.mxu0 %v6300
    %6979 = vmatpush1.msra.mxu0 %v6299
    %6980 = vmatprep.subr.mxu0 %v6302
    %6981 = vmatpush1.msra.mxu0 %v6301
    %6982 = vmatprep.subr.mxu0 %v6304
    %6983 = vmatpush1.msra.mxu0 %v6303
    %6984 = vmatprep.subr.mxu0 %v6306
    %6985 = vmatpush1.msra.mxu0 %v6305
    %6986 = vmatprep.subr.mxu0 %v6308
    %6987 = vmatpush1.msra.mxu0 %v6307
    %6988 = vmatprep.subr.mxu0 %v6310
    %6989 = vmatpush1.msra.mxu0 %v6309
    %6990 = vmatprep.subr.mxu0 %v6312
    %6991 = vmatpush1.msra.mxu0 %v6311
    %6992 = vmatprep.subr.mxu0 %v6314
    %6993 = vmatpush1.msra.mxu0 %v6313
    %6994 = vmatprep.subr.mxu0 %v6316
    %6995 = vmatpush1.msra.mxu0 %v6315
    %6996 = vmatprep.subr.mxu0 %v6318
    %6997 = vmatpush1.msra.mxu0 %v6317
    %6998 = vmatprep.subr.mxu0 %v6320
    %6999 = vmatpush1.msra.mxu0 %v6319
    %7000 = vmatprep.subr.mxu0 %v6322
    %7001 = vmatpush1.msra.mxu0 %v6321
    %7002 = vmatprep.subr.mxu0 %v6324
    %7003 = vmatpush1.msra.mxu0 %v6323
    %7004 = vmatprep.subr.mxu0 %v6326
    %7005 = vmatpush1.msra.mxu0 %v6325
    %7006 = vmatprep.subr.mxu0 %v6328
    %7007 = vmatpush1.msra.mxu0 %v6327
    %7008 = vmatprep.subr.mxu0 %v6330
    %7009 = vmatpush1.msra.mxu0 %v6329
    %7010 = vmatprep.subr.mxu0 %v6332
    %7011 = vmatpush1.msra.mxu0 %v6331
    %7012 = vmatprep.subr.mxu0 %v6334
    %7013 = vmatpush1.msra.mxu0 %v6333
    %7014 = vmatprep.subr.mxu0 %v6336
    %7015 = vmatpush1.msra.mxu0 %v6335
    %7016 = vmatprep.mubr.f32.mxu0 %v6730
    %7017 = vmatmul.mubr.f32.gmra.mrb[0].mxu0 %v6728
    %v7018 = vpop.f32.mrb[0].mxu0
    %v7019 = vadd.f32 %v6948, %v7018
    %v7020 = vpop.f32.mrb[0].mxu0
    %v7021 = vadd.f32 %v6950, %v7020
    %7022 = vdwg.mxu0
    %v7023 = vmax.f32 %v7019, 0.0
    %v7024 = vmax.f32 %v7021, 0.0
    %v7027 = vcombine.low %v7023, %v7024
    %v7029 = vunpack.c.l.s4 1983009808
    %v7030 = vunpack.c.0.s8 %v7029
    %v7031 = vlaneseq
    %v7032 = vshrl.u32 %v7031, 7
    %v7033 = vsub.s32 %v7030, %v7032
    %v7034 = vrot.slane %v7027, %v7033
    %7036 = vst [vmem:[#allocation3 + $0x4] sm:$0xf] %v7034
    %v7037 = vld [vmem:[#allocation2 + $0x10] sm:$0xff]
    %v7038 = vld [vmem:[#allocation2 + $0x18] sm:$0xff]
    %v7041 = vcombine.high %v7037, %v7037
    %v7043 = vunpack.c.l.s4 1983009808
    %v7044 = vunpack.c.0.s8 %v7043
    %v7045 = vlaneseq
    %v7046 = vshrl.u32 %v7045, 7
    %v7047 = vsub.s32 %v7044, %v7046
    %v7048 = vrot.slane %v7037, %v7047
    %v7050 = vunpack.c.l.s4 1983009808
    %v7051 = vunpack.c.0.s8 %v7050
    %v7052 = vlaneseq
    %v7053 = vshrl.u32 %v7052, 7
    %v7054 = vsub.s32 %v7051, %v7053
    %v7055 = vrot.slane %v7041, %v7054
    %v7056 = vcombine.high %v7048, %v7048
    %v7057 = vcombine.high %v7055, %v7055
    %v7058 = vcombine.high %v7038, %v7038
    %v7060 = vunpack.c.l.s4 1983009808
    %v7061 = vunpack.c.0.s8 %v7060
    %v7062 = vlaneseq
    %v7063 = vshrl.u32 %v7062, 7
    %v7064 = vsub.s32 %v7061, %v7063
    %v7065 = vrot.slane %v7038, %v7064
    %v7067 = vunpack.c.l.s4 1983009808
    %v7068 = vunpack.c.0.s8 %v7067
    %v7069 = vlaneseq
    %v7070 = vshrl.u32 %v7069, 7
    %v7071 = vsub.s32 %v7068, %v7070
    %v7072 = vrot.slane %v7058, %v7071
    %v7073 = vcombine.high %v7065, %v7065
    %v7074 = vcombine.high %v7072, %v7072
    %7083 = vmatprep.subr.mxu0 %v6082
    %7084 = vmatpush1.msra.mxu0 %v6081
    %7085 = vmatprep.subr.mxu0 %v6084
    %7086 = vmatpush1.msra.mxu0 %v6083
    %7087 = vmatprep.subr.mxu0 %v6086
    %7088 = vmatpush1.msra.mxu0 %v6085
    %7089 = vmatprep.subr.mxu0 %v6088
    %7090 = vmatpush1.msra.mxu0 %v6087
    %7091 = vmatprep.subr.mxu0 %v6090
    %7092 = vmatpush1.msra.mxu0 %v6089
    %7093 = vmatprep.subr.mxu0 %v6092
    %7094 = vmatpush1.msra.mxu0 %v6091
    %7095 = vmatprep.subr.mxu0 %v6094
    %7096 = vmatpush1.msra.mxu0 %v6093
    %7097 = vmatprep.subr.mxu0 %v6096
    %7098 = vmatpush1.msra.mxu0 %v6095
    %7099 = vmatprep.subr.mxu0 %v6098
    %7100 = vmatpush1.msra.mxu0 %v6097
    %7101 = vmatprep.subr.mxu0 %v6100
    %7102 = vmatpush1.msra.mxu0 %v6099
    %7103 = vmatprep.subr.mxu0 %v6102
    %7104 = vmatpush1.msra.mxu0 %v6101
    %7105 = vmatprep.subr.mxu0 %v6104
    %7106 = vmatpush1.msra.mxu0 %v6103
    %7107 = vmatprep.subr.mxu0 %v6106
    %7108 = vmatpush1.msra.mxu0 %v6105
    %7109 = vmatprep.subr.mxu0 %v6108
    %7110 = vmatpush1.msra.mxu0 %v6107
    %7111 = vmatprep.subr.mxu0 %v6110
    %7112 = vmatpush1.msra.mxu0 %v6109
    %7113 = vmatprep.subr.mxu0 %v6112
    %7114 = vmatpush1.msra.mxu0 %v6111
    %7115 = vmatprep.subr.mxu0 %v6114
    %7116 = vmatpush1.msra.mxu0 %v6113
    %7117 = vmatprep.subr.mxu0 %v6116
    %7118 = vmatpush1.msra.mxu0 %v6115
    %7119 = vmatprep.subr.mxu0 %v6118
    %7120 = vmatpush1.msra.mxu0 %v6117
    %7121 = vmatprep.subr.mxu0 %v6120
    %7122 = vmatpush1.msra.mxu0 %v6119
    %7123 = vmatprep.subr.mxu0 %v6122
    %7124 = vmatpush1.msra.mxu0 %v6121
    %7125 = vmatprep.subr.mxu0 %v6124
    %7126 = vmatpush1.msra.mxu0 %v6123
    %7127 = vmatprep.subr.mxu0 %v6126
    %7128 = vmatpush1.msra.mxu0 %v6125
    %7129 = vmatprep.subr.mxu0 %v6128
    %7130 = vmatpush1.msra.mxu0 %v6127
    %7131 = vmatprep.subr.mxu0 %v6130
    %7132 = vmatpush1.msra.mxu0 %v6129
    %7133 = vmatprep.subr.mxu0 %v6132
    %7134 = vmatpush1.msra.mxu0 %v6131
    %7135 = vmatprep.subr.mxu0 %v6134
    %7136 = vmatpush1.msra.mxu0 %v6133
    %7137 = vmatprep.subr.mxu0 %v6136
    %7138 = vmatpush1.msra.mxu0 %v6135
    %7139 = vmatprep.subr.mxu0 %v6138
    %7140 = vmatpush1.msra.mxu0 %v6137
    %7141 = vmatprep.subr.mxu0 %v6140
    %7142 = vmatpush1.msra.mxu0 %v6139
    %7143 = vmatprep.subr.mxu0 %v6142
    %7144 = vmatpush1.msra.mxu0 %v6141
    %7145 = vmatprep.subr.mxu0 %v6144
    %7146 = vmatpush1.msra.mxu0 %v6143
    %7147 = vmatprep.mubr.f32.mxu0 %v7056
    %7148 = vmatmul.mubr.f32.gmra.mrb[0].mxu0 %v7048
    %v7149 = vpop.f32.mrb[0].mxu0
    %v7150 = vadd.f32 %v6344, %v7149
    %v7151 = vpop.f32.mrb[0].mxu0
    %v7152 = vadd.f32 %v6348, %v7151
    %7153 = vdwg.mxu0
    %7154 = vmatprep.subr.mxu0 %v6146
    %7155 = vmatpush1.msra.mxu0 %v6145
    %7156 = vmatprep.subr.mxu0 %v6148
    %7157 = vmatpush1.msra.mxu0 %v6147
    %7158 = vmatprep.subr.mxu0 %v6150
    %7159 = vmatpush1.msra.mxu0 %v6149
    %7160 = vmatprep.subr.mxu0 %v6152
    %7161 = vmatpush1.msra.mxu0 %v6151
    %7162 = vmatprep.subr.mxu0 %v6154
    %7163 = vmatpush1.msra.mxu0 %v6153
    %7164 = vmatprep.subr.mxu0 %v6156
    %7165 = vmatpush1.msra.mxu0 %v6155
    %7166 = vmatprep.subr.mxu0 %v6158
    %7167 = vmatpush1.msra.mxu0 %v6157
    %7168 = vmatprep.subr.mxu0 %v6160
    %7169 = vmatpush1.msra.mxu0 %v6159
    %7170 = vmatprep.subr.mxu0 %v6162
    %7171 = vmatpush1.msra.mxu0 %v6161
    %7172 = vmatprep.subr.mxu0 %v6164
    %7173 = vmatpush1.msra.mxu0 %v6163
    %7174 = vmatprep.subr.mxu0 %v6166
    %7175 = vmatpush1.msra.mxu0 %v6165
    %7176 = vmatprep.subr.mxu0 %v6168
    %7177 = vmatpush1.msra.mxu0 %v6167
    %7178 = vmatprep.subr.mxu0 %v6170
    %7179 = vmatpush1.msra.mxu0 %v6169
    %7180 = vmatprep.subr.mxu0 %v6172
    %7181 = vmatpush1.msra.mxu0 %v6171
    %7182 = vmatprep.subr.mxu0 %v6174
    %7183 = vmatpush1.msra.mxu0 %v6173
    %7184 = vmatprep.subr.mxu0 %v6176
    %7185 = vmatpush1.msra.mxu0 %v6175
    %7186 = vmatprep.subr.mxu0 %v6178
    %7187 = vmatpush1.msra.mxu0 %v6177
    %7188 = vmatprep.subr.mxu0 %v6180
    %7189 = vmatpush1.msra.mxu0 %v6179
    %7190 = vmatprep.subr.mxu0 %v6182
    %7191 = vmatpush1.msra.mxu0 %v6181
    %7192 = vmatprep.subr.mxu0 %v6184
    %7193 = vmatpush1.msra.mxu0 %v6183
    %7194 = vmatprep.subr.mxu0 %v6186
    %7195 = vmatpush1.msra.mxu0 %v6185
    %7196 = vmatprep.subr.mxu0 %v6188
    %7197 = vmatpush1.msra.mxu0 %v6187
    %7198 = vmatprep.subr.mxu0 %v6190
    %7199 = vmatpush1.msra.mxu0 %v6189
    %7200 = vmatprep.subr.mxu0 %v6192
    %7201 = vmatpush1.msra.mxu0 %v6191
    %7202 = vmatprep.subr.mxu0 %v6194
    %7203 = vmatpush1.msra.mxu0 %v6193
    %7204 = vmatprep.subr.mxu0 %v6196
    %7205 = vmatpush1.msra.mxu0 %v6195
    %7206 = vmatprep.subr.mxu0 %v6198
    %7207 = vmatpush1.msra.mxu0 %v6197
    %7208 = vmatprep.subr.mxu0 %v6200
    %7209 = vmatpush1.msra.mxu0 %v6199
    %7210 = vmatprep.subr.mxu0 %v6202
    %7211 = vmatpush1.msra.mxu0 %v6201
    %7212 = vmatprep.subr.mxu0 %v6204
    %7213 = vmatpush1.msra.mxu0 %v6203
    %7214 = vmatprep.subr.mxu0 %v6206
    %7215 = vmatpush1.msra.mxu0 %v6205
    %7216 = vmatprep.subr.mxu0 %v6208
    %7217 = vmatpush1.msra.mxu0 %v6207
    %7218 = vmatprep.mubr.f32.mxu0 %v7057
    %7219 = vmatmul.mubr.f32.gmra.mrb[0].mxu0 %v7055
    %v7220 = vpop.f32.mrb[0].mxu0
    %v7221 = vadd.f32 %v7150, %v7220
    %v7222 = vpop.f32.mrb[0].mxu0
    %v7223 = vadd.f32 %v7152, %v7222
    %7224 = vdwg.mxu0
    %7225 = vmatprep.subr.mxu0 %v6210
    %7226 = vmatpush1.msra.mxu0 %v6209
    %7227 = vmatprep.subr.mxu0 %v6212
    %7228 = vmatpush1.msra.mxu0 %v6211
    %7229 = vmatprep.subr.mxu0 %v6214
    %7230 = vmatpush1.msra.mxu0 %v6213
    %7231 = vmatprep.subr.mxu0 %v6216
    %7232 = vmatpush1.msra.mxu0 %v6215
    %7233 = vmatprep.subr.mxu0 %v6218
    %7234 = vmatpush1.msra.mxu0 %v6217
    %7235 = vmatprep.subr.mxu0 %v6220
    %7236 = vmatpush1.msra.mxu0 %v6219
    %7237 = vmatprep.subr.mxu0 %v6222
    %7238 = vmatpush1.msra.mxu0 %v6221
    %7239 = vmatprep.subr.mxu0 %v6224
    %7240 = vmatpush1.msra.mxu0 %v6223
    %7241 = vmatprep.subr.mxu0 %v6226
    %7242 = vmatpush1.msra.mxu0 %v6225
    %7243 = vmatprep.subr.mxu0 %v6228
    %7244 = vmatpush1.msra.mxu0 %v6227
    %7245 = vmatprep.subr.mxu0 %v6230
    %7246 = vmatpush1.msra.mxu0 %v6229
    %7247 = vmatprep.subr.mxu0 %v6232
    %7248 = vmatpush1.msra.mxu0 %v6231
    %7249 = vmatprep.subr.mxu0 %v6234
    %7250 = vmatpush1.msra.mxu0 %v6233
    %7251 = vmatprep.subr.mxu0 %v6236
    %7252 = vmatpush1.msra.mxu0 %v6235
    %7253 = vmatprep.subr.mxu0 %v6238
    %7254 = vmatpush1.msra.mxu0 %v6237
    %7255 = vmatprep.subr.mxu0 %v6240
    %7256 = vmatpush1.msra.mxu0 %v6239
    %7257 = vmatprep.subr.mxu0 %v6242
    %7258 = vmatpush1.msra.mxu0 %v6241
    %7259 = vmatprep.subr.mxu0 %v6244
    %7260 = vmatpush1.msra.mxu0 %v6243
    %7261 = vmatprep.subr.mxu0 %v6246
    %7262 = vmatpush1.msra.mxu0 %v6245
    %7263 = vmatprep.subr.mxu0 %v6248
    %7264 = vmatpush1.msra.mxu0 %v6247
    %7265 = vmatprep.subr.mxu0 %v6250
    %7266 = vmatpush1.msra.mxu0 %v6249
    %7267 = vmatprep.subr.mxu0 %v6252
    %7268 = vmatpush1.msra.mxu0 %v6251
    %7269 = vmatprep.subr.mxu0 %v6254
    %7270 = vmatpush1.msra.mxu0 %v6253
    %7271 = vmatprep.subr.mxu0 %v6256
    %7272 = vmatpush1.msra.mxu0 %v6255
    %7273 = vmatprep.subr.mxu0 %v6258
    %7274 = vmatpush1.msra.mxu0 %v6257
    %7275 = vmatprep.subr.mxu0 %v6260
    %7276 = vmatpush1.msra.mxu0 %v6259
    %7277 = vmatprep.subr.mxu0 %v6262
    %7278 = vmatpush1.msra.mxu0 %v6261
    %7279 = vmatprep.subr.mxu0 %v6264
    %7280 = vmatpush1.msra.mxu0 %v6263
    %7281 = vmatprep.subr.mxu0 %v6266
    %7282 = vmatpush1.msra.mxu0 %v6265
    %7283 = vmatprep.subr.mxu0 %v6268
    %7284 = vmatpush1.msra.mxu0 %v6267
    %7285 = vmatprep.subr.mxu0 %v6270
    %7286 = vmatpush1.msra.mxu0 %v6269
    %7287 = vmatprep.subr.mxu0 %v6272
    %7288 = vmatpush1.msra.mxu0 %v6271
    %7289 = vmatprep.mubr.f32.mxu0 %v7073
    %7290 = vmatmul.mubr.f32.gmra.mrb[0].mxu0 %v7065
    %v7291 = vpop.f32.mrb[0].mxu0
    %v7292 = vadd.f32 %v7221, %v7291
    %v7293 = vpop.f32.mrb[0].mxu0
    %v7294 = vadd.f32 %v7223, %v7293
    %7295 = vdwg.mxu0
    %7296 = vmatprep.subr.mxu0 %v6274
    %7297 = vmatpush1.msra.mxu0 %v6273
    %7298 = vmatprep.subr.mxu0 %v6276
    %7299 = vmatpush1.msra.mxu0 %v6275
    %7300 = vmatprep.subr.mxu0 %v6278
    %7301 = vmatpush1.msra.mxu0 %v6277
    %7302 = vmatprep.subr.mxu0 %v6280
    %7303 = vmatpush1.msra.mxu0 %v6279
    %7304 = vmatprep.subr.mxu0 %v6282
    %7305 = vmatpush1.msra.mxu0 %v6281
    %7306 = vmatprep.subr.mxu0 %v6284
    %7307 = vmatpush1.msra.mxu0 %v6283
    %7308 = vmatprep.subr.mxu0 %v6286
    %7309 = vmatpush1.msra.mxu0 %v6285
    %7310 = vmatprep.subr.mxu0 %v6288
    %7311 = vmatpush1.msra.mxu0 %v6287
    %7312 = vmatprep.subr.mxu0 %v6290
    %7313 = vmatpush1.msra.mxu0 %v6289
    %7314 = vmatprep.subr.mxu0 %v6292
    %7315 = vmatpush1.msra.mxu0 %v6291
    %7316 = vmatprep.subr.mxu0 %v6294
    %7317 = vmatpush1.msra.mxu0 %v6293
    %7318 = vmatprep.subr.mxu0 %v6296
    %7319 = vmatpush1.msra.mxu0 %v6295
    %7320 = vmatprep.subr.mxu0 %v6298
    %7321 = vmatpush1.msra.mxu0 %v6297
    %7322 = vmatprep.subr.mxu0 %v6300
    %7323 = vmatpush1.msra.mxu0 %v6299
    %7324 = vmatprep.subr.mxu0 %v6302
    %7325 = vmatpush1.msra.mxu0 %v6301
    %7326 = vmatprep.subr.mxu0 %v6304
    %7327 = vmatpush1.msra.mxu0 %v6303
    %7328 = vmatprep.subr.mxu0 %v6306
    %7329 = vmatpush1.msra.mxu0 %v6305
    %7330 = vmatprep.subr.mxu0 %v6308
    %7331 = vmatpush1.msra.mxu0 %v6307
    %7332 = vmatprep.subr.mxu0 %v6310
    %7333 = vmatpush1.msra.mxu0 %v6309
    %7334 = vmatprep.subr.mxu0 %v6312
    %7335 = vmatpush1.msra.mxu0 %v6311
    %7336 = vmatprep.subr.mxu0 %v6314
    %7337 = vmatpush1.msra.mxu0 %v6313
    %7338 = vmatprep.subr.mxu0 %v6316
    %7339 = vmatpush1.msra.mxu0 %v6315
    %7340 = vmatprep.subr.mxu0 %v6318
    %7341 = vmatpush1.msra.mxu0 %v6317
    %7342 = vmatprep.subr.mxu0 %v6320
    %7343 = vmatpush1.msra.mxu0 %v6319
    %7344 = vmatprep.subr.mxu0 %v6322
    %7345 = vmatpush1.msra.mxu0 %v6321
    %7346 = vmatprep.subr.mxu0 %v6324
    %7347 = vmatpush1.msra.mxu0 %v6323
    %7348 = vmatprep.subr.mxu0 %v6326
    %7349 = vmatpush1.msra.mxu0 %v6325
    %7350 = vmatprep.subr.mxu0 %v6328
    %7351 = vmatpush1.msra.mxu0 %v6327
    %7352 = vmatprep.subr.mxu0 %v6330
    %7353 = vmatpush1.msra.mxu0 %v6329
    %7354 = vmatprep.subr.mxu0 %v6332
    %7355 = vmatpush1.msra.mxu0 %v6331
    %7356 = vmatprep.subr.mxu0 %v6334
    %7357 = vmatpush1.msra.mxu0 %v6333
    %7358 = vmatprep.subr.mxu0 %v6336
    %7359 = vmatpush1.msra.mxu0 %v6335
    %7360 = vmatprep.mubr.f32.mxu0 %v7074
    %7361 = vmatmul.mubr.f32.gmra.mrb[0].mxu0 %v7072
    %v7362 = vpop.f32.mrb[0].mxu0
    %v7363 = vadd.f32 %v7292, %v7362
    %v7364 = vpop.f32.mrb[0].mxu0
    %v7365 = vadd.f32 %v7294, %v7364
    %7366 = vdwg.mxu0
    %v7367 = vmax.f32 %v7363, 0.0
    %v7368 = vmax.f32 %v7365, 0.0
    %v7371 = vcombine.low %v7367, %v7368
    %v7373 = vunpack.c.l.s4 1983009808
    %v7374 = vunpack.c.0.s8 %v7373
    %v7375 = vlaneseq
    %v7376 = vshrl.u32 %v7375, 7
    %v7377 = vsub.s32 %v7374, %v7376
    %v7378 = vrot.slane %v7371, %v7377
    %7380 = vst [vmem:[#allocation3 + $0x8] sm:$0xf] %v7378
    %v7381 = vld [vmem:[#allocation12] sm:$0xff]
    %v7382 = vld [vmem:[#allocation12 + $0x8] sm:$0xff]
    %v7383 = vld [vmem:[#allocation12 + $0x10] sm:$0xff]
    %v7384 = vld [vmem:[#allocation12 + $0x18] sm:$0xff]
    %v7385 = vld [vmem:[#allocation12 + $0x20] sm:$0xff]
    %v7386 = vld [vmem:[#allocation12 + $0x28] sm:$0xff]
    %v7387 = vld [vmem:[#allocation12 + $0x30] sm:$0xff]
    %v7388 = vld [vmem:[#allocation12 + $0x38] sm:$0xff]
    %v7389 = vld [vmem:[#allocation12 + $0x40] sm:$0xff]
    %v7390 = vld [vmem:[#allocation12 + $0x48] sm:$0xff]
    %v7391 = vld [vmem:[#allocation12 + $0x50] sm:$0xff]
    %v7392 = vld [vmem:[#allocation12 + $0x58] sm:$0xff]
    %v7393 = vld [vmem:[#allocation12 + $0x60] sm:$0xff]
    %v7394 = vld [vmem:[#allocation12 + $0x68] sm:$0xff]
    %v7395 = vld [vmem:[#allocation12 + $0x70] sm:$0xff]
    %v7396 = vld [vmem:[#allocation12 + $0x78] sm:$0xff]
    %v7397 = vld [vmem:[#allocation12 + $0x80] sm:$0xff]
    %v7398 = vld [vmem:[#allocation12 + $0x88] sm:$0xff]
    %v7399 = vld [vmem:[#allocation12 + $0x90] sm:$0xff]
    %v7400 = vld [vmem:[#allocation12 + $0x98] sm:$0xff]
    %v7401 = vld [vmem:[#allocation12 + $0xa0] sm:$0xff]
    %v7402 = vld [vmem:[#allocation12 + $0xa8] sm:$0xff]
    %v7403 = vld [vmem:[#allocation12 + $0xb0] sm:$0xff]
    %v7404 = vld [vmem:[#allocation12 + $0xb8] sm:$0xff]
    %v7405 = vld [vmem:[#allocation12 + $0xc0] sm:$0xff]
    %v7406 = vld [vmem:[#allocation12 + $0xc8] sm:$0xff]
    %v7407 = vld [vmem:[#allocation12 + $0xd0] sm:$0xff]
    %v7408 = vld [vmem:[#allocation12 + $0xd8] sm:$0xff]
    %v7409 = vld [vmem:[#allocation12 + $0xe0] sm:$0xff]
    %v7410 = vld [vmem:[#allocation12 + $0xe8] sm:$0xff]
    %v7411 = vld [vmem:[#allocation12 + $0xf0] sm:$0xff]
    %v7412 = vld [vmem:[#allocation12 + $0xf8] sm:$0xff]
    %v7413 = vld [vmem:[#allocation12 + $0x100] sm:$0xff]
    %v7414 = vld [vmem:[#allocation12 + $0x108] sm:$0xff]
    %v7415 = vld [vmem:[#allocation12 + $0x110] sm:$0xff]
    %v7416 = vld [vmem:[#allocation12 + $0x118] sm:$0xff]
    %v7417 = vld [vmem:[#allocation12 + $0x120] sm:$0xff]
    %v7418 = vld [vmem:[#allocation12 + $0x128] sm:$0xff]
    %v7419 = vld [vmem:[#allocation12 + $0x130] sm:$0xff]
    %v7420 = vld [vmem:[#allocation12 + $0x138] sm:$0xff]
    %v7421 = vld [vmem:[#allocation12 + $0x140] sm:$0xff]
    %v7422 = vld [vmem:[#allocation12 + $0x148] sm:$0xff]
    %v7423 = vld [vmem:[#allocation12 + $0x150] sm:$0xff]
    %v7424 = vld [vmem:[#allocation12 + $0x158] sm:$0xff]
    %v7425 = vld [vmem:[#allocation12 + $0x160] sm:$0xff]
    %v7426 = vld [vmem:[#allocation12 + $0x168] sm:$0xff]
    %v7427 = vld [vmem:[#allocation12 + $0x170] sm:$0xff]
    %v7428 = vld [vmem:[#allocation12 + $0x178] sm:$0xff]
    %v7429 = vld [vmem:[#allocation12 + $0x180] sm:$0xff]
    %v7430 = vld [vmem:[#allocation12 + $0x188] sm:$0xff]
    %v7431 = vld [vmem:[#allocation12 + $0x190] sm:$0xff]
    %v7432 = vld [vmem:[#allocation12 + $0x198] sm:$0xff]
    %v7433 = vld [vmem:[#allocation12 + $0x1a0] sm:$0xff]
    %v7434 = vld [vmem:[#allocation12 + $0x1a8] sm:$0xff]
    %v7435 = vld [vmem:[#allocation12 + $0x1b0] sm:$0xff]
    %v7436 = vld [vmem:[#allocation12 + $0x1b8] sm:$0xff]
    %v7437 = vld [vmem:[#allocation12 + $0x1c0] sm:$0xff]
    %v7438 = vld [vmem:[#allocation12 + $0x1c8] sm:$0xff]
    %v7439 = vld [vmem:[#allocation12 + $0x1d0] sm:$0xff]
    %v7440 = vld [vmem:[#allocation12 + $0x1d8] sm:$0xff]
    %v7441 = vld [vmem:[#allocation12 + $0x1e0] sm:$0xff]
    %v7442 = vld [vmem:[#allocation12 + $0x1e8] sm:$0xff]
    %v7443 = vld [vmem:[#allocation12 + $0x1f0] sm:$0xff]
    %v7444 = vld [vmem:[#allocation12 + $0x1f8] sm:$0xff]
    %v7445 = vld [vmem:[#allocation12 + $0x200] sm:$0xff]
    %v7446 = vld [vmem:[#allocation12 + $0x208] sm:$0xff]
    %v7447 = vld [vmem:[#allocation12 + $0x210] sm:$0xff]
    %v7448 = vld [vmem:[#allocation12 + $0x218] sm:$0xff]
    %v7449 = vld [vmem:[#allocation12 + $0x220] sm:$0xff]
    %v7450 = vld [vmem:[#allocation12 + $0x228] sm:$0xff]
    %v7451 = vld [vmem:[#allocation12 + $0x230] sm:$0xff]
    %v7452 = vld [vmem:[#allocation12 + $0x238] sm:$0xff]
    %v7453 = vld [vmem:[#allocation12 + $0x240] sm:$0xff]
    %v7454 = vld [vmem:[#allocation12 + $0x248] sm:$0xff]
    %v7455 = vld [vmem:[#allocation12 + $0x250] sm:$0xff]
    %v7456 = vld [vmem:[#allocation12 + $0x258] sm:$0xff]
    %v7457 = vld [vmem:[#allocation12 + $0x260] sm:$0xff]
    %v7458 = vld [vmem:[#allocation12 + $0x268] sm:$0xff]
    %v7459 = vld [vmem:[#allocation12 + $0x270] sm:$0xff]
    %v7460 = vld [vmem:[#allocation12 + $0x278] sm:$0xff]
    %v7461 = vld [vmem:[#allocation12 + $0x280] sm:$0xff]
    %v7462 = vld [vmem:[#allocation12 + $0x288] sm:$0xff]
    %v7463 = vld [vmem:[#allocation12 + $0x290] sm:$0xff]
    %v7464 = vld [vmem:[#allocation12 + $0x298] sm:$0xff]
    %v7465 = vld [vmem:[#allocation12 + $0x2a0] sm:$0xff]
    %v7466 = vld [vmem:[#allocation12 + $0x2a8] sm:$0xff]
    %v7467 = vld [vmem:[#allocation12 + $0x2b0] sm:$0xff]
    %v7468 = vld [vmem:[#allocation12 + $0x2b8] sm:$0xff]
    %v7469 = vld [vmem:[#allocation12 + $0x2c0] sm:$0xff]
    %v7470 = vld [vmem:[#allocation12 + $0x2c8] sm:$0xff]
    %v7471 = vld [vmem:[#allocation12 + $0x2d0] sm:$0xff]
    %v7472 = vld [vmem:[#allocation12 + $0x2d8] sm:$0xff]
    %v7473 = vld [vmem:[#allocation12 + $0x2e0] sm:$0xff]
    %v7474 = vld [vmem:[#allocation12 + $0x2e8] sm:$0xff]
    %v7475 = vld [vmem:[#allocation12 + $0x2f0] sm:$0xff]
    %v7476 = vld [vmem:[#allocation12 + $0x2f8] sm:$0xff]
    %v7477 = vld [vmem:[#allocation13] sm:$0x1]
    %v7478 = vld [vmem:[#allocation3] sm:$0xff]
    %v7479 = vld [vmem:[#allocation3 + $0x8] sm:$0xf]
    %v7481 = vlaneseq
    %v7482 = vshrl.u32 %v7481, 7
    %v7483 = vsub.s32 0, %v7482
    %v7484 = vrot.slane %v7477, %v7483
    %v7488 = vcombine.high %v7478, %v7478
    %v7490 = vunpack.c.l.s4 1983009808
    %v7491 = vunpack.c.0.s8 %v7490
    %v7492 = vlaneseq
    %v7493 = vshrl.u32 %v7492, 7
    %v7494 = vsub.s32 %v7491, %v7493
    %v7495 = vrot.slane %v7478, %v7494
    %v7497 = vunpack.c.l.s4 1983009808
    %v7498 = vunpack.c.0.s8 %v7497
    %v7499 = vlaneseq
    %v7500 = vshrl.u32 %v7499, 7
    %v7501 = vsub.s32 %v7498, %v7500
    %v7502 = vrot.slane %v7488, %v7501
    %v7503 = vcombine.high %v7495, %v7495
    %v7504 = vcombine.high %v7502, %v7502
    %v7506 = vunpack.c.l.s4 1983009808
    %v7507 = vunpack.c.0.s8 %v7506
    %v7508 = vlaneseq
    %v7509 = vshrl.u32 %v7508, 7
    %v7510 = vsub.s32 %v7507, %v7509
    %v7511 = vrot.slane %v7479, %v7510
    %v7512 = vcombine.high %v7511, %v7511
    %7519 = vmatprep.subr.mxu0 0.0
    %7520 = vmatpush1.msra.mxu0 %v7381
    %7521 = vmatprep.subr.mxu0 0.0
    %7522 = vmatpush1.msra.mxu0 %v7382
    %7523 = vmatprep.subr.mxu0 0.0
    %7524 = vmatpush1.msra.mxu0 %v7383
    %7525 = vmatprep.subr.mxu0 0.0
    %7526 = vmatpush1.msra.mxu0 %v7384
    %7527 = vmatprep.subr.mxu0 0.0
    %7528 = vmatpush1.msra.mxu0 %v7385
    %7529 = vmatprep.subr.mxu0 0.0
    %7530 = vmatpush1.msra.mxu0 %v7386
    %7531 = vmatprep.subr.mxu0 0.0
    %7532 = vmatpush1.msra.mxu0 %v7387
    %7533 = vmatprep.subr.mxu0 0.0
    %7534 = vmatpush1.msra.mxu0 %v7388
    %7535 = vmatprep.subr.mxu0 0.0
    %7536 = vmatpush1.msra.mxu0 %v7389
    %7537 = vmatprep.subr.mxu0 0.0
    %7538 = vmatpush1.msra.mxu0 %v7390
    %7539 = vmatprep.subr.mxu0 0.0
    %7540 = vmatpush1.msra.mxu0 %v7391
    %7541 = vmatprep.subr.mxu0 0.0
    %7542 = vmatpush1.msra.mxu0 %v7392
    %7543 = vmatprep.subr.mxu0 0.0
    %7544 = vmatpush1.msra.mxu0 %v7393
    %7545 = vmatprep.subr.mxu0 0.0
    %7546 = vmatpush1.msra.mxu0 %v7394
    %7547 = vmatprep.subr.mxu0 0.0
    %7548 = vmatpush1.msra.mxu0 %v7395
    %7549 = vmatprep.subr.mxu0 0.0
    %7550 = vmatpush1.msra.mxu0 %v7396
    %7551 = vmatprep.subr.mxu0 0.0
    %7552 = vmatpush1.msra.mxu0 %v7397
    %7553 = vmatprep.subr.mxu0 0.0
    %7554 = vmatpush1.msra.mxu0 %v7398
    %7555 = vmatprep.subr.mxu0 0.0
    %7556 = vmatpush1.msra.mxu0 %v7399
    %7557 = vmatprep.subr.mxu0 0.0
    %7558 = vmatpush1.msra.mxu0 %v7400
    %7559 = vmatprep.subr.mxu0 0.0
    %7560 = vmatpush1.msra.mxu0 %v7401
    %7561 = vmatprep.subr.mxu0 0.0
    %7562 = vmatpush1.msra.mxu0 %v7402
    %7563 = vmatprep.subr.mxu0 0.0
    %7564 = vmatpush1.msra.mxu0 %v7403
    %7565 = vmatprep.subr.mxu0 0.0
    %7566 = vmatpush1.msra.mxu0 %v7404
    %7567 = vmatprep.subr.mxu0 0.0
    %7568 = vmatpush1.msra.mxu0 %v7405
    %7569 = vmatprep.subr.mxu0 0.0
    %7570 = vmatpush1.msra.mxu0 %v7406
    %7571 = vmatprep.subr.mxu0 0.0
    %7572 = vmatpush1.msra.mxu0 %v7407
    %7573 = vmatprep.subr.mxu0 0.0
    %7574 = vmatpush1.msra.mxu0 %v7408
    %7575 = vmatprep.subr.mxu0 0.0
    %7576 = vmatpush1.msra.mxu0 %v7409
    %7577 = vmatprep.subr.mxu0 0.0
    %7578 = vmatpush1.msra.mxu0 %v7410
    %7579 = vmatprep.subr.mxu0 0.0
    %7580 = vmatpush1.msra.mxu0 %v7411
    %7581 = vmatprep.subr.mxu0 0.0
    %7582 = vmatpush1.msra.mxu0 %v7412
    %7583 = vmatprep.mubr.f32.mxu0 %v7503
    %7584 = vmatmul.mubr.f32.gmra.mrb[0].mxu0 %v7495
    %v7585 = vpop.f32.mrb[0].mxu0
    %v7586 = vadd.f32 %v7484, %v7585
    %v7587 = vpop.f32.mrb[0].mxu0
    %7588 = vdwg.mxu0
    %7589 = vmatprep.subr.mxu0 0.0
    %7590 = vmatpush1.msra.mxu0 %v7413
    %7591 = vmatprep.subr.mxu0 0.0
    %7592 = vmatpush1.msra.mxu0 %v7414
    %7593 = vmatprep.subr.mxu0 0.0
    %7594 = vmatpush1.msra.mxu0 %v7415
    %7595 = vmatprep.subr.mxu0 0.0
    %7596 = vmatpush1.msra.mxu0 %v7416
    %7597 = vmatprep.subr.mxu0 0.0
    %7598 = vmatpush1.msra.mxu0 %v7417
    %7599 = vmatprep.subr.mxu0 0.0
    %7600 = vmatpush1.msra.mxu0 %v7418
    %7601 = vmatprep.subr.mxu0 0.0
    %7602 = vmatpush1.msra.mxu0 %v7419
    %7603 = vmatprep.subr.mxu0 0.0
    %7604 = vmatpush1.msra.mxu0 %v7420
    %7605 = vmatprep.subr.mxu0 0.0
    %7606 = vmatpush1.msra.mxu0 %v7421
    %7607 = vmatprep.subr.mxu0 0.0
    %7608 = vmatpush1.msra.mxu0 %v7422
    %7609 = vmatprep.subr.mxu0 0.0
    %7610 = vmatpush1.msra.mxu0 %v7423
    %7611 = vmatprep.subr.mxu0 0.0
    %7612 = vmatpush1.msra.mxu0 %v7424
    %7613 = vmatprep.subr.mxu0 0.0
    %7614 = vmatpush1.msra.mxu0 %v7425
    %7615 = vmatprep.subr.mxu0 0.0
    %7616 = vmatpush1.msra.mxu0 %v7426
    %7617 = vmatprep.subr.mxu0 0.0
    %7618 = vmatpush1.msra.mxu0 %v7427
    %7619 = vmatprep.subr.mxu0 0.0
    %7620 = vmatpush1.msra.mxu0 %v7428
    %7621 = vmatprep.subr.mxu0 0.0
    %7622 = vmatpush1.msra.mxu0 %v7429
    %7623 = vmatprep.subr.mxu0 0.0
    %7624 = vmatpush1.msra.mxu0 %v7430
    %7625 = vmatprep.subr.mxu0 0.0
    %7626 = vmatpush1.msra.mxu0 %v7431
    %7627 = vmatprep.subr.mxu0 0.0
    %7628 = vmatpush1.msra.mxu0 %v7432
    %7629 = vmatprep.subr.mxu0 0.0
    %7630 = vmatpush1.msra.mxu0 %v7433
    %7631 = vmatprep.subr.mxu0 0.0
    %7632 = vmatpush1.msra.mxu0 %v7434
    %7633 = vmatprep.subr.mxu0 0.0
    %7634 = vmatpush1.msra.mxu0 %v7435
    %7635 = vmatprep.subr.mxu0 0.0
    %7636 = vmatpush1.msra.mxu0 %v7436
    %7637 = vmatprep.subr.mxu0 0.0
    %7638 = vmatpush1.msra.mxu0 %v7437
    %7639 = vmatprep.subr.mxu0 0.0
    %7640 = vmatpush1.msra.mxu0 %v7438
    %7641 = vmatprep.subr.mxu0 0.0
    %7642 = vmatpush1.msra.mxu0 %v7439
    %7643 = vmatprep.subr.mxu0 0.0
    %7644 = vmatpush1.msra.mxu0 %v7440
    %7645 = vmatprep.subr.mxu0 0.0
    %7646 = vmatpush1.msra.mxu0 %v7441
    %7647 = vmatprep.subr.mxu0 0.0
    %7648 = vmatpush1.msra.mxu0 %v7442
    %7649 = vmatprep.subr.mxu0 0.0
    %7650 = vmatpush1.msra.mxu0 %v7443
    %7651 = vmatprep.subr.mxu0 0.0
    %7652 = vmatpush1.msra.mxu0 %v7444
    %7653 = vmatprep.mubr.f32.mxu0 %v7504
    %7654 = vmatmul.mubr.f32.gmra.mrb[0].mxu0 %v7502
    %v7655 = vpop.f32.mrb[0].mxu0
    %v7656 = vadd.f32 %v7586, %v7655
    %v7657 = vpop.f32.mrb[0].mxu0
    %7658 = vdwg.mxu0
    %7659 = vmatprep.subr.mxu0 0.0
    %7660 = vmatpush1.msra.mxu0 %v7445
    %7661 = vmatprep.subr.mxu0 0.0
    %7662 = vmatpush1.msra.mxu0 %v7446
    %7663 = vmatprep.subr.mxu0 0.0
    %7664 = vmatpush1.msra.mxu0 %v7447
    %7665 = vmatprep.subr.mxu0 0.0
    %7666 = vmatpush1.msra.mxu0 %v7448
    %7667 = vmatprep.subr.mxu0 0.0
    %7668 = vmatpush1.msra.mxu0 %v7449
    %7669 = vmatprep.subr.mxu0 0.0
    %7670 = vmatpush1.msra.mxu0 %v7450
    %7671 = vmatprep.subr.mxu0 0.0
    %7672 = vmatpush1.msra.mxu0 %v7451
    %7673 = vmatprep.subr.mxu0 0.0
    %7674 = vmatpush1.msra.mxu0 %v7452
    %7675 = vmatprep.subr.mxu0 0.0
    %7676 = vmatpush1.msra.mxu0 %v7453
    %7677 = vmatprep.subr.mxu0 0.0
    %7678 = vmatpush1.msra.mxu0 %v7454
    %7679 = vmatprep.subr.mxu0 0.0
    %7680 = vmatpush1.msra.mxu0 %v7455
    %7681 = vmatprep.subr.mxu0 0.0
    %7682 = vmatpush1.msra.mxu0 %v7456
    %7683 = vmatprep.subr.mxu0 0.0
    %7684 = vmatpush1.msra.mxu0 %v7457
    %7685 = vmatprep.subr.mxu0 0.0
    %7686 = vmatpush1.msra.mxu0 %v7458
    %7687 = vmatprep.subr.mxu0 0.0
    %7688 = vmatpush1.msra.mxu0 %v7459
    %7689 = vmatprep.subr.mxu0 0.0
    %7690 = vmatpush1.msra.mxu0 %v7460
    %7691 = vmatprep.subr.mxu0 0.0
    %7692 = vmatpush1.msra.mxu0 %v7461
    %7693 = vmatprep.subr.mxu0 0.0
    %7694 = vmatpush1.msra.mxu0 %v7462
    %7695 = vmatprep.subr.mxu0 0.0
    %7696 = vmatpush1.msra.mxu0 %v7463
    %7697 = vmatprep.subr.mxu0 0.0
    %7698 = vmatpush1.msra.mxu0 %v7464
    %7699 = vmatprep.subr.mxu0 0.0
    %7700 = vmatpush1.msra.mxu0 %v7465
    %7701 = vmatprep.subr.mxu0 0.0
    %7702 = vmatpush1.msra.mxu0 %v7466
    %7703 = vmatprep.subr.mxu0 0.0
    %7704 = vmatpush1.msra.mxu0 %v7467
    %7705 = vmatprep.subr.mxu0 0.0
    %7706 = vmatpush1.msra.mxu0 %v7468
    %7707 = vmatprep.subr.mxu0 0.0
    %7708 = vmatpush1.msra.mxu0 %v7469
    %7709 = vmatprep.subr.mxu0 0.0
    %7710 = vmatpush1.msra.mxu0 %v7470
    %7711 = vmatprep.subr.mxu0 0.0
    %7712 = vmatpush1.msra.mxu0 %v7471
    %7713 = vmatprep.subr.mxu0 0.0
    %7714 = vmatpush1.msra.mxu0 %v7472
    %7715 = vmatprep.subr.mxu0 0.0
    %7716 = vmatpush1.msra.mxu0 %v7473
    %7717 = vmatprep.subr.mxu0 0.0
    %7718 = vmatpush1.msra.mxu0 %v7474
    %7719 = vmatprep.subr.mxu0 0.0
    %7720 = vmatpush1.msra.mxu0 %v7475
    %7721 = vmatprep.subr.mxu0 0.0
    %7722 = vmatpush1.msra.mxu0 %v7476
    %7723 = vmatprep.mubr.f32.mxu0 %v7512
    %7724 = vmatmul.mubr.f32.gmra.mrb[0].mxu0 %v7511
    %v7725 = vpop.f32.mrb[0].mxu0
    %v7726 = vadd.f32 %v7656, %v7725
    %v7727 = vpop.f32.mrb[0].mxu0
    %7728 = vdwg.mxu0
    %v7729 = vmax.f32 %v7726, 0.0
    %v7730 = vld [vmem:[#allocation15] sm:$0xff]
    %v7731 = vld [vmem:[#allocation15 + $0x8] sm:$0xff]
    %v7732 = vld [vmem:[#allocation15 + $0x10] sm:$0xff]
    %v7733 = vld [vmem:[#allocation15 + $0x18] sm:$0xff]
    %v7734 = vld [vmem:[#allocation15 + $0x20] sm:$0xff]
    %v7735 = vld [vmem:[#allocation15 + $0x28] sm:$0xff]
    %v7736 = vld [vmem:[#allocation15 + $0x30] sm:$0xff]
    %v7737 = vld [vmem:[#allocation15 + $0x38] sm:$0xff]
    %v7738 = vld [vmem:[#allocation15 + $0x40] sm:$0xff]
    %v7739 = vld [vmem:[#allocation15 + $0x48] sm:$0xff]
    %v7740 = vld [vmem:[#allocation15 + $0x50] sm:$0xff]
    %v7741 = vld [vmem:[#allocation15 + $0x58] sm:$0xff]
    %v7742 = vld [vmem:[#allocation15 + $0x60] sm:$0xff]
    %v7743 = vld [vmem:[#allocation15 + $0x68] sm:$0xff]
    %v7744 = vld [vmem:[#allocation15 + $0x70] sm:$0xff]
    %v7745 = vld [vmem:[#allocation15 + $0x78] sm:$0xff]
    %v7746 = vld [vmem:[#allocation15 + $0x80] sm:$0xff]
    %v7747 = vld [vmem:[#allocation15 + $0x88] sm:$0xff]
    %v7748 = vld [vmem:[#allocation15 + $0x90] sm:$0xff]
    %v7749 = vld [vmem:[#allocation15 + $0x98] sm:$0xff]
    %v7750 = vld [vmem:[#allocation15 + $0xa0] sm:$0xff]
    %v7751 = vld [vmem:[#allocation15 + $0xa8] sm:$0xff]
    %v7752 = vld [vmem:[#allocation15 + $0xb0] sm:$0xff]
    %v7753 = vld [vmem:[#allocation15 + $0xb8] sm:$0xff]
    %v7754 = vld [vmem:[#allocation15 + $0xc0] sm:$0xff]
    %v7755 = vld [vmem:[#allocation15 + $0xc8] sm:$0xff]
    %v7756 = vld [vmem:[#allocation15 + $0xd0] sm:$0xff]
    %v7757 = vld [vmem:[#allocation15 + $0xd8] sm:$0xff]
    %v7758 = vld [vmem:[#allocation15 + $0xe0] sm:$0xff]
    %v7759 = vld [vmem:[#allocation15 + $0xe8] sm:$0xff]
    %v7760 = vld [vmem:[#allocation15 + $0xf0] sm:$0xff]
    %v7761 = vld [vmem:[#allocation15 + $0xf8] sm:$0xff]
    %v7762 = vld [vmem:[#allocation15 + $0x100] sm:$0xff]
    %v7763 = vld [vmem:[#allocation15 + $0x108] sm:$0xff]
    %v7764 = vld [vmem:[#allocation15 + $0x110] sm:$0xff]
    %v7765 = vld [vmem:[#allocation15 + $0x118] sm:$0xff]
    %v7766 = vld [vmem:[#allocation15 + $0x120] sm:$0xff]
    %v7767 = vld [vmem:[#allocation15 + $0x128] sm:$0xff]
    %v7768 = vld [vmem:[#allocation15 + $0x130] sm:$0xff]
    %v7769 = vld [vmem:[#allocation15 + $0x138] sm:$0xff]
    %v7770 = vld [vmem:[#allocation15 + $0x140] sm:$0xff]
    %v7771 = vld [vmem:[#allocation15 + $0x148] sm:$0xff]
    %v7772 = vld [vmem:[#allocation15 + $0x150] sm:$0xff]
    %v7773 = vld [vmem:[#allocation15 + $0x158] sm:$0xff]
    %v7774 = vld [vmem:[#allocation15 + $0x160] sm:$0xff]
    %v7775 = vld [vmem:[#allocation15 + $0x168] sm:$0xff]
    %v7776 = vld [vmem:[#allocation15 + $0x170] sm:$0xff]
    %v7777 = vld [vmem:[#allocation15 + $0x178] sm:$0xff]
    %v7778 = vld [vmem:[#allocation15 + $0x180] sm:$0xff]
    %v7779 = vld [vmem:[#allocation15 + $0x188] sm:$0xff]
    %v7780 = vld [vmem:[#allocation15 + $0x190] sm:$0xff]
    %v7781 = vld [vmem:[#allocation15 + $0x198] sm:$0xff]
    %v7782 = vld [vmem:[#allocation15 + $0x1a0] sm:$0xff]
    %v7783 = vld [vmem:[#allocation15 + $0x1a8] sm:$0xff]
    %v7784 = vld [vmem:[#allocation15 + $0x1b0] sm:$0xff]
    %v7785 = vld [vmem:[#allocation15 + $0x1b8] sm:$0xff]
    %v7786 = vld [vmem:[#allocation15 + $0x1c0] sm:$0xff]
    %v7787 = vld [vmem:[#allocation15 + $0x1c8] sm:$0xff]
    %v7788 = vld [vmem:[#allocation15 + $0x1d0] sm:$0xff]
    %v7789 = vld [vmem:[#allocation15 + $0x1d8] sm:$0xff]
    %v7790 = vld [vmem:[#allocation15 + $0x1e0] sm:$0xff]
    %v7791 = vld [vmem:[#allocation15 + $0x1e8] sm:$0xff]
    %v7792 = vld [vmem:[#allocation15 + $0x1f0] sm:$0xff]
    %v7793 = vld [vmem:[#allocation15 + $0x1f8] sm:$0xff]
    %v7794 = vld [vmem:[#allocation16] sm:$0xf]
    %v7796 = vlaneseq
    %v7797 = vshrl.u32 %v7796, 7
    %v7798 = vsub.s32 0, %v7797
    %v7799 = vrot.slane %v7794, %v7798
    %v7800 = vlaneseq
    %v7801 = vshrl.u32 %v7800, 7
    %v7802 = vsub.s32 1, %v7801
    %v7803 = vrot.slane %v7794, %v7802
    %v7804 = vlaneseq
    %v7805 = vshrl.u32 %v7804, 7
    %v7806 = vsub.s32 2, %v7805
    %v7807 = vrot.slane %v7794, %v7806
    %v7808 = vlaneseq
    %v7809 = vshrl.u32 %v7808, 7
    %v7810 = vsub.s32 3, %v7809
    %v7811 = vrot.slane %v7794, %v7810
    %7816 = vmatprep.subr.mxu0 %v7731
    %7817 = vmatpush1.msra.mxu0 %v7730
    %7818 = vmatprep.subr.mxu0 %v7735
    %7819 = vmatpush1.msra.mxu0 %v7734
    %7820 = vmatprep.subr.mxu0 %v7739
    %7821 = vmatpush1.msra.mxu0 %v7738
    %7822 = vmatprep.subr.mxu0 %v7743
    %7823 = vmatpush1.msra.mxu0 %v7742
    %7824 = vmatprep.subr.mxu0 %v7747
    %7825 = vmatpush1.msra.mxu0 %v7746
    %7826 = vmatprep.subr.mxu0 %v7751
    %7827 = vmatpush1.msra.mxu0 %v7750
    %7828 = vmatprep.subr.mxu0 %v7755
    %7829 = vmatpush1.msra.mxu0 %v7754
    %7830 = vmatprep.subr.mxu0 %v7759
    %7831 = vmatpush1.msra.mxu0 %v7758
    %7832 = vmatprep.subr.mxu0 %v7763
    %7833 = vmatpush1.msra.mxu0 %v7762
    %7834 = vmatprep.subr.mxu0 %v7767
    %7835 = vmatpush1.msra.mxu0 %v7766
    %7836 = vmatprep.subr.mxu0 %v7771
    %7837 = vmatpush1.msra.mxu0 %v7770
    %7838 = vmatprep.subr.mxu0 %v7775
    %7839 = vmatpush1.msra.mxu0 %v7774
    %7840 = vmatprep.subr.mxu0 %v7779
    %7841 = vmatpush1.msra.mxu0 %v7778
    %7842 = vmatprep.subr.mxu0 %v7783
    %7843 = vmatpush1.msra.mxu0 %v7782
    %7844 = vmatprep.subr.mxu0 %v7787
    %7845 = vmatpush1.msra.mxu0 %v7786
    %7846 = vmatprep.subr.mxu0 %v7791
    %7847 = vmatpush1.msra.mxu0 %v7790
    %7848 = vmatprep.subr.mxu0 0.0
    %7849 = vmatpush1.msra.mxu0 0.0
    %7850 = vmatprep.subr.mxu0 0.0
    %7851 = vmatpush1.msra.mxu0 0.0
    %7852 = vmatprep.subr.mxu0 0.0
    %7853 = vmatpush1.msra.mxu0 0.0
    %7854 = vmatprep.subr.mxu0 0.0
    %7855 = vmatpush1.msra.mxu0 0.0
    %7856 = vmatprep.subr.mxu0 0.0
    %7857 = vmatpush1.msra.mxu0 0.0
    %7858 = vmatprep.subr.mxu0 0.0
    %7859 = vmatpush1.msra.mxu0 0.0
    %7860 = vmatprep.subr.mxu0 0.0
    %7861 = vmatpush1.msra.mxu0 0.0
    %7862 = vmatprep.subr.mxu0 0.0
    %7863 = vmatpush1.msra.mxu0 0.0
    %7864 = vmatprep.subr.mxu0 0.0
    %7865 = vmatpush1.msra.mxu0 0.0
    %7866 = vmatprep.subr.mxu0 0.0
    %7867 = vmatpush1.msra.mxu0 0.0
    %7868 = vmatprep.subr.mxu0 0.0
    %7869 = vmatpush1.msra.mxu0 0.0
    %7870 = vmatprep.subr.mxu0 0.0
    %7871 = vmatpush1.msra.mxu0 0.0
    %7872 = vmatprep.subr.mxu0 0.0
    %7873 = vmatpush1.msra.mxu0 0.0
    %7874 = vmatprep.subr.mxu0 0.0
    %7875 = vmatpush1.msra.mxu0 0.0
    %7876 = vmatprep.subr.mxu0 0.0
    %7877 = vmatpush1.msra.mxu0 0.0
    %7878 = vmatprep.subr.mxu0 0.0
    %7879 = vmatpush1.msra.mxu0 0.0
    %7880 = vmatprep.mubr.f32.mxu0 0.0
    %7881 = vmatmul.mubr.f32.gmra.mrb[0].mxu0 %v7729
    %v7882 = vpop.f32.mrb[0].mxu0
    %v7883 = vadd.f32 %v7799, %v7882
    %v7884 = vpop.f32.mrb[0].mxu0
    %v7885 = vadd.f32 %v7803, %v7884
    %7886 = vdwg.mxu0
    %7887 = vmatprep.subr.mxu0 %v7733
    %7888 = vmatpush1.msra.mxu0 %v7732
    %7889 = vmatprep.subr.mxu0 %v7737
    %7890 = vmatpush1.msra.mxu0 %v7736
    %7891 = vmatprep.subr.mxu0 %v7741
    %7892 = vmatpush1.msra.mxu0 %v7740
    %7893 = vmatprep.subr.mxu0 %v7745
    %7894 = vmatpush1.msra.mxu0 %v7744
    %7895 = vmatprep.subr.mxu0 %v7749
    %7896 = vmatpush1.msra.mxu0 %v7748
    %7897 = vmatprep.subr.mxu0 %v7753
    %7898 = vmatpush1.msra.mxu0 %v7752
    %7899 = vmatprep.subr.mxu0 %v7757
    %7900 = vmatpush1.msra.mxu0 %v7756
    %7901 = vmatprep.subr.mxu0 %v7761
    %7902 = vmatpush1.msra.mxu0 %v7760
    %7903 = vmatprep.subr.mxu0 %v7765
    %7904 = vmatpush1.msra.mxu0 %v7764
    %7905 = vmatprep.subr.mxu0 %v7769
    %7906 = vmatpush1.msra.mxu0 %v7768
    %7907 = vmatprep.subr.mxu0 %v7773
    %7908 = vmatpush1.msra.mxu0 %v7772
    %7909 = vmatprep.subr.mxu0 %v7777
    %7910 = vmatpush1.msra.mxu0 %v7776
    %7911 = vmatprep.subr.mxu0 %v7781
    %7912 = vmatpush1.msra.mxu0 %v7780
    %7913 = vmatprep.subr.mxu0 %v7785
    %7914 = vmatpush1.msra.mxu0 %v7784
    %7915 = vmatprep.subr.mxu0 %v7789
    %7916 = vmatpush1.msra.mxu0 %v7788
    %7917 = vmatprep.subr.mxu0 %v7793
    %7918 = vmatpush1.msra.mxu0 %v7792
    %7919 = vmatprep.subr.mxu0 0.0
    %7920 = vmatpush1.msra.mxu0 0.0
    %7921 = vmatprep.subr.mxu0 0.0
    %7922 = vmatpush1.msra.mxu0 0.0
    %7923 = vmatprep.subr.mxu0 0.0
    %7924 = vmatpush1.msra.mxu0 0.0
    %7925 = vmatprep.subr.mxu0 0.0
    %7926 = vmatpush1.msra.mxu0 0.0
    %7927 = vmatprep.subr.mxu0 0.0
    %7928 = vmatpush1.msra.mxu0 0.0
    %7929 = vmatprep.subr.mxu0 0.0
    %7930 = vmatpush1.msra.mxu0 0.0
    %7931 = vmatprep.subr.mxu0 0.0
    %7932 = vmatpush1.msra.mxu0 0.0
    %7933 = vmatprep.subr.mxu0 0.0
    %7934 = vmatpush1.msra.mxu0 0.0
    %7935 = vmatprep.subr.mxu0 0.0
    %7936 = vmatpush1.msra.mxu0 0.0
    %7937 = vmatprep.subr.mxu0 0.0
    %7938 = vmatpush1.msra.mxu0 0.0
    %7939 = vmatprep.subr.mxu0 0.0
    %7940 = vmatpush1.msra.mxu0 0.0
    %7941 = vmatprep.subr.mxu0 0.0
    %7942 = vmatpush1.msra.mxu0 0.0
    %7943 = vmatprep.subr.mxu0 0.0
    %7944 = vmatpush1.msra.mxu0 0.0
    %7945 = vmatprep.subr.mxu0 0.0
    %7946 = vmatpush1.msra.mxu0 0.0
    %7947 = vmatprep.subr.mxu0 0.0
    %7948 = vmatpush1.msra.mxu0 0.0
    %7949 = vmatprep.subr.mxu0 0.0
    %7950 = vmatpush1.msra.mxu0 0.0
    %7951 = vmatprep.mubr.f32.mxu0 0.0
    %7952 = vmatmul.mubr.f32.gmra.mrb[0].mxu0 %v7729
    %v7953 = vpop.f32.mrb[0].mxu0
    %v7954 = vadd.f32 %v7807, %v7953
    %v7955 = vpop.f32.mrb[0].mxu0
    %v7956 = vadd.f32 %v7811, %v7955
    %7957 = vdwg.mxu0
    %v7958 = vmax.f32 %v7883, 0.0
    %v7959 = vmax.f32 %v7885, 0.0
    %v7960 = vmax.f32 %v7954, 0.0
    %v7961 = vmax.f32 %v7956, 0.0
    %v7962 = vld [vmem:[#allocation18] sm:$0xff]
    %v7963 = vld [vmem:[#allocation18 + $0x8] sm:$0xff]
    %v7964 = vld [vmem:[#allocation18 + $0x10] sm:$0xff]
    %v7965 = vld [vmem:[#allocation18 + $0x18] sm:$0xff]
    %v7966 = vld [vmem:[#allocation18 + $0x20] sm:$0xff]
    %v7967 = vld [vmem:[#allocation18 + $0x28] sm:$0xff]
    %v7968 = vld [vmem:[#allocation18 + $0x30] sm:$0xff]
    %v7969 = vld [vmem:[#allocation18 + $0x38] sm:$0xff]
    %v7970 = vld [vmem:[#allocation18 + $0x40] sm:$0xff]
    %v7971 = vld [vmem:[#allocation18 + $0x48] sm:$0xff]
    %v7972 = vld [vmem:[#allocation18 + $0x50] sm:$0xff]
    %v7973 = vld [vmem:[#allocation18 + $0x58] sm:$0xff]
    %v7974 = vld [vmem:[#allocation18 + $0x60] sm:$0xff]
    %v7975 = vld [vmem:[#allocation18 + $0x68] sm:$0xff]
    %v7976 = vld [vmem:[#allocation18 + $0x70] sm:$0xff]
    %v7977 = vld [vmem:[#allocation18 + $0x78] sm:$0xff]
    %v7978 = vld [vmem:[#allocation18 + $0x80] sm:$0xff]
    %v7979 = vld [vmem:[#allocation18 + $0x88] sm:$0xff]
    %v7980 = vld [vmem:[#allocation18 + $0x90] sm:$0xff]
    %v7981 = vld [vmem:[#allocation18 + $0x98] sm:$0xff]
    %v7982 = vld [vmem:[#allocation18 + $0xa0] sm:$0xff]
    %v7983 = vld [vmem:[#allocation18 + $0xa8] sm:$0xff]
    %v7984 = vld [vmem:[#allocation18 + $0xb0] sm:$0xff]
    %v7985 = vld [vmem:[#allocation18 + $0xb8] sm:$0xff]
    %v7986 = vld [vmem:[#allocation18 + $0xc0] sm:$0xff]
    %v7987 = vld [vmem:[#allocation18 + $0xc8] sm:$0xff]
    %v7988 = vld [vmem:[#allocation18 + $0xd0] sm:$0xff]
    %v7989 = vld [vmem:[#allocation18 + $0xd8] sm:$0xff]
    %v7990 = vld [vmem:[#allocation18 + $0xe0] sm:$0xff]
    %v7991 = vld [vmem:[#allocation18 + $0xe8] sm:$0xff]
    %v7992 = vld [vmem:[#allocation18 + $0xf0] sm:$0xff]
    %v7993 = vld [vmem:[#allocation18 + $0xf8] sm:$0xff]
    %v7994 = vld [vmem:[#allocation18 + $0x100] sm:$0xff]
    %v7995 = vld [vmem:[#allocation18 + $0x108] sm:$0xff]
    %v7996 = vld [vmem:[#allocation18 + $0x110] sm:$0xff]
    %v7997 = vld [vmem:[#allocation18 + $0x118] sm:$0xff]
    %v7998 = vld [vmem:[#allocation18 + $0x120] sm:$0xff]
    %v7999 = vld [vmem:[#allocation18 + $0x128] sm:$0xff]
    %v8000 = vld [vmem:[#allocation18 + $0x130] sm:$0xff]
    %v8001 = vld [vmem:[#allocation18 + $0x138] sm:$0xff]
    %v8002 = vld [vmem:[#allocation18 + $0x140] sm:$0xff]
    %v8003 = vld [vmem:[#allocation18 + $0x148] sm:$0xff]
    %v8004 = vld [vmem:[#allocation18 + $0x150] sm:$0xff]
    %v8005 = vld [vmem:[#allocation18 + $0x158] sm:$0xff]
    %v8006 = vld [vmem:[#allocation18 + $0x160] sm:$0xff]
    %v8007 = vld [vmem:[#allocation18 + $0x168] sm:$0xff]
    %v8008 = vld [vmem:[#allocation18 + $0x170] sm:$0xff]
    %v8009 = vld [vmem:[#allocation18 + $0x178] sm:$0xff]
    %v8010 = vld [vmem:[#allocation18 + $0x180] sm:$0xff]
    %v8011 = vld [vmem:[#allocation18 + $0x188] sm:$0xff]
    %v8012 = vld [vmem:[#allocation18 + $0x190] sm:$0xff]
    %v8013 = vld [vmem:[#allocation18 + $0x198] sm:$0xff]
    %v8014 = vld [vmem:[#allocation18 + $0x1a0] sm:$0xff]
    %v8015 = vld [vmem:[#allocation18 + $0x1a8] sm:$0xff]
    %v8016 = vld [vmem:[#allocation18 + $0x1b0] sm:$0xff]
    %v8017 = vld [vmem:[#allocation18 + $0x1b8] sm:$0xff]
    %v8018 = vld [vmem:[#allocation18 + $0x1c0] sm:$0xff]
    %v8019 = vld [vmem:[#allocation18 + $0x1c8] sm:$0xff]
    %v8020 = vld [vmem:[#allocation18 + $0x1d0] sm:$0xff]
    %v8021 = vld [vmem:[#allocation18 + $0x1d8] sm:$0xff]
    %v8022 = vld [vmem:[#allocation18 + $0x1e0] sm:$0xff]
    %v8023 = vld [vmem:[#allocation18 + $0x1e8] sm:$0xff]
    %v8024 = vld [vmem:[#allocation18 + $0x1f0] sm:$0xff]
    %v8025 = vld [vmem:[#allocation18 + $0x1f8] sm:$0xff]
    %v8026 = vld [vmem:[#allocation19] sm:$0x1]
    %v8028 = vlaneseq
    %v8029 = vshrl.u32 %v8028, 7
    %v8030 = vsub.s32 0, %v8029
    %v8031 = vrot.slane %v8026, %v8030
    %8033 = vmatprep.subr.mxu0 0.0
    %8034 = vmatpush1.msra.mxu0 %v7962
    %8035 = vmatprep.subr.mxu0 0.0
    %8036 = vmatpush1.msra.mxu0 %v7963
    %8037 = vmatprep.subr.mxu0 0.0
    %8038 = vmatpush1.msra.mxu0 %v7964
    %8039 = vmatprep.subr.mxu0 0.0
    %8040 = vmatpush1.msra.mxu0 %v7965
    %8041 = vmatprep.subr.mxu0 0.0
    %8042 = vmatpush1.msra.mxu0 %v7966
    %8043 = vmatprep.subr.mxu0 0.0
    %8044 = vmatpush1.msra.mxu0 %v7967
    %8045 = vmatprep.subr.mxu0 0.0
    %8046 = vmatpush1.msra.mxu0 %v7968
    %8047 = vmatprep.subr.mxu0 0.0
    %8048 = vmatpush1.msra.mxu0 %v7969
    %8049 = vmatprep.subr.mxu0 0.0
    %8050 = vmatpush1.msra.mxu0 %v7970
    %8051 = vmatprep.subr.mxu0 0.0
    %8052 = vmatpush1.msra.mxu0 %v7971
    %8053 = vmatprep.subr.mxu0 0.0
    %8054 = vmatpush1.msra.mxu0 %v7972
    %8055 = vmatprep.subr.mxu0 0.0
    %8056 = vmatpush1.msra.mxu0 %v7973
    %8057 = vmatprep.subr.mxu0 0.0
    %8058 = vmatpush1.msra.mxu0 %v7974
    %8059 = vmatprep.subr.mxu0 0.0
    %8060 = vmatpush1.msra.mxu0 %v7975
    %8061 = vmatprep.subr.mxu0 0.0
    %8062 = vmatpush1.msra.mxu0 %v7976
    %8063 = vmatprep.subr.mxu0 0.0
    %8064 = vmatpush1.msra.mxu0 %v7977
    %8065 = vmatprep.subr.mxu0 0.0
    %8066 = vmatpush1.msra.mxu0 %v7978
    %8067 = vmatprep.subr.mxu0 0.0
    %8068 = vmatpush1.msra.mxu0 %v7979
    %8069 = vmatprep.subr.mxu0 0.0
    %8070 = vmatpush1.msra.mxu0 %v7980
    %8071 = vmatprep.subr.mxu0 0.0
    %8072 = vmatpush1.msra.mxu0 %v7981
    %8073 = vmatprep.subr.mxu0 0.0
    %8074 = vmatpush1.msra.mxu0 %v7982
    %8075 = vmatprep.subr.mxu0 0.0
    %8076 = vmatpush1.msra.mxu0 %v7983
    %8077 = vmatprep.subr.mxu0 0.0
    %8078 = vmatpush1.msra.mxu0 %v7984
    %8079 = vmatprep.subr.mxu0 0.0
    %8080 = vmatpush1.msra.mxu0 %v7985
    %8081 = vmatprep.subr.mxu0 0.0
    %8082 = vmatpush1.msra.mxu0 %v7986
    %8083 = vmatprep.subr.mxu0 0.0
    %8084 = vmatpush1.msra.mxu0 %v7987
    %8085 = vmatprep.subr.mxu0 0.0
    %8086 = vmatpush1.msra.mxu0 %v7988
    %8087 = vmatprep.subr.mxu0 0.0
    %8088 = vmatpush1.msra.mxu0 %v7989
    %8089 = vmatprep.subr.mxu0 0.0
    %8090 = vmatpush1.msra.mxu0 %v7990
    %8091 = vmatprep.subr.mxu0 0.0
    %8092 = vmatpush1.msra.mxu0 %v7991
    %8093 = vmatprep.subr.mxu0 0.0
    %8094 = vmatpush1.msra.mxu0 %v7992
    %8095 = vmatprep.subr.mxu0 0.0
    %8096 = vmatpush1.msra.mxu0 %v7993
    %8097 = vmatprep.mubr.f32.mxu0 %v7959
    %8098 = vmatmul.mubr.f32.gmra.mrb[0].mxu0 %v7958
    %v8099 = vpop.f32.mrb[0].mxu0
    %v8100 = vadd.f32 %v8031, %v8099
    %v8101 = vpop.f32.mrb[0].mxu0
    %8102 = vdwg.mxu0
    %8103 = vmatprep.subr.mxu0 0.0
    %8104 = vmatpush1.msra.mxu0 %v7994
    %8105 = vmatprep.subr.mxu0 0.0
    %8106 = vmatpush1.msra.mxu0 %v7995
    %8107 = vmatprep.subr.mxu0 0.0
    %8108 = vmatpush1.msra.mxu0 %v7996
    %8109 = vmatprep.subr.mxu0 0.0
    %8110 = vmatpush1.msra.mxu0 %v7997
    %8111 = vmatprep.subr.mxu0 0.0
    %8112 = vmatpush1.msra.mxu0 %v7998
    %8113 = vmatprep.subr.mxu0 0.0
    %8114 = vmatpush1.msra.mxu0 %v7999
    %8115 = vmatprep.subr.mxu0 0.0
    %8116 = vmatpush1.msra.mxu0 %v8000
    %8117 = vmatprep.subr.mxu0 0.0
    %8118 = vmatpush1.msra.mxu0 %v8001
    %8119 = vmatprep.subr.mxu0 0.0
    %8120 = vmatpush1.msra.mxu0 %v8002
    %8121 = vmatprep.subr.mxu0 0.0
    %8122 = vmatpush1.msra.mxu0 %v8003
    %8123 = vmatprep.subr.mxu0 0.0
    %8124 = vmatpush1.msra.mxu0 %v8004
    %8125 = vmatprep.subr.mxu0 0.0
    %8126 = vmatpush1.msra.mxu0 %v8005
    %8127 = vmatprep.subr.mxu0 0.0
    %8128 = vmatpush1.msra.mxu0 %v8006
    %8129 = vmatprep.subr.mxu0 0.0
    %8130 = vmatpush1.msra.mxu0 %v8007
    %8131 = vmatprep.subr.mxu0 0.0
    %8132 = vmatpush1.msra.mxu0 %v8008
    %8133 = vmatprep.subr.mxu0 0.0
    %8134 = vmatpush1.msra.mxu0 %v8009
    %8135 = vmatprep.subr.mxu0 0.0
    %8136 = vmatpush1.msra.mxu0 %v8010
    %8137 = vmatprep.subr.mxu0 0.0
    %8138 = vmatpush1.msra.mxu0 %v8011
    %8139 = vmatprep.subr.mxu0 0.0
    %8140 = vmatpush1.msra.mxu0 %v8012
    %8141 = vmatprep.subr.mxu0 0.0
    %8142 = vmatpush1.msra.mxu0 %v8013
    %8143 = vmatprep.subr.mxu0 0.0
    %8144 = vmatpush1.msra.mxu0 %v8014
    %8145 = vmatprep.subr.mxu0 0.0
    %8146 = vmatpush1.msra.mxu0 %v8015
    %8147 = vmatprep.subr.mxu0 0.0
    %8148 = vmatpush1.msra.mxu0 %v8016
    %8149 = vmatprep.subr.mxu0 0.0
    %8150 = vmatpush1.msra.mxu0 %v8017
    %8151 = vmatprep.subr.mxu0 0.0
    %8152 = vmatpush1.msra.mxu0 %v8018
    %8153 = vmatprep.subr.mxu0 0.0
    %8154 = vmatpush1.msra.mxu0 %v8019
    %8155 = vmatprep.subr.mxu0 0.0
    %8156 = vmatpush1.msra.mxu0 %v8020
    %8157 = vmatprep.subr.mxu0 0.0
    %8158 = vmatpush1.msra.mxu0 %v8021
    %8159 = vmatprep.subr.mxu0 0.0
    %8160 = vmatpush1.msra.mxu0 %v8022
    %8161 = vmatprep.subr.mxu0 0.0
    %8162 = vmatpush1.msra.mxu0 %v8023
    %8163 = vmatprep.subr.mxu0 0.0
    %8164 = vmatpush1.msra.mxu0 %v8024
    %8165 = vmatprep.subr.mxu0 0.0
    %8166 = vmatpush1.msra.mxu0 %v8025
    %8167 = vmatprep.mubr.f32.mxu0 %v7961
    %8168 = vmatmul.mubr.f32.gmra.mrb[0].mxu0 %v7960
    %v8169 = vpop.f32.mrb[0].mxu0
    %v8170 = vadd.f32 %v8100, %v8169
    %v8171 = vpop.f32.mrb[0].mxu0
    %8172 = vdwg.mxu0
    %8173 = vst [vmem:[#allocation21] sm:$0x3] %v8170
    // Predicated region
    $region86: #{dqn_forward.1} parent=1 // pred_check
      _
    $region87: #{dqn_forward.1} parent=1 // pred_check_branch
      %8175 = sbr.rel (0) target = $region89
    $region88: #{dqn_forward.1} parent=1 // pred_region
      %s8177 = ssub.s32 32, 32
      %8178 = vsyncadd [#allocation6], %s8177
      %s8180 = sshll.u32 [#allocation21], 4
      %s8181 = int_to_ptr.vmem [resolvable:$true] %s8180
      %8183 = dma.vmem_to_hbm [thread:$0]  %s8181, 32, %s11, [#allocation6]
    $region89: #{dqn_forward.1} parent=1 // pred_fallthru
      _
    // Predicated region
    $region90: #{dqn_forward.1} parent=1 // pred_check
      _
    $region91: #{dqn_forward.1} parent=1 // pred_check_branch
      %8185 = sbr.rel (0) target = $region93
    $region92: #{dqn_forward.1} parent=1 // pred_region
      %8186 = dma.done [#allocation6], 32
    $region93: #{dqn_forward.1} parent=1 // pred_fallthru
      _
    %8187 = vsyncpa [#allocation5], 1
    %8188 = vsyncpa [#allocation8], 1
    %8189 = vsyncpa [#allocation11], 1
    %8190 = vsyncpa [#allocation14], 1
    %8191 = vsyncpa [#allocation17], 1
    %8192 = vsyncpa [#allocation20], 1
    %8193 = vsyncpa [#allocation6], 1

</llo_original>
